<compile_context>
chip_gen: v7x
topology: tpu7x:2x2x1
jax: 0.10.0
libtpu: 0.0.40
codegen_flags: <defaults>
</compile_context>

<pallas_src>
import jax
import jax.numpy as jnp
from jax.experimental import pallas as pl
from jax.experimental.pallas import tpu as pltpu

# ---------------- config (small stand-in for nghuyong/ernie-1.0) ----------------
B, S, H = 2, 8, 32            # batch, seq (incl. [CLS]), hidden
NH, DH = 4, 8                 # heads, head dim
FF = 64                       # FFN intermediate
VOCAB = 100
NLAYERS = 2
TAG_TO_IX = {"O": 0, "B": 1, "I": 2, "<START>": 3, "<STOP>": 4}
T = len(TAG_TO_IX)
START, STOP = TAG_TO_IX["<START>"], TAG_TO_IX["<STOP>"]
LN_EPS = 1e-12
LOSS_PAD = 128                # lane-dense loss row


# ---------------- fully fused encoder + classifier + CRF kernel ----------------
def _bert_crf_kernel(x0_ref, mask_ref, embg_ref, embb_ref,
                     wqkv_ref, bqkv_ref, wo_ref, bo_ref,
                     ln1g_ref, ln1b_ref, w1_ref, b1_ref, w2_ref, b2_ref,
                     ln2g_ref, ln2b_ref, wcls_ref, bcls_ref,
                     trans_ref, tagsT_ref,
                     transf_ref, tags_ref, len_ref,
                     loss_ref):
    f32 = jnp.float32

    def ln(x, g, b):
        mu = jnp.mean(x, axis=-1, keepdims=True)
        var = jnp.mean((x - mu) ** 2, axis=-1, keepdims=True)
        return (x - mu) * jax.lax.rsqrt(var + LN_EPS) * g + b

    # ---------------- encoder on the flattened (B*S, H) slab ----------------
    x = ln(x0_ref[...].reshape(B * S, H), embg_ref[...], embb_ref[...])
    scale = 1.0 / (DH ** 0.5)

    for l in range(NLAYERS):                               # unrolled (NLAYERS=2)
        # fused QKV projection for the whole batch: one (B*S,H)@(H,3H) MXU push
        qkv = jnp.dot(x, wqkv_ref[l], preferred_element_type=f32) + bqkv_ref[l]
        ctx_rows = []
        for b in range(B):                                 # attention is per-sequence
            qkv_b = qkv[b * S:(b + 1) * S, :]              # (S, 3H)
            amask = mask_ref[b]                            # (1, S) additive mask
            heads = []
            for h in range(NH):
                q = qkv_b[:, h * DH:(h + 1) * DH]
                k = qkv_b[:, H + h * DH:H + (h + 1) * DH]
                v = qkv_b[:, 2 * H + h * DH:2 * H + (h + 1) * DH]
                s = jax.lax.dot_general(q, k, (((1,), (1,)), ((), ())),
                                        preferred_element_type=f32) * scale + amask
                s = s - jnp.max(s, axis=-1, keepdims=True)
                p = jnp.exp(s)
                p = p * pl.reciprocal(jnp.sum(p, axis=-1, keepdims=True), approx=True)
                heads.append(jnp.dot(p, v, preferred_element_type=f32))      # (S, DH)
            ctx_rows.append(jnp.concatenate(heads, axis=-1))                 # (S, H)
        ctx = jnp.concatenate(ctx_rows, axis=0)                              # (B*S, H)
        # single merged-heads output projection for the whole batch
        attn = jnp.dot(ctx, wo_ref[l], preferred_element_type=f32) + bo_ref[l]
        x = ln(x + attn, ln1g_ref[l], ln1b_ref[l])

        hmid = jnp.dot(x, w1_ref[l], preferred_element_type=f32) + b1_ref[l]
        # TODO(synk): reference BERT/ERNIE uses erf GELU; tanh approximation used here.
        hmid = jax.nn.gelu(hmid, approximate=True)
        ffn = jnp.dot(hmid, w2_ref[l], preferred_element_type=f32) + b2_ref[l]
        x = ln(x + ffn, ln2g_ref[l], ln2b_ref[l])

    # classifier: logits never leave VMEM (no HBM round trip)
    logits = jnp.dot(x, wcls_ref[...], preferred_element_type=f32) + bcls_ref[...]   # (B*S, T)

    # ---------------- fused CRF negative log-likelihood ----------------
    trans = trans_ref[...]                                  # (T, T) in VMEM
    col_iota = jax.lax.broadcasted_iota(jnp.int32, (S, T), 1)
    row_iota = jax.lax.broadcasted_iota(jnp.int32, (S, T), 0)

    total = jnp.float32(0.0)
    for b in range(B):                                      # B=2, unrolled
        length = len_ref[b]                                 # scalar SMEM read
        logits_b = logits[b * S:(b + 1) * S, :]             # (S, T); row 0 = [CLS], skipped

        # gold emission score hoisted out of the recursion: one masked one-hot reduce
        tag_col = tagsT_ref[:, b:b + 1]                     # (S, 1) int32
        onehot = tag_col == col_iota
        valid = (row_iota >= 1) & (row_iota <= length)      # feats use rows 1..length
        gold = jnp.sum(jnp.where(onehot & valid, logits_b, 0.0))

        # gold transition score: scalar SMEM lookups, unrolled + masked
        tag1 = tags_ref[b, 1]
        gold = gold + transf_ref[START * T + tag1]
        prev_tag = tag1
        for r in range(2, S):
            tag_r = tags_ref[b, r]
            step = transf_ref[prev_tag * T + tag_r]
            on = r <= length
            gold = gold + jnp.where(on, step, 0.0)
            prev_tag = jnp.where(on, tag_r, prev_tag)       # carries tags[b, length]
        gold = gold + transf_ref[prev_tag * T + STOP]

        # forward (log-partition) recursion, unrolled to the static bound and masked
        prev = logits_b[1:2, :] + trans[START:START + 1, :]           # (1, T) after t=0
        for r in range(2, S):
            feat_r = logits_b[r:r + 1, :]                             # (1, T)
            score = jnp.transpose(prev) + feat_r + trans              # (T, T)
            m = jnp.max(score, axis=0, keepdims=True)
            new_prev = m + jnp.log(jnp.sum(jnp.exp(score - m), axis=0, keepdims=True))
            prev = jnp.where(r <= length, new_prev, prev)
        m = jnp.max(prev)
        # NOTE: reference CRF.forward() omits transitions[:, <STOP>] in the partition
        # score (gold_score does include it); we match the module's semantics exactly.
        fwd = m + jnp.log(jnp.sum(jnp.exp(prev - m)))

        total = total + (fwd - gold)

    loss_ref[...] = jnp.zeros((1, LOSS_PAD), f32) + total * (1.0 / B)


def bert_crf_loss(params, x0, add_mask, label, text_lengths):
    """x0: (B,S,H) summed embeddings (pre-LN); add_mask: (B,1,S) additive mask."""
    trans = params["transitions"]
    vmem = pl.BlockSpec(memory_space=pltpu.MemorySpace.VMEM)
    smem = pl.BlockSpec(memory_space=pltpu.MemorySpace.SMEM)
    losses = pl.pallas_call(
        _bert_crf_kernel,
        out_shape=jax.ShapeDtypeStruct((1, LOSS_PAD), jnp.float32),
        in_specs=[vmem] * 20 + [smem] * 3,
        out_specs=vmem,
    )(x0, add_mask, params["emb_ln_g"], params["emb_ln_b"],
      params["wqkv"], params["bqkv"], params["wo"], params["bo"],
      params["ln1_g"], params["ln1_b"], params["w1"], params["b1"],
      params["w2"], params["b2"], params["ln2_g"], params["ln2_b"],
      params["wcls"], params["bcls"],
      trans, label.astype(jnp.int32).T,                     # (S, B) tags in VMEM (one-hot)
      trans.reshape(-1),                                    # (T*T,) in SMEM (scalar lookups)
      label.astype(jnp.int32), text_lengths.astype(jnp.int32))
    return losses[0, 0]


# ---------------- parameter init (deterministic, synthetic) ----------------
def init_params(key):
    keys = jax.random.split(key, 10)
    p = {}
    p["word_emb"] = 0.02 * jax.random.normal(keys[0], (VOCAB, H), jnp.float32)
    p["pos_emb"] = 0.02 * jax.random.normal(keys[1], (S, H), jnp.float32)
    p["type_emb"] = 0.02 * jax.random.normal(keys[2], (2, H), jnp.float32)
    p["emb_ln_g"] = jnp.ones((1, H), jnp.float32)
    p["emb_ln_b"] = jnp.zeros((1, H), jnp.float32)
    p["wqkv"] = 0.02 * jax.random.normal(keys[3], (NLAYERS, H, 3 * H), jnp.float32)
    p["bqkv"] = jnp.zeros((NLAYERS, 1, 3 * H), jnp.float32)
    p["wo"] = 0.02 * jax.random.normal(keys[4], (NLAYERS, H, H), jnp.float32)
    p["bo"] = jnp.zeros((NLAYERS, 1, H), jnp.float32)
    p["ln1_g"] = jnp.ones((NLAYERS, 1, H), jnp.float32)
    p["ln1_b"] = jnp.zeros((NLAYERS, 1, H), jnp.float32)
    p["w1"] = 0.02 * jax.random.normal(keys[5], (NLAYERS, H, FF), jnp.float32)
    p["b1"] = jnp.zeros((NLAYERS, 1, FF), jnp.float32)
    p["w2"] = 0.02 * jax.random.normal(keys[6], (NLAYERS, FF, H), jnp.float32)
    p["b2"] = jnp.zeros((NLAYERS, 1, H), jnp.float32)
    p["ln2_g"] = jnp.ones((NLAYERS, 1, H), jnp.float32)
    p["ln2_b"] = jnp.zeros((NLAYERS, 1, H), jnp.float32)
    p["wcls"] = 0.02 * jax.random.normal(keys[7], (H, T), jnp.float32)
    p["bcls"] = jnp.zeros((1, T), jnp.float32)
    trans = jax.random.normal(keys[8], (T, T), jnp.float32)
    trans = trans.at[:, START].set(-10000.0)   # never transition INTO <START>
    trans = trans.at[STOP, :].set(-10000.0)    # never transition OUT OF <STOP>
    p["transitions"] = trans
    return p


# ---------------- BERT_CRF.forward ----------------
def bert_crf_forward(params, input_ids, token_type_ids, attention_mask, label, text_lengths):
    Bn, Sn = input_ids.shape
    # embeddings (gather is glue in plain JAX)
    x0 = (jnp.take(params["word_emb"], input_ids, axis=0)
          + params["pos_emb"][None, :Sn, :]
          + jnp.take(params["type_emb"], token_type_ids, axis=0))            # (B, S, H)
    add_mask = ((1.0 - attention_mask.astype(jnp.float32)) * -10000.0)[:, None, :]  # (B,1,S)

    # TODO(synk): nn.Dropout(0.2) is stochastic in train mode; modeled as eval-mode identity.
    # CRF part of the fused kernel drops the [CLS] position (reads row t+1, tag label[:, t+1]).
    return bert_crf_loss(params, x0, add_mask, label, text_lengths)


if __name__ == "__main__":
    key = jax.random.PRNGKey(0)
    pk, dk1, dk2 = jax.random.split(key, 3)
    params = init_params(pk)

    input_ids = jax.random.randint(dk1, (B, S), 1, VOCAB, dtype=jnp.int32)
    token_type_ids = jnp.zeros((B, S), jnp.int32)
    text_lengths = jnp.array([S - 1, S - 3], jnp.int32)   # tokens after [CLS], per sequence
    attention_mask = (jnp.arange(S)[None, :] < (text_lengths + 1)[:, None]).astype(jnp.int32)
    label = jax.random.randint(dk2, (B, S), 0, 3, dtype=jnp.int32)   # tags in {O, B, I}

    loss = jax.jit(bert_crf_forward)(params, input_ids, token_type_ids, attention_mask,
                                     label, text_lengths)
    loss = jax.block_until_ready(loss)
    assert bool(jnp.isfinite(loss)), "loss is not finite"
    print("KERNEL_OK")
</pallas_src>

<mosaic_0001>
module attributes {stable_mosaic.version = 11 : i64} {
  func.func @_bert_crf_kernel(%arg0: memref<2x8x32xf32, #tpu.memory_space<vmem>>, %arg1: memref<2x1x8xf32, #tpu.memory_space<vmem>>, %arg2: memref<1x32xf32, #tpu.memory_space<vmem>>, %arg3: memref<1x32xf32, #tpu.memory_space<vmem>>, %arg4: memref<2x32x96xf32, #tpu.memory_space<vmem>>, %arg5: memref<2x1x96xf32, #tpu.memory_space<vmem>>, %arg6: memref<2x32x32xf32, #tpu.memory_space<vmem>>, %arg7: memref<2x1x32xf32, #tpu.memory_space<vmem>>, %arg8: memref<2x1x32xf32, #tpu.memory_space<vmem>>, %arg9: memref<2x1x32xf32, #tpu.memory_space<vmem>>, %arg10: memref<2x32x64xf32, #tpu.memory_space<vmem>>, %arg11: memref<2x1x64xf32, #tpu.memory_space<vmem>>, %arg12: memref<2x64x32xf32, #tpu.memory_space<vmem>>, %arg13: memref<2x1x32xf32, #tpu.memory_space<vmem>>, %arg14: memref<2x1x32xf32, #tpu.memory_space<vmem>>, %arg15: memref<2x1x32xf32, #tpu.memory_space<vmem>>, %arg16: memref<32x5xf32, #tpu.memory_space<vmem>>, %arg17: memref<1x5xf32, #tpu.memory_space<vmem>>, %arg18: memref<5x5xf32, #tpu.memory_space<vmem>>, %arg19: memref<8x2xi32, #tpu.memory_space<vmem>>, %arg20: memref<25xf32, #tpu.memory_space<smem>>, %arg21: memref<2x8xi32, #tpu.memory_space<smem>>, %arg22: memref<2xi32, #tpu.memory_space<smem>>, %arg23: memref<1x128xf32, #tpu.memory_space<vmem>>) attributes {dimension_semantics = [], scalar_prefetch = 0 : i64, scratch_operands = 0 : i64, tpu.core_type = #tpu.core_type<tc>} {
    %c0 = arith.constant 0 : index
    %c0_0 = arith.constant 0 : index
    %c0_1 = arith.constant 0 : index
    %0 = vector.load %arg0[%c0, %c0_0, %c0_1] : memref<2x8x32xf32, #tpu.memory_space<vmem>>, vector<2x8x32xf32>
    %1 = vector.shape_cast %0 : vector<2x8x32xf32> to vector<16x32xf32>
    %c0_2 = arith.constant 0 : index
    %c0_3 = arith.constant 0 : index
    %2 = vector.load %arg2[%c0_2, %c0_3] : memref<1x32xf32, #tpu.memory_space<vmem>>, vector<1x32xf32>
    %c0_4 = arith.constant 0 : index
    %c0_5 = arith.constant 0 : index
    %3 = vector.load %arg3[%c0_4, %c0_5] : memref<1x32xf32, #tpu.memory_space<vmem>>, vector<1x32xf32>
    %cst = arith.constant dense<0.000000e+00> : vector<16xf32>
    %4 = vector.multi_reduction <add>, %1, %cst [1] : vector<16x32xf32> to vector<16xf32>
    %5 = vector.shape_cast %4 : vector<16xf32> to vector<16x1xf32>
    %cst_6 = arith.constant 3.200000e+01 : f32
    %6 = vector.broadcast %cst_6 : f32 to vector<16x1xf32>
    %7 = arith.divf %5, %6 : vector<16x1xf32>
    %8 = vector.broadcast %7 : vector<16x1xf32> to vector<16x32xf32>
    %9 = arith.subf %1, %8 : vector<16x32xf32>
    %10 = arith.mulf %9, %9 : vector<16x32xf32>
    %cst_7 = arith.constant dense<0.000000e+00> : vector<16xf32>
    %11 = vector.multi_reduction <add>, %10, %cst_7 [1] : vector<16x32xf32> to vector<16xf32>
    %12 = vector.shape_cast %11 : vector<16xf32> to vector<16x1xf32>
    %cst_8 = arith.constant 3.200000e+01 : f32
    %13 = vector.broadcast %cst_8 : f32 to vector<16x1xf32>
    %14 = arith.divf %12, %13 : vector<16x1xf32>
    %15 = vector.broadcast %7 : vector<16x1xf32> to vector<16x32xf32>
    %16 = arith.subf %1, %15 : vector<16x32xf32>
    %cst_9 = arith.constant 9.99999996E-13 : f32
    %17 = vector.broadcast %cst_9 : f32 to vector<16x1xf32>
    %18 = arith.addf %14, %17 : vector<16x1xf32>
    %19 = math.rsqrt %18 : vector<16x1xf32>
    %20 = vector.broadcast %19 : vector<16x1xf32> to vector<16x32xf32>
    %21 = arith.mulf %16, %20 : vector<16x32xf32>
    %22 = vector.broadcast %2 : vector<1x32xf32> to vector<16x32xf32>
    %23 = arith.mulf %21, %22 : vector<16x32xf32>
    %24 = vector.broadcast %3 : vector<1x32xf32> to vector<16x32xf32>
    %25 = arith.addf %23, %24 : vector<16x32xf32>
    %c0_10 = arith.constant 0 : index
    %c0_11 = arith.constant 0 : index
    %c0_12 = arith.constant 0 : index
    %26 = vector.load %arg4[%c0_10, %c0_11, %c0_12] : memref<2x32x96xf32, #tpu.memory_space<vmem>>, vector<1x32x96xf32>
    %27 = vector.shape_cast %26 : vector<1x32x96xf32> to vector<32x96xf32>
    %cst_13 = arith.constant dense<0.000000e+00> : vector<16x96xf32>
    %28 = tpu.matmul %25, %27, %cst_13 {dimension_numbers = #tpu.dot_dimension_numbers<[1], [0], [0], [1], [0, 0, 1, 1], [], []>} : vector<16x32xf32>, vector<32x96xf32>, vector<16x96xf32> -> vector<16x96xf32>
    %c0_14 = arith.constant 0 : index
    %c0_15 = arith.constant 0 : index
    %c0_16 = arith.constant 0 : index
    %29 = vector.load %arg5[%c0_14, %c0_15, %c0_16] : memref<2x1x96xf32, #tpu.memory_space<vmem>>, vector<1x1x96xf32>
    %30 = vector.shape_cast %29 : vector<1x1x96xf32> to vector<1x96xf32>
    %31 = vector.broadcast %30 : vector<1x96xf32> to vector<16x96xf32>
    %32 = arith.addf %28, %31 : vector<16x96xf32>
    %33 = vector.extract_strided_slice %32 {offsets = [0, 0], sizes = [8, 96], strides = [1, 1]} : vector<16x96xf32> to vector<8x96xf32>
    %c0_17 = arith.constant 0 : index
    %c0_18 = arith.constant 0 : index
    %c0_19 = arith.constant 0 : index
    %34 = vector.load %arg1[%c0_17, %c0_18, %c0_19] : memref<2x1x8xf32, #tpu.memory_space<vmem>>, vector<1x1x8xf32>
    %35 = vector.shape_cast %34 : vector<1x1x8xf32> to vector<1x8xf32>
    %36 = vector.extract_strided_slice %33 {offsets = [0, 0], sizes = [8, 8], strides = [1, 1]} : vector<8x96xf32> to vector<8x8xf32>
    %37 = vector.extract_strided_slice %33 {offsets = [0, 32], sizes = [8, 8], strides = [1, 1]} : vector<8x96xf32> to vector<8x8xf32>
    %38 = vector.extract_strided_slice %33 {offsets = [0, 64], sizes = [8, 8], strides = [1, 1]} : vector<8x96xf32> to vector<8x8xf32>
    %cst_20 = arith.constant dense<0.000000e+00> : vector<8x8xf32>
    %39 = tpu.matmul %36, %37, %cst_20 {dimension_numbers = #tpu.dot_dimension_numbers<[1], [1], [0], [0], [0, 0, 1, 0], [], []>} : vector<8x8xf32>, vector<8x8xf32>, vector<8x8xf32> -> vector<8x8xf32>
    %cst_21 = arith.constant 0.353553385 : f32
    %40 = vector.broadcast %cst_21 : f32 to vector<8x8xf32>
    %41 = arith.mulf %39, %40 : vector<8x8xf32>
    %42 = vector.broadcast %35 : vector<1x8xf32> to vector<8x8xf32>
    %43 = arith.addf %41, %42 : vector<8x8xf32>
    %cst_22 = arith.constant dense<0xFF800000> : vector<8xf32>
    %44 = vector.multi_reduction <maximumf>, %43, %cst_22 [1] : vector<8x8xf32> to vector<8xf32>
    %45 = vector.shape_cast %44 : vector<8xf32> to vector<8x1xf32>
    %46 = vector.broadcast %45 : vector<8x1xf32> to vector<8x8xf32>
    %47 = arith.subf %43, %46 : vector<8x8xf32>
    %48 = math.exp %47 : vector<8x8xf32>
    %cst_23 = arith.constant dense<0.000000e+00> : vector<8xf32>
    %49 = vector.multi_reduction <add>, %48, %cst_23 [1] : vector<8x8xf32> to vector<8xf32>
    %50 = vector.shape_cast %49 : vector<8xf32> to vector<8x1xf32>
    %51 = tpu.reciprocal %50 {approx = true} : vector<8x1xf32> -> vector<8x1xf32>
    %52 = vector.broadcast %51 : vector<8x1xf32> to vector<8x8xf32>
    %53 = arith.mulf %48, %52 : vector<8x8xf32>
    %cst_24 = arith.constant dense<0.000000e+00> : vector<8x8xf32>
    %54 = tpu.matmul %53, %38, %cst_24 {dimension_numbers = #tpu.dot_dimension_numbers<[1], [0], [0], [1], [0, 0, 1, 1], [], []>} : vector<8x8xf32>, vector<8x8xf32>, vector<8x8xf32> -> vector<8x8xf32>
    %55 = vector.extract_strided_slice %33 {offsets = [0, 8], sizes = [8, 8], strides = [1, 1]} : vector<8x96xf32> to vector<8x8xf32>
    %56 = vector.extract_strided_slice %33 {offsets = [0, 40], sizes = [8, 8], strides = [1, 1]} : vector<8x96xf32> to vector<8x8xf32>
    %57 = vector.extract_strided_slice %33 {offsets = [0, 72], sizes = [8, 8], strides = [1, 1]} : vector<8x96xf32> to vector<8x8xf32>
    %cst_25 = arith.constant dense<0.000000e+00> : vector<8x8xf32>
    %58 = tpu.matmul %55, %56, %cst_25 {dimension_numbers = #tpu.dot_dimension_numbers<[1], [1], [0], [0], [0, 0, 1, 0], [], []>} : vector<8x8xf32>, vector<8x8xf32>, vector<8x8xf32> -> vector<8x8xf32>
    %cst_26 = arith.constant 0.353553385 : f32
    %59 = vector.broadcast %cst_26 : f32 to vector<8x8xf32>
    %60 = arith.mulf %58, %59 : vector<8x8xf32>
    %61 = vector.broadcast %35 : vector<1x8xf32> to vector<8x8xf32>
    %62 = arith.addf %60, %61 : vector<8x8xf32>
    %cst_27 = arith.constant dense<0xFF800000> : vector<8xf32>
    %63 = vector.multi_reduction <maximumf>, %62, %cst_27 [1] : vector<8x8xf32> to vector<8xf32>
    %64 = vector.shape_cast %63 : vector<8xf32> to vector<8x1xf32>
    %65 = vector.broadcast %64 : vector<8x1xf32> to vector<8x8xf32>
    %66 = arith.subf %62, %65 : vector<8x8xf32>
    %67 = math.exp %66 : vector<8x8xf32>
    %cst_28 = arith.constant dense<0.000000e+00> : vector<8xf32>
    %68 = vector.multi_reduction <add>, %67, %cst_28 [1] : vector<8x8xf32> to vector<8xf32>
    %69 = vector.shape_cast %68 : vector<8xf32> to vector<8x1xf32>
    %70 = tpu.reciprocal %69 {approx = true} : vector<8x1xf32> -> vector<8x1xf32>
    %71 = vector.broadcast %70 : vector<8x1xf32> to vector<8x8xf32>
    %72 = arith.mulf %67, %71 : vector<8x8xf32>
    %cst_29 = arith.constant dense<0.000000e+00> : vector<8x8xf32>
    %73 = tpu.matmul %72, %57, %cst_29 {dimension_numbers = #tpu.dot_dimension_numbers<[1], [0], [0], [1], [0, 0, 1, 1], [], []>} : vector<8x8xf32>, vector<8x8xf32>, vector<8x8xf32> -> vector<8x8xf32>
    %74 = vector.extract_strided_slice %33 {offsets = [0, 16], sizes = [8, 8], strides = [1, 1]} : vector<8x96xf32> to vector<8x8xf32>
    %75 = vector.extract_strided_slice %33 {offsets = [0, 48], sizes = [8, 8], strides = [1, 1]} : vector<8x96xf32> to vector<8x8xf32>
    %76 = vector.extract_strided_slice %33 {offsets = [0, 80], sizes = [8, 8], strides = [1, 1]} : vector<8x96xf32> to vector<8x8xf32>
    %cst_30 = arith.constant dense<0.000000e+00> : vector<8x8xf32>
    %77 = tpu.matmul %74, %75, %cst_30 {dimension_numbers = #tpu.dot_dimension_numbers<[1], [1], [0], [0], [0, 0, 1, 0], [], []>} : vector<8x8xf32>, vector<8x8xf32>, vector<8x8xf32> -> vector<8x8xf32>
    %cst_31 = arith.constant 0.353553385 : f32
    %78 = vector.broadcast %cst_31 : f32 to vector<8x8xf32>
    %79 = arith.mulf %77, %78 : vector<8x8xf32>
    %80 = vector.broadcast %35 : vector<1x8xf32> to vector<8x8xf32>
    %81 = arith.addf %79, %80 : vector<8x8xf32>
    %cst_32 = arith.constant dense<0xFF800000> : vector<8xf32>
    %82 = vector.multi_reduction <maximumf>, %81, %cst_32 [1] : vector<8x8xf32> to vector<8xf32>
    %83 = vector.shape_cast %82 : vector<8xf32> to vector<8x1xf32>
    %84 = vector.broadcast %83 : vector<8x1xf32> to vector<8x8xf32>
    %85 = arith.subf %81, %84 : vector<8x8xf32>
    %86 = math.exp %85 : vector<8x8xf32>
    %cst_33 = arith.constant dense<0.000000e+00> : vector<8xf32>
    %87 = vector.multi_reduction <add>, %86, %cst_33 [1] : vector<8x8xf32> to vector<8xf32>
    %88 = vector.shape_cast %87 : vector<8xf32> to vector<8x1xf32>
    %89 = tpu.reciprocal %88 {approx = true} : vector<8x1xf32> -> vector<8x1xf32>
    %90 = vector.broadcast %89 : vector<8x1xf32> to vector<8x8xf32>
    %91 = arith.mulf %86, %90 : vector<8x8xf32>
    %cst_34 = arith.constant dense<0.000000e+00> : vector<8x8xf32>
    %92 = tpu.matmul %91, %76, %cst_34 {dimension_numbers = #tpu.dot_dimension_numbers<[1], [0], [0], [1], [0, 0, 1, 1], [], []>} : vector<8x8xf32>, vector<8x8xf32>, vector<8x8xf32> -> vector<8x8xf32>
    %93 = vector.extract_strided_slice %33 {offsets = [0, 24], sizes = [8, 8], strides = [1, 1]} : vector<8x96xf32> to vector<8x8xf32>
    %94 = vector.extract_strided_slice %33 {offsets = [0, 56], sizes = [8, 8], strides = [1, 1]} : vector<8x96xf32> to vector<8x8xf32>
    %95 = vector.extract_strided_slice %33 {offsets = [0, 88], sizes = [8, 8], strides = [1, 1]} : vector<8x96xf32> to vector<8x8xf32>
    %cst_35 = arith.constant dense<0.000000e+00> : vector<8x8xf32>
    %96 = tpu.matmul %93, %94, %cst_35 {dimension_numbers = #tpu.dot_dimension_numbers<[1], [1], [0], [0], [0, 0, 1, 0], [], []>} : vector<8x8xf32>, vector<8x8xf32>, vector<8x8xf32> -> vector<8x8xf32>
    %cst_36 = arith.constant 0.353553385 : f32
    %97 = vector.broadcast %cst_36 : f32 to vector<8x8xf32>
    %98 = arith.mulf %96, %97 : vector<8x8xf32>
    %99 = vector.broadcast %35 : vector<1x8xf32> to vector<8x8xf32>
    %100 = arith.addf %98, %99 : vector<8x8xf32>
    %cst_37 = arith.constant dense<0xFF800000> : vector<8xf32>
    %101 = vector.multi_reduction <maximumf>, %100, %cst_37 [1] : vector<8x8xf32> to vector<8xf32>
    %102 = vector.shape_cast %101 : vector<8xf32> to vector<8x1xf32>
    %103 = vector.broadcast %102 : vector<8x1xf32> to vector<8x8xf32>
    %104 = arith.subf %100, %103 : vector<8x8xf32>
    %105 = math.exp %104 : vector<8x8xf32>
    %cst_38 = arith.constant dense<0.000000e+00> : vector<8xf32>
    %106 = vector.multi_reduction <add>, %105, %cst_38 [1] : vector<8x8xf32> to vector<8xf32>
    %107 = vector.shape_cast %106 : vector<8xf32> to vector<8x1xf32>
    %108 = tpu.reciprocal %107 {approx = true} : vector<8x1xf32> -> vector<8x1xf32>
    %109 = vector.broadcast %108 : vector<8x1xf32> to vector<8x8xf32>
    %110 = arith.mulf %105, %109 : vector<8x8xf32>
    %cst_39 = arith.constant dense<0.000000e+00> : vector<8x8xf32>
    %111 = tpu.matmul %110, %95, %cst_39 {dimension_numbers = #tpu.dot_dimension_numbers<[1], [0], [0], [1], [0, 0, 1, 1], [], []>} : vector<8x8xf32>, vector<8x8xf32>, vector<8x8xf32> -> vector<8x8xf32>
    %112 = tpu.concatenate %54, %73, %92, %111 in 1 : vector<8x8xf32>, vector<8x8xf32>, vector<8x8xf32>, vector<8x8xf32> -> vector<8x32xf32>
    %113 = vector.extract_strided_slice %32 {offsets = [8, 0], sizes = [8, 96], strides = [1, 1]} : vector<16x96xf32> to vector<8x96xf32>
    %c1 = arith.constant 1 : index
    %c0_40 = arith.constant 0 : index
    %c0_41 = arith.constant 0 : index
    %114 = vector.load %arg1[%c1, %c0_40, %c0_41] : memref<2x1x8xf32, #tpu.memory_space<vmem>>, vector<1x1x8xf32>
    %115 = vector.shape_cast %114 : vector<1x1x8xf32> to vector<1x8xf32>
    %116 = vector.extract_strided_slice %113 {offsets = [0, 0], sizes = [8, 8], strides = [1, 1]} : vector<8x96xf32> to vector<8x8xf32>
    %117 = vector.extract_strided_slice %113 {offsets = [0, 32], sizes = [8, 8], strides = [1, 1]} : vector<8x96xf32> to vector<8x8xf32>
    %118 = vector.extract_strided_slice %113 {offsets = [0, 64], sizes = [8, 8], strides = [1, 1]} : vector<8x96xf32> to vector<8x8xf32>
    %cst_42 = arith.constant dense<0.000000e+00> : vector<8x8xf32>
    %119 = tpu.matmul %116, %117, %cst_42 {dimension_numbers = #tpu.dot_dimension_numbers<[1], [1], [0], [0], [0, 0, 1, 0], [], []>} : vector<8x8xf32>, vector<8x8xf32>, vector<8x8xf32> -> vector<8x8xf32>
    %cst_43 = arith.constant 0.353553385 : f32
    %120 = vector.broadcast %cst_43 : f32 to vector<8x8xf32>
    %121 = arith.mulf %119, %120 : vector<8x8xf32>
    %122 = vector.broadcast %115 : vector<1x8xf32> to vector<8x8xf32>
    %123 = arith.addf %121, %122 : vector<8x8xf32>
    %cst_44 = arith.constant dense<0xFF800000> : vector<8xf32>
    %124 = vector.multi_reduction <maximumf>, %123, %cst_44 [1] : vector<8x8xf32> to vector<8xf32>
    %125 = vector.shape_cast %124 : vector<8xf32> to vector<8x1xf32>
    %126 = vector.broadcast %125 : vector<8x1xf32> to vector<8x8xf32>
    %127 = arith.subf %123, %126 : vector<8x8xf32>
    %128 = math.exp %127 : vector<8x8xf32>
    %cst_45 = arith.constant dense<0.000000e+00> : vector<8xf32>
    %129 = vector.multi_reduction <add>, %128, %cst_45 [1] : vector<8x8xf32> to vector<8xf32>
    %130 = vector.shape_cast %129 : vector<8xf32> to vector<8x1xf32>
    %131 = tpu.reciprocal %130 {approx = true} : vector<8x1xf32> -> vector<8x1xf32>
    %132 = vector.broadcast %131 : vector<8x1xf32> to vector<8x8xf32>
    %133 = arith.mulf %128, %132 : vector<8x8xf32>
    %cst_46 = arith.constant dense<0.000000e+00> : vector<8x8xf32>
    %134 = tpu.matmul %133, %118, %cst_46 {dimension_numbers = #tpu.dot_dimension_numbers<[1], [0], [0], [1], [0, 0, 1, 1], [], []>} : vector<8x8xf32>, vector<8x8xf32>, vector<8x8xf32> -> vector<8x8xf32>
    %135 = vector.extract_strided_slice %113 {offsets = [0, 8], sizes = [8, 8], strides = [1, 1]} : vector<8x96xf32> to vector<8x8xf32>
    %136 = vector.extract_strided_slice %113 {offsets = [0, 40], sizes = [8, 8], strides = [1, 1]} : vector<8x96xf32> to vector<8x8xf32>
    %137 = vector.extract_strided_slice %113 {offsets = [0, 72], sizes = [8, 8], strides = [1, 1]} : vector<8x96xf32> to vector<8x8xf32>
    %cst_47 = arith.constant dense<0.000000e+00> : vector<8x8xf32>
    %138 = tpu.matmul %135, %136, %cst_47 {dimension_numbers = #tpu.dot_dimension_numbers<[1], [1], [0], [0], [0, 0, 1, 0], [], []>} : vector<8x8xf32>, vector<8x8xf32>, vector<8x8xf32> -> vector<8x8xf32>
    %cst_48 = arith.constant 0.353553385 : f32
    %139 = vector.broadcast %cst_48 : f32 to vector<8x8xf32>
    %140 = arith.mulf %138, %139 : vector<8x8xf32>
    %141 = vector.broadcast %115 : vector<1x8xf32> to vector<8x8xf32>
    %142 = arith.addf %140, %141 : vector<8x8xf32>
    %cst_49 = arith.constant dense<0xFF800000> : vector<8xf32>
    %143 = vector.multi_reduction <maximumf>, %142, %cst_49 [1] : vector<8x8xf32> to vector<8xf32>
    %144 = vector.shape_cast %143 : vector<8xf32> to vector<8x1xf32>
    %145 = vector.broadcast %144 : vector<8x1xf32> to vector<8x8xf32>
    %146 = arith.subf %142, %145 : vector<8x8xf32>
    %147 = math.exp %146 : vector<8x8xf32>
    %cst_50 = arith.constant dense<0.000000e+00> : vector<8xf32>
    %148 = vector.multi_reduction <add>, %147, %cst_50 [1] : vector<8x8xf32> to vector<8xf32>
    %149 = vector.shape_cast %148 : vector<8xf32> to vector<8x1xf32>
    %150 = tpu.reciprocal %149 {approx = true} : vector<8x1xf32> -> vector<8x1xf32>
    %151 = vector.broadcast %150 : vector<8x1xf32> to vector<8x8xf32>
    %152 = arith.mulf %147, %151 : vector<8x8xf32>
    %cst_51 = arith.constant dense<0.000000e+00> : vector<8x8xf32>
    %153 = tpu.matmul %152, %137, %cst_51 {dimension_numbers = #tpu.dot_dimension_numbers<[1], [0], [0], [1], [0, 0, 1, 1], [], []>} : vector<8x8xf32>, vector<8x8xf32>, vector<8x8xf32> -> vector<8x8xf32>
    %154 = vector.extract_strided_slice %113 {offsets = [0, 16], sizes = [8, 8], strides = [1, 1]} : vector<8x96xf32> to vector<8x8xf32>
    %155 = vector.extract_strided_slice %113 {offsets = [0, 48], sizes = [8, 8], strides = [1, 1]} : vector<8x96xf32> to vector<8x8xf32>
    %156 = vector.extract_strided_slice %113 {offsets = [0, 80], sizes = [8, 8], strides = [1, 1]} : vector<8x96xf32> to vector<8x8xf32>
    %cst_52 = arith.constant dense<0.000000e+00> : vector<8x8xf32>
    %157 = tpu.matmul %154, %155, %cst_52 {dimension_numbers = #tpu.dot_dimension_numbers<[1], [1], [0], [0], [0, 0, 1, 0], [], []>} : vector<8x8xf32>, vector<8x8xf32>, vector<8x8xf32> -> vector<8x8xf32>
    %cst_53 = arith.constant 0.353553385 : f32
    %158 = vector.broadcast %cst_53 : f32 to vector<8x8xf32>
    %159 = arith.mulf %157, %158 : vector<8x8xf32>
    %160 = vector.broadcast %115 : vector<1x8xf32> to vector<8x8xf32>
    %161 = arith.addf %159, %160 : vector<8x8xf32>
    %cst_54 = arith.constant dense<0xFF800000> : vector<8xf32>
    %162 = vector.multi_reduction <maximumf>, %161, %cst_54 [1] : vector<8x8xf32> to vector<8xf32>
    %163 = vector.shape_cast %162 : vector<8xf32> to vector<8x1xf32>
    %164 = vector.broadcast %163 : vector<8x1xf32> to vector<8x8xf32>
    %165 = arith.subf %161, %164 : vector<8x8xf32>
    %166 = math.exp %165 : vector<8x8xf32>
    %cst_55 = arith.constant dense<0.000000e+00> : vector<8xf32>
    %167 = vector.multi_reduction <add>, %166, %cst_55 [1] : vector<8x8xf32> to vector<8xf32>
    %168 = vector.shape_cast %167 : vector<8xf32> to vector<8x1xf32>
    %169 = tpu.reciprocal %168 {approx = true} : vector<8x1xf32> -> vector<8x1xf32>
    %170 = vector.broadcast %169 : vector<8x1xf32> to vector<8x8xf32>
    %171 = arith.mulf %166, %170 : vector<8x8xf32>
    %cst_56 = arith.constant dense<0.000000e+00> : vector<8x8xf32>
    %172 = tpu.matmul %171, %156, %cst_56 {dimension_numbers = #tpu.dot_dimension_numbers<[1], [0], [0], [1], [0, 0, 1, 1], [], []>} : vector<8x8xf32>, vector<8x8xf32>, vector<8x8xf32> -> vector<8x8xf32>
    %173 = vector.extract_strided_slice %113 {offsets = [0, 24], sizes = [8, 8], strides = [1, 1]} : vector<8x96xf32> to vector<8x8xf32>
    %174 = vector.extract_strided_slice %113 {offsets = [0, 56], sizes = [8, 8], strides = [1, 1]} : vector<8x96xf32> to vector<8x8xf32>
    %175 = vector.extract_strided_slice %113 {offsets = [0, 88], sizes = [8, 8], strides = [1, 1]} : vector<8x96xf32> to vector<8x8xf32>
    %cst_57 = arith.constant dense<0.000000e+00> : vector<8x8xf32>
    %176 = tpu.matmul %173, %174, %cst_57 {dimension_numbers = #tpu.dot_dimension_numbers<[1], [1], [0], [0], [0, 0, 1, 0], [], []>} : vector<8x8xf32>, vector<8x8xf32>, vector<8x8xf32> -> vector<8x8xf32>
    %cst_58 = arith.constant 0.353553385 : f32
    %177 = vector.broadcast %cst_58 : f32 to vector<8x8xf32>
    %178 = arith.mulf %176, %177 : vector<8x8xf32>
    %179 = vector.broadcast %115 : vector<1x8xf32> to vector<8x8xf32>
    %180 = arith.addf %178, %179 : vector<8x8xf32>
    %cst_59 = arith.constant dense<0xFF800000> : vector<8xf32>
    %181 = vector.multi_reduction <maximumf>, %180, %cst_59 [1] : vector<8x8xf32> to vector<8xf32>
    %182 = vector.shape_cast %181 : vector<8xf32> to vector<8x1xf32>
    %183 = vector.broadcast %182 : vector<8x1xf32> to vector<8x8xf32>
    %184 = arith.subf %180, %183 : vector<8x8xf32>
    %185 = math.exp %184 : vector<8x8xf32>
    %cst_60 = arith.constant dense<0.000000e+00> : vector<8xf32>
    %186 = vector.multi_reduction <add>, %185, %cst_60 [1] : vector<8x8xf32> to vector<8xf32>
    %187 = vector.shape_cast %186 : vector<8xf32> to vector<8x1xf32>
    %188 = tpu.reciprocal %187 {approx = true} : vector<8x1xf32> -> vector<8x1xf32>
    %189 = vector.broadcast %188 : vector<8x1xf32> to vector<8x8xf32>
    %190 = arith.mulf %185, %189 : vector<8x8xf32>
    %cst_61 = arith.constant dense<0.000000e+00> : vector<8x8xf32>
    %191 = tpu.matmul %190, %175, %cst_61 {dimension_numbers = #tpu.dot_dimension_numbers<[1], [0], [0], [1], [0, 0, 1, 1], [], []>} : vector<8x8xf32>, vector<8x8xf32>, vector<8x8xf32> -> vector<8x8xf32>
    %192 = tpu.concatenate %134, %153, %172, %191 in 1 : vector<8x8xf32>, vector<8x8xf32>, vector<8x8xf32>, vector<8x8xf32> -> vector<8x32xf32>
    %193 = tpu.concatenate %112, %192 in 0 : vector<8x32xf32>, vector<8x32xf32> -> vector<16x32xf32>
    %c0_62 = arith.constant 0 : index
    %c0_63 = arith.constant 0 : index
    %c0_64 = arith.constant 0 : index
    %194 = vector.load %arg6[%c0_62, %c0_63, %c0_64] : memref<2x32x32xf32, #tpu.memory_space<vmem>>, vector<1x32x32xf32>
    %195 = vector.shape_cast %194 : vector<1x32x32xf32> to vector<32x32xf32>
    %cst_65 = arith.constant dense<0.000000e+00> : vector<16x32xf32>
    %196 = tpu.matmul %193, %195, %cst_65 {dimension_numbers = #tpu.dot_dimension_numbers<[1], [0], [0], [1], [0, 0, 1, 1], [], []>} : vector<16x32xf32>, vector<32x32xf32>, vector<16x32xf32> -> vector<16x32xf32>
    %c0_66 = arith.constant 0 : index
    %c0_67 = arith.constant 0 : index
    %c0_68 = arith.constant 0 : index
    %197 = vector.load %arg7[%c0_66, %c0_67, %c0_68] : memref<2x1x32xf32, #tpu.memory_space<vmem>>, vector<1x1x32xf32>
    %198 = vector.shape_cast %197 : vector<1x1x32xf32> to vector<1x32xf32>
    %199 = vector.broadcast %198 : vector<1x32xf32> to vector<16x32xf32>
    %200 = arith.addf %196, %199 : vector<16x32xf32>
    %201 = arith.addf %25, %200 : vector<16x32xf32>
    %c0_69 = arith.constant 0 : index
    %c0_70 = arith.constant 0 : index
    %c0_71 = arith.constant 0 : index
    %202 = vector.load %arg8[%c0_69, %c0_70, %c0_71] : memref<2x1x32xf32, #tpu.memory_space<vmem>>, vector<1x1x32xf32>
    %203 = vector.shape_cast %202 : vector<1x1x32xf32> to vector<1x32xf32>
    %c0_72 = arith.constant 0 : index
    %c0_73 = arith.constant 0 : index
    %c0_74 = arith.constant 0 : index
    %204 = vector.load %arg9[%c0_72, %c0_73, %c0_74] : memref<2x1x32xf32, #tpu.memory_space<vmem>>, vector<1x1x32xf32>
    %205 = vector.shape_cast %204 : vector<1x1x32xf32> to vector<1x32xf32>
    %cst_75 = arith.constant dense<0.000000e+00> : vector<16xf32>
    %206 = vector.multi_reduction <add>, %201, %cst_75 [1] : vector<16x32xf32> to vector<16xf32>
    %207 = vector.shape_cast %206 : vector<16xf32> to vector<16x1xf32>
    %cst_76 = arith.constant 3.200000e+01 : f32
    %208 = vector.broadcast %cst_76 : f32 to vector<16x1xf32>
    %209 = arith.divf %207, %208 : vector<16x1xf32>
    %210 = vector.broadcast %209 : vector<16x1xf32> to vector<16x32xf32>
    %211 = arith.subf %201, %210 : vector<16x32xf32>
    %212 = arith.mulf %211, %211 : vector<16x32xf32>
    %cst_77 = arith.constant dense<0.000000e+00> : vector<16xf32>
    %213 = vector.multi_reduction <add>, %212, %cst_77 [1] : vector<16x32xf32> to vector<16xf32>
    %214 = vector.shape_cast %213 : vector<16xf32> to vector<16x1xf32>
    %cst_78 = arith.constant 3.200000e+01 : f32
    %215 = vector.broadcast %cst_78 : f32 to vector<16x1xf32>
    %216 = arith.divf %214, %215 : vector<16x1xf32>
    %217 = vector.broadcast %209 : vector<16x1xf32> to vector<16x32xf32>
    %218 = arith.subf %201, %217 : vector<16x32xf32>
    %cst_79 = arith.constant 9.99999996E-13 : f32
    %219 = vector.broadcast %cst_79 : f32 to vector<16x1xf32>
    %220 = arith.addf %216, %219 : vector<16x1xf32>
    %221 = math.rsqrt %220 : vector<16x1xf32>
    %222 = vector.broadcast %221 : vector<16x1xf32> to vector<16x32xf32>
    %223 = arith.mulf %218, %222 : vector<16x32xf32>
    %224 = vector.broadcast %203 : vector<1x32xf32> to vector<16x32xf32>
    %225 = arith.mulf %223, %224 : vector<16x32xf32>
    %226 = vector.broadcast %205 : vector<1x32xf32> to vector<16x32xf32>
    %227 = arith.addf %225, %226 : vector<16x32xf32>
    %c0_80 = arith.constant 0 : index
    %c0_81 = arith.constant 0 : index
    %c0_82 = arith.constant 0 : index
    %228 = vector.load %arg10[%c0_80, %c0_81, %c0_82] : memref<2x32x64xf32, #tpu.memory_space<vmem>>, vector<1x32x64xf32>
    %229 = vector.shape_cast %228 : vector<1x32x64xf32> to vector<32x64xf32>
    %cst_83 = arith.constant dense<0.000000e+00> : vector<16x64xf32>
    %230 = tpu.matmul %227, %229, %cst_83 {dimension_numbers = #tpu.dot_dimension_numbers<[1], [0], [0], [1], [0, 0, 1, 1], [], []>} : vector<16x32xf32>, vector<32x64xf32>, vector<16x64xf32> -> vector<16x64xf32>
    %c0_84 = arith.constant 0 : index
    %c0_85 = arith.constant 0 : index
    %c0_86 = arith.constant 0 : index
    %231 = vector.load %arg11[%c0_84, %c0_85, %c0_86] : memref<2x1x64xf32, #tpu.memory_space<vmem>>, vector<1x1x64xf32>
    %232 = vector.shape_cast %231 : vector<1x1x64xf32> to vector<1x64xf32>
    %233 = vector.broadcast %232 : vector<1x64xf32> to vector<16x64xf32>
    %234 = arith.addf %230, %233 : vector<16x64xf32>
    %235 = arith.mulf %234, %234 : vector<16x64xf32>
    %236 = arith.mulf %234, %235 : vector<16x64xf32>
    %cst_87 = arith.constant 4.471500e-02 : f32
    %237 = vector.broadcast %cst_87 : f32 to vector<16x64xf32>
    %238 = arith.mulf %237, %236 : vector<16x64xf32>
    %239 = arith.addf %234, %238 : vector<16x64xf32>
    %cst_88 = arith.constant 0.797884583 : f32
    %240 = vector.broadcast %cst_88 : f32 to vector<16x64xf32>
    %241 = arith.mulf %240, %239 : vector<16x64xf32>
    %242 = math.tanh %241 : vector<16x64xf32>
    %cst_89 = arith.constant 1.000000e+00 : f32
    %243 = vector.broadcast %cst_89 : f32 to vector<16x64xf32>
    %244 = arith.addf %243, %242 : vector<16x64xf32>
    %cst_90 = arith.constant 5.000000e-01 : f32
    %245 = vector.broadcast %cst_90 : f32 to vector<16x64xf32>
    %246 = arith.mulf %245, %244 : vector<16x64xf32>
    %247 = arith.mulf %234, %246 : vector<16x64xf32>
    %c0_91 = arith.constant 0 : index
    %c0_92 = arith.constant 0 : index
    %c0_93 = arith.constant 0 : index
    %248 = vector.load %arg12[%c0_91, %c0_92, %c0_93] : memref<2x64x32xf32, #tpu.memory_space<vmem>>, vector<1x64x32xf32>
    %249 = vector.shape_cast %248 : vector<1x64x32xf32> to vector<64x32xf32>
    %cst_94 = arith.constant dense<0.000000e+00> : vector<16x32xf32>
    %250 = tpu.matmul %247, %249, %cst_94 {dimension_numbers = #tpu.dot_dimension_numbers<[1], [0], [0], [1], [0, 0, 1, 1], [], []>} : vector<16x64xf32>, vector<64x32xf32>, vector<16x32xf32> -> vector<16x32xf32>
    %c0_95 = arith.constant 0 : index
    %c0_96 = arith.constant 0 : index
    %c0_97 = arith.constant 0 : index
    %251 = vector.load %arg13[%c0_95, %c0_96, %c0_97] : memref<2x1x32xf32, #tpu.memory_space<vmem>>, vector<1x1x32xf32>
    %252 = vector.shape_cast %251 : vector<1x1x32xf32> to vector<1x32xf32>
    %253 = vector.broadcast %252 : vector<1x32xf32> to vector<16x32xf32>
    %254 = arith.addf %250, %253 : vector<16x32xf32>
    %255 = arith.addf %227, %254 : vector<16x32xf32>
    %c0_98 = arith.constant 0 : index
    %c0_99 = arith.constant 0 : index
    %c0_100 = arith.constant 0 : index
    %256 = vector.load %arg14[%c0_98, %c0_99, %c0_100] : memref<2x1x32xf32, #tpu.memory_space<vmem>>, vector<1x1x32xf32>
    %257 = vector.shape_cast %256 : vector<1x1x32xf32> to vector<1x32xf32>
    %c0_101 = arith.constant 0 : index
    %c0_102 = arith.constant 0 : index
    %c0_103 = arith.constant 0 : index
    %258 = vector.load %arg15[%c0_101, %c0_102, %c0_103] : memref<2x1x32xf32, #tpu.memory_space<vmem>>, vector<1x1x32xf32>
    %259 = vector.shape_cast %258 : vector<1x1x32xf32> to vector<1x32xf32>
    %cst_104 = arith.constant dense<0.000000e+00> : vector<16xf32>
    %260 = vector.multi_reduction <add>, %255, %cst_104 [1] : vector<16x32xf32> to vector<16xf32>
    %261 = vector.shape_cast %260 : vector<16xf32> to vector<16x1xf32>
    %cst_105 = arith.constant 3.200000e+01 : f32
    %262 = vector.broadcast %cst_105 : f32 to vector<16x1xf32>
    %263 = arith.divf %261, %262 : vector<16x1xf32>
    %264 = vector.broadcast %263 : vector<16x1xf32> to vector<16x32xf32>
    %265 = arith.subf %255, %264 : vector<16x32xf32>
    %266 = arith.mulf %265, %265 : vector<16x32xf32>
    %cst_106 = arith.constant dense<0.000000e+00> : vector<16xf32>
    %267 = vector.multi_reduction <add>, %266, %cst_106 [1] : vector<16x32xf32> to vector<16xf32>
    %268 = vector.shape_cast %267 : vector<16xf32> to vector<16x1xf32>
    %cst_107 = arith.constant 3.200000e+01 : f32
    %269 = vector.broadcast %cst_107 : f32 to vector<16x1xf32>
    %270 = arith.divf %268, %269 : vector<16x1xf32>
    %271 = vector.broadcast %263 : vector<16x1xf32> to vector<16x32xf32>
    %272 = arith.subf %255, %271 : vector<16x32xf32>
    %cst_108 = arith.constant 9.99999996E-13 : f32
    %273 = vector.broadcast %cst_108 : f32 to vector<16x1xf32>
    %274 = arith.addf %270, %273 : vector<16x1xf32>
    %275 = math.rsqrt %274 : vector<16x1xf32>
    %276 = vector.broadcast %275 : vector<16x1xf32> to vector<16x32xf32>
    %277 = arith.mulf %272, %276 : vector<16x32xf32>
    %278 = vector.broadcast %257 : vector<1x32xf32> to vector<16x32xf32>
    %279 = arith.mulf %277, %278 : vector<16x32xf32>
    %280 = vector.broadcast %259 : vector<1x32xf32> to vector<16x32xf32>
    %281 = arith.addf %279, %280 : vector<16x32xf32>
    %c1_109 = arith.constant 1 : index
    %c0_110 = arith.constant 0 : index
    %c0_111 = arith.constant 0 : index
    %282 = vector.load %arg4[%c1_109, %c0_110, %c0_111] : memref<2x32x96xf32, #tpu.memory_space<vmem>>, vector<1x32x96xf32>
    %283 = vector.shape_cast %282 : vector<1x32x96xf32> to vector<32x96xf32>
    %cst_112 = arith.constant dense<0.000000e+00> : vector<16x96xf32>
    %284 = tpu.matmul %281, %283, %cst_112 {dimension_numbers = #tpu.dot_dimension_numbers<[1], [0], [0], [1], [0, 0, 1, 1], [], []>} : vector<16x32xf32>, vector<32x96xf32>, vector<16x96xf32> -> vector<16x96xf32>
    %c1_113 = arith.constant 1 : index
    %c0_114 = arith.constant 0 : index
    %c0_115 = arith.constant 0 : index
    %285 = vector.load %arg5[%c1_113, %c0_114, %c0_115] : memref<2x1x96xf32, #tpu.memory_space<vmem>>, vector<1x1x96xf32>
    %286 = vector.shape_cast %285 : vector<1x1x96xf32> to vector<1x96xf32>
    %287 = vector.broadcast %286 : vector<1x96xf32> to vector<16x96xf32>
    %288 = arith.addf %284, %287 : vector<16x96xf32>
    %289 = vector.extract_strided_slice %288 {offsets = [0, 0], sizes = [8, 96], strides = [1, 1]} : vector<16x96xf32> to vector<8x96xf32>
    %c0_116 = arith.constant 0 : index
    %c0_117 = arith.constant 0 : index
    %c0_118 = arith.constant 0 : index
    %290 = vector.load %arg1[%c0_116, %c0_117, %c0_118] : memref<2x1x8xf32, #tpu.memory_space<vmem>>, vector<1x1x8xf32>
    %291 = vector.shape_cast %290 : vector<1x1x8xf32> to vector<1x8xf32>
    %292 = vector.extract_strided_slice %289 {offsets = [0, 0], sizes = [8, 8], strides = [1, 1]} : vector<8x96xf32> to vector<8x8xf32>
    %293 = vector.extract_strided_slice %289 {offsets = [0, 32], sizes = [8, 8], strides = [1, 1]} : vector<8x96xf32> to vector<8x8xf32>
    %294 = vector.extract_strided_slice %289 {offsets = [0, 64], sizes = [8, 8], strides = [1, 1]} : vector<8x96xf32> to vector<8x8xf32>
    %cst_119 = arith.constant dense<0.000000e+00> : vector<8x8xf32>
    %295 = tpu.matmul %292, %293, %cst_119 {dimension_numbers = #tpu.dot_dimension_numbers<[1], [1], [0], [0], [0, 0, 1, 0], [], []>} : vector<8x8xf32>, vector<8x8xf32>, vector<8x8xf32> -> vector<8x8xf32>
    %cst_120 = arith.constant 0.353553385 : f32
    %296 = vector.broadcast %cst_120 : f32 to vector<8x8xf32>
    %297 = arith.mulf %295, %296 : vector<8x8xf32>
    %298 = vector.broadcast %291 : vector<1x8xf32> to vector<8x8xf32>
    %299 = arith.addf %297, %298 : vector<8x8xf32>
    %cst_121 = arith.constant dense<0xFF800000> : vector<8xf32>
    %300 = vector.multi_reduction <maximumf>, %299, %cst_121 [1] : vector<8x8xf32> to vector<8xf32>
    %301 = vector.shape_cast %300 : vector<8xf32> to vector<8x1xf32>
    %302 = vector.broadcast %301 : vector<8x1xf32> to vector<8x8xf32>
    %303 = arith.subf %299, %302 : vector<8x8xf32>
    %304 = math.exp %303 : vector<8x8xf32>
    %cst_122 = arith.constant dense<0.000000e+00> : vector<8xf32>
    %305 = vector.multi_reduction <add>, %304, %cst_122 [1] : vector<8x8xf32> to vector<8xf32>
    %306 = vector.shape_cast %305 : vector<8xf32> to vector<8x1xf32>
    %307 = tpu.reciprocal %306 {approx = true} : vector<8x1xf32> -> vector<8x1xf32>
    %308 = vector.broadcast %307 : vector<8x1xf32> to vector<8x8xf32>
    %309 = arith.mulf %304, %308 : vector<8x8xf32>
    %cst_123 = arith.constant dense<0.000000e+00> : vector<8x8xf32>
    %310 = tpu.matmul %309, %294, %cst_123 {dimension_numbers = #tpu.dot_dimension_numbers<[1], [0], [0], [1], [0, 0, 1, 1], [], []>} : vector<8x8xf32>, vector<8x8xf32>, vector<8x8xf32> -> vector<8x8xf32>
    %311 = vector.extract_strided_slice %289 {offsets = [0, 8], sizes = [8, 8], strides = [1, 1]} : vector<8x96xf32> to vector<8x8xf32>
    %312 = vector.extract_strided_slice %289 {offsets = [0, 40], sizes = [8, 8], strides = [1, 1]} : vector<8x96xf32> to vector<8x8xf32>
    %313 = vector.extract_strided_slice %289 {offsets = [0, 72], sizes = [8, 8], strides = [1, 1]} : vector<8x96xf32> to vector<8x8xf32>
    %cst_124 = arith.constant dense<0.000000e+00> : vector<8x8xf32>
    %314 = tpu.matmul %311, %312, %cst_124 {dimension_numbers = #tpu.dot_dimension_numbers<[1], [1], [0], [0], [0, 0, 1, 0], [], []>} : vector<8x8xf32>, vector<8x8xf32>, vector<8x8xf32> -> vector<8x8xf32>
    %cst_125 = arith.constant 0.353553385 : f32
    %315 = vector.broadcast %cst_125 : f32 to vector<8x8xf32>
    %316 = arith.mulf %314, %315 : vector<8x8xf32>
    %317 = vector.broadcast %291 : vector<1x8xf32> to vector<8x8xf32>
    %318 = arith.addf %316, %317 : vector<8x8xf32>
    %cst_126 = arith.constant dense<0xFF800000> : vector<8xf32>
    %319 = vector.multi_reduction <maximumf>, %318, %cst_126 [1] : vector<8x8xf32> to vector<8xf32>
    %320 = vector.shape_cast %319 : vector<8xf32> to vector<8x1xf32>
    %321 = vector.broadcast %320 : vector<8x1xf32> to vector<8x8xf32>
    %322 = arith.subf %318, %321 : vector<8x8xf32>
    %323 = math.exp %322 : vector<8x8xf32>
    %cst_127 = arith.constant dense<0.000000e+00> : vector<8xf32>
    %324 = vector.multi_reduction <add>, %323, %cst_127 [1] : vector<8x8xf32> to vector<8xf32>
    %325 = vector.shape_cast %324 : vector<8xf32> to vector<8x1xf32>
    %326 = tpu.reciprocal %325 {approx = true} : vector<8x1xf32> -> vector<8x1xf32>
    %327 = vector.broadcast %326 : vector<8x1xf32> to vector<8x8xf32>
    %328 = arith.mulf %323, %327 : vector<8x8xf32>
    %cst_128 = arith.constant dense<0.000000e+00> : vector<8x8xf32>
    %329 = tpu.matmul %328, %313, %cst_128 {dimension_numbers = #tpu.dot_dimension_numbers<[1], [0], [0], [1], [0, 0, 1, 1], [], []>} : vector<8x8xf32>, vector<8x8xf32>, vector<8x8xf32> -> vector<8x8xf32>
    %330 = vector.extract_strided_slice %289 {offsets = [0, 16], sizes = [8, 8], strides = [1, 1]} : vector<8x96xf32> to vector<8x8xf32>
    %331 = vector.extract_strided_slice %289 {offsets = [0, 48], sizes = [8, 8], strides = [1, 1]} : vector<8x96xf32> to vector<8x8xf32>
    %332 = vector.extract_strided_slice %289 {offsets = [0, 80], sizes = [8, 8], strides = [1, 1]} : vector<8x96xf32> to vector<8x8xf32>
    %cst_129 = arith.constant dense<0.000000e+00> : vector<8x8xf32>
    %333 = tpu.matmul %330, %331, %cst_129 {dimension_numbers = #tpu.dot_dimension_numbers<[1], [1], [0], [0], [0, 0, 1, 0], [], []>} : vector<8x8xf32>, vector<8x8xf32>, vector<8x8xf32> -> vector<8x8xf32>
    %cst_130 = arith.constant 0.353553385 : f32
    %334 = vector.broadcast %cst_130 : f32 to vector<8x8xf32>
    %335 = arith.mulf %333, %334 : vector<8x8xf32>
    %336 = vector.broadcast %291 : vector<1x8xf32> to vector<8x8xf32>
    %337 = arith.addf %335, %336 : vector<8x8xf32>
    %cst_131 = arith.constant dense<0xFF800000> : vector<8xf32>
    %338 = vector.multi_reduction <maximumf>, %337, %cst_131 [1] : vector<8x8xf32> to vector<8xf32>
    %339 = vector.shape_cast %338 : vector<8xf32> to vector<8x1xf32>
    %340 = vector.broadcast %339 : vector<8x1xf32> to vector<8x8xf32>
    %341 = arith.subf %337, %340 : vector<8x8xf32>
    %342 = math.exp %341 : vector<8x8xf32>
    %cst_132 = arith.constant dense<0.000000e+00> : vector<8xf32>
    %343 = vector.multi_reduction <add>, %342, %cst_132 [1] : vector<8x8xf32> to vector<8xf32>
    %344 = vector.shape_cast %343 : vector<8xf32> to vector<8x1xf32>
    %345 = tpu.reciprocal %344 {approx = true} : vector<8x1xf32> -> vector<8x1xf32>
    %346 = vector.broadcast %345 : vector<8x1xf32> to vector<8x8xf32>
    %347 = arith.mulf %342, %346 : vector<8x8xf32>
    %cst_133 = arith.constant dense<0.000000e+00> : vector<8x8xf32>
    %348 = tpu.matmul %347, %332, %cst_133 {dimension_numbers = #tpu.dot_dimension_numbers<[1], [0], [0], [1], [0, 0, 1, 1], [], []>} : vector<8x8xf32>, vector<8x8xf32>, vector<8x8xf32> -> vector<8x8xf32>
    %349 = vector.extract_strided_slice %289 {offsets = [0, 24], sizes = [8, 8], strides = [1, 1]} : vector<8x96xf32> to vector<8x8xf32>
    %350 = vector.extract_strided_slice %289 {offsets = [0, 56], sizes = [8, 8], strides = [1, 1]} : vector<8x96xf32> to vector<8x8xf32>
    %351 = vector.extract_strided_slice %289 {offsets = [0, 88], sizes = [8, 8], strides = [1, 1]} : vector<8x96xf32> to vector<8x8xf32>
    %cst_134 = arith.constant dense<0.000000e+00> : vector<8x8xf32>
    %352 = tpu.matmul %349, %350, %cst_134 {dimension_numbers = #tpu.dot_dimension_numbers<[1], [1], [0], [0], [0, 0, 1, 0], [], []>} : vector<8x8xf32>, vector<8x8xf32>, vector<8x8xf32> -> vector<8x8xf32>
    %cst_135 = arith.constant 0.353553385 : f32
    %353 = vector.broadcast %cst_135 : f32 to vector<8x8xf32>
    %354 = arith.mulf %352, %353 : vector<8x8xf32>
    %355 = vector.broadcast %291 : vector<1x8xf32> to vector<8x8xf32>
    %356 = arith.addf %354, %355 : vector<8x8xf32>
    %cst_136 = arith.constant dense<0xFF800000> : vector<8xf32>
    %357 = vector.multi_reduction <maximumf>, %356, %cst_136 [1] : vector<8x8xf32> to vector<8xf32>
    %358 = vector.shape_cast %357 : vector<8xf32> to vector<8x1xf32>
    %359 = vector.broadcast %358 : vector<8x1xf32> to vector<8x8xf32>
    %360 = arith.subf %356, %359 : vector<8x8xf32>
    %361 = math.exp %360 : vector<8x8xf32>
    %cst_137 = arith.constant dense<0.000000e+00> : vector<8xf32>
    %362 = vector.multi_reduction <add>, %361, %cst_137 [1] : vector<8x8xf32> to vector<8xf32>
    %363 = vector.shape_cast %362 : vector<8xf32> to vector<8x1xf32>
    %364 = tpu.reciprocal %363 {approx = true} : vector<8x1xf32> -> vector<8x1xf32>
    %365 = vector.broadcast %364 : vector<8x1xf32> to vector<8x8xf32>
    %366 = arith.mulf %361, %365 : vector<8x8xf32>
    %cst_138 = arith.constant dense<0.000000e+00> : vector<8x8xf32>
    %367 = tpu.matmul %366, %351, %cst_138 {dimension_numbers = #tpu.dot_dimension_numbers<[1], [0], [0], [1], [0, 0, 1, 1], [], []>} : vector<8x8xf32>, vector<8x8xf32>, vector<8x8xf32> -> vector<8x8xf32>
    %368 = tpu.concatenate %310, %329, %348, %367 in 1 : vector<8x8xf32>, vector<8x8xf32>, vector<8x8xf32>, vector<8x8xf32> -> vector<8x32xf32>
    %369 = vector.extract_strided_slice %288 {offsets = [8, 0], sizes = [8, 96], strides = [1, 1]} : vector<16x96xf32> to vector<8x96xf32>
    %c1_139 = arith.constant 1 : index
    %c0_140 = arith.constant 0 : index
    %c0_141 = arith.constant 0 : index
    %370 = vector.load %arg1[%c1_139, %c0_140, %c0_141] : memref<2x1x8xf32, #tpu.memory_space<vmem>>, vector<1x1x8xf32>
    %371 = vector.shape_cast %370 : vector<1x1x8xf32> to vector<1x8xf32>
    %372 = vector.extract_strided_slice %369 {offsets = [0, 0], sizes = [8, 8], strides = [1, 1]} : vector<8x96xf32> to vector<8x8xf32>
    %373 = vector.extract_strided_slice %369 {offsets = [0, 32], sizes = [8, 8], strides = [1, 1]} : vector<8x96xf32> to vector<8x8xf32>
    %374 = vector.extract_strided_slice %369 {offsets = [0, 64], sizes = [8, 8], strides = [1, 1]} : vector<8x96xf32> to vector<8x8xf32>
    %cst_142 = arith.constant dense<0.000000e+00> : vector<8x8xf32>
    %375 = tpu.matmul %372, %373, %cst_142 {dimension_numbers = #tpu.dot_dimension_numbers<[1], [1], [0], [0], [0, 0, 1, 0], [], []>} : vector<8x8xf32>, vector<8x8xf32>, vector<8x8xf32> -> vector<8x8xf32>
    %cst_143 = arith.constant 0.353553385 : f32
    %376 = vector.broadcast %cst_143 : f32 to vector<8x8xf32>
    %377 = arith.mulf %375, %376 : vector<8x8xf32>
    %378 = vector.broadcast %371 : vector<1x8xf32> to vector<8x8xf32>
    %379 = arith.addf %377, %378 : vector<8x8xf32>
    %cst_144 = arith.constant dense<0xFF800000> : vector<8xf32>
    %380 = vector.multi_reduction <maximumf>, %379, %cst_144 [1] : vector<8x8xf32> to vector<8xf32>
    %381 = vector.shape_cast %380 : vector<8xf32> to vector<8x1xf32>
    %382 = vector.broadcast %381 : vector<8x1xf32> to vector<8x8xf32>
    %383 = arith.subf %379, %382 : vector<8x8xf32>
    %384 = math.exp %383 : vector<8x8xf32>
    %cst_145 = arith.constant dense<0.000000e+00> : vector<8xf32>
    %385 = vector.multi_reduction <add>, %384, %cst_145 [1] : vector<8x8xf32> to vector<8xf32>
    %386 = vector.shape_cast %385 : vector<8xf32> to vector<8x1xf32>
    %387 = tpu.reciprocal %386 {approx = true} : vector<8x1xf32> -> vector<8x1xf32>
    %388 = vector.broadcast %387 : vector<8x1xf32> to vector<8x8xf32>
    %389 = arith.mulf %384, %388 : vector<8x8xf32>
    %cst_146 = arith.constant dense<0.000000e+00> : vector<8x8xf32>
    %390 = tpu.matmul %389, %374, %cst_146 {dimension_numbers = #tpu.dot_dimension_numbers<[1], [0], [0], [1], [0, 0, 1, 1], [], []>} : vector<8x8xf32>, vector<8x8xf32>, vector<8x8xf32> -> vector<8x8xf32>
    %391 = vector.extract_strided_slice %369 {offsets = [0, 8], sizes = [8, 8], strides = [1, 1]} : vector<8x96xf32> to vector<8x8xf32>
    %392 = vector.extract_strided_slice %369 {offsets = [0, 40], sizes = [8, 8], strides = [1, 1]} : vector<8x96xf32> to vector<8x8xf32>
    %393 = vector.extract_strided_slice %369 {offsets = [0, 72], sizes = [8, 8], strides = [1, 1]} : vector<8x96xf32> to vector<8x8xf32>
    %cst_147 = arith.constant dense<0.000000e+00> : vector<8x8xf32>
    %394 = tpu.matmul %391, %392, %cst_147 {dimension_numbers = #tpu.dot_dimension_numbers<[1], [1], [0], [0], [0, 0, 1, 0], [], []>} : vector<8x8xf32>, vector<8x8xf32>, vector<8x8xf32> -> vector<8x8xf32>
    %cst_148 = arith.constant 0.353553385 : f32
    %395 = vector.broadcast %cst_148 : f32 to vector<8x8xf32>
    %396 = arith.mulf %394, %395 : vector<8x8xf32>
    %397 = vector.broadcast %371 : vector<1x8xf32> to vector<8x8xf32>
    %398 = arith.addf %396, %397 : vector<8x8xf32>
    %cst_149 = arith.constant dense<0xFF800000> : vector<8xf32>
    %399 = vector.multi_reduction <maximumf>, %398, %cst_149 [1] : vector<8x8xf32> to vector<8xf32>
    %400 = vector.shape_cast %399 : vector<8xf32> to vector<8x1xf32>
    %401 = vector.broadcast %400 : vector<8x1xf32> to vector<8x8xf32>
    %402 = arith.subf %398, %401 : vector<8x8xf32>
    %403 = math.exp %402 : vector<8x8xf32>
    %cst_150 = arith.constant dense<0.000000e+00> : vector<8xf32>
    %404 = vector.multi_reduction <add>, %403, %cst_150 [1] : vector<8x8xf32> to vector<8xf32>
    %405 = vector.shape_cast %404 : vector<8xf32> to vector<8x1xf32>
    %406 = tpu.reciprocal %405 {approx = true} : vector<8x1xf32> -> vector<8x1xf32>
    %407 = vector.broadcast %406 : vector<8x1xf32> to vector<8x8xf32>
    %408 = arith.mulf %403, %407 : vector<8x8xf32>
    %cst_151 = arith.constant dense<0.000000e+00> : vector<8x8xf32>
    %409 = tpu.matmul %408, %393, %cst_151 {dimension_numbers = #tpu.dot_dimension_numbers<[1], [0], [0], [1], [0, 0, 1, 1], [], []>} : vector<8x8xf32>, vector<8x8xf32>, vector<8x8xf32> -> vector<8x8xf32>
    %410 = vector.extract_strided_slice %369 {offsets = [0, 16], sizes = [8, 8], strides = [1, 1]} : vector<8x96xf32> to vector<8x8xf32>
    %411 = vector.extract_strided_slice %369 {offsets = [0, 48], sizes = [8, 8], strides = [1, 1]} : vector<8x96xf32> to vector<8x8xf32>
    %412 = vector.extract_strided_slice %369 {offsets = [0, 80], sizes = [8, 8], strides = [1, 1]} : vector<8x96xf32> to vector<8x8xf32>
    %cst_152 = arith.constant dense<0.000000e+00> : vector<8x8xf32>
    %413 = tpu.matmul %410, %411, %cst_152 {dimension_numbers = #tpu.dot_dimension_numbers<[1], [1], [0], [0], [0, 0, 1, 0], [], []>} : vector<8x8xf32>, vector<8x8xf32>, vector<8x8xf32> -> vector<8x8xf32>
    %cst_153 = arith.constant 0.353553385 : f32
    %414 = vector.broadcast %cst_153 : f32 to vector<8x8xf32>
    %415 = arith.mulf %413, %414 : vector<8x8xf32>
    %416 = vector.broadcast %371 : vector<1x8xf32> to vector<8x8xf32>
    %417 = arith.addf %415, %416 : vector<8x8xf32>
    %cst_154 = arith.constant dense<0xFF800000> : vector<8xf32>
    %418 = vector.multi_reduction <maximumf>, %417, %cst_154 [1] : vector<8x8xf32> to vector<8xf32>
    %419 = vector.shape_cast %418 : vector<8xf32> to vector<8x1xf32>
    %420 = vector.broadcast %419 : vector<8x1xf32> to vector<8x8xf32>
    %421 = arith.subf %417, %420 : vector<8x8xf32>
    %422 = math.exp %421 : vector<8x8xf32>
    %cst_155 = arith.constant dense<0.000000e+00> : vector<8xf32>
    %423 = vector.multi_reduction <add>, %422, %cst_155 [1] : vector<8x8xf32> to vector<8xf32>
    %424 = vector.shape_cast %423 : vector<8xf32> to vector<8x1xf32>
    %425 = tpu.reciprocal %424 {approx = true} : vector<8x1xf32> -> vector<8x1xf32>
    %426 = vector.broadcast %425 : vector<8x1xf32> to vector<8x8xf32>
    %427 = arith.mulf %422, %426 : vector<8x8xf32>
    %cst_156 = arith.constant dense<0.000000e+00> : vector<8x8xf32>
    %428 = tpu.matmul %427, %412, %cst_156 {dimension_numbers = #tpu.dot_dimension_numbers<[1], [0], [0], [1], [0, 0, 1, 1], [], []>} : vector<8x8xf32>, vector<8x8xf32>, vector<8x8xf32> -> vector<8x8xf32>
    %429 = vector.extract_strided_slice %369 {offsets = [0, 24], sizes = [8, 8], strides = [1, 1]} : vector<8x96xf32> to vector<8x8xf32>
    %430 = vector.extract_strided_slice %369 {offsets = [0, 56], sizes = [8, 8], strides = [1, 1]} : vector<8x96xf32> to vector<8x8xf32>
    %431 = vector.extract_strided_slice %369 {offsets = [0, 88], sizes = [8, 8], strides = [1, 1]} : vector<8x96xf32> to vector<8x8xf32>
    %cst_157 = arith.constant dense<0.000000e+00> : vector<8x8xf32>
    %432 = tpu.matmul %429, %430, %cst_157 {dimension_numbers = #tpu.dot_dimension_numbers<[1], [1], [0], [0], [0, 0, 1, 0], [], []>} : vector<8x8xf32>, vector<8x8xf32>, vector<8x8xf32> -> vector<8x8xf32>
    %cst_158 = arith.constant 0.353553385 : f32
    %433 = vector.broadcast %cst_158 : f32 to vector<8x8xf32>
    %434 = arith.mulf %432, %433 : vector<8x8xf32>
    %435 = vector.broadcast %371 : vector<1x8xf32> to vector<8x8xf32>
    %436 = arith.addf %434, %435 : vector<8x8xf32>
    %cst_159 = arith.constant dense<0xFF800000> : vector<8xf32>
    %437 = vector.multi_reduction <maximumf>, %436, %cst_159 [1] : vector<8x8xf32> to vector<8xf32>
    %438 = vector.shape_cast %437 : vector<8xf32> to vector<8x1xf32>
    %439 = vector.broadcast %438 : vector<8x1xf32> to vector<8x8xf32>
    %440 = arith.subf %436, %439 : vector<8x8xf32>
    %441 = math.exp %440 : vector<8x8xf32>
    %cst_160 = arith.constant dense<0.000000e+00> : vector<8xf32>
    %442 = vector.multi_reduction <add>, %441, %cst_160 [1] : vector<8x8xf32> to vector<8xf32>
    %443 = vector.shape_cast %442 : vector<8xf32> to vector<8x1xf32>
    %444 = tpu.reciprocal %443 {approx = true} : vector<8x1xf32> -> vector<8x1xf32>
    %445 = vector.broadcast %444 : vector<8x1xf32> to vector<8x8xf32>
    %446 = arith.mulf %441, %445 : vector<8x8xf32>
    %cst_161 = arith.constant dense<0.000000e+00> : vector<8x8xf32>
    %447 = tpu.matmul %446, %431, %cst_161 {dimension_numbers = #tpu.dot_dimension_numbers<[1], [0], [0], [1], [0, 0, 1, 1], [], []>} : vector<8x8xf32>, vector<8x8xf32>, vector<8x8xf32> -> vector<8x8xf32>
    %448 = tpu.concatenate %390, %409, %428, %447 in 1 : vector<8x8xf32>, vector<8x8xf32>, vector<8x8xf32>, vector<8x8xf32> -> vector<8x32xf32>
    %449 = tpu.concatenate %368, %448 in 0 : vector<8x32xf32>, vector<8x32xf32> -> vector<16x32xf32>
    %c1_162 = arith.constant 1 : index
    %c0_163 = arith.constant 0 : index
    %c0_164 = arith.constant 0 : index
    %450 = vector.load %arg6[%c1_162, %c0_163, %c0_164] : memref<2x32x32xf32, #tpu.memory_space<vmem>>, vector<1x32x32xf32>
    %451 = vector.shape_cast %450 : vector<1x32x32xf32> to vector<32x32xf32>
    %cst_165 = arith.constant dense<0.000000e+00> : vector<16x32xf32>
    %452 = tpu.matmul %449, %451, %cst_165 {dimension_numbers = #tpu.dot_dimension_numbers<[1], [0], [0], [1], [0, 0, 1, 1], [], []>} : vector<16x32xf32>, vector<32x32xf32>, vector<16x32xf32> -> vector<16x32xf32>
    %c1_166 = arith.constant 1 : index
    %c0_167 = arith.constant 0 : index
    %c0_168 = arith.constant 0 : index
    %453 = vector.load %arg7[%c1_166, %c0_167, %c0_168] : memref<2x1x32xf32, #tpu.memory_space<vmem>>, vector<1x1x32xf32>
    %454 = vector.shape_cast %453 : vector<1x1x32xf32> to vector<1x32xf32>
    %455 = vector.broadcast %454 : vector<1x32xf32> to vector<16x32xf32>
    %456 = arith.addf %452, %455 : vector<16x32xf32>
    %457 = arith.addf %281, %456 : vector<16x32xf32>
    %c1_169 = arith.constant 1 : index
    %c0_170 = arith.constant 0 : index
    %c0_171 = arith.constant 0 : index
    %458 = vector.load %arg8[%c1_169, %c0_170, %c0_171] : memref<2x1x32xf32, #tpu.memory_space<vmem>>, vector<1x1x32xf32>
    %459 = vector.shape_cast %458 : vector<1x1x32xf32> to vector<1x32xf32>
    %c1_172 = arith.constant 1 : index
    %c0_173 = arith.constant 0 : index
    %c0_174 = arith.constant 0 : index
    %460 = vector.load %arg9[%c1_172, %c0_173, %c0_174] : memref<2x1x32xf32, #tpu.memory_space<vmem>>, vector<1x1x32xf32>
    %461 = vector.shape_cast %460 : vector<1x1x32xf32> to vector<1x32xf32>
    %cst_175 = arith.constant dense<0.000000e+00> : vector<16xf32>
    %462 = vector.multi_reduction <add>, %457, %cst_175 [1] : vector<16x32xf32> to vector<16xf32>
    %463 = vector.shape_cast %462 : vector<16xf32> to vector<16x1xf32>
    %cst_176 = arith.constant 3.200000e+01 : f32
    %464 = vector.broadcast %cst_176 : f32 to vector<16x1xf32>
    %465 = arith.divf %463, %464 : vector<16x1xf32>
    %466 = vector.broadcast %465 : vector<16x1xf32> to vector<16x32xf32>
    %467 = arith.subf %457, %466 : vector<16x32xf32>
    %468 = arith.mulf %467, %467 : vector<16x32xf32>
    %cst_177 = arith.constant dense<0.000000e+00> : vector<16xf32>
    %469 = vector.multi_reduction <add>, %468, %cst_177 [1] : vector<16x32xf32> to vector<16xf32>
    %470 = vector.shape_cast %469 : vector<16xf32> to vector<16x1xf32>
    %cst_178 = arith.constant 3.200000e+01 : f32
    %471 = vector.broadcast %cst_178 : f32 to vector<16x1xf32>
    %472 = arith.divf %470, %471 : vector<16x1xf32>
    %473 = vector.broadcast %465 : vector<16x1xf32> to vector<16x32xf32>
    %474 = arith.subf %457, %473 : vector<16x32xf32>
    %cst_179 = arith.constant 9.99999996E-13 : f32
    %475 = vector.broadcast %cst_179 : f32 to vector<16x1xf32>
    %476 = arith.addf %472, %475 : vector<16x1xf32>
    %477 = math.rsqrt %476 : vector<16x1xf32>
    %478 = vector.broadcast %477 : vector<16x1xf32> to vector<16x32xf32>
    %479 = arith.mulf %474, %478 : vector<16x32xf32>
    %480 = vector.broadcast %459 : vector<1x32xf32> to vector<16x32xf32>
    %481 = arith.mulf %479, %480 : vector<16x32xf32>
    %482 = vector.broadcast %461 : vector<1x32xf32> to vector<16x32xf32>
    %483 = arith.addf %481, %482 : vector<16x32xf32>
    %c1_180 = arith.constant 1 : index
    %c0_181 = arith.constant 0 : index
    %c0_182 = arith.constant 0 : index
    %484 = vector.load %arg10[%c1_180, %c0_181, %c0_182] : memref<2x32x64xf32, #tpu.memory_space<vmem>>, vector<1x32x64xf32>
    %485 = vector.shape_cast %484 : vector<1x32x64xf32> to vector<32x64xf32>
    %cst_183 = arith.constant dense<0.000000e+00> : vector<16x64xf32>
    %486 = tpu.matmul %483, %485, %cst_183 {dimension_numbers = #tpu.dot_dimension_numbers<[1], [0], [0], [1], [0, 0, 1, 1], [], []>} : vector<16x32xf32>, vector<32x64xf32>, vector<16x64xf32> -> vector<16x64xf32>
    %c1_184 = arith.constant 1 : index
    %c0_185 = arith.constant 0 : index
    %c0_186 = arith.constant 0 : index
    %487 = vector.load %arg11[%c1_184, %c0_185, %c0_186] : memref<2x1x64xf32, #tpu.memory_space<vmem>>, vector<1x1x64xf32>
    %488 = vector.shape_cast %487 : vector<1x1x64xf32> to vector<1x64xf32>
    %489 = vector.broadcast %488 : vector<1x64xf32> to vector<16x64xf32>
    %490 = arith.addf %486, %489 : vector<16x64xf32>
    %491 = arith.mulf %490, %490 : vector<16x64xf32>
    %492 = arith.mulf %490, %491 : vector<16x64xf32>
    %cst_187 = arith.constant 4.471500e-02 : f32
    %493 = vector.broadcast %cst_187 : f32 to vector<16x64xf32>
    %494 = arith.mulf %493, %492 : vector<16x64xf32>
    %495 = arith.addf %490, %494 : vector<16x64xf32>
    %cst_188 = arith.constant 0.797884583 : f32
    %496 = vector.broadcast %cst_188 : f32 to vector<16x64xf32>
    %497 = arith.mulf %496, %495 : vector<16x64xf32>
    %498 = math.tanh %497 : vector<16x64xf32>
    %cst_189 = arith.constant 1.000000e+00 : f32
    %499 = vector.broadcast %cst_189 : f32 to vector<16x64xf32>
    %500 = arith.addf %499, %498 : vector<16x64xf32>
    %cst_190 = arith.constant 5.000000e-01 : f32
    %501 = vector.broadcast %cst_190 : f32 to vector<16x64xf32>
    %502 = arith.mulf %501, %500 : vector<16x64xf32>
    %503 = arith.mulf %490, %502 : vector<16x64xf32>
    %c1_191 = arith.constant 1 : index
    %c0_192 = arith.constant 0 : index
    %c0_193 = arith.constant 0 : index
    %504 = vector.load %arg12[%c1_191, %c0_192, %c0_193] : memref<2x64x32xf32, #tpu.memory_space<vmem>>, vector<1x64x32xf32>
    %505 = vector.shape_cast %504 : vector<1x64x32xf32> to vector<64x32xf32>
    %cst_194 = arith.constant dense<0.000000e+00> : vector<16x32xf32>
    %506 = tpu.matmul %503, %505, %cst_194 {dimension_numbers = #tpu.dot_dimension_numbers<[1], [0], [0], [1], [0, 0, 1, 1], [], []>} : vector<16x64xf32>, vector<64x32xf32>, vector<16x32xf32> -> vector<16x32xf32>
    %c1_195 = arith.constant 1 : index
    %c0_196 = arith.constant 0 : index
    %c0_197 = arith.constant 0 : index
    %507 = vector.load %arg13[%c1_195, %c0_196, %c0_197] : memref<2x1x32xf32, #tpu.memory_space<vmem>>, vector<1x1x32xf32>
    %508 = vector.shape_cast %507 : vector<1x1x32xf32> to vector<1x32xf32>
    %509 = vector.broadcast %508 : vector<1x32xf32> to vector<16x32xf32>
    %510 = arith.addf %506, %509 : vector<16x32xf32>
    %511 = arith.addf %483, %510 : vector<16x32xf32>
    %c1_198 = arith.constant 1 : index
    %c0_199 = arith.constant 0 : index
    %c0_200 = arith.constant 0 : index
    %512 = vector.load %arg14[%c1_198, %c0_199, %c0_200] : memref<2x1x32xf32, #tpu.memory_space<vmem>>, vector<1x1x32xf32>
    %513 = vector.shape_cast %512 : vector<1x1x32xf32> to vector<1x32xf32>
    %c1_201 = arith.constant 1 : index
    %c0_202 = arith.constant 0 : index
    %c0_203 = arith.constant 0 : index
    %514 = vector.load %arg15[%c1_201, %c0_202, %c0_203] : memref<2x1x32xf32, #tpu.memory_space<vmem>>, vector<1x1x32xf32>
    %515 = vector.shape_cast %514 : vector<1x1x32xf32> to vector<1x32xf32>
    %cst_204 = arith.constant dense<0.000000e+00> : vector<16xf32>
    %516 = vector.multi_reduction <add>, %511, %cst_204 [1] : vector<16x32xf32> to vector<16xf32>
    %517 = vector.shape_cast %516 : vector<16xf32> to vector<16x1xf32>
    %cst_205 = arith.constant 3.200000e+01 : f32
    %518 = vector.broadcast %cst_205 : f32 to vector<16x1xf32>
    %519 = arith.divf %517, %518 : vector<16x1xf32>
    %520 = vector.broadcast %519 : vector<16x1xf32> to vector<16x32xf32>
    %521 = arith.subf %511, %520 : vector<16x32xf32>
    %522 = arith.mulf %521, %521 : vector<16x32xf32>
    %cst_206 = arith.constant dense<0.000000e+00> : vector<16xf32>
    %523 = vector.multi_reduction <add>, %522, %cst_206 [1] : vector<16x32xf32> to vector<16xf32>
    %524 = vector.shape_cast %523 : vector<16xf32> to vector<16x1xf32>
    %cst_207 = arith.constant 3.200000e+01 : f32
    %525 = vector.broadcast %cst_207 : f32 to vector<16x1xf32>
    %526 = arith.divf %524, %525 : vector<16x1xf32>
    %527 = vector.broadcast %519 : vector<16x1xf32> to vector<16x32xf32>
    %528 = arith.subf %511, %527 : vector<16x32xf32>
    %cst_208 = arith.constant 9.99999996E-13 : f32
    %529 = vector.broadcast %cst_208 : f32 to vector<16x1xf32>
    %530 = arith.addf %526, %529 : vector<16x1xf32>
    %531 = math.rsqrt %530 : vector<16x1xf32>
    %532 = vector.broadcast %531 : vector<16x1xf32> to vector<16x32xf32>
    %533 = arith.mulf %528, %532 : vector<16x32xf32>
    %534 = vector.broadcast %513 : vector<1x32xf32> to vector<16x32xf32>
    %535 = arith.mulf %533, %534 : vector<16x32xf32>
    %536 = vector.broadcast %515 : vector<1x32xf32> to vector<16x32xf32>
    %537 = arith.addf %535, %536 : vector<16x32xf32>
    %c0_209 = arith.constant 0 : index
    %c0_210 = arith.constant 0 : index
    %538 = vector.load %arg16[%c0_209, %c0_210] : memref<32x5xf32, #tpu.memory_space<vmem>>, vector<32x5xf32>
    %cst_211 = arith.constant dense<0.000000e+00> : vector<16x5xf32>
    %539 = tpu.matmul %537, %538, %cst_211 {dimension_numbers = #tpu.dot_dimension_numbers<[1], [0], [0], [1], [0, 0, 1, 1], [], []>} : vector<16x32xf32>, vector<32x5xf32>, vector<16x5xf32> -> vector<16x5xf32>
    %c0_212 = arith.constant 0 : index
    %c0_213 = arith.constant 0 : index
    %540 = vector.load %arg17[%c0_212, %c0_213] : memref<1x5xf32, #tpu.memory_space<vmem>>, vector<1x5xf32>
    %541 = vector.broadcast %540 : vector<1x5xf32> to vector<16x5xf32>
    %542 = arith.addf %539, %541 : vector<16x5xf32>
    %c0_214 = arith.constant 0 : index
    %c0_215 = arith.constant 0 : index
    %543 = vector.load %arg18[%c0_214, %c0_215] : memref<5x5xf32, #tpu.memory_space<vmem>>, vector<5x5xf32>
    %544 = tpu.iota {dimensions = array<i32: 1>} : vector<8x5xi32>
    %545 = tpu.iota {dimensions = array<i32: 0>} : vector<8x5xi32>
    %c0_216 = arith.constant 0 : index
    %546 = memref.load %arg22[%c0_216] : memref<2xi32, #tpu.memory_space<smem>>
    %547 = vector.extract_strided_slice %542 {offsets = [0, 0], sizes = [8, 5], strides = [1, 1]} : vector<16x5xf32> to vector<8x5xf32>
    %c0_217 = arith.constant 0 : index
    %c0_218 = arith.constant 0 : index
    %548 = vector.load %arg19[%c0_217, %c0_218] : memref<8x2xi32, #tpu.memory_space<vmem>>, vector<8x1xi32>
    %549 = vector.broadcast %548 : vector<8x1xi32> to vector<8x5xi32>
    %550 = arith.cmpi eq, %549, %544 : vector<8x5xi32>
    %c1_i32 = arith.constant 1 : i32
    %551 = vector.broadcast %c1_i32 : i32 to vector<8x5xi32>
    %552 = arith.cmpi sge, %545, %551 : vector<8x5xi32>
    %553 = vector.broadcast %546 : i32 to vector<8x5xi32>
    %554 = arith.cmpi sle, %545, %553 : vector<8x5xi32>
    %555 = arith.andi %552, %554 : vector<8x5xi1>
    %556 = arith.andi %550, %555 : vector<8x5xi1>
    %cst_219 = arith.constant 0.000000e+00 : f32
    %557 = vector.broadcast %cst_219 : f32 to vector<8x5xf32>
    %558 = arith.select %556, %547, %557 : vector<8x5xi1>, vector<8x5xf32>
    %559 = vector.shape_cast %558 : vector<8x5xf32> to vector<1x8x5xf32>
    %cst_220 = arith.constant dense<0.000000e+00> : vector<1xf32>
    %560 = vector.multi_reduction <add>, %559, %cst_220 [1, 2] : vector<1x8x5xf32> to vector<1xf32>
    %561 = vector.shape_cast %560 : vector<1xf32> to vector<1x1x1xf32>
    %562 = vector.extract %561[0, 0, 0] : f32 from vector<1x1x1xf32>
    %c0_221 = arith.constant 0 : index
    %c1_222 = arith.constant 1 : index
    %563 = memref.load %arg21[%c0_221, %c1_222] : memref<2x8xi32, #tpu.memory_space<smem>>
    %c15_i32 = arith.constant 15 : i32
    %564 = arith.addi %c15_i32, %563 : i32
    %565 = arith.index_cast %564 : i32 to index
    %566 = memref.load %arg20[%565] : memref<25xf32, #tpu.memory_space<smem>>
    %567 = arith.addf %562, %566 : f32
    %c0_223 = arith.constant 0 : index
    %c2 = arith.constant 2 : index
    %568 = memref.load %arg21[%c0_223, %c2] : memref<2x8xi32, #tpu.memory_space<smem>>
    %c5_i32 = arith.constant 5 : i32
    %569 = arith.muli %563, %c5_i32 : i32
    %570 = arith.addi %569, %568 : i32
    %571 = arith.index_cast %570 : i32 to index
    %572 = memref.load %arg20[%571] : memref<25xf32, #tpu.memory_space<smem>>
    %c2_i32 = arith.constant 2 : i32
    %573 = arith.cmpi sge, %546, %c2_i32 : i32
    %cst_224 = arith.constant 0.000000e+00 : f32
    %574 = arith.select %573, %572, %cst_224 : f32
    %575 = arith.addf %567, %574 : f32
    %576 = arith.select %573, %568, %563 : i32
    %c0_225 = arith.constant 0 : index
    %c3 = arith.constant 3 : index
    %577 = memref.load %arg21[%c0_225, %c3] : memref<2x8xi32, #tpu.memory_space<smem>>
    %c5_i32_226 = arith.constant 5 : i32
    %578 = arith.muli %576, %c5_i32_226 : i32
    %579 = arith.addi %578, %577 : i32
    %580 = arith.index_cast %579 : i32 to index
    %581 = memref.load %arg20[%580] : memref<25xf32, #tpu.memory_space<smem>>
    %c3_i32 = arith.constant 3 : i32
    %582 = arith.cmpi sge, %546, %c3_i32 : i32
    %cst_227 = arith.constant 0.000000e+00 : f32
    %583 = arith.select %582, %581, %cst_227 : f32
    %584 = arith.addf %575, %583 : f32
    %585 = arith.select %582, %577, %576 : i32
    %c0_228 = arith.constant 0 : index
    %c4 = arith.constant 4 : index
    %586 = memref.load %arg21[%c0_228, %c4] : memref<2x8xi32, #tpu.memory_space<smem>>
    %c5_i32_229 = arith.constant 5 : i32
    %587 = arith.muli %585, %c5_i32_229 : i32
    %588 = arith.addi %587, %586 : i32
    %589 = arith.index_cast %588 : i32 to index
    %590 = memref.load %arg20[%589] : memref<25xf32, #tpu.memory_space<smem>>
    %c4_i32 = arith.constant 4 : i32
    %591 = arith.cmpi sge, %546, %c4_i32 : i32
    %cst_230 = arith.constant 0.000000e+00 : f32
    %592 = arith.select %591, %590, %cst_230 : f32
    %593 = arith.addf %584, %592 : f32
    %594 = arith.select %591, %586, %585 : i32
    %c0_231 = arith.constant 0 : index
    %c5 = arith.constant 5 : index
    %595 = memref.load %arg21[%c0_231, %c5] : memref<2x8xi32, #tpu.memory_space<smem>>
    %c5_i32_232 = arith.constant 5 : i32
    %596 = arith.muli %594, %c5_i32_232 : i32
    %597 = arith.addi %596, %595 : i32
    %598 = arith.index_cast %597 : i32 to index
    %599 = memref.load %arg20[%598] : memref<25xf32, #tpu.memory_space<smem>>
    %c5_i32_233 = arith.constant 5 : i32
    %600 = arith.cmpi sge, %546, %c5_i32_233 : i32
    %cst_234 = arith.constant 0.000000e+00 : f32
    %601 = arith.select %600, %599, %cst_234 : f32
    %602 = arith.addf %593, %601 : f32
    %603 = arith.select %600, %595, %594 : i32
    %c0_235 = arith.constant 0 : index
    %c6 = arith.constant 6 : index
    %604 = memref.load %arg21[%c0_235, %c6] : memref<2x8xi32, #tpu.memory_space<smem>>
    %c5_i32_236 = arith.constant 5 : i32
    %605 = arith.muli %603, %c5_i32_236 : i32
    %606 = arith.addi %605, %604 : i32
    %607 = arith.index_cast %606 : i32 to index
    %608 = memref.load %arg20[%607] : memref<25xf32, #tpu.memory_space<smem>>
    %c6_i32 = arith.constant 6 : i32
    %609 = arith.cmpi sge, %546, %c6_i32 : i32
    %cst_237 = arith.constant 0.000000e+00 : f32
    %610 = arith.select %609, %608, %cst_237 : f32
    %611 = arith.addf %602, %610 : f32
    %612 = arith.select %609, %604, %603 : i32
    %c0_238 = arith.constant 0 : index
    %c7 = arith.constant 7 : index
    %613 = memref.load %arg21[%c0_238, %c7] : memref<2x8xi32, #tpu.memory_space<smem>>
    %c5_i32_239 = arith.constant 5 : i32
    %614 = arith.muli %612, %c5_i32_239 : i32
    %615 = arith.addi %614, %613 : i32
    %616 = arith.index_cast %615 : i32 to index
    %617 = memref.load %arg20[%616] : memref<25xf32, #tpu.memory_space<smem>>
    %c7_i32 = arith.constant 7 : i32
    %618 = arith.cmpi sge, %546, %c7_i32 : i32
    %cst_240 = arith.constant 0.000000e+00 : f32
    %619 = arith.select %618, %617, %cst_240 : f32
    %620 = arith.addf %611, %619 : f32
    %621 = arith.select %618, %613, %612 : i32
    %c5_i32_241 = arith.constant 5 : i32
    %622 = arith.muli %621, %c5_i32_241 : i32
    %c4_i32_242 = arith.constant 4 : i32
    %623 = arith.addi %622, %c4_i32_242 : i32
    %624 = arith.index_cast %623 : i32 to index
    %625 = memref.load %arg20[%624] : memref<25xf32, #tpu.memory_space<smem>>
    %626 = arith.addf %620, %625 : f32
    %627 = vector.extract_strided_slice %547 {offsets = [1, 0], sizes = [1, 5], strides = [1, 1]} : vector<8x5xf32> to vector<1x5xf32>
    %628 = vector.extract_strided_slice %543 {offsets = [3, 0], sizes = [1, 5], strides = [1, 1]} : vector<5x5xf32> to vector<1x5xf32>
    %629 = arith.addf %627, %628 : vector<1x5xf32>
    %630 = vector.extract_strided_slice %547 {offsets = [2, 0], sizes = [1, 5], strides = [1, 1]} : vector<8x5xf32> to vector<1x5xf32>
    %631 = tpu.transpose %629, [1, 0] : vector<1x5xf32> -> vector<5x1xf32>
    %632 = vector.broadcast %631 : vector<5x1xf32> to vector<5x5xf32>
    %633 = vector.broadcast %630 : vector<1x5xf32> to vector<5x5xf32>
    %634 = arith.addf %632, %633 : vector<5x5xf32>
    %635 = arith.addf %634, %543 : vector<5x5xf32>
    %cst_243 = arith.constant dense<0xFF800000> : vector<5xf32>
    %636 = vector.multi_reduction <maximumf>, %635, %cst_243 [0] : vector<5x5xf32> to vector<5xf32>
    %637 = vector.shape_cast %636 : vector<5xf32> to vector<1x5xf32>
    %638 = vector.broadcast %637 : vector<1x5xf32> to vector<5x5xf32>
    %639 = arith.subf %635, %638 : vector<5x5xf32>
    %640 = math.exp %639 : vector<5x5xf32>
    %cst_244 = arith.constant dense<0.000000e+00> : vector<5xf32>
    %641 = vector.multi_reduction <add>, %640, %cst_244 [0] : vector<5x5xf32> to vector<5xf32>
    %642 = vector.shape_cast %641 : vector<5xf32> to vector<1x5xf32>
    %643 = math.log %642 : vector<1x5xf32>
    %644 = arith.addf %637, %643 : vector<1x5xf32>
    %c2_i32_245 = arith.constant 2 : i32
    %645 = arith.cmpi sge, %546, %c2_i32_245 : i32
    %646 = arith.select %645, %644, %629 : vector<1x5xf32>
    %647 = vector.extract_strided_slice %547 {offsets = [3, 0], sizes = [1, 5], strides = [1, 1]} : vector<8x5xf32> to vector<1x5xf32>
    %648 = tpu.transpose %646, [1, 0] : vector<1x5xf32> -> vector<5x1xf32>
    %649 = vector.broadcast %648 : vector<5x1xf32> to vector<5x5xf32>
    %650 = vector.broadcast %647 : vector<1x5xf32> to vector<5x5xf32>
    %651 = arith.addf %649, %650 : vector<5x5xf32>
    %652 = arith.addf %651, %543 : vector<5x5xf32>
    %cst_246 = arith.constant dense<0xFF800000> : vector<5xf32>
    %653 = vector.multi_reduction <maximumf>, %652, %cst_246 [0] : vector<5x5xf32> to vector<5xf32>
    %654 = vector.shape_cast %653 : vector<5xf32> to vector<1x5xf32>
    %655 = vector.broadcast %654 : vector<1x5xf32> to vector<5x5xf32>
    %656 = arith.subf %652, %655 : vector<5x5xf32>
    %657 = math.exp %656 : vector<5x5xf32>
    %cst_247 = arith.constant dense<0.000000e+00> : vector<5xf32>
    %658 = vector.multi_reduction <add>, %657, %cst_247 [0] : vector<5x5xf32> to vector<5xf32>
    %659 = vector.shape_cast %658 : vector<5xf32> to vector<1x5xf32>
    %660 = math.log %659 : vector<1x5xf32>
    %661 = arith.addf %654, %660 : vector<1x5xf32>
    %c3_i32_248 = arith.constant 3 : i32
    %662 = arith.cmpi sge, %546, %c3_i32_248 : i32
    %663 = arith.select %662, %661, %646 : vector<1x5xf32>
    %664 = vector.extract_strided_slice %547 {offsets = [4, 0], sizes = [1, 5], strides = [1, 1]} : vector<8x5xf32> to vector<1x5xf32>
    %665 = tpu.transpose %663, [1, 0] : vector<1x5xf32> -> vector<5x1xf32>
    %666 = vector.broadcast %665 : vector<5x1xf32> to vector<5x5xf32>
    %667 = vector.broadcast %664 : vector<1x5xf32> to vector<5x5xf32>
    %668 = arith.addf %666, %667 : vector<5x5xf32>
    %669 = arith.addf %668, %543 : vector<5x5xf32>
    %cst_249 = arith.constant dense<0xFF800000> : vector<5xf32>
    %670 = vector.multi_reduction <maximumf>, %669, %cst_249 [0] : vector<5x5xf32> to vector<5xf32>
    %671 = vector.shape_cast %670 : vector<5xf32> to vector<1x5xf32>
    %672 = vector.broadcast %671 : vector<1x5xf32> to vector<5x5xf32>
    %673 = arith.subf %669, %672 : vector<5x5xf32>
    %674 = math.exp %673 : vector<5x5xf32>
    %cst_250 = arith.constant dense<0.000000e+00> : vector<5xf32>
    %675 = vector.multi_reduction <add>, %674, %cst_250 [0] : vector<5x5xf32> to vector<5xf32>
    %676 = vector.shape_cast %675 : vector<5xf32> to vector<1x5xf32>
    %677 = math.log %676 : vector<1x5xf32>
    %678 = arith.addf %671, %677 : vector<1x5xf32>
    %c4_i32_251 = arith.constant 4 : i32
    %679 = arith.cmpi sge, %546, %c4_i32_251 : i32
    %680 = arith.select %679, %678, %663 : vector<1x5xf32>
    %681 = vector.extract_strided_slice %547 {offsets = [5, 0], sizes = [1, 5], strides = [1, 1]} : vector<8x5xf32> to vector<1x5xf32>
    %682 = tpu.transpose %680, [1, 0] : vector<1x5xf32> -> vector<5x1xf32>
    %683 = vector.broadcast %682 : vector<5x1xf32> to vector<5x5xf32>
    %684 = vector.broadcast %681 : vector<1x5xf32> to vector<5x5xf32>
    %685 = arith.addf %683, %684 : vector<5x5xf32>
    %686 = arith.addf %685, %543 : vector<5x5xf32>
    %cst_252 = arith.constant dense<0xFF800000> : vector<5xf32>
    %687 = vector.multi_reduction <maximumf>, %686, %cst_252 [0] : vector<5x5xf32> to vector<5xf32>
    %688 = vector.shape_cast %687 : vector<5xf32> to vector<1x5xf32>
    %689 = vector.broadcast %688 : vector<1x5xf32> to vector<5x5xf32>
    %690 = arith.subf %686, %689 : vector<5x5xf32>
    %691 = math.exp %690 : vector<5x5xf32>
    %cst_253 = arith.constant dense<0.000000e+00> : vector<5xf32>
    %692 = vector.multi_reduction <add>, %691, %cst_253 [0] : vector<5x5xf32> to vector<5xf32>
    %693 = vector.shape_cast %692 : vector<5xf32> to vector<1x5xf32>
    %694 = math.log %693 : vector<1x5xf32>
    %695 = arith.addf %688, %694 : vector<1x5xf32>
    %c5_i32_254 = arith.constant 5 : i32
    %696 = arith.cmpi sge, %546, %c5_i32_254 : i32
    %697 = arith.select %696, %695, %680 : vector<1x5xf32>
    %698 = vector.extract_strided_slice %547 {offsets = [6, 0], sizes = [1, 5], strides = [1, 1]} : vector<8x5xf32> to vector<1x5xf32>
    %699 = tpu.transpose %697, [1, 0] : vector<1x5xf32> -> vector<5x1xf32>
    %700 = vector.broadcast %699 : vector<5x1xf32> to vector<5x5xf32>
    %701 = vector.broadcast %698 : vector<1x5xf32> to vector<5x5xf32>
    %702 = arith.addf %700, %701 : vector<5x5xf32>
    %703 = arith.addf %702, %543 : vector<5x5xf32>
    %cst_255 = arith.constant dense<0xFF800000> : vector<5xf32>
    %704 = vector.multi_reduction <maximumf>, %703, %cst_255 [0] : vector<5x5xf32> to vector<5xf32>
    %705 = vector.shape_cast %704 : vector<5xf32> to vector<1x5xf32>
    %706 = vector.broadcast %705 : vector<1x5xf32> to vector<5x5xf32>
    %707 = arith.subf %703, %706 : vector<5x5xf32>
    %708 = math.exp %707 : vector<5x5xf32>
    %cst_256 = arith.constant dense<0.000000e+00> : vector<5xf32>
    %709 = vector.multi_reduction <add>, %708, %cst_256 [0] : vector<5x5xf32> to vector<5xf32>
    %710 = vector.shape_cast %709 : vector<5xf32> to vector<1x5xf32>
    %711 = math.log %710 : vector<1x5xf32>
    %712 = arith.addf %705, %711 : vector<1x5xf32>
    %c6_i32_257 = arith.constant 6 : i32
    %713 = arith.cmpi sge, %546, %c6_i32_257 : i32
    %714 = arith.select %713, %712, %697 : vector<1x5xf32>
    %715 = vector.extract_strided_slice %547 {offsets = [7, 0], sizes = [1, 5], strides = [1, 1]} : vector<8x5xf32> to vector<1x5xf32>
    %716 = tpu.transpose %714, [1, 0] : vector<1x5xf32> -> vector<5x1xf32>
    %717 = vector.broadcast %716 : vector<5x1xf32> to vector<5x5xf32>
    %718 = vector.broadcast %715 : vector<1x5xf32> to vector<5x5xf32>
    %719 = arith.addf %717, %718 : vector<5x5xf32>
    %720 = arith.addf %719, %543 : vector<5x5xf32>
    %cst_258 = arith.constant dense<0xFF800000> : vector<5xf32>
    %721 = vector.multi_reduction <maximumf>, %720, %cst_258 [0] : vector<5x5xf32> to vector<5xf32>
    %722 = vector.shape_cast %721 : vector<5xf32> to vector<1x5xf32>
    %723 = vector.broadcast %722 : vector<1x5xf32> to vector<5x5xf32>
    %724 = arith.subf %720, %723 : vector<5x5xf32>
    %725 = math.exp %724 : vector<5x5xf32>
    %cst_259 = arith.constant dense<0.000000e+00> : vector<5xf32>
    %726 = vector.multi_reduction <add>, %725, %cst_259 [0] : vector<5x5xf32> to vector<5xf32>
    %727 = vector.shape_cast %726 : vector<5xf32> to vector<1x5xf32>
    %728 = math.log %727 : vector<1x5xf32>
    %729 = arith.addf %722, %728 : vector<1x5xf32>
    %c7_i32_260 = arith.constant 7 : i32
    %730 = arith.cmpi sge, %546, %c7_i32_260 : i32
    %731 = arith.select %730, %729, %714 : vector<1x5xf32>
    %732 = vector.shape_cast %731 : vector<1x5xf32> to vector<1x1x5xf32>
    %cst_261 = arith.constant dense<0xFF800000> : vector<1xf32>
    %733 = vector.multi_reduction <maximumf>, %732, %cst_261 [1, 2] : vector<1x1x5xf32> to vector<1xf32>
    %734 = vector.shape_cast %733 : vector<1xf32> to vector<1x1x1xf32>
    %735 = vector.extract %734[0, 0, 0] : f32 from vector<1x1x1xf32>
    %736 = vector.broadcast %735 : f32 to vector<1x5xf32>
    %737 = arith.subf %731, %736 : vector<1x5xf32>
    %738 = math.exp %737 : vector<1x5xf32>
    %739 = vector.shape_cast %738 : vector<1x5xf32> to vector<1x1x5xf32>
    %cst_262 = arith.constant dense<0.000000e+00> : vector<1xf32>
    %740 = vector.multi_reduction <add>, %739, %cst_262 [1, 2] : vector<1x1x5xf32> to vector<1xf32>
    %741 = vector.shape_cast %740 : vector<1xf32> to vector<1x1x1xf32>
    %742 = vector.extract %741[0, 0, 0] : f32 from vector<1x1x1xf32>
    %743 = math.log %742 : f32
    %744 = arith.addf %735, %743 : f32
    %745 = arith.subf %744, %626 : f32
    %cst_263 = arith.constant 0.000000e+00 : f32
    %746 = arith.addf %cst_263, %745 : f32
    %c1_264 = arith.constant 1 : index
    %747 = memref.load %arg22[%c1_264] : memref<2xi32, #tpu.memory_space<smem>>
    %748 = vector.extract_strided_slice %542 {offsets = [8, 0], sizes = [8, 5], strides = [1, 1]} : vector<16x5xf32> to vector<8x5xf32>
    %c0_265 = arith.constant 0 : index
    %c1_266 = arith.constant 1 : index
    %749 = vector.load %arg19[%c0_265, %c1_266] : memref<8x2xi32, #tpu.memory_space<vmem>>, vector<8x1xi32>
    %750 = vector.broadcast %749 : vector<8x1xi32> to vector<8x5xi32>
    %751 = arith.cmpi eq, %750, %544 : vector<8x5xi32>
    %c1_i32_267 = arith.constant 1 : i32
    %752 = vector.broadcast %c1_i32_267 : i32 to vector<8x5xi32>
    %753 = arith.cmpi sge, %545, %752 : vector<8x5xi32>
    %754 = vector.broadcast %747 : i32 to vector<8x5xi32>
    %755 = arith.cmpi sle, %545, %754 : vector<8x5xi32>
    %756 = arith.andi %753, %755 : vector<8x5xi1>
    %757 = arith.andi %751, %756 : vector<8x5xi1>
    %cst_268 = arith.constant 0.000000e+00 : f32
    %758 = vector.broadcast %cst_268 : f32 to vector<8x5xf32>
    %759 = arith.select %757, %748, %758 : vector<8x5xi1>, vector<8x5xf32>
    %760 = vector.shape_cast %759 : vector<8x5xf32> to vector<1x8x5xf32>
    %cst_269 = arith.constant dense<0.000000e+00> : vector<1xf32>
    %761 = vector.multi_reduction <add>, %760, %cst_269 [1, 2] : vector<1x8x5xf32> to vector<1xf32>
    %762 = vector.shape_cast %761 : vector<1xf32> to vector<1x1x1xf32>
    %763 = vector.extract %762[0, 0, 0] : f32 from vector<1x1x1xf32>
    %c1_270 = arith.constant 1 : index
    %c1_271 = arith.constant 1 : index
    %764 = memref.load %arg21[%c1_270, %c1_271] : memref<2x8xi32, #tpu.memory_space<smem>>
    %c15_i32_272 = arith.constant 15 : i32
    %765 = arith.addi %c15_i32_272, %764 : i32
    %766 = arith.index_cast %765 : i32 to index
    %767 = memref.load %arg20[%766] : memref<25xf32, #tpu.memory_space<smem>>
    %768 = arith.addf %763, %767 : f32
    %c1_273 = arith.constant 1 : index
    %c2_274 = arith.constant 2 : index
    %769 = memref.load %arg21[%c1_273, %c2_274] : memref<2x8xi32, #tpu.memory_space<smem>>
    %c5_i32_275 = arith.constant 5 : i32
    %770 = arith.muli %764, %c5_i32_275 : i32
    %771 = arith.addi %770, %769 : i32
    %772 = arith.index_cast %771 : i32 to index
    %773 = memref.load %arg20[%772] : memref<25xf32, #tpu.memory_space<smem>>
    %c2_i32_276 = arith.constant 2 : i32
    %774 = arith.cmpi sge, %747, %c2_i32_276 : i32
    %cst_277 = arith.constant 0.000000e+00 : f32
    %775 = arith.select %774, %773, %cst_277 : f32
    %776 = arith.addf %768, %775 : f32
    %777 = arith.select %774, %769, %764 : i32
    %c1_278 = arith.constant 1 : index
    %c3_279 = arith.constant 3 : index
    %778 = memref.load %arg21[%c1_278, %c3_279] : memref<2x8xi32, #tpu.memory_space<smem>>
    %c5_i32_280 = arith.constant 5 : i32
    %779 = arith.muli %777, %c5_i32_280 : i32
    %780 = arith.addi %779, %778 : i32
    %781 = arith.index_cast %780 : i32 to index
    %782 = memref.load %arg20[%781] : memref<25xf32, #tpu.memory_space<smem>>
    %c3_i32_281 = arith.constant 3 : i32
    %783 = arith.cmpi sge, %747, %c3_i32_281 : i32
    %cst_282 = arith.constant 0.000000e+00 : f32
    %784 = arith.select %783, %782, %cst_282 : f32
    %785 = arith.addf %776, %784 : f32
    %786 = arith.select %783, %778, %777 : i32
    %c1_283 = arith.constant 1 : index
    %c4_284 = arith.constant 4 : index
    %787 = memref.load %arg21[%c1_283, %c4_284] : memref<2x8xi32, #tpu.memory_space<smem>>
    %c5_i32_285 = arith.constant 5 : i32
    %788 = arith.muli %786, %c5_i32_285 : i32
    %789 = arith.addi %788, %787 : i32
    %790 = arith.index_cast %789 : i32 to index
    %791 = memref.load %arg20[%790] : memref<25xf32, #tpu.memory_space<smem>>
    %c4_i32_286 = arith.constant 4 : i32
    %792 = arith.cmpi sge, %747, %c4_i32_286 : i32
    %cst_287 = arith.constant 0.000000e+00 : f32
    %793 = arith.select %792, %791, %cst_287 : f32
    %794 = arith.addf %785, %793 : f32
    %795 = arith.select %792, %787, %786 : i32
    %c1_288 = arith.constant 1 : index
    %c5_289 = arith.constant 5 : index
    %796 = memref.load %arg21[%c1_288, %c5_289] : memref<2x8xi32, #tpu.memory_space<smem>>
    %c5_i32_290 = arith.constant 5 : i32
    %797 = arith.muli %795, %c5_i32_290 : i32
    %798 = arith.addi %797, %796 : i32
    %799 = arith.index_cast %798 : i32 to index
    %800 = memref.load %arg20[%799] : memref<25xf32, #tpu.memory_space<smem>>
    %c5_i32_291 = arith.constant 5 : i32
    %801 = arith.cmpi sge, %747, %c5_i32_291 : i32
    %cst_292 = arith.constant 0.000000e+00 : f32
    %802 = arith.select %801, %800, %cst_292 : f32
    %803 = arith.addf %794, %802 : f32
    %804 = arith.select %801, %796, %795 : i32
    %c1_293 = arith.constant 1 : index
    %c6_294 = arith.constant 6 : index
    %805 = memref.load %arg21[%c1_293, %c6_294] : memref<2x8xi32, #tpu.memory_space<smem>>
    %c5_i32_295 = arith.constant 5 : i32
    %806 = arith.muli %804, %c5_i32_295 : i32
    %807 = arith.addi %806, %805 : i32
    %808 = arith.index_cast %807 : i32 to index
    %809 = memref.load %arg20[%808] : memref<25xf32, #tpu.memory_space<smem>>
    %c6_i32_296 = arith.constant 6 : i32
    %810 = arith.cmpi sge, %747, %c6_i32_296 : i32
    %cst_297 = arith.constant 0.000000e+00 : f32
    %811 = arith.select %810, %809, %cst_297 : f32
    %812 = arith.addf %803, %811 : f32
    %813 = arith.select %810, %805, %804 : i32
    %c1_298 = arith.constant 1 : index
    %c7_299 = arith.constant 7 : index
    %814 = memref.load %arg21[%c1_298, %c7_299] : memref<2x8xi32, #tpu.memory_space<smem>>
    %c5_i32_300 = arith.constant 5 : i32
    %815 = arith.muli %813, %c5_i32_300 : i32
    %816 = arith.addi %815, %814 : i32
    %817 = arith.index_cast %816 : i32 to index
    %818 = memref.load %arg20[%817] : memref<25xf32, #tpu.memory_space<smem>>
    %c7_i32_301 = arith.constant 7 : i32
    %819 = arith.cmpi sge, %747, %c7_i32_301 : i32
    %cst_302 = arith.constant 0.000000e+00 : f32
    %820 = arith.select %819, %818, %cst_302 : f32
    %821 = arith.addf %812, %820 : f32
    %822 = arith.select %819, %814, %813 : i32
    %c5_i32_303 = arith.constant 5 : i32
    %823 = arith.muli %822, %c5_i32_303 : i32
    %c4_i32_304 = arith.constant 4 : i32
    %824 = arith.addi %823, %c4_i32_304 : i32
    %825 = arith.index_cast %824 : i32 to index
    %826 = memref.load %arg20[%825] : memref<25xf32, #tpu.memory_space<smem>>
    %827 = arith.addf %821, %826 : f32
    %828 = vector.extract_strided_slice %748 {offsets = [1, 0], sizes = [1, 5], strides = [1, 1]} : vector<8x5xf32> to vector<1x5xf32>
    %829 = vector.extract_strided_slice %543 {offsets = [3, 0], sizes = [1, 5], strides = [1, 1]} : vector<5x5xf32> to vector<1x5xf32>
    %830 = arith.addf %828, %829 : vector<1x5xf32>
    %831 = vector.extract_strided_slice %748 {offsets = [2, 0], sizes = [1, 5], strides = [1, 1]} : vector<8x5xf32> to vector<1x5xf32>
    %832 = tpu.transpose %830, [1, 0] : vector<1x5xf32> -> vector<5x1xf32>
    %833 = vector.broadcast %832 : vector<5x1xf32> to vector<5x5xf32>
    %834 = vector.broadcast %831 : vector<1x5xf32> to vector<5x5xf32>
    %835 = arith.addf %833, %834 : vector<5x5xf32>
    %836 = arith.addf %835, %543 : vector<5x5xf32>
    %cst_305 = arith.constant dense<0xFF800000> : vector<5xf32>
    %837 = vector.multi_reduction <maximumf>, %836, %cst_305 [0] : vector<5x5xf32> to vector<5xf32>
    %838 = vector.shape_cast %837 : vector<5xf32> to vector<1x5xf32>
    %839 = vector.broadcast %838 : vector<1x5xf32> to vector<5x5xf32>
    %840 = arith.subf %836, %839 : vector<5x5xf32>
    %841 = math.exp %840 : vector<5x5xf32>
    %cst_306 = arith.constant dense<0.000000e+00> : vector<5xf32>
    %842 = vector.multi_reduction <add>, %841, %cst_306 [0] : vector<5x5xf32> to vector<5xf32>
    %843 = vector.shape_cast %842 : vector<5xf32> to vector<1x5xf32>
    %844 = math.log %843 : vector<1x5xf32>
    %845 = arith.addf %838, %844 : vector<1x5xf32>
    %c2_i32_307 = arith.constant 2 : i32
    %846 = arith.cmpi sge, %747, %c2_i32_307 : i32
    %847 = arith.select %846, %845, %830 : vector<1x5xf32>
    %848 = vector.extract_strided_slice %748 {offsets = [3, 0], sizes = [1, 5], strides = [1, 1]} : vector<8x5xf32> to vector<1x5xf32>
    %849 = tpu.transpose %847, [1, 0] : vector<1x5xf32> -> vector<5x1xf32>
    %850 = vector.broadcast %849 : vector<5x1xf32> to vector<5x5xf32>
    %851 = vector.broadcast %848 : vector<1x5xf32> to vector<5x5xf32>
    %852 = arith.addf %850, %851 : vector<5x5xf32>
    %853 = arith.addf %852, %543 : vector<5x5xf32>
    %cst_308 = arith.constant dense<0xFF800000> : vector<5xf32>
    %854 = vector.multi_reduction <maximumf>, %853, %cst_308 [0] : vector<5x5xf32> to vector<5xf32>
    %855 = vector.shape_cast %854 : vector<5xf32> to vector<1x5xf32>
    %856 = vector.broadcast %855 : vector<1x5xf32> to vector<5x5xf32>
    %857 = arith.subf %853, %856 : vector<5x5xf32>
    %858 = math.exp %857 : vector<5x5xf32>
    %cst_309 = arith.constant dense<0.000000e+00> : vector<5xf32>
    %859 = vector.multi_reduction <add>, %858, %cst_309 [0] : vector<5x5xf32> to vector<5xf32>
    %860 = vector.shape_cast %859 : vector<5xf32> to vector<1x5xf32>
    %861 = math.log %860 : vector<1x5xf32>
    %862 = arith.addf %855, %861 : vector<1x5xf32>
    %c3_i32_310 = arith.constant 3 : i32
    %863 = arith.cmpi sge, %747, %c3_i32_310 : i32
    %864 = arith.select %863, %862, %847 : vector<1x5xf32>
    %865 = vector.extract_strided_slice %748 {offsets = [4, 0], sizes = [1, 5], strides = [1, 1]} : vector<8x5xf32> to vector<1x5xf32>
    %866 = tpu.transpose %864, [1, 0] : vector<1x5xf32> -> vector<5x1xf32>
    %867 = vector.broadcast %866 : vector<5x1xf32> to vector<5x5xf32>
    %868 = vector.broadcast %865 : vector<1x5xf32> to vector<5x5xf32>
    %869 = arith.addf %867, %868 : vector<5x5xf32>
    %870 = arith.addf %869, %543 : vector<5x5xf32>
    %cst_311 = arith.constant dense<0xFF800000> : vector<5xf32>
    %871 = vector.multi_reduction <maximumf>, %870, %cst_311 [0] : vector<5x5xf32> to vector<5xf32>
    %872 = vector.shape_cast %871 : vector<5xf32> to vector<1x5xf32>
    %873 = vector.broadcast %872 : vector<1x5xf32> to vector<5x5xf32>
    %874 = arith.subf %870, %873 : vector<5x5xf32>
    %875 = math.exp %874 : vector<5x5xf32>
    %cst_312 = arith.constant dense<0.000000e+00> : vector<5xf32>
    %876 = vector.multi_reduction <add>, %875, %cst_312 [0] : vector<5x5xf32> to vector<5xf32>
    %877 = vector.shape_cast %876 : vector<5xf32> to vector<1x5xf32>
    %878 = math.log %877 : vector<1x5xf32>
    %879 = arith.addf %872, %878 : vector<1x5xf32>
    %c4_i32_313 = arith.constant 4 : i32
    %880 = arith.cmpi sge, %747, %c4_i32_313 : i32
    %881 = arith.select %880, %879, %864 : vector<1x5xf32>
    %882 = vector.extract_strided_slice %748 {offsets = [5, 0], sizes = [1, 5], strides = [1, 1]} : vector<8x5xf32> to vector<1x5xf32>
    %883 = tpu.transpose %881, [1, 0] : vector<1x5xf32> -> vector<5x1xf32>
    %884 = vector.broadcast %883 : vector<5x1xf32> to vector<5x5xf32>
    %885 = vector.broadcast %882 : vector<1x5xf32> to vector<5x5xf32>
    %886 = arith.addf %884, %885 : vector<5x5xf32>
    %887 = arith.addf %886, %543 : vector<5x5xf32>
    %cst_314 = arith.constant dense<0xFF800000> : vector<5xf32>
    %888 = vector.multi_reduction <maximumf>, %887, %cst_314 [0] : vector<5x5xf32> to vector<5xf32>
    %889 = vector.shape_cast %888 : vector<5xf32> to vector<1x5xf32>
    %890 = vector.broadcast %889 : vector<1x5xf32> to vector<5x5xf32>
    %891 = arith.subf %887, %890 : vector<5x5xf32>
    %892 = math.exp %891 : vector<5x5xf32>
    %cst_315 = arith.constant dense<0.000000e+00> : vector<5xf32>
    %893 = vector.multi_reduction <add>, %892, %cst_315 [0] : vector<5x5xf32> to vector<5xf32>
    %894 = vector.shape_cast %893 : vector<5xf32> to vector<1x5xf32>
    %895 = math.log %894 : vector<1x5xf32>
    %896 = arith.addf %889, %895 : vector<1x5xf32>
    %c5_i32_316 = arith.constant 5 : i32
    %897 = arith.cmpi sge, %747, %c5_i32_316 : i32
    %898 = arith.select %897, %896, %881 : vector<1x5xf32>
    %899 = vector.extract_strided_slice %748 {offsets = [6, 0], sizes = [1, 5], strides = [1, 1]} : vector<8x5xf32> to vector<1x5xf32>
    %900 = tpu.transpose %898, [1, 0] : vector<1x5xf32> -> vector<5x1xf32>
    %901 = vector.broadcast %900 : vector<5x1xf32> to vector<5x5xf32>
    %902 = vector.broadcast %899 : vector<1x5xf32> to vector<5x5xf32>
    %903 = arith.addf %901, %902 : vector<5x5xf32>
    %904 = arith.addf %903, %543 : vector<5x5xf32>
    %cst_317 = arith.constant dense<0xFF800000> : vector<5xf32>
    %905 = vector.multi_reduction <maximumf>, %904, %cst_317 [0] : vector<5x5xf32> to vector<5xf32>
    %906 = vector.shape_cast %905 : vector<5xf32> to vector<1x5xf32>
    %907 = vector.broadcast %906 : vector<1x5xf32> to vector<5x5xf32>
    %908 = arith.subf %904, %907 : vector<5x5xf32>
    %909 = math.exp %908 : vector<5x5xf32>
    %cst_318 = arith.constant dense<0.000000e+00> : vector<5xf32>
    %910 = vector.multi_reduction <add>, %909, %cst_318 [0] : vector<5x5xf32> to vector<5xf32>
    %911 = vector.shape_cast %910 : vector<5xf32> to vector<1x5xf32>
    %912 = math.log %911 : vector<1x5xf32>
    %913 = arith.addf %906, %912 : vector<1x5xf32>
    %c6_i32_319 = arith.constant 6 : i32
    %914 = arith.cmpi sge, %747, %c6_i32_319 : i32
    %915 = arith.select %914, %913, %898 : vector<1x5xf32>
    %916 = vector.extract_strided_slice %748 {offsets = [7, 0], sizes = [1, 5], strides = [1, 1]} : vector<8x5xf32> to vector<1x5xf32>
    %917 = tpu.transpose %915, [1, 0] : vector<1x5xf32> -> vector<5x1xf32>
    %918 = vector.broadcast %917 : vector<5x1xf32> to vector<5x5xf32>
    %919 = vector.broadcast %916 : vector<1x5xf32> to vector<5x5xf32>
    %920 = arith.addf %918, %919 : vector<5x5xf32>
    %921 = arith.addf %920, %543 : vector<5x5xf32>
    %cst_320 = arith.constant dense<0xFF800000> : vector<5xf32>
    %922 = vector.multi_reduction <maximumf>, %921, %cst_320 [0] : vector<5x5xf32> to vector<5xf32>
    %923 = vector.shape_cast %922 : vector<5xf32> to vector<1x5xf32>
    %924 = vector.broadcast %923 : vector<1x5xf32> to vector<5x5xf32>
    %925 = arith.subf %921, %924 : vector<5x5xf32>
    %926 = math.exp %925 : vector<5x5xf32>
    %cst_321 = arith.constant dense<0.000000e+00> : vector<5xf32>
    %927 = vector.multi_reduction <add>, %926, %cst_321 [0] : vector<5x5xf32> to vector<5xf32>
    %928 = vector.shape_cast %927 : vector<5xf32> to vector<1x5xf32>
    %929 = math.log %928 : vector<1x5xf32>
    %930 = arith.addf %923, %929 : vector<1x5xf32>
    %c7_i32_322 = arith.constant 7 : i32
    %931 = arith.cmpi sge, %747, %c7_i32_322 : i32
    %932 = arith.select %931, %930, %915 : vector<1x5xf32>
    %933 = vector.shape_cast %932 : vector<1x5xf32> to vector<1x1x5xf32>
    %cst_323 = arith.constant dense<0xFF800000> : vector<1xf32>
    %934 = vector.multi_reduction <maximumf>, %933, %cst_323 [1, 2] : vector<1x1x5xf32> to vector<1xf32>
    %935 = vector.shape_cast %934 : vector<1xf32> to vector<1x1x1xf32>
    %936 = vector.extract %935[0, 0, 0] : f32 from vector<1x1x1xf32>
    %937 = vector.broadcast %936 : f32 to vector<1x5xf32>
    %938 = arith.subf %932, %937 : vector<1x5xf32>
    %939 = math.exp %938 : vector<1x5xf32>
    %940 = vector.shape_cast %939 : vector<1x5xf32> to vector<1x1x5xf32>
    %cst_324 = arith.constant dense<0.000000e+00> : vector<1xf32>
    %941 = vector.multi_reduction <add>, %940, %cst_324 [1, 2] : vector<1x1x5xf32> to vector<1xf32>
    %942 = vector.shape_cast %941 : vector<1xf32> to vector<1x1x1xf32>
    %943 = vector.extract %942[0, 0, 0] : f32 from vector<1x1x1xf32>
    %944 = math.log %943 : f32
    %945 = arith.addf %936, %944 : f32
    %946 = arith.subf %945, %827 : f32
    %947 = arith.addf %746, %946 : f32
    %cst_325 = arith.constant 0.000000e+00 : f32
    %948 = vector.broadcast %cst_325 : f32 to vector<1x128xf32>
    %cst_326 = arith.constant 5.000000e-01 : f32
    %949 = arith.mulf %947, %cst_326 : f32
    %950 = vector.broadcast %949 : f32 to vector<1x128xf32>
    %951 = arith.addf %948, %950 : vector<1x128xf32>
    %c0_327 = arith.constant 0 : index
    %c0_328 = arith.constant 0 : index
    %952 = vector.load %arg23[%c0_327, %c0_328] : memref<1x128xf32, #tpu.memory_space<vmem>>, vector<1x128xf32>
    tpu.vector_store %arg23[%c0_327, %c0_328], %951 {strides = array<i32>} : memref<1x128xf32, #tpu.memory_space<vmem>>, vector<1x128xf32>,
    return
  }
}

</mosaic_0001>

<llo_original>
// kernel: bert_crf_forward.1
$region0: #{bert_crf_forward.1}
  #allocation0 [shape = 'u32[]', space=smem, size = 0x4, offset = 0x4, fixed_abs, tag = 'smem constant byte address 0x4 - core index']
  #allocation1 [shape = 'u32[144,128]{1,0:T(1,128)}', space=vmem, size = 0x12000, scoped, tag = 'internal scratch']
  %s0 = inlined_call_operand.vmem [shape: f32[2,8,32], index: 0, kind: input, shape index: {}]
  %s1 = inlined_call_operand.vmem [shape: f32[2,1,8], index: 1, kind: input, shape index: {}]
  %s2 = inlined_call_operand.vmem [shape: f32[1,32], index: 2, kind: input, shape index: {}]
  %s3 = inlined_call_operand.vmem [shape: f32[1,32], index: 3, kind: input, shape index: {}]
  %s4 = inlined_call_operand.vmem [shape: f32[2,32,96], index: 4, kind: input, shape index: {}]
  %s5 = inlined_call_operand.vmem [shape: f32[2,1,96], index: 5, kind: input, shape index: {}]
  %s6 = inlined_call_operand.vmem [shape: f32[2,32,32], index: 6, kind: input, shape index: {}]
  %s7 = inlined_call_operand.vmem [shape: f32[2,1,32], index: 7, kind: input, shape index: {}]
  %s8 = inlined_call_operand.vmem [shape: f32[2,1,32], index: 8, kind: input, shape index: {}]
  %s9 = inlined_call_operand.vmem [shape: f32[2,1,32], index: 9, kind: input, shape index: {}]
  %s10 = inlined_call_operand.vmem [shape: f32[2,32,64], index: 10, kind: input, shape index: {}]
  %s11 = inlined_call_operand.vmem [shape: f32[2,1,64], index: 11, kind: input, shape index: {}]
  %s12 = inlined_call_operand.vmem [shape: f32[2,64,32], index: 12, kind: input, shape index: {}]
  %s13 = inlined_call_operand.vmem [shape: f32[2,1,32], index: 13, kind: input, shape index: {}]
  %s14 = inlined_call_operand.vmem [shape: f32[2,1,32], index: 14, kind: input, shape index: {}]
  %s15 = inlined_call_operand.vmem [shape: f32[2,1,32], index: 15, kind: input, shape index: {}]
  %s16 = inlined_call_operand.vmem [shape: f32[32,5], index: 16, kind: input, shape index: {}]
  %s17 = inlined_call_operand.vmem [shape: f32[1,5], index: 17, kind: input, shape index: {}]
  %s18 = inlined_call_operand.vmem [shape: f32[5,5], index: 18, kind: input, shape index: {}]
  %s19 = inlined_call_operand.vmem [shape: s32[8,2], index: 19, kind: input, shape index: {}]
  %s20 = inlined_call_operand.vmem [shape: f32[25], index: 20, kind: input, shape index: {}]
  %s21 = inlined_call_operand.vmem [shape: s32[2,8], index: 21, kind: input, shape index: {}]
  %s22 = inlined_call_operand.vmem [shape: s32[2], index: 22, kind: input, shape index: {}]
  %s23 = inlined_call_operand.hbm [shape: f32[1,128], index: 23, kind: output, shape index: {}]
  %s24 = sld [smem:[#allocation0]]
  $region114: #{bert_crf_forward.1} parent=0
    _
  %s26 = ssub.s32 1, %s24
  %s27 = scalar_select 0, %s26, %s24
  $region1: #{bert_crf_forward.1} parent=0
    #allocation2 [shape = 'u8[512]{0}', space=smem, size = 0x200, scoped, tag = 'input window, operand 20, single buffered']
    #allocation3 [shape = 's32[1]{0}', space=sflag, size = 0x4, scoped, tag = 'scoped memory for bert_crf_forward.1']
    #allocation4 [shape = 's32[1]{0}', space=sflag, size = 0x4, scoped, tag = 'scoped memory for bert_crf_forward.1']
    #allocation5 [shape = 'u8[1024]{0}', space=smem, size = 0x400, scoped, tag = 'input window, operand 21, single buffered']
    #allocation6 [shape = 's32[1]{0}', space=sflag, size = 0x4, scoped, tag = 'scoped memory for bert_crf_forward.1']
    #allocation7 [shape = 'u8[512]{0}', space=smem, size = 0x200, scoped, tag = 'input window, operand 22, single buffered']
    #allocation8 [shape = 'u8[512]{0}', space=vmem, size = 0x400, scoped, tag = 'output window, operand 0, single buffered']
    %28 = vsyncpa [#allocation4], 0
    %29 = vsyncpa [#allocation6], 0
    %30 = vsyncpa [#allocation3], 0
    // Predicated region
    $region2: #{bert_crf_forward.1} parent=1 // pred_check
      _
    $region3: #{bert_crf_forward.1} parent=1 // pred_check_branch
      %32 = sbr.rel (0) target = $region5
    $region4: #{bert_crf_forward.1} parent=1 // pred_region
      _
    $region5: #{bert_crf_forward.1} parent=1 // pred_fallthru
      _
    // Predicated region
    $region6: #{bert_crf_forward.1} parent=1 // pred_check
      _
    $region7: #{bert_crf_forward.1} parent=1 // pred_check_branch
      %34 = sbr.rel (0) target = $region9
    $region8: #{bert_crf_forward.1} parent=1 // pred_region
      _
    $region9: #{bert_crf_forward.1} parent=1 // pred_fallthru
      _
    // Predicated region
    $region10: #{bert_crf_forward.1} parent=1 // pred_check
      _
    $region11: #{bert_crf_forward.1} parent=1 // pred_check_branch
      %36 = sbr.rel (0) target = $region13
    $region12: #{bert_crf_forward.1} parent=1 // pred_region
      _
    $region13: #{bert_crf_forward.1} parent=1 // pred_fallthru
      _
    // Predicated region
    $region14: #{bert_crf_forward.1} parent=1 // pred_check
      _
    $region15: #{bert_crf_forward.1} parent=1 // pred_check_branch
      %38 = sbr.rel (0) target = $region17
    $region16: #{bert_crf_forward.1} parent=1 // pred_region
      _
    $region17: #{bert_crf_forward.1} parent=1 // pred_fallthru
      _
    // Predicated region
    $region18: #{bert_crf_forward.1} parent=1 // pred_check
      _
    $region19: #{bert_crf_forward.1} parent=1 // pred_check_branch
      %40 = sbr.rel (0) target = $region21
    $region20: #{bert_crf_forward.1} parent=1 // pred_region
      _
    $region21: #{bert_crf_forward.1} parent=1 // pred_fallthru
      _
    // Predicated region
    $region22: #{bert_crf_forward.1} parent=1 // pred_check
      _
    $region23: #{bert_crf_forward.1} parent=1 // pred_check_branch
      %42 = sbr.rel (0) target = $region25
    $region24: #{bert_crf_forward.1} parent=1 // pred_region
      _
    $region25: #{bert_crf_forward.1} parent=1 // pred_fallthru
      _
    // Predicated region
    $region26: #{bert_crf_forward.1} parent=1 // pred_check
      _
    $region27: #{bert_crf_forward.1} parent=1 // pred_check_branch
      %44 = sbr.rel (0) target = $region29
    $region28: #{bert_crf_forward.1} parent=1 // pred_region
      _
    $region29: #{bert_crf_forward.1} parent=1 // pred_fallthru
      _
    // Predicated region
    $region30: #{bert_crf_forward.1} parent=1 // pred_check
      _
    $region31: #{bert_crf_forward.1} parent=1 // pred_check_branch
      %46 = sbr.rel (0) target = $region33
    $region32: #{bert_crf_forward.1} parent=1 // pred_region
      _
    $region33: #{bert_crf_forward.1} parent=1 // pred_fallthru
      _
    // Predicated region
    $region34: #{bert_crf_forward.1} parent=1 // pred_check
      _
    $region35: #{bert_crf_forward.1} parent=1 // pred_check_branch
      %48 = sbr.rel (0) target = $region37
    $region36: #{bert_crf_forward.1} parent=1 // pred_region
      _
    $region37: #{bert_crf_forward.1} parent=1 // pred_fallthru
      _
    // Predicated region
    $region38: #{bert_crf_forward.1} parent=1 // pred_check
      _
    $region39: #{bert_crf_forward.1} parent=1 // pred_check_branch
      %50 = sbr.rel (0) target = $region41
    $region40: #{bert_crf_forward.1} parent=1 // pred_region
      _
    $region41: #{bert_crf_forward.1} parent=1 // pred_fallthru
      _
    // Predicated region
    $region42: #{bert_crf_forward.1} parent=1 // pred_check
      _
    $region43: #{bert_crf_forward.1} parent=1 // pred_check_branch
      %52 = sbr.rel (0) target = $region45
    $region44: #{bert_crf_forward.1} parent=1 // pred_region
      _
    $region45: #{bert_crf_forward.1} parent=1 // pred_fallthru
      _
    // Predicated region
    $region46: #{bert_crf_forward.1} parent=1 // pred_check
      _
    $region47: #{bert_crf_forward.1} parent=1 // pred_check_branch
      %54 = sbr.rel (0) target = $region49
    $region48: #{bert_crf_forward.1} parent=1 // pred_region
      _
    $region49: #{bert_crf_forward.1} parent=1 // pred_fallthru
      _
    // Predicated region
    $region50: #{bert_crf_forward.1} parent=1 // pred_check
      _
    $region51: #{bert_crf_forward.1} parent=1 // pred_check_branch
      %56 = sbr.rel (0) target = $region53
    $region52: #{bert_crf_forward.1} parent=1 // pred_region
      _
    $region53: #{bert_crf_forward.1} parent=1 // pred_fallthru
      _
    // Predicated region
    $region54: #{bert_crf_forward.1} parent=1 // pred_check
      _
    $region55: #{bert_crf_forward.1} parent=1 // pred_check_branch
      %58 = sbr.rel (0) target = $region57
    $region56: #{bert_crf_forward.1} parent=1 // pred_region
      _
    $region57: #{bert_crf_forward.1} parent=1 // pred_fallthru
      _
    // Predicated region
    $region58: #{bert_crf_forward.1} parent=1 // pred_check
      _
    $region59: #{bert_crf_forward.1} parent=1 // pred_check_branch
      %60 = sbr.rel (0) target = $region61
    $region60: #{bert_crf_forward.1} parent=1 // pred_region
      _
    $region61: #{bert_crf_forward.1} parent=1 // pred_fallthru
      _
    // Predicated region
    $region62: #{bert_crf_forward.1} parent=1 // pred_check
      _
    $region63: #{bert_crf_forward.1} parent=1 // pred_check_branch
      %62 = sbr.rel (0) target = $region65
    $region64: #{bert_crf_forward.1} parent=1 // pred_region
      _
    $region65: #{bert_crf_forward.1} parent=1 // pred_fallthru
      _
    // Predicated region
    $region66: #{bert_crf_forward.1} parent=1 // pred_check
      _
    $region67: #{bert_crf_forward.1} parent=1 // pred_check_branch
      %64 = sbr.rel (0) target = $region69
    $region68: #{bert_crf_forward.1} parent=1 // pred_region
      _
    $region69: #{bert_crf_forward.1} parent=1 // pred_fallthru
      _
    // Predicated region
    $region70: #{bert_crf_forward.1} parent=1 // pred_check
      _
    $region71: #{bert_crf_forward.1} parent=1 // pred_check_branch
      %66 = sbr.rel (0) target = $region73
    $region72: #{bert_crf_forward.1} parent=1 // pred_region
      _
    $region73: #{bert_crf_forward.1} parent=1 // pred_fallthru
      _
    // Predicated region
    $region74: #{bert_crf_forward.1} parent=1 // pred_check
      _
    $region75: #{bert_crf_forward.1} parent=1 // pred_check_branch
      %68 = sbr.rel (0) target = $region77
    $region76: #{bert_crf_forward.1} parent=1 // pred_region
      _
    $region77: #{bert_crf_forward.1} parent=1 // pred_fallthru
      _
    // Predicated region
    $region78: #{bert_crf_forward.1} parent=1 // pred_check
      _
    $region79: #{bert_crf_forward.1} parent=1 // pred_check_branch
      %70 = sbr.rel (0) target = $region81
    $region80: #{bert_crf_forward.1} parent=1 // pred_region
      _
    $region81: #{bert_crf_forward.1} parent=1 // pred_fallthru
      _
    // Predicated region
    $region82: #{bert_crf_forward.1} parent=1 // pred_check
      _
    $region83: #{bert_crf_forward.1} parent=1 // pred_check_branch
      %72 = sbr.rel (0) target = $region85
    $region84: #{bert_crf_forward.1} parent=1 // pred_region
      %s74 = ssub.s32 16, 16
      %75 = vsyncadd [#allocation4], %s74
      %s77 = sshll.u32 %s20, 4
      %s78 = int_to_ptr.vmem [resolvable:$true] %s77
      %80 = dma.vmem_to_smem %s78, 16, [#allocation2], [#allocation4]
    $region85: #{bert_crf_forward.1} parent=1 // pred_fallthru
      _
    // Predicated region
    $region86: #{bert_crf_forward.1} parent=1 // pred_check
      _
    $region87: #{bert_crf_forward.1} parent=1 // pred_check_branch
      %82 = sbr.rel (0) target = $region89
    $region88: #{bert_crf_forward.1} parent=1 // pred_region
      %s84 = ssub.s32 32, 32
      %85 = vsyncadd [#allocation6], %s84
      %s87 = sshll.u32 %s21, 4
      %s88 = int_to_ptr.vmem [resolvable:$true] %s87
      %90 = dma.vmem_to_smem %s88, 32, [#allocation5], [#allocation6]
    $region89: #{bert_crf_forward.1} parent=1 // pred_fallthru
      _
    // Predicated region
    $region90: #{bert_crf_forward.1} parent=1 // pred_check
      _
    $region91: #{bert_crf_forward.1} parent=1 // pred_check_branch
      %92 = sbr.rel (0) target = $region93
    $region92: #{bert_crf_forward.1} parent=1 // pred_region
      %s94 = ssub.s32 16, 16
      %95 = vsyncadd [#allocation6], %s94
      %s97 = sshll.u32 %s22, 4
      %s98 = int_to_ptr.vmem [resolvable:$true] %s97
      %100 = dma.vmem_to_smem %s98, 16, [#allocation7], [#allocation6]
    $region93: #{bert_crf_forward.1} parent=1 // pred_fallthru
      _
    // Predicated region
    $region94: #{bert_crf_forward.1} parent=1 // pred_check
      _
    $region95: #{bert_crf_forward.1} parent=1 // pred_check_branch
      %102 = sbr.rel (0) target = $region97
    $region96: #{bert_crf_forward.1} parent=1 // pred_region
      %103 = dma.done [#allocation4], 16
    $region97: #{bert_crf_forward.1} parent=1 // pred_fallthru
      _
    // Predicated region
    $region98: #{bert_crf_forward.1} parent=1 // pred_check
      _
    $region99: #{bert_crf_forward.1} parent=1 // pred_check_branch
      %105 = sbr.rel (0) target = $region101
    $region100: #{bert_crf_forward.1} parent=1 // pred_region
      %106 = dma.done [#allocation6], 32
    $region101: #{bert_crf_forward.1} parent=1 // pred_fallthru
      _
    // Predicated region
    $region102: #{bert_crf_forward.1} parent=1 // pred_check
      _
    $region103: #{bert_crf_forward.1} parent=1 // pred_check_branch
      %108 = sbr.rel (0) target = $region105
    $region104: #{bert_crf_forward.1} parent=1 // pred_region
      %109 = dma.done [#allocation6], 16
    $region105: #{bert_crf_forward.1} parent=1 // pred_fallthru
      _
    %110 = sfence
    %v111 = vld [vmem:[%s0] sm:$0xff]
    %v112 = vld [vmem:[%s0 + $0x8] sm:$0xff]
    %v113 = vld [vmem:[%s2] sm:$0x1]
    %v114 = vld [vmem:[%s3] sm:$0x1]
    %vm115 = vcmask 261120
    %v116 = vsel %vm115, %v111, 0.0
    %117 = vadd.xlane.f32.xlu0 %v116
    %v118 = vpop.xlane.xlu0 %117
    %v119 = vsel %vm115, %v112, 0.0
    %120 = vadd.xlane.f32.xlu0 %v119
    %v121 = vpop.xlane.xlu0 %120
    %v122 = vrcp.pop 32.0
    %v123 = vmul.f32 %v118, %v122
    %v124 = vmul.f32 %v121, %v122
    %v125 = vsub.f32 %v111, %v123
    %v126 = vsub.f32 %v112, %v124
    %v127 = vmul.f32 %v125, %v125
    %v128 = vmul.f32 %v126, %v126
    %v129 = vsel %vm115, %v127, 0.0
    %130 = vadd.xlane.f32.xlu0 %v129
    %v131 = vpop.xlane.xlu0 %130
    %v132 = vsel %vm115, %v128, 0.0
    %133 = vadd.xlane.f32.xlu0 %v132
    %v134 = vpop.xlane.xlu0 %133
    %v135 = vmul.f32 %v131, %v122
    %v136 = vmul.f32 %v134, %v122
    %v137 = vadd.f32 %v135, 1e-12
    %v138 = vadd.f32 %v136, 1e-12
    %v139 = vrsqrt.pop %v137
    %v140 = vrsqrt.pop %v138
    %v141 = vmul.f32 %v125, %v139
    %v142 = vmul.f32 %v126, %v140
    %v144 = vlaneseq
    %v145 = vshrl.u32 %v144, 7
    %v146 = vsub.s32 0, %v145
    %v147 = vrot.slane %v113, %v146
    %v149 = vmul.f32 %v141, %v147
    %v150 = vmul.f32 %v142, %v147
    %v152 = vlaneseq
    %v153 = vshrl.u32 %v152, 7
    %v154 = vsub.s32 0, %v153
    %v155 = vrot.slane %v114, %v154
    %v157 = vadd.f32 %v149, %v155
    %v158 = vadd.f32 %v150, %v155
    %v159 = vld [vmem:[%s4] sm:$0xff]
    %v160 = vld [vmem:[%s4 + $0x8] sm:$0xff]
    %v161 = vld [vmem:[%s4 + $0x10] sm:$0xff]
    %v162 = vld [vmem:[%s4 + $0x18] sm:$0xff]
    %v163 = vld [vmem:[%s5] sm:$0x1]
    %v165 = vlaneseq
    %v166 = vshrl.u32 %v165, 7
    %v167 = vsub.s32 0, %v166
    %v168 = vrot.slane %v163, %v167
    %v171 = vsel %vm115, %v157, 0
    %v174 = vsel %vm115, %v158, 0
    %176 = vmatprep.subr.mxu0 0.0
    %177 = vmatpush1.msra.mxu0 %v159
    %178 = vmatprep.subr.mxu0 0.0
    %179 = vmatpush1.msra.mxu0 %v160
    %180 = vmatprep.subr.mxu0 0.0
    %181 = vmatpush1.msra.mxu0 %v161
    %182 = vmatprep.subr.mxu0 0.0
    %183 = vmatpush1.msra.mxu0 %v162
    %184 = vmatprep.subr.mxu0 0.0
    %185 = vmatpush1.msra.mxu0 0.0
    %186 = vmatprep.subr.mxu0 0.0
    %187 = vmatpush1.msra.mxu0 0.0
    %188 = vmatprep.subr.mxu0 0.0
    %189 = vmatpush1.msra.mxu0 0.0
    %190 = vmatprep.subr.mxu0 0.0
    %191 = vmatpush1.msra.mxu0 0.0
    %192 = vmatprep.subr.mxu0 0.0
    %193 = vmatpush1.msra.mxu0 0.0
    %194 = vmatprep.subr.mxu0 0.0
    %195 = vmatpush1.msra.mxu0 0.0
    %196 = vmatprep.subr.mxu0 0.0
    %197 = vmatpush1.msra.mxu0 0.0
    %198 = vmatprep.subr.mxu0 0.0
    %199 = vmatpush1.msra.mxu0 0.0
    %200 = vmatprep.subr.mxu0 0.0
    %201 = vmatpush1.msra.mxu0 0.0
    %202 = vmatprep.subr.mxu0 0.0
    %203 = vmatpush1.msra.mxu0 0.0
    %204 = vmatprep.subr.mxu0 0.0
    %205 = vmatpush1.msra.mxu0 0.0
    %206 = vmatprep.subr.mxu0 0.0
    %207 = vmatpush1.msra.mxu0 0.0
    %208 = vmatprep.subr.mxu0 0.0
    %209 = vmatpush1.msra.mxu0 0.0
    %210 = vmatprep.subr.mxu0 0.0
    %211 = vmatpush1.msra.mxu0 0.0
    %212 = vmatprep.subr.mxu0 0.0
    %213 = vmatpush1.msra.mxu0 0.0
    %214 = vmatprep.subr.mxu0 0.0
    %215 = vmatpush1.msra.mxu0 0.0
    %216 = vmatprep.subr.mxu0 0.0
    %217 = vmatpush1.msra.mxu0 0.0
    %218 = vmatprep.subr.mxu0 0.0
    %219 = vmatpush1.msra.mxu0 0.0
    %220 = vmatprep.subr.mxu0 0.0
    %221 = vmatpush1.msra.mxu0 0.0
    %222 = vmatprep.subr.mxu0 0.0
    %223 = vmatpush1.msra.mxu0 0.0
    %224 = vmatprep.subr.mxu0 0.0
    %225 = vmatpush1.msra.mxu0 0.0
    %226 = vmatprep.subr.mxu0 0.0
    %227 = vmatpush1.msra.mxu0 0.0
    %228 = vmatprep.subr.mxu0 0.0
    %229 = vmatpush1.msra.mxu0 0.0
    %230 = vmatprep.subr.mxu0 0.0
    %231 = vmatpush1.msra.mxu0 0.0
    %232 = vmatprep.subr.mxu0 0.0
    %233 = vmatpush1.msra.mxu0 0.0
    %234 = vmatprep.subr.mxu0 0.0
    %235 = vmatpush1.msra.mxu0 0.0
    %236 = vmatprep.subr.mxu0 0.0
    %237 = vmatpush1.msra.mxu0 0.0
    %238 = vmatprep.subr.mxu0 0.0
    %239 = vmatpush1.msra.mxu0 0.0
    %240 = vmatprep.mubr.f32.mxu0 0.0
    %241 = vmatmul.mubr.f32.gmra.mrb[0].mxu0 %v171
    %v242 = vpop.f32.mrb[0].mxu0
    %v243 = vadd.f32 %v168, %v242
    %v244 = vpop.f32.mrb[0].mxu0
    %245 = vmatprep.mubr.f32.mxu0 0.0
    %246 = vmatmul.mubr.f32.gmra.mrb[0].mxu0 %v174
    %v247 = vpop.f32.mrb[0].mxu0
    %v248 = vadd.f32 %v168, %v247
    %v249 = vpop.f32.mrb[0].mxu0
    %250 = vdwg.mxu0
    %v251 = vld [vmem:[%s1] sm:$0x1]
    %253 = vrot.lane.b32.xlu0 %v243, 96
    %v254 = vpop.permute.xlu0 %253
    %vm255 = vcmask 64512
    %v256 = vsel %vm255, %v243, 0
    %v258 = vsel %vm255, %v254, 0
    %260 = vmatprep.subr.mxu0 0.0
    %261 = vmatpush1.xpose.msra.mxu0 %v258
    %262 = vmatprep.subr.mxu0 0.0
    %263 = vmatpush1.xpose.msra.mxu0 0.0
    %264 = vmatprep.subr.mxu0 0.0
    %265 = vmatpush1.xpose.msra.mxu0 0.0
    %266 = vmatprep.subr.mxu0 0.0
    %267 = vmatpush1.xpose.msra.mxu0 0.0
    %268 = vmatprep.subr.mxu0 0.0
    %269 = vmatpush1.xpose.msra.mxu0 0.0
    %270 = vmatprep.subr.mxu0 0.0
    %271 = vmatpush1.xpose.msra.mxu0 0.0
    %272 = vmatprep.subr.mxu0 0.0
    %273 = vmatpush1.xpose.msra.mxu0 0.0
    %274 = vmatprep.subr.mxu0 0.0
    %275 = vmatpush1.xpose.msra.mxu0 0.0
    %276 = vmatprep.subr.mxu0 0.0
    %277 = vmatpush1.xpose.msra.mxu0 0.0
    %278 = vmatprep.subr.mxu0 0.0
    %279 = vmatpush1.xpose.msra.mxu0 0.0
    %280 = vmatprep.subr.mxu0 0.0
    %281 = vmatpush1.xpose.msra.mxu0 0.0
    %282 = vmatprep.subr.mxu0 0.0
    %283 = vmatpush1.xpose.msra.mxu0 0.0
    %284 = vmatprep.subr.mxu0 0.0
    %285 = vmatpush1.xpose.msra.mxu0 0.0
    %286 = vmatprep.subr.mxu0 0.0
    %287 = vmatpush1.xpose.msra.mxu0 0.0
    %288 = vmatprep.subr.mxu0 0.0
    %289 = vmatpush1.xpose.msra.mxu0 0.0
    %290 = vmatprep.subr.mxu0 0.0
    %291 = vmatpush1.xpose.msra.mxu0 0.0
    %292 = vmatprep.subr.mxu0 0.0
    %293 = vmatpush1.xpose.msra.mxu0 0.0
    %294 = vmatprep.subr.mxu0 0.0
    %295 = vmatpush1.xpose.msra.mxu0 0.0
    %296 = vmatprep.subr.mxu0 0.0
    %297 = vmatpush1.xpose.msra.mxu0 0.0
    %298 = vmatprep.subr.mxu0 0.0
    %299 = vmatpush1.xpose.msra.mxu0 0.0
    %300 = vmatprep.subr.mxu0 0.0
    %301 = vmatpush1.xpose.msra.mxu0 0.0
    %302 = vmatprep.subr.mxu0 0.0
    %303 = vmatpush1.xpose.msra.mxu0 0.0
    %304 = vmatprep.subr.mxu0 0.0
    %305 = vmatpush1.xpose.msra.mxu0 0.0
    %306 = vmatprep.subr.mxu0 0.0
    %307 = vmatpush1.xpose.msra.mxu0 0.0
    %308 = vmatprep.subr.mxu0 0.0
    %309 = vmatpush1.xpose.msra.mxu0 0.0
    %310 = vmatprep.subr.mxu0 0.0
    %311 = vmatpush1.xpose.msra.mxu0 0.0
    %312 = vmatprep.subr.mxu0 0.0
    %313 = vmatpush1.xpose.msra.mxu0 0.0
    %314 = vmatprep.subr.mxu0 0.0
    %315 = vmatpush1.xpose.msra.mxu0 0.0
    %316 = vmatprep.subr.mxu0 0.0
    %317 = vmatpush1.xpose.msra.mxu0 0.0
    %318 = vmatprep.subr.mxu0 0.0
    %319 = vmatpush1.xpose.msra.mxu0 0.0
    %320 = vmatprep.subr.mxu0 0.0
    %321 = vmatpush1.xpose.msra.mxu0 0.0
    %322 = vmatprep.subr.mxu0 0.0
    %323 = vmatpush1.xpose.msra.mxu0 0.0
    %324 = vmatprep.mubr.f32.mxu0 0.0
    %325 = vmatmul.mubr.f32.gmra.mrb[0].mxu0 %v256
    %v326 = vpop.f32.mrb[0].mxu0
    %v327 = vadd.f32 0.0, %v326
    %v328 = vpop.f32.mrb[0].mxu0
    %329 = vdwg.mxu0
    %v330 = vmul.f32 %v327, 0.35355338
    %v332 = vlaneseq
    %v333 = vshrl.u32 %v332, 7
    %v334 = vsub.s32 0, %v333
    %v335 = vrot.slane %v251, %v334
    %v337 = vadd.f32 %v330, %v335
    %v338 = vsel %vm255, %v337, -inf
    %339 = vmax.xlane.f32.xlu0 %v338
    %v340 = vpop.xlane.xlu0 %339
    %v341 = vsub.f32 %v337, %v340
    %v342 = vmul.f32 %v341, 1.442695
    %v343 = vpow.pop %v342
    %v344 = vsel %vm255, %v343, 0.0
    %345 = vadd.xlane.f32.xlu0 %v344
    %v346 = vpop.xlane.xlu0 %345
    %v347 = vrcp.pop %v346
    %v348 = vmul.f32 %v343, %v347
    %349 = vrot.lane.b32.xlu0 %v243, 64
    %v350 = vpop.permute.xlu0 %349
    %v353 = vsel %vm255, %v348, 0
    %355 = vmatprep.subr.mxu0 0.0
    %356 = vmatpush1.msra.mxu0 %v350
    %357 = vmatprep.subr.mxu0 0.0
    %358 = vmatpush1.msra.mxu0 0.0
    %359 = vmatprep.subr.mxu0 0.0
    %360 = vmatpush1.msra.mxu0 0.0
    %361 = vmatprep.subr.mxu0 0.0
    %362 = vmatpush1.msra.mxu0 0.0
    %363 = vmatprep.subr.mxu0 0.0
    %364 = vmatpush1.msra.mxu0 0.0
    %365 = vmatprep.subr.mxu0 0.0
    %366 = vmatpush1.msra.mxu0 0.0
    %367 = vmatprep.subr.mxu0 0.0
    %368 = vmatpush1.msra.mxu0 0.0
    %369 = vmatprep.subr.mxu0 0.0
    %370 = vmatpush1.msra.mxu0 0.0
    %371 = vmatprep.subr.mxu0 0.0
    %372 = vmatpush1.msra.mxu0 0.0
    %373 = vmatprep.subr.mxu0 0.0
    %374 = vmatpush1.msra.mxu0 0.0
    %375 = vmatprep.subr.mxu0 0.0
    %376 = vmatpush1.msra.mxu0 0.0
    %377 = vmatprep.subr.mxu0 0.0
    %378 = vmatpush1.msra.mxu0 0.0
    %379 = vmatprep.subr.mxu0 0.0
    %380 = vmatpush1.msra.mxu0 0.0
    %381 = vmatprep.subr.mxu0 0.0
    %382 = vmatpush1.msra.mxu0 0.0
    %383 = vmatprep.subr.mxu0 0.0
    %384 = vmatpush1.msra.mxu0 0.0
    %385 = vmatprep.subr.mxu0 0.0
    %386 = vmatpush1.msra.mxu0 0.0
    %387 = vmatprep.subr.mxu0 0.0
    %388 = vmatpush1.msra.mxu0 0.0
    %389 = vmatprep.subr.mxu0 0.0
    %390 = vmatpush1.msra.mxu0 0.0
    %391 = vmatprep.subr.mxu0 0.0
    %392 = vmatpush1.msra.mxu0 0.0
    %393 = vmatprep.subr.mxu0 0.0
    %394 = vmatpush1.msra.mxu0 0.0
    %395 = vmatprep.subr.mxu0 0.0
    %396 = vmatpush1.msra.mxu0 0.0
    %397 = vmatprep.subr.mxu0 0.0
    %398 = vmatpush1.msra.mxu0 0.0
    %399 = vmatprep.subr.mxu0 0.0
    %400 = vmatpush1.msra.mxu0 0.0
    %401 = vmatprep.subr.mxu0 0.0
    %402 = vmatpush1.msra.mxu0 0.0
    %403 = vmatprep.subr.mxu0 0.0
    %404 = vmatpush1.msra.mxu0 0.0
    %405 = vmatprep.subr.mxu0 0.0
    %406 = vmatpush1.msra.mxu0 0.0
    %407 = vmatprep.subr.mxu0 0.0
    %408 = vmatpush1.msra.mxu0 0.0
    %409 = vmatprep.subr.mxu0 0.0
    %410 = vmatpush1.msra.mxu0 0.0
    %411 = vmatprep.subr.mxu0 0.0
    %412 = vmatpush1.msra.mxu0 0.0
    %413 = vmatprep.subr.mxu0 0.0
    %414 = vmatpush1.msra.mxu0 0.0
    %415 = vmatprep.subr.mxu0 0.0
    %416 = vmatpush1.msra.mxu0 0.0
    %417 = vmatprep.subr.mxu0 0.0
    %418 = vmatpush1.msra.mxu0 0.0
    %419 = vmatprep.mubr.f32.mxu0 0.0
    %420 = vmatmul.mubr.f32.gmra.mrb[0].mxu0 %v353
    %v421 = vpop.f32.mrb[0].mxu0
    %v422 = vadd.f32 0.0, %v421
    %v423 = vpop.f32.mrb[0].mxu0
    %424 = vdwg.mxu0
    %425 = vrot.lane.b32.xlu0 %v243, 120
    %v426 = vpop.permute.xlu0 %425
    %427 = vrot.lane.b32.xlu0 %v243, 88
    %v428 = vpop.permute.xlu0 %427
    %v429 = vsel %vm255, %v426, 0
    %v431 = vsel %vm255, %v428, 0
    %433 = vmatprep.subr.mxu0 0.0
    %434 = vmatpush1.xpose.msra.mxu0 %v431
    %435 = vmatprep.subr.mxu0 0.0
    %436 = vmatpush1.xpose.msra.mxu0 0.0
    %437 = vmatprep.subr.mxu0 0.0
    %438 = vmatpush1.xpose.msra.mxu0 0.0
    %439 = vmatprep.subr.mxu0 0.0
    %440 = vmatpush1.xpose.msra.mxu0 0.0
    %441 = vmatprep.subr.mxu0 0.0
    %442 = vmatpush1.xpose.msra.mxu0 0.0
    %443 = vmatprep.subr.mxu0 0.0
    %444 = vmatpush1.xpose.msra.mxu0 0.0
    %445 = vmatprep.subr.mxu0 0.0
    %446 = vmatpush1.xpose.msra.mxu0 0.0
    %447 = vmatprep.subr.mxu0 0.0
    %448 = vmatpush1.xpose.msra.mxu0 0.0
    %449 = vmatprep.subr.mxu0 0.0
    %450 = vmatpush1.xpose.msra.mxu0 0.0
    %451 = vmatprep.subr.mxu0 0.0
    %452 = vmatpush1.xpose.msra.mxu0 0.0
    %453 = vmatprep.subr.mxu0 0.0
    %454 = vmatpush1.xpose.msra.mxu0 0.0
    %455 = vmatprep.subr.mxu0 0.0
    %456 = vmatpush1.xpose.msra.mxu0 0.0
    %457 = vmatprep.subr.mxu0 0.0
    %458 = vmatpush1.xpose.msra.mxu0 0.0
    %459 = vmatprep.subr.mxu0 0.0
    %460 = vmatpush1.xpose.msra.mxu0 0.0
    %461 = vmatprep.subr.mxu0 0.0
    %462 = vmatpush1.xpose.msra.mxu0 0.0
    %463 = vmatprep.subr.mxu0 0.0
    %464 = vmatpush1.xpose.msra.mxu0 0.0
    %465 = vmatprep.subr.mxu0 0.0
    %466 = vmatpush1.xpose.msra.mxu0 0.0
    %467 = vmatprep.subr.mxu0 0.0
    %468 = vmatpush1.xpose.msra.mxu0 0.0
    %469 = vmatprep.subr.mxu0 0.0
    %470 = vmatpush1.xpose.msra.mxu0 0.0
    %471 = vmatprep.subr.mxu0 0.0
    %472 = vmatpush1.xpose.msra.mxu0 0.0
    %473 = vmatprep.subr.mxu0 0.0
    %474 = vmatpush1.xpose.msra.mxu0 0.0
    %475 = vmatprep.subr.mxu0 0.0
    %476 = vmatpush1.xpose.msra.mxu0 0.0
    %477 = vmatprep.subr.mxu0 0.0
    %478 = vmatpush1.xpose.msra.mxu0 0.0
    %479 = vmatprep.subr.mxu0 0.0
    %480 = vmatpush1.xpose.msra.mxu0 0.0
    %481 = vmatprep.subr.mxu0 0.0
    %482 = vmatpush1.xpose.msra.mxu0 0.0
    %483 = vmatprep.subr.mxu0 0.0
    %484 = vmatpush1.xpose.msra.mxu0 0.0
    %485 = vmatprep.subr.mxu0 0.0
    %486 = vmatpush1.xpose.msra.mxu0 0.0
    %487 = vmatprep.subr.mxu0 0.0
    %488 = vmatpush1.xpose.msra.mxu0 0.0
    %489 = vmatprep.subr.mxu0 0.0
    %490 = vmatpush1.xpose.msra.mxu0 0.0
    %491 = vmatprep.subr.mxu0 0.0
    %492 = vmatpush1.xpose.msra.mxu0 0.0
    %493 = vmatprep.subr.mxu0 0.0
    %494 = vmatpush1.xpose.msra.mxu0 0.0
    %495 = vmatprep.subr.mxu0 0.0
    %496 = vmatpush1.xpose.msra.mxu0 0.0
    %497 = vmatprep.mubr.f32.mxu0 0.0
    %498 = vmatmul.mubr.f32.gmra.mrb[0].mxu0 %v429
    %v499 = vpop.f32.mrb[0].mxu0
    %v500 = vadd.f32 0.0, %v499
    %v501 = vpop.f32.mrb[0].mxu0
    %502 = vdwg.mxu0
    %v503 = vmul.f32 %v500, 0.35355338
    %v504 = vadd.f32 %v503, %v335
    %v505 = vsel %vm255, %v504, -inf
    %506 = vmax.xlane.f32.xlu0 %v505
    %v507 = vpop.xlane.xlu0 %506
    %v508 = vsub.f32 %v504, %v507
    %v509 = vmul.f32 %v508, 1.442695
    %v510 = vpow.pop %v509
    %v511 = vsel %vm255, %v510, 0.0
    %512 = vadd.xlane.f32.xlu0 %v511
    %v513 = vpop.xlane.xlu0 %512
    %v514 = vrcp.pop %v513
    %v515 = vmul.f32 %v510, %v514
    %516 = vrot.lane.b32.xlu0 %v243, 56
    %v517 = vpop.permute.xlu0 %516
    %v520 = vsel %vm255, %v515, 0
    %522 = vmatprep.subr.mxu0 0.0
    %523 = vmatpush1.msra.mxu0 %v517
    %524 = vmatprep.subr.mxu0 0.0
    %525 = vmatpush1.msra.mxu0 0.0
    %526 = vmatprep.subr.mxu0 0.0
    %527 = vmatpush1.msra.mxu0 0.0
    %528 = vmatprep.subr.mxu0 0.0
    %529 = vmatpush1.msra.mxu0 0.0
    %530 = vmatprep.subr.mxu0 0.0
    %531 = vmatpush1.msra.mxu0 0.0
    %532 = vmatprep.subr.mxu0 0.0
    %533 = vmatpush1.msra.mxu0 0.0
    %534 = vmatprep.subr.mxu0 0.0
    %535 = vmatpush1.msra.mxu0 0.0
    %536 = vmatprep.subr.mxu0 0.0
    %537 = vmatpush1.msra.mxu0 0.0
    %538 = vmatprep.subr.mxu0 0.0
    %539 = vmatpush1.msra.mxu0 0.0
    %540 = vmatprep.subr.mxu0 0.0
    %541 = vmatpush1.msra.mxu0 0.0
    %542 = vmatprep.subr.mxu0 0.0
    %543 = vmatpush1.msra.mxu0 0.0
    %544 = vmatprep.subr.mxu0 0.0
    %545 = vmatpush1.msra.mxu0 0.0
    %546 = vmatprep.subr.mxu0 0.0
    %547 = vmatpush1.msra.mxu0 0.0
    %548 = vmatprep.subr.mxu0 0.0
    %549 = vmatpush1.msra.mxu0 0.0
    %550 = vmatprep.subr.mxu0 0.0
    %551 = vmatpush1.msra.mxu0 0.0
    %552 = vmatprep.subr.mxu0 0.0
    %553 = vmatpush1.msra.mxu0 0.0
    %554 = vmatprep.subr.mxu0 0.0
    %555 = vmatpush1.msra.mxu0 0.0
    %556 = vmatprep.subr.mxu0 0.0
    %557 = vmatpush1.msra.mxu0 0.0
    %558 = vmatprep.subr.mxu0 0.0
    %559 = vmatpush1.msra.mxu0 0.0
    %560 = vmatprep.subr.mxu0 0.0
    %561 = vmatpush1.msra.mxu0 0.0
    %562 = vmatprep.subr.mxu0 0.0
    %563 = vmatpush1.msra.mxu0 0.0
    %564 = vmatprep.subr.mxu0 0.0
    %565 = vmatpush1.msra.mxu0 0.0
    %566 = vmatprep.subr.mxu0 0.0
    %567 = vmatpush1.msra.mxu0 0.0
    %568 = vmatprep.subr.mxu0 0.0
    %569 = vmatpush1.msra.mxu0 0.0
    %570 = vmatprep.subr.mxu0 0.0
    %571 = vmatpush1.msra.mxu0 0.0
    %572 = vmatprep.subr.mxu0 0.0
    %573 = vmatpush1.msra.mxu0 0.0
    %574 = vmatprep.subr.mxu0 0.0
    %575 = vmatpush1.msra.mxu0 0.0
    %576 = vmatprep.subr.mxu0 0.0
    %577 = vmatpush1.msra.mxu0 0.0
    %578 = vmatprep.subr.mxu0 0.0
    %579 = vmatpush1.msra.mxu0 0.0
    %580 = vmatprep.subr.mxu0 0.0
    %581 = vmatpush1.msra.mxu0 0.0
    %582 = vmatprep.subr.mxu0 0.0
    %583 = vmatpush1.msra.mxu0 0.0
    %584 = vmatprep.subr.mxu0 0.0
    %585 = vmatpush1.msra.mxu0 0.0
    %586 = vmatprep.mubr.f32.mxu0 0.0
    %587 = vmatmul.mubr.f32.gmra.mrb[0].mxu0 %v520
    %v588 = vpop.f32.mrb[0].mxu0
    %v589 = vadd.f32 0.0, %v588
    %v590 = vpop.f32.mrb[0].mxu0
    %591 = vdwg.mxu0
    %592 = vrot.lane.b32.xlu0 %v243, 112
    %v593 = vpop.permute.xlu0 %592
    %594 = vrot.lane.b32.xlu0 %v243, 80
    %v595 = vpop.permute.xlu0 %594
    %v596 = vsel %vm255, %v593, 0
    %v598 = vsel %vm255, %v595, 0
    %600 = vmatprep.subr.mxu0 0.0
    %601 = vmatpush1.xpose.msra.mxu0 %v598
    %602 = vmatprep.subr.mxu0 0.0
    %603 = vmatpush1.xpose.msra.mxu0 0.0
    %604 = vmatprep.subr.mxu0 0.0
    %605 = vmatpush1.xpose.msra.mxu0 0.0
    %606 = vmatprep.subr.mxu0 0.0
    %607 = vmatpush1.xpose.msra.mxu0 0.0
    %608 = vmatprep.subr.mxu0 0.0
    %609 = vmatpush1.xpose.msra.mxu0 0.0
    %610 = vmatprep.subr.mxu0 0.0
    %611 = vmatpush1.xpose.msra.mxu0 0.0
    %612 = vmatprep.subr.mxu0 0.0
    %613 = vmatpush1.xpose.msra.mxu0 0.0
    %614 = vmatprep.subr.mxu0 0.0
    %615 = vmatpush1.xpose.msra.mxu0 0.0
    %616 = vmatprep.subr.mxu0 0.0
    %617 = vmatpush1.xpose.msra.mxu0 0.0
    %618 = vmatprep.subr.mxu0 0.0
    %619 = vmatpush1.xpose.msra.mxu0 0.0
    %620 = vmatprep.subr.mxu0 0.0
    %621 = vmatpush1.xpose.msra.mxu0 0.0
    %622 = vmatprep.subr.mxu0 0.0
    %623 = vmatpush1.xpose.msra.mxu0 0.0
    %624 = vmatprep.subr.mxu0 0.0
    %625 = vmatpush1.xpose.msra.mxu0 0.0
    %626 = vmatprep.subr.mxu0 0.0
    %627 = vmatpush1.xpose.msra.mxu0 0.0
    %628 = vmatprep.subr.mxu0 0.0
    %629 = vmatpush1.xpose.msra.mxu0 0.0
    %630 = vmatprep.subr.mxu0 0.0
    %631 = vmatpush1.xpose.msra.mxu0 0.0
    %632 = vmatprep.subr.mxu0 0.0
    %633 = vmatpush1.xpose.msra.mxu0 0.0
    %634 = vmatprep.subr.mxu0 0.0
    %635 = vmatpush1.xpose.msra.mxu0 0.0
    %636 = vmatprep.subr.mxu0 0.0
    %637 = vmatpush1.xpose.msra.mxu0 0.0
    %638 = vmatprep.subr.mxu0 0.0
    %639 = vmatpush1.xpose.msra.mxu0 0.0
    %640 = vmatprep.subr.mxu0 0.0
    %641 = vmatpush1.xpose.msra.mxu0 0.0
    %642 = vmatprep.subr.mxu0 0.0
    %643 = vmatpush1.xpose.msra.mxu0 0.0
    %644 = vmatprep.subr.mxu0 0.0
    %645 = vmatpush1.xpose.msra.mxu0 0.0
    %646 = vmatprep.subr.mxu0 0.0
    %647 = vmatpush1.xpose.msra.mxu0 0.0
    %648 = vmatprep.subr.mxu0 0.0
    %649 = vmatpush1.xpose.msra.mxu0 0.0
    %650 = vmatprep.subr.mxu0 0.0
    %651 = vmatpush1.xpose.msra.mxu0 0.0
    %652 = vmatprep.subr.mxu0 0.0
    %653 = vmatpush1.xpose.msra.mxu0 0.0
    %654 = vmatprep.subr.mxu0 0.0
    %655 = vmatpush1.xpose.msra.mxu0 0.0
    %656 = vmatprep.subr.mxu0 0.0
    %657 = vmatpush1.xpose.msra.mxu0 0.0
    %658 = vmatprep.subr.mxu0 0.0
    %659 = vmatpush1.xpose.msra.mxu0 0.0
    %660 = vmatprep.subr.mxu0 0.0
    %661 = vmatpush1.xpose.msra.mxu0 0.0
    %662 = vmatprep.subr.mxu0 0.0
    %663 = vmatpush1.xpose.msra.mxu0 0.0
    %664 = vmatprep.mubr.f32.mxu0 0.0
    %665 = vmatmul.mubr.f32.gmra.mrb[0].mxu0 %v596
    %v666 = vpop.f32.mrb[0].mxu0
    %v667 = vadd.f32 0.0, %v666
    %v668 = vpop.f32.mrb[0].mxu0
    %669 = vdwg.mxu0
    %v670 = vmul.f32 %v667, 0.35355338
    %v671 = vadd.f32 %v670, %v335
    %v672 = vsel %vm255, %v671, -inf
    %673 = vmax.xlane.f32.xlu0 %v672
    %v674 = vpop.xlane.xlu0 %673
    %v675 = vsub.f32 %v671, %v674
    %v676 = vmul.f32 %v675, 1.442695
    %v677 = vpow.pop %v676
    %v678 = vsel %vm255, %v677, 0.0
    %679 = vadd.xlane.f32.xlu0 %v678
    %v680 = vpop.xlane.xlu0 %679
    %v681 = vrcp.pop %v680
    %v682 = vmul.f32 %v677, %v681
    %683 = vrot.lane.b32.xlu0 %v243, 48
    %v684 = vpop.permute.xlu0 %683
    %v687 = vsel %vm255, %v682, 0
    %689 = vmatprep.subr.mxu0 0.0
    %690 = vmatpush1.msra.mxu0 %v684
    %691 = vmatprep.subr.mxu0 0.0
    %692 = vmatpush1.msra.mxu0 0.0
    %693 = vmatprep.subr.mxu0 0.0
    %694 = vmatpush1.msra.mxu0 0.0
    %695 = vmatprep.subr.mxu0 0.0
    %696 = vmatpush1.msra.mxu0 0.0
    %697 = vmatprep.subr.mxu0 0.0
    %698 = vmatpush1.msra.mxu0 0.0
    %699 = vmatprep.subr.mxu0 0.0
    %700 = vmatpush1.msra.mxu0 0.0
    %701 = vmatprep.subr.mxu0 0.0
    %702 = vmatpush1.msra.mxu0 0.0
    %703 = vmatprep.subr.mxu0 0.0
    %704 = vmatpush1.msra.mxu0 0.0
    %705 = vmatprep.subr.mxu0 0.0
    %706 = vmatpush1.msra.mxu0 0.0
    %707 = vmatprep.subr.mxu0 0.0
    %708 = vmatpush1.msra.mxu0 0.0
    %709 = vmatprep.subr.mxu0 0.0
    %710 = vmatpush1.msra.mxu0 0.0
    %711 = vmatprep.subr.mxu0 0.0
    %712 = vmatpush1.msra.mxu0 0.0
    %713 = vmatprep.subr.mxu0 0.0
    %714 = vmatpush1.msra.mxu0 0.0
    %715 = vmatprep.subr.mxu0 0.0
    %716 = vmatpush1.msra.mxu0 0.0
    %717 = vmatprep.subr.mxu0 0.0
    %718 = vmatpush1.msra.mxu0 0.0
    %719 = vmatprep.subr.mxu0 0.0
    %720 = vmatpush1.msra.mxu0 0.0
    %721 = vmatprep.subr.mxu0 0.0
    %722 = vmatpush1.msra.mxu0 0.0
    %723 = vmatprep.subr.mxu0 0.0
    %724 = vmatpush1.msra.mxu0 0.0
    %725 = vmatprep.subr.mxu0 0.0
    %726 = vmatpush1.msra.mxu0 0.0
    %727 = vmatprep.subr.mxu0 0.0
    %728 = vmatpush1.msra.mxu0 0.0
    %729 = vmatprep.subr.mxu0 0.0
    %730 = vmatpush1.msra.mxu0 0.0
    %731 = vmatprep.subr.mxu0 0.0
    %732 = vmatpush1.msra.mxu0 0.0
    %733 = vmatprep.subr.mxu0 0.0
    %734 = vmatpush1.msra.mxu0 0.0
    %735 = vmatprep.subr.mxu0 0.0
    %736 = vmatpush1.msra.mxu0 0.0
    %737 = vmatprep.subr.mxu0 0.0
    %738 = vmatpush1.msra.mxu0 0.0
    %739 = vmatprep.subr.mxu0 0.0
    %740 = vmatpush1.msra.mxu0 0.0
    %741 = vmatprep.subr.mxu0 0.0
    %742 = vmatpush1.msra.mxu0 0.0
    %743 = vmatprep.subr.mxu0 0.0
    %744 = vmatpush1.msra.mxu0 0.0
    %745 = vmatprep.subr.mxu0 0.0
    %746 = vmatpush1.msra.mxu0 0.0
    %747 = vmatprep.subr.mxu0 0.0
    %748 = vmatpush1.msra.mxu0 0.0
    %749 = vmatprep.subr.mxu0 0.0
    %750 = vmatpush1.msra.mxu0 0.0
    %751 = vmatprep.subr.mxu0 0.0
    %752 = vmatpush1.msra.mxu0 0.0
    %753 = vmatprep.mubr.f32.mxu0 0.0
    %754 = vmatmul.mubr.f32.gmra.mrb[0].mxu0 %v687
    %v755 = vpop.f32.mrb[0].mxu0
    %v756 = vadd.f32 0.0, %v755
    %v757 = vpop.f32.mrb[0].mxu0
    %758 = vdwg.mxu0
    %759 = vrot.lane.b32.xlu0 %v243, 104
    %v760 = vpop.permute.xlu0 %759
    %761 = vrot.lane.b32.xlu0 %v243, 72
    %v762 = vpop.permute.xlu0 %761
    %v763 = vsel %vm255, %v760, 0
    %v765 = vsel %vm255, %v762, 0
    %767 = vmatprep.subr.mxu0 0.0
    %768 = vmatpush1.xpose.msra.mxu0 %v765
    %769 = vmatprep.subr.mxu0 0.0
    %770 = vmatpush1.xpose.msra.mxu0 0.0
    %771 = vmatprep.subr.mxu0 0.0
    %772 = vmatpush1.xpose.msra.mxu0 0.0
    %773 = vmatprep.subr.mxu0 0.0
    %774 = vmatpush1.xpose.msra.mxu0 0.0
    %775 = vmatprep.subr.mxu0 0.0
    %776 = vmatpush1.xpose.msra.mxu0 0.0
    %777 = vmatprep.subr.mxu0 0.0
    %778 = vmatpush1.xpose.msra.mxu0 0.0
    %779 = vmatprep.subr.mxu0 0.0
    %780 = vmatpush1.xpose.msra.mxu0 0.0
    %781 = vmatprep.subr.mxu0 0.0
    %782 = vmatpush1.xpose.msra.mxu0 0.0
    %783 = vmatprep.subr.mxu0 0.0
    %784 = vmatpush1.xpose.msra.mxu0 0.0
    %785 = vmatprep.subr.mxu0 0.0
    %786 = vmatpush1.xpose.msra.mxu0 0.0
    %787 = vmatprep.subr.mxu0 0.0
    %788 = vmatpush1.xpose.msra.mxu0 0.0
    %789 = vmatprep.subr.mxu0 0.0
    %790 = vmatpush1.xpose.msra.mxu0 0.0
    %791 = vmatprep.subr.mxu0 0.0
    %792 = vmatpush1.xpose.msra.mxu0 0.0
    %793 = vmatprep.subr.mxu0 0.0
    %794 = vmatpush1.xpose.msra.mxu0 0.0
    %795 = vmatprep.subr.mxu0 0.0
    %796 = vmatpush1.xpose.msra.mxu0 0.0
    %797 = vmatprep.subr.mxu0 0.0
    %798 = vmatpush1.xpose.msra.mxu0 0.0
    %799 = vmatprep.subr.mxu0 0.0
    %800 = vmatpush1.xpose.msra.mxu0 0.0
    %801 = vmatprep.subr.mxu0 0.0
    %802 = vmatpush1.xpose.msra.mxu0 0.0
    %803 = vmatprep.subr.mxu0 0.0
    %804 = vmatpush1.xpose.msra.mxu0 0.0
    %805 = vmatprep.subr.mxu0 0.0
    %806 = vmatpush1.xpose.msra.mxu0 0.0
    %807 = vmatprep.subr.mxu0 0.0
    %808 = vmatpush1.xpose.msra.mxu0 0.0
    %809 = vmatprep.subr.mxu0 0.0
    %810 = vmatpush1.xpose.msra.mxu0 0.0
    %811 = vmatprep.subr.mxu0 0.0
    %812 = vmatpush1.xpose.msra.mxu0 0.0
    %813 = vmatprep.subr.mxu0 0.0
    %814 = vmatpush1.xpose.msra.mxu0 0.0
    %815 = vmatprep.subr.mxu0 0.0
    %816 = vmatpush1.xpose.msra.mxu0 0.0
    %817 = vmatprep.subr.mxu0 0.0
    %818 = vmatpush1.xpose.msra.mxu0 0.0
    %819 = vmatprep.subr.mxu0 0.0
    %820 = vmatpush1.xpose.msra.mxu0 0.0
    %821 = vmatprep.subr.mxu0 0.0
    %822 = vmatpush1.xpose.msra.mxu0 0.0
    %823 = vmatprep.subr.mxu0 0.0
    %824 = vmatpush1.xpose.msra.mxu0 0.0
    %825 = vmatprep.subr.mxu0 0.0
    %826 = vmatpush1.xpose.msra.mxu0 0.0
    %827 = vmatprep.subr.mxu0 0.0
    %828 = vmatpush1.xpose.msra.mxu0 0.0
    %829 = vmatprep.subr.mxu0 0.0
    %830 = vmatpush1.xpose.msra.mxu0 0.0
    %831 = vmatprep.mubr.f32.mxu0 0.0
    %832 = vmatmul.mubr.f32.gmra.mrb[0].mxu0 %v763
    %v833 = vpop.f32.mrb[0].mxu0
    %v834 = vadd.f32 0.0, %v833
    %v835 = vpop.f32.mrb[0].mxu0
    %836 = vdwg.mxu0
    %v837 = vmul.f32 %v834, 0.35355338
    %v838 = vadd.f32 %v837, %v335
    %v839 = vsel %vm255, %v838, -inf
    %840 = vmax.xlane.f32.xlu0 %v839
    %v841 = vpop.xlane.xlu0 %840
    %v842 = vsub.f32 %v838, %v841
    %v843 = vmul.f32 %v842, 1.442695
    %v844 = vpow.pop %v843
    %v845 = vsel %vm255, %v844, 0.0
    %846 = vadd.xlane.f32.xlu0 %v845
    %v847 = vpop.xlane.xlu0 %846
    %v848 = vrcp.pop %v847
    %v849 = vmul.f32 %v844, %v848
    %850 = vrot.lane.b32.xlu0 %v243, 40
    %v851 = vpop.permute.xlu0 %850
    %v854 = vsel %vm255, %v849, 0
    %856 = vmatprep.subr.mxu0 0.0
    %857 = vmatpush1.msra.mxu0 %v851
    %858 = vmatprep.subr.mxu0 0.0
    %859 = vmatpush1.msra.mxu0 0.0
    %860 = vmatprep.subr.mxu0 0.0
    %861 = vmatpush1.msra.mxu0 0.0
    %862 = vmatprep.subr.mxu0 0.0
    %863 = vmatpush1.msra.mxu0 0.0
    %864 = vmatprep.subr.mxu0 0.0
    %865 = vmatpush1.msra.mxu0 0.0
    %866 = vmatprep.subr.mxu0 0.0
    %867 = vmatpush1.msra.mxu0 0.0
    %868 = vmatprep.subr.mxu0 0.0
    %869 = vmatpush1.msra.mxu0 0.0
    %870 = vmatprep.subr.mxu0 0.0
    %871 = vmatpush1.msra.mxu0 0.0
    %872 = vmatprep.subr.mxu0 0.0
    %873 = vmatpush1.msra.mxu0 0.0
    %874 = vmatprep.subr.mxu0 0.0
    %875 = vmatpush1.msra.mxu0 0.0
    %876 = vmatprep.subr.mxu0 0.0
    %877 = vmatpush1.msra.mxu0 0.0
    %878 = vmatprep.subr.mxu0 0.0
    %879 = vmatpush1.msra.mxu0 0.0
    %880 = vmatprep.subr.mxu0 0.0
    %881 = vmatpush1.msra.mxu0 0.0
    %882 = vmatprep.subr.mxu0 0.0
    %883 = vmatpush1.msra.mxu0 0.0
    %884 = vmatprep.subr.mxu0 0.0
    %885 = vmatpush1.msra.mxu0 0.0
    %886 = vmatprep.subr.mxu0 0.0
    %887 = vmatpush1.msra.mxu0 0.0
    %888 = vmatprep.subr.mxu0 0.0
    %889 = vmatpush1.msra.mxu0 0.0
    %890 = vmatprep.subr.mxu0 0.0
    %891 = vmatpush1.msra.mxu0 0.0
    %892 = vmatprep.subr.mxu0 0.0
    %893 = vmatpush1.msra.mxu0 0.0
    %894 = vmatprep.subr.mxu0 0.0
    %895 = vmatpush1.msra.mxu0 0.0
    %896 = vmatprep.subr.mxu0 0.0
    %897 = vmatpush1.msra.mxu0 0.0
    %898 = vmatprep.subr.mxu0 0.0
    %899 = vmatpush1.msra.mxu0 0.0
    %900 = vmatprep.subr.mxu0 0.0
    %901 = vmatpush1.msra.mxu0 0.0
    %902 = vmatprep.subr.mxu0 0.0
    %903 = vmatpush1.msra.mxu0 0.0
    %904 = vmatprep.subr.mxu0 0.0
    %905 = vmatpush1.msra.mxu0 0.0
    %906 = vmatprep.subr.mxu0 0.0
    %907 = vmatpush1.msra.mxu0 0.0
    %908 = vmatprep.subr.mxu0 0.0
    %909 = vmatpush1.msra.mxu0 0.0
    %910 = vmatprep.subr.mxu0 0.0
    %911 = vmatpush1.msra.mxu0 0.0
    %912 = vmatprep.subr.mxu0 0.0
    %913 = vmatpush1.msra.mxu0 0.0
    %914 = vmatprep.subr.mxu0 0.0
    %915 = vmatpush1.msra.mxu0 0.0
    %916 = vmatprep.subr.mxu0 0.0
    %917 = vmatpush1.msra.mxu0 0.0
    %918 = vmatprep.subr.mxu0 0.0
    %919 = vmatpush1.msra.mxu0 0.0
    %920 = vmatprep.mubr.f32.mxu0 0.0
    %921 = vmatmul.mubr.f32.gmra.mrb[0].mxu0 %v854
    %v922 = vpop.f32.mrb[0].mxu0
    %v923 = vadd.f32 0.0, %v922
    %v924 = vpop.f32.mrb[0].mxu0
    %925 = vdwg.mxu0
    %927 = vrot.lane.b32.xlu0 %v589, 8
    %v928 = vpop.permute.xlu0 %927
    %931 = vrot.lane.b32.xlu0 %v756, 16
    %v932 = vpop.permute.xlu0 %931
    %935 = vrot.lane.b32.xlu0 %v923, 24
    %v936 = vpop.permute.xlu0 %935
    %v938 = vsel %vm255, %v422, %v928
    %vm939 = vcmask 130048
    %v940 = vsel %vm939, %v938, %v932
    %vm941 = vcmask 195584
    %v942 = vsel %vm941, %v940, %v936
    %s943 = scalar_lea.vmem %s1, 1
    %v944 = vld [vmem:[%s943] sm:$0x1]
    %946 = vrot.lane.b32.xlu0 %v248, 96
    %v947 = vpop.permute.xlu0 %946
    %v948 = vsel %vm255, %v248, 0
    %v950 = vsel %vm255, %v947, 0
    %952 = vmatprep.subr.mxu0 0.0
    %953 = vmatpush1.xpose.msra.mxu0 %v950
    %954 = vmatprep.subr.mxu0 0.0
    %955 = vmatpush1.xpose.msra.mxu0 0.0
    %956 = vmatprep.subr.mxu0 0.0
    %957 = vmatpush1.xpose.msra.mxu0 0.0
    %958 = vmatprep.subr.mxu0 0.0
    %959 = vmatpush1.xpose.msra.mxu0 0.0
    %960 = vmatprep.subr.mxu0 0.0
    %961 = vmatpush1.xpose.msra.mxu0 0.0
    %962 = vmatprep.subr.mxu0 0.0
    %963 = vmatpush1.xpose.msra.mxu0 0.0
    %964 = vmatprep.subr.mxu0 0.0
    %965 = vmatpush1.xpose.msra.mxu0 0.0
    %966 = vmatprep.subr.mxu0 0.0
    %967 = vmatpush1.xpose.msra.mxu0 0.0
    %968 = vmatprep.subr.mxu0 0.0
    %969 = vmatpush1.xpose.msra.mxu0 0.0
    %970 = vmatprep.subr.mxu0 0.0
    %971 = vmatpush1.xpose.msra.mxu0 0.0
    %972 = vmatprep.subr.mxu0 0.0
    %973 = vmatpush1.xpose.msra.mxu0 0.0
    %974 = vmatprep.subr.mxu0 0.0
    %975 = vmatpush1.xpose.msra.mxu0 0.0
    %976 = vmatprep.subr.mxu0 0.0
    %977 = vmatpush1.xpose.msra.mxu0 0.0
    %978 = vmatprep.subr.mxu0 0.0
    %979 = vmatpush1.xpose.msra.mxu0 0.0
    %980 = vmatprep.subr.mxu0 0.0
    %981 = vmatpush1.xpose.msra.mxu0 0.0
    %982 = vmatprep.subr.mxu0 0.0
    %983 = vmatpush1.xpose.msra.mxu0 0.0
    %984 = vmatprep.subr.mxu0 0.0
    %985 = vmatpush1.xpose.msra.mxu0 0.0
    %986 = vmatprep.subr.mxu0 0.0
    %987 = vmatpush1.xpose.msra.mxu0 0.0
    %988 = vmatprep.subr.mxu0 0.0
    %989 = vmatpush1.xpose.msra.mxu0 0.0
    %990 = vmatprep.subr.mxu0 0.0
    %991 = vmatpush1.xpose.msra.mxu0 0.0
    %992 = vmatprep.subr.mxu0 0.0
    %993 = vmatpush1.xpose.msra.mxu0 0.0
    %994 = vmatprep.subr.mxu0 0.0
    %995 = vmatpush1.xpose.msra.mxu0 0.0
    %996 = vmatprep.subr.mxu0 0.0
    %997 = vmatpush1.xpose.msra.mxu0 0.0
    %998 = vmatprep.subr.mxu0 0.0
    %999 = vmatpush1.xpose.msra.mxu0 0.0
    %1000 = vmatprep.subr.mxu0 0.0
    %1001 = vmatpush1.xpose.msra.mxu0 0.0
    %1002 = vmatprep.subr.mxu0 0.0
    %1003 = vmatpush1.xpose.msra.mxu0 0.0
    %1004 = vmatprep.subr.mxu0 0.0
    %1005 = vmatpush1.xpose.msra.mxu0 0.0
    %1006 = vmatprep.subr.mxu0 0.0
    %1007 = vmatpush1.xpose.msra.mxu0 0.0
    %1008 = vmatprep.subr.mxu0 0.0
    %1009 = vmatpush1.xpose.msra.mxu0 0.0
    %1010 = vmatprep.subr.mxu0 0.0
    %1011 = vmatpush1.xpose.msra.mxu0 0.0
    %1012 = vmatprep.subr.mxu0 0.0
    %1013 = vmatpush1.xpose.msra.mxu0 0.0
    %1014 = vmatprep.subr.mxu0 0.0
    %1015 = vmatpush1.xpose.msra.mxu0 0.0
    %1016 = vmatprep.mubr.f32.mxu0 0.0
    %1017 = vmatmul.mubr.f32.gmra.mrb[0].mxu0 %v948
    %v1018 = vpop.f32.mrb[0].mxu0
    %v1019 = vadd.f32 0.0, %v1018
    %v1020 = vpop.f32.mrb[0].mxu0
    %1021 = vdwg.mxu0
    %v1022 = vmul.f32 %v1019, 0.35355338
    %v1024 = vlaneseq
    %v1025 = vshrl.u32 %v1024, 7
    %v1026 = vsub.s32 0, %v1025
    %v1027 = vrot.slane %v944, %v1026
    %v1029 = vadd.f32 %v1022, %v1027
    %v1030 = vsel %vm255, %v1029, -inf
    %1031 = vmax.xlane.f32.xlu0 %v1030
    %v1032 = vpop.xlane.xlu0 %1031
    %v1033 = vsub.f32 %v1029, %v1032
    %v1034 = vmul.f32 %v1033, 1.442695
    %v1035 = vpow.pop %v1034
    %v1036 = vsel %vm255, %v1035, 0.0
    %1037 = vadd.xlane.f32.xlu0 %v1036
    %v1038 = vpop.xlane.xlu0 %1037
    %v1039 = vrcp.pop %v1038
    %v1040 = vmul.f32 %v1035, %v1039
    %1041 = vrot.lane.b32.xlu0 %v248, 64
    %v1042 = vpop.permute.xlu0 %1041
    %v1045 = vsel %vm255, %v1040, 0
    %1047 = vmatprep.subr.mxu0 0.0
    %1048 = vmatpush1.msra.mxu0 %v1042
    %1049 = vmatprep.subr.mxu0 0.0
    %1050 = vmatpush1.msra.mxu0 0.0
    %1051 = vmatprep.subr.mxu0 0.0
    %1052 = vmatpush1.msra.mxu0 0.0
    %1053 = vmatprep.subr.mxu0 0.0
    %1054 = vmatpush1.msra.mxu0 0.0
    %1055 = vmatprep.subr.mxu0 0.0
    %1056 = vmatpush1.msra.mxu0 0.0
    %1057 = vmatprep.subr.mxu0 0.0
    %1058 = vmatpush1.msra.mxu0 0.0
    %1059 = vmatprep.subr.mxu0 0.0
    %1060 = vmatpush1.msra.mxu0 0.0
    %1061 = vmatprep.subr.mxu0 0.0
    %1062 = vmatpush1.msra.mxu0 0.0
    %1063 = vmatprep.subr.mxu0 0.0
    %1064 = vmatpush1.msra.mxu0 0.0
    %1065 = vmatprep.subr.mxu0 0.0
    %1066 = vmatpush1.msra.mxu0 0.0
    %1067 = vmatprep.subr.mxu0 0.0
    %1068 = vmatpush1.msra.mxu0 0.0
    %1069 = vmatprep.subr.mxu0 0.0
    %1070 = vmatpush1.msra.mxu0 0.0
    %1071 = vmatprep.subr.mxu0 0.0
    %1072 = vmatpush1.msra.mxu0 0.0
    %1073 = vmatprep.subr.mxu0 0.0
    %1074 = vmatpush1.msra.mxu0 0.0
    %1075 = vmatprep.subr.mxu0 0.0
    %1076 = vmatpush1.msra.mxu0 0.0
    %1077 = vmatprep.subr.mxu0 0.0
    %1078 = vmatpush1.msra.mxu0 0.0
    %1079 = vmatprep.subr.mxu0 0.0
    %1080 = vmatpush1.msra.mxu0 0.0
    %1081 = vmatprep.subr.mxu0 0.0
    %1082 = vmatpush1.msra.mxu0 0.0
    %1083 = vmatprep.subr.mxu0 0.0
    %1084 = vmatpush1.msra.mxu0 0.0
    %1085 = vmatprep.subr.mxu0 0.0
    %1086 = vmatpush1.msra.mxu0 0.0
    %1087 = vmatprep.subr.mxu0 0.0
    %1088 = vmatpush1.msra.mxu0 0.0
    %1089 = vmatprep.subr.mxu0 0.0
    %1090 = vmatpush1.msra.mxu0 0.0
    %1091 = vmatprep.subr.mxu0 0.0
    %1092 = vmatpush1.msra.mxu0 0.0
    %1093 = vmatprep.subr.mxu0 0.0
    %1094 = vmatpush1.msra.mxu0 0.0
    %1095 = vmatprep.subr.mxu0 0.0
    %1096 = vmatpush1.msra.mxu0 0.0
    %1097 = vmatprep.subr.mxu0 0.0
    %1098 = vmatpush1.msra.mxu0 0.0
    %1099 = vmatprep.subr.mxu0 0.0
    %1100 = vmatpush1.msra.mxu0 0.0
    %1101 = vmatprep.subr.mxu0 0.0
    %1102 = vmatpush1.msra.mxu0 0.0
    %1103 = vmatprep.subr.mxu0 0.0
    %1104 = vmatpush1.msra.mxu0 0.0
    %1105 = vmatprep.subr.mxu0 0.0
    %1106 = vmatpush1.msra.mxu0 0.0
    %1107 = vmatprep.subr.mxu0 0.0
    %1108 = vmatpush1.msra.mxu0 0.0
    %1109 = vmatprep.subr.mxu0 0.0
    %1110 = vmatpush1.msra.mxu0 0.0
    %1111 = vmatprep.mubr.f32.mxu0 0.0
    %1112 = vmatmul.mubr.f32.gmra.mrb[0].mxu0 %v1045
    %v1113 = vpop.f32.mrb[0].mxu0
    %v1114 = vadd.f32 0.0, %v1113
    %v1115 = vpop.f32.mrb[0].mxu0
    %1116 = vdwg.mxu0
    %1117 = vrot.lane.b32.xlu0 %v248, 120
    %v1118 = vpop.permute.xlu0 %1117
    %1119 = vrot.lane.b32.xlu0 %v248, 88
    %v1120 = vpop.permute.xlu0 %1119
    %v1121 = vsel %vm255, %v1118, 0
    %v1123 = vsel %vm255, %v1120, 0
    %1125 = vmatprep.subr.mxu0 0.0
    %1126 = vmatpush1.xpose.msra.mxu0 %v1123
    %1127 = vmatprep.subr.mxu0 0.0
    %1128 = vmatpush1.xpose.msra.mxu0 0.0
    %1129 = vmatprep.subr.mxu0 0.0
    %1130 = vmatpush1.xpose.msra.mxu0 0.0
    %1131 = vmatprep.subr.mxu0 0.0
    %1132 = vmatpush1.xpose.msra.mxu0 0.0
    %1133 = vmatprep.subr.mxu0 0.0
    %1134 = vmatpush1.xpose.msra.mxu0 0.0
    %1135 = vmatprep.subr.mxu0 0.0
    %1136 = vmatpush1.xpose.msra.mxu0 0.0
    %1137 = vmatprep.subr.mxu0 0.0
    %1138 = vmatpush1.xpose.msra.mxu0 0.0
    %1139 = vmatprep.subr.mxu0 0.0
    %1140 = vmatpush1.xpose.msra.mxu0 0.0
    %1141 = vmatprep.subr.mxu0 0.0
    %1142 = vmatpush1.xpose.msra.mxu0 0.0
    %1143 = vmatprep.subr.mxu0 0.0
    %1144 = vmatpush1.xpose.msra.mxu0 0.0
    %1145 = vmatprep.subr.mxu0 0.0
    %1146 = vmatpush1.xpose.msra.mxu0 0.0
    %1147 = vmatprep.subr.mxu0 0.0
    %1148 = vmatpush1.xpose.msra.mxu0 0.0
    %1149 = vmatprep.subr.mxu0 0.0
    %1150 = vmatpush1.xpose.msra.mxu0 0.0
    %1151 = vmatprep.subr.mxu0 0.0
    %1152 = vmatpush1.xpose.msra.mxu0 0.0
    %1153 = vmatprep.subr.mxu0 0.0
    %1154 = vmatpush1.xpose.msra.mxu0 0.0
    %1155 = vmatprep.subr.mxu0 0.0
    %1156 = vmatpush1.xpose.msra.mxu0 0.0
    %1157 = vmatprep.subr.mxu0 0.0
    %1158 = vmatpush1.xpose.msra.mxu0 0.0
    %1159 = vmatprep.subr.mxu0 0.0
    %1160 = vmatpush1.xpose.msra.mxu0 0.0
    %1161 = vmatprep.subr.mxu0 0.0
    %1162 = vmatpush1.xpose.msra.mxu0 0.0
    %1163 = vmatprep.subr.mxu0 0.0
    %1164 = vmatpush1.xpose.msra.mxu0 0.0
    %1165 = vmatprep.subr.mxu0 0.0
    %1166 = vmatpush1.xpose.msra.mxu0 0.0
    %1167 = vmatprep.subr.mxu0 0.0
    %1168 = vmatpush1.xpose.msra.mxu0 0.0
    %1169 = vmatprep.subr.mxu0 0.0
    %1170 = vmatpush1.xpose.msra.mxu0 0.0
    %1171 = vmatprep.subr.mxu0 0.0
    %1172 = vmatpush1.xpose.msra.mxu0 0.0
    %1173 = vmatprep.subr.mxu0 0.0
    %1174 = vmatpush1.xpose.msra.mxu0 0.0
    %1175 = vmatprep.subr.mxu0 0.0
    %1176 = vmatpush1.xpose.msra.mxu0 0.0
    %1177 = vmatprep.subr.mxu0 0.0
    %1178 = vmatpush1.xpose.msra.mxu0 0.0
    %1179 = vmatprep.subr.mxu0 0.0
    %1180 = vmatpush1.xpose.msra.mxu0 0.0
    %1181 = vmatprep.subr.mxu0 0.0
    %1182 = vmatpush1.xpose.msra.mxu0 0.0
    %1183 = vmatprep.subr.mxu0 0.0
    %1184 = vmatpush1.xpose.msra.mxu0 0.0
    %1185 = vmatprep.subr.mxu0 0.0
    %1186 = vmatpush1.xpose.msra.mxu0 0.0
    %1187 = vmatprep.subr.mxu0 0.0
    %1188 = vmatpush1.xpose.msra.mxu0 0.0
    %1189 = vmatprep.mubr.f32.mxu0 0.0
    %1190 = vmatmul.mubr.f32.gmra.mrb[0].mxu0 %v1121
    %v1191 = vpop.f32.mrb[0].mxu0
    %v1192 = vadd.f32 0.0, %v1191
    %v1193 = vpop.f32.mrb[0].mxu0
    %1194 = vdwg.mxu0
    %v1195 = vmul.f32 %v1192, 0.35355338
    %v1196 = vadd.f32 %v1195, %v1027
    %v1197 = vsel %vm255, %v1196, -inf
    %1198 = vmax.xlane.f32.xlu0 %v1197
    %v1199 = vpop.xlane.xlu0 %1198
    %v1200 = vsub.f32 %v1196, %v1199
    %v1201 = vmul.f32 %v1200, 1.442695
    %v1202 = vpow.pop %v1201
    %v1203 = vsel %vm255, %v1202, 0.0
    %1204 = vadd.xlane.f32.xlu0 %v1203
    %v1205 = vpop.xlane.xlu0 %1204
    %v1206 = vrcp.pop %v1205
    %v1207 = vmul.f32 %v1202, %v1206
    %1208 = vrot.lane.b32.xlu0 %v248, 56
    %v1209 = vpop.permute.xlu0 %1208
    %v1212 = vsel %vm255, %v1207, 0
    %1214 = vmatprep.subr.mxu0 0.0
    %1215 = vmatpush1.msra.mxu0 %v1209
    %1216 = vmatprep.subr.mxu0 0.0
    %1217 = vmatpush1.msra.mxu0 0.0
    %1218 = vmatprep.subr.mxu0 0.0
    %1219 = vmatpush1.msra.mxu0 0.0
    %1220 = vmatprep.subr.mxu0 0.0
    %1221 = vmatpush1.msra.mxu0 0.0
    %1222 = vmatprep.subr.mxu0 0.0
    %1223 = vmatpush1.msra.mxu0 0.0
    %1224 = vmatprep.subr.mxu0 0.0
    %1225 = vmatpush1.msra.mxu0 0.0
    %1226 = vmatprep.subr.mxu0 0.0
    %1227 = vmatpush1.msra.mxu0 0.0
    %1228 = vmatprep.subr.mxu0 0.0
    %1229 = vmatpush1.msra.mxu0 0.0
    %1230 = vmatprep.subr.mxu0 0.0
    %1231 = vmatpush1.msra.mxu0 0.0
    %1232 = vmatprep.subr.mxu0 0.0
    %1233 = vmatpush1.msra.mxu0 0.0
    %1234 = vmatprep.subr.mxu0 0.0
    %1235 = vmatpush1.msra.mxu0 0.0
    %1236 = vmatprep.subr.mxu0 0.0
    %1237 = vmatpush1.msra.mxu0 0.0
    %1238 = vmatprep.subr.mxu0 0.0
    %1239 = vmatpush1.msra.mxu0 0.0
    %1240 = vmatprep.subr.mxu0 0.0
    %1241 = vmatpush1.msra.mxu0 0.0
    %1242 = vmatprep.subr.mxu0 0.0
    %1243 = vmatpush1.msra.mxu0 0.0
    %1244 = vmatprep.subr.mxu0 0.0
    %1245 = vmatpush1.msra.mxu0 0.0
    %1246 = vmatprep.subr.mxu0 0.0
    %1247 = vmatpush1.msra.mxu0 0.0
    %1248 = vmatprep.subr.mxu0 0.0
    %1249 = vmatpush1.msra.mxu0 0.0
    %1250 = vmatprep.subr.mxu0 0.0
    %1251 = vmatpush1.msra.mxu0 0.0
    %1252 = vmatprep.subr.mxu0 0.0
    %1253 = vmatpush1.msra.mxu0 0.0
    %1254 = vmatprep.subr.mxu0 0.0
    %1255 = vmatpush1.msra.mxu0 0.0
    %1256 = vmatprep.subr.mxu0 0.0
    %1257 = vmatpush1.msra.mxu0 0.0
    %1258 = vmatprep.subr.mxu0 0.0
    %1259 = vmatpush1.msra.mxu0 0.0
    %1260 = vmatprep.subr.mxu0 0.0
    %1261 = vmatpush1.msra.mxu0 0.0
    %1262 = vmatprep.subr.mxu0 0.0
    %1263 = vmatpush1.msra.mxu0 0.0
    %1264 = vmatprep.subr.mxu0 0.0
    %1265 = vmatpush1.msra.mxu0 0.0
    %1266 = vmatprep.subr.mxu0 0.0
    %1267 = vmatpush1.msra.mxu0 0.0
    %1268 = vmatprep.subr.mxu0 0.0
    %1269 = vmatpush1.msra.mxu0 0.0
    %1270 = vmatprep.subr.mxu0 0.0
    %1271 = vmatpush1.msra.mxu0 0.0
    %1272 = vmatprep.subr.mxu0 0.0
    %1273 = vmatpush1.msra.mxu0 0.0
    %1274 = vmatprep.subr.mxu0 0.0
    %1275 = vmatpush1.msra.mxu0 0.0
    %1276 = vmatprep.subr.mxu0 0.0
    %1277 = vmatpush1.msra.mxu0 0.0
    %1278 = vmatprep.mubr.f32.mxu0 0.0
    %1279 = vmatmul.mubr.f32.gmra.mrb[0].mxu0 %v1212
    %v1280 = vpop.f32.mrb[0].mxu0
    %v1281 = vadd.f32 0.0, %v1280
    %v1282 = vpop.f32.mrb[0].mxu0
    %1283 = vdwg.mxu0
    %1284 = vrot.lane.b32.xlu0 %v248, 112
    %v1285 = vpop.permute.xlu0 %1284
    %1286 = vrot.lane.b32.xlu0 %v248, 80
    %v1287 = vpop.permute.xlu0 %1286
    %v1288 = vsel %vm255, %v1285, 0
    %v1290 = vsel %vm255, %v1287, 0
    %1292 = vmatprep.subr.mxu0 0.0
    %1293 = vmatpush1.xpose.msra.mxu0 %v1290
    %1294 = vmatprep.subr.mxu0 0.0
    %1295 = vmatpush1.xpose.msra.mxu0 0.0
    %1296 = vmatprep.subr.mxu0 0.0
    %1297 = vmatpush1.xpose.msra.mxu0 0.0
    %1298 = vmatprep.subr.mxu0 0.0
    %1299 = vmatpush1.xpose.msra.mxu0 0.0
    %1300 = vmatprep.subr.mxu0 0.0
    %1301 = vmatpush1.xpose.msra.mxu0 0.0
    %1302 = vmatprep.subr.mxu0 0.0
    %1303 = vmatpush1.xpose.msra.mxu0 0.0
    %1304 = vmatprep.subr.mxu0 0.0
    %1305 = vmatpush1.xpose.msra.mxu0 0.0
    %1306 = vmatprep.subr.mxu0 0.0
    %1307 = vmatpush1.xpose.msra.mxu0 0.0
    %1308 = vmatprep.subr.mxu0 0.0
    %1309 = vmatpush1.xpose.msra.mxu0 0.0
    %1310 = vmatprep.subr.mxu0 0.0
    %1311 = vmatpush1.xpose.msra.mxu0 0.0
    %1312 = vmatprep.subr.mxu0 0.0
    %1313 = vmatpush1.xpose.msra.mxu0 0.0
    %1314 = vmatprep.subr.mxu0 0.0
    %1315 = vmatpush1.xpose.msra.mxu0 0.0
    %1316 = vmatprep.subr.mxu0 0.0
    %1317 = vmatpush1.xpose.msra.mxu0 0.0
    %1318 = vmatprep.subr.mxu0 0.0
    %1319 = vmatpush1.xpose.msra.mxu0 0.0
    %1320 = vmatprep.subr.mxu0 0.0
    %1321 = vmatpush1.xpose.msra.mxu0 0.0
    %1322 = vmatprep.subr.mxu0 0.0
    %1323 = vmatpush1.xpose.msra.mxu0 0.0
    %1324 = vmatprep.subr.mxu0 0.0
    %1325 = vmatpush1.xpose.msra.mxu0 0.0
    %1326 = vmatprep.subr.mxu0 0.0
    %1327 = vmatpush1.xpose.msra.mxu0 0.0
    %1328 = vmatprep.subr.mxu0 0.0
    %1329 = vmatpush1.xpose.msra.mxu0 0.0
    %1330 = vmatprep.subr.mxu0 0.0
    %1331 = vmatpush1.xpose.msra.mxu0 0.0
    %1332 = vmatprep.subr.mxu0 0.0
    %1333 = vmatpush1.xpose.msra.mxu0 0.0
    %1334 = vmatprep.subr.mxu0 0.0
    %1335 = vmatpush1.xpose.msra.mxu0 0.0
    %1336 = vmatprep.subr.mxu0 0.0
    %1337 = vmatpush1.xpose.msra.mxu0 0.0
    %1338 = vmatprep.subr.mxu0 0.0
    %1339 = vmatpush1.xpose.msra.mxu0 0.0
    %1340 = vmatprep.subr.mxu0 0.0
    %1341 = vmatpush1.xpose.msra.mxu0 0.0
    %1342 = vmatprep.subr.mxu0 0.0
    %1343 = vmatpush1.xpose.msra.mxu0 0.0
    %1344 = vmatprep.subr.mxu0 0.0
    %1345 = vmatpush1.xpose.msra.mxu0 0.0
    %1346 = vmatprep.subr.mxu0 0.0
    %1347 = vmatpush1.xpose.msra.mxu0 0.0
    %1348 = vmatprep.subr.mxu0 0.0
    %1349 = vmatpush1.xpose.msra.mxu0 0.0
    %1350 = vmatprep.subr.mxu0 0.0
    %1351 = vmatpush1.xpose.msra.mxu0 0.0
    %1352 = vmatprep.subr.mxu0 0.0
    %1353 = vmatpush1.xpose.msra.mxu0 0.0
    %1354 = vmatprep.subr.mxu0 0.0
    %1355 = vmatpush1.xpose.msra.mxu0 0.0
    %1356 = vmatprep.mubr.f32.mxu0 0.0
    %1357 = vmatmul.mubr.f32.gmra.mrb[0].mxu0 %v1288
    %v1358 = vpop.f32.mrb[0].mxu0
    %v1359 = vadd.f32 0.0, %v1358
    %v1360 = vpop.f32.mrb[0].mxu0
    %1361 = vdwg.mxu0
    %v1362 = vmul.f32 %v1359, 0.35355338
    %v1363 = vadd.f32 %v1362, %v1027
    %v1364 = vsel %vm255, %v1363, -inf
    %1365 = vmax.xlane.f32.xlu0 %v1364
    %v1366 = vpop.xlane.xlu0 %1365
    %v1367 = vsub.f32 %v1363, %v1366
    %v1368 = vmul.f32 %v1367, 1.442695
    %v1369 = vpow.pop %v1368
    %v1370 = vsel %vm255, %v1369, 0.0
    %1371 = vadd.xlane.f32.xlu0 %v1370
    %v1372 = vpop.xlane.xlu0 %1371
    %v1373 = vrcp.pop %v1372
    %v1374 = vmul.f32 %v1369, %v1373
    %1375 = vrot.lane.b32.xlu0 %v248, 48
    %v1376 = vpop.permute.xlu0 %1375
    %v1379 = vsel %vm255, %v1374, 0
    %1381 = vmatprep.subr.mxu0 0.0
    %1382 = vmatpush1.msra.mxu0 %v1376
    %1383 = vmatprep.subr.mxu0 0.0
    %1384 = vmatpush1.msra.mxu0 0.0
    %1385 = vmatprep.subr.mxu0 0.0
    %1386 = vmatpush1.msra.mxu0 0.0
    %1387 = vmatprep.subr.mxu0 0.0
    %1388 = vmatpush1.msra.mxu0 0.0
    %1389 = vmatprep.subr.mxu0 0.0
    %1390 = vmatpush1.msra.mxu0 0.0
    %1391 = vmatprep.subr.mxu0 0.0
    %1392 = vmatpush1.msra.mxu0 0.0
    %1393 = vmatprep.subr.mxu0 0.0
    %1394 = vmatpush1.msra.mxu0 0.0
    %1395 = vmatprep.subr.mxu0 0.0
    %1396 = vmatpush1.msra.mxu0 0.0
    %1397 = vmatprep.subr.mxu0 0.0
    %1398 = vmatpush1.msra.mxu0 0.0
    %1399 = vmatprep.subr.mxu0 0.0
    %1400 = vmatpush1.msra.mxu0 0.0
    %1401 = vmatprep.subr.mxu0 0.0
    %1402 = vmatpush1.msra.mxu0 0.0
    %1403 = vmatprep.subr.mxu0 0.0
    %1404 = vmatpush1.msra.mxu0 0.0
    %1405 = vmatprep.subr.mxu0 0.0
    %1406 = vmatpush1.msra.mxu0 0.0
    %1407 = vmatprep.subr.mxu0 0.0
    %1408 = vmatpush1.msra.mxu0 0.0
    %1409 = vmatprep.subr.mxu0 0.0
    %1410 = vmatpush1.msra.mxu0 0.0
    %1411 = vmatprep.subr.mxu0 0.0
    %1412 = vmatpush1.msra.mxu0 0.0
    %1413 = vmatprep.subr.mxu0 0.0
    %1414 = vmatpush1.msra.mxu0 0.0
    %1415 = vmatprep.subr.mxu0 0.0
    %1416 = vmatpush1.msra.mxu0 0.0
    %1417 = vmatprep.subr.mxu0 0.0
    %1418 = vmatpush1.msra.mxu0 0.0
    %1419 = vmatprep.subr.mxu0 0.0
    %1420 = vmatpush1.msra.mxu0 0.0
    %1421 = vmatprep.subr.mxu0 0.0
    %1422 = vmatpush1.msra.mxu0 0.0
    %1423 = vmatprep.subr.mxu0 0.0
    %1424 = vmatpush1.msra.mxu0 0.0
    %1425 = vmatprep.subr.mxu0 0.0
    %1426 = vmatpush1.msra.mxu0 0.0
    %1427 = vmatprep.subr.mxu0 0.0
    %1428 = vmatpush1.msra.mxu0 0.0
    %1429 = vmatprep.subr.mxu0 0.0
    %1430 = vmatpush1.msra.mxu0 0.0
    %1431 = vmatprep.subr.mxu0 0.0
    %1432 = vmatpush1.msra.mxu0 0.0
    %1433 = vmatprep.subr.mxu0 0.0
    %1434 = vmatpush1.msra.mxu0 0.0
    %1435 = vmatprep.subr.mxu0 0.0
    %1436 = vmatpush1.msra.mxu0 0.0
    %1437 = vmatprep.subr.mxu0 0.0
    %1438 = vmatpush1.msra.mxu0 0.0
    %1439 = vmatprep.subr.mxu0 0.0
    %1440 = vmatpush1.msra.mxu0 0.0
    %1441 = vmatprep.subr.mxu0 0.0
    %1442 = vmatpush1.msra.mxu0 0.0
    %1443 = vmatprep.subr.mxu0 0.0
    %1444 = vmatpush1.msra.mxu0 0.0
    %1445 = vmatprep.mubr.f32.mxu0 0.0
    %1446 = vmatmul.mubr.f32.gmra.mrb[0].mxu0 %v1379
    %v1447 = vpop.f32.mrb[0].mxu0
    %v1448 = vadd.f32 0.0, %v1447
    %v1449 = vpop.f32.mrb[0].mxu0
    %1450 = vdwg.mxu0
    %1451 = vrot.lane.b32.xlu0 %v248, 104
    %v1452 = vpop.permute.xlu0 %1451
    %1453 = vrot.lane.b32.xlu0 %v248, 72
    %v1454 = vpop.permute.xlu0 %1453
    %v1455 = vsel %vm255, %v1452, 0
    %v1457 = vsel %vm255, %v1454, 0
    %1459 = vmatprep.subr.mxu0 0.0
    %1460 = vmatpush1.xpose.msra.mxu0 %v1457
    %1461 = vmatprep.subr.mxu0 0.0
    %1462 = vmatpush1.xpose.msra.mxu0 0.0
    %1463 = vmatprep.subr.mxu0 0.0
    %1464 = vmatpush1.xpose.msra.mxu0 0.0
    %1465 = vmatprep.subr.mxu0 0.0
    %1466 = vmatpush1.xpose.msra.mxu0 0.0
    %1467 = vmatprep.subr.mxu0 0.0
    %1468 = vmatpush1.xpose.msra.mxu0 0.0
    %1469 = vmatprep.subr.mxu0 0.0
    %1470 = vmatpush1.xpose.msra.mxu0 0.0
    %1471 = vmatprep.subr.mxu0 0.0
    %1472 = vmatpush1.xpose.msra.mxu0 0.0
    %1473 = vmatprep.subr.mxu0 0.0
    %1474 = vmatpush1.xpose.msra.mxu0 0.0
    %1475 = vmatprep.subr.mxu0 0.0
    %1476 = vmatpush1.xpose.msra.mxu0 0.0
    %1477 = vmatprep.subr.mxu0 0.0
    %1478 = vmatpush1.xpose.msra.mxu0 0.0
    %1479 = vmatprep.subr.mxu0 0.0
    %1480 = vmatpush1.xpose.msra.mxu0 0.0
    %1481 = vmatprep.subr.mxu0 0.0
    %1482 = vmatpush1.xpose.msra.mxu0 0.0
    %1483 = vmatprep.subr.mxu0 0.0
    %1484 = vmatpush1.xpose.msra.mxu0 0.0
    %1485 = vmatprep.subr.mxu0 0.0
    %1486 = vmatpush1.xpose.msra.mxu0 0.0
    %1487 = vmatprep.subr.mxu0 0.0
    %1488 = vmatpush1.xpose.msra.mxu0 0.0
    %1489 = vmatprep.subr.mxu0 0.0
    %1490 = vmatpush1.xpose.msra.mxu0 0.0
    %1491 = vmatprep.subr.mxu0 0.0
    %1492 = vmatpush1.xpose.msra.mxu0 0.0
    %1493 = vmatprep.subr.mxu0 0.0
    %1494 = vmatpush1.xpose.msra.mxu0 0.0
    %1495 = vmatprep.subr.mxu0 0.0
    %1496 = vmatpush1.xpose.msra.mxu0 0.0
    %1497 = vmatprep.subr.mxu0 0.0
    %1498 = vmatpush1.xpose.msra.mxu0 0.0
    %1499 = vmatprep.subr.mxu0 0.0
    %1500 = vmatpush1.xpose.msra.mxu0 0.0
    %1501 = vmatprep.subr.mxu0 0.0
    %1502 = vmatpush1.xpose.msra.mxu0 0.0
    %1503 = vmatprep.subr.mxu0 0.0
    %1504 = vmatpush1.xpose.msra.mxu0 0.0
    %1505 = vmatprep.subr.mxu0 0.0
    %1506 = vmatpush1.xpose.msra.mxu0 0.0
    %1507 = vmatprep.subr.mxu0 0.0
    %1508 = vmatpush1.xpose.msra.mxu0 0.0
    %1509 = vmatprep.subr.mxu0 0.0
    %1510 = vmatpush1.xpose.msra.mxu0 0.0
    %1511 = vmatprep.subr.mxu0 0.0
    %1512 = vmatpush1.xpose.msra.mxu0 0.0
    %1513 = vmatprep.subr.mxu0 0.0
    %1514 = vmatpush1.xpose.msra.mxu0 0.0
    %1515 = vmatprep.subr.mxu0 0.0
    %1516 = vmatpush1.xpose.msra.mxu0 0.0
    %1517 = vmatprep.subr.mxu0 0.0
    %1518 = vmatpush1.xpose.msra.mxu0 0.0
    %1519 = vmatprep.subr.mxu0 0.0
    %1520 = vmatpush1.xpose.msra.mxu0 0.0
    %1521 = vmatprep.subr.mxu0 0.0
    %1522 = vmatpush1.xpose.msra.mxu0 0.0
    %1523 = vmatprep.mubr.f32.mxu0 0.0
    %1524 = vmatmul.mubr.f32.gmra.mrb[0].mxu0 %v1455
    %v1525 = vpop.f32.mrb[0].mxu0
    %v1526 = vadd.f32 0.0, %v1525
    %v1527 = vpop.f32.mrb[0].mxu0
    %1528 = vdwg.mxu0
    %v1529 = vmul.f32 %v1526, 0.35355338
    %v1530 = vadd.f32 %v1529, %v1027
    %v1531 = vsel %vm255, %v1530, -inf
    %1532 = vmax.xlane.f32.xlu0 %v1531
    %v1533 = vpop.xlane.xlu0 %1532
    %v1534 = vsub.f32 %v1530, %v1533
    %v1535 = vmul.f32 %v1534, 1.442695
    %v1536 = vpow.pop %v1535
    %v1537 = vsel %vm255, %v1536, 0.0
    %1538 = vadd.xlane.f32.xlu0 %v1537
    %v1539 = vpop.xlane.xlu0 %1538
    %v1540 = vrcp.pop %v1539
    %v1541 = vmul.f32 %v1536, %v1540
    %1542 = vrot.lane.b32.xlu0 %v248, 40
    %v1543 = vpop.permute.xlu0 %1542
    %v1546 = vsel %vm255, %v1541, 0
    %1548 = vmatprep.subr.mxu0 0.0
    %1549 = vmatpush1.msra.mxu0 %v1543
    %1550 = vmatprep.subr.mxu0 0.0
    %1551 = vmatpush1.msra.mxu0 0.0
    %1552 = vmatprep.subr.mxu0 0.0
    %1553 = vmatpush1.msra.mxu0 0.0
    %1554 = vmatprep.subr.mxu0 0.0
    %1555 = vmatpush1.msra.mxu0 0.0
    %1556 = vmatprep.subr.mxu0 0.0
    %1557 = vmatpush1.msra.mxu0 0.0
    %1558 = vmatprep.subr.mxu0 0.0
    %1559 = vmatpush1.msra.mxu0 0.0
    %1560 = vmatprep.subr.mxu0 0.0
    %1561 = vmatpush1.msra.mxu0 0.0
    %1562 = vmatprep.subr.mxu0 0.0
    %1563 = vmatpush1.msra.mxu0 0.0
    %1564 = vmatprep.subr.mxu0 0.0
    %1565 = vmatpush1.msra.mxu0 0.0
    %1566 = vmatprep.subr.mxu0 0.0
    %1567 = vmatpush1.msra.mxu0 0.0
    %1568 = vmatprep.subr.mxu0 0.0
    %1569 = vmatpush1.msra.mxu0 0.0
    %1570 = vmatprep.subr.mxu0 0.0
    %1571 = vmatpush1.msra.mxu0 0.0
    %1572 = vmatprep.subr.mxu0 0.0
    %1573 = vmatpush1.msra.mxu0 0.0
    %1574 = vmatprep.subr.mxu0 0.0
    %1575 = vmatpush1.msra.mxu0 0.0
    %1576 = vmatprep.subr.mxu0 0.0
    %1577 = vmatpush1.msra.mxu0 0.0
    %1578 = vmatprep.subr.mxu0 0.0
    %1579 = vmatpush1.msra.mxu0 0.0
    %1580 = vmatprep.subr.mxu0 0.0
    %1581 = vmatpush1.msra.mxu0 0.0
    %1582 = vmatprep.subr.mxu0 0.0
    %1583 = vmatpush1.msra.mxu0 0.0
    %1584 = vmatprep.subr.mxu0 0.0
    %1585 = vmatpush1.msra.mxu0 0.0
    %1586 = vmatprep.subr.mxu0 0.0
    %1587 = vmatpush1.msra.mxu0 0.0
    %1588 = vmatprep.subr.mxu0 0.0
    %1589 = vmatpush1.msra.mxu0 0.0
    %1590 = vmatprep.subr.mxu0 0.0
    %1591 = vmatpush1.msra.mxu0 0.0
    %1592 = vmatprep.subr.mxu0 0.0
    %1593 = vmatpush1.msra.mxu0 0.0
    %1594 = vmatprep.subr.mxu0 0.0
    %1595 = vmatpush1.msra.mxu0 0.0
    %1596 = vmatprep.subr.mxu0 0.0
    %1597 = vmatpush1.msra.mxu0 0.0
    %1598 = vmatprep.subr.mxu0 0.0
    %1599 = vmatpush1.msra.mxu0 0.0
    %1600 = vmatprep.subr.mxu0 0.0
    %1601 = vmatpush1.msra.mxu0 0.0
    %1602 = vmatprep.subr.mxu0 0.0
    %1603 = vmatpush1.msra.mxu0 0.0
    %1604 = vmatprep.subr.mxu0 0.0
    %1605 = vmatpush1.msra.mxu0 0.0
    %1606 = vmatprep.subr.mxu0 0.0
    %1607 = vmatpush1.msra.mxu0 0.0
    %1608 = vmatprep.subr.mxu0 0.0
    %1609 = vmatpush1.msra.mxu0 0.0
    %1610 = vmatprep.subr.mxu0 0.0
    %1611 = vmatpush1.msra.mxu0 0.0
    %1612 = vmatprep.mubr.f32.mxu0 0.0
    %1613 = vmatmul.mubr.f32.gmra.mrb[0].mxu0 %v1546
    %v1614 = vpop.f32.mrb[0].mxu0
    %v1615 = vadd.f32 0.0, %v1614
    %v1616 = vpop.f32.mrb[0].mxu0
    %1617 = vdwg.mxu0
    %1619 = vrot.lane.b32.xlu0 %v1281, 8
    %v1620 = vpop.permute.xlu0 %1619
    %1623 = vrot.lane.b32.xlu0 %v1448, 16
    %v1624 = vpop.permute.xlu0 %1623
    %1627 = vrot.lane.b32.xlu0 %v1615, 24
    %v1628 = vpop.permute.xlu0 %1627
    %v1630 = vsel %vm255, %v1114, %v1620
    %v1631 = vsel %vm939, %v1630, %v1624
    %v1632 = vsel %vm941, %v1631, %v1628
    %v1633 = vld [vmem:[%s6] sm:$0xff]
    %v1634 = vld [vmem:[%s6 + $0x8] sm:$0xff]
    %v1635 = vld [vmem:[%s6 + $0x10] sm:$0xff]
    %v1636 = vld [vmem:[%s6 + $0x18] sm:$0xff]
    %v1637 = vld [vmem:[%s7] sm:$0x1]
    %v1639 = vlaneseq
    %v1640 = vshrl.u32 %v1639, 7
    %v1641 = vsub.s32 0, %v1640
    %v1642 = vrot.slane %v1637, %v1641
    %v1645 = vsel %vm115, %v942, 0
    %v1648 = vsel %vm115, %v1632, 0
    %1650 = vmatprep.subr.mxu0 0.0
    %1651 = vmatpush1.msra.mxu0 %v1633
    %1652 = vmatprep.subr.mxu0 0.0
    %1653 = vmatpush1.msra.mxu0 %v1634
    %1654 = vmatprep.subr.mxu0 0.0
    %1655 = vmatpush1.msra.mxu0 %v1635
    %1656 = vmatprep.subr.mxu0 0.0
    %1657 = vmatpush1.msra.mxu0 %v1636
    %1658 = vmatprep.subr.mxu0 0.0
    %1659 = vmatpush1.msra.mxu0 0.0
    %1660 = vmatprep.subr.mxu0 0.0
    %1661 = vmatpush1.msra.mxu0 0.0
    %1662 = vmatprep.subr.mxu0 0.0
    %1663 = vmatpush1.msra.mxu0 0.0
    %1664 = vmatprep.subr.mxu0 0.0
    %1665 = vmatpush1.msra.mxu0 0.0
    %1666 = vmatprep.subr.mxu0 0.0
    %1667 = vmatpush1.msra.mxu0 0.0
    %1668 = vmatprep.subr.mxu0 0.0
    %1669 = vmatpush1.msra.mxu0 0.0
    %1670 = vmatprep.subr.mxu0 0.0
    %1671 = vmatpush1.msra.mxu0 0.0
    %1672 = vmatprep.subr.mxu0 0.0
    %1673 = vmatpush1.msra.mxu0 0.0
    %1674 = vmatprep.subr.mxu0 0.0
    %1675 = vmatpush1.msra.mxu0 0.0
    %1676 = vmatprep.subr.mxu0 0.0
    %1677 = vmatpush1.msra.mxu0 0.0
    %1678 = vmatprep.subr.mxu0 0.0
    %1679 = vmatpush1.msra.mxu0 0.0
    %1680 = vmatprep.subr.mxu0 0.0
    %1681 = vmatpush1.msra.mxu0 0.0
    %1682 = vmatprep.subr.mxu0 0.0
    %1683 = vmatpush1.msra.mxu0 0.0
    %1684 = vmatprep.subr.mxu0 0.0
    %1685 = vmatpush1.msra.mxu0 0.0
    %1686 = vmatprep.subr.mxu0 0.0
    %1687 = vmatpush1.msra.mxu0 0.0
    %1688 = vmatprep.subr.mxu0 0.0
    %1689 = vmatpush1.msra.mxu0 0.0
    %1690 = vmatprep.subr.mxu0 0.0
    %1691 = vmatpush1.msra.mxu0 0.0
    %1692 = vmatprep.subr.mxu0 0.0
    %1693 = vmatpush1.msra.mxu0 0.0
    %1694 = vmatprep.subr.mxu0 0.0
    %1695 = vmatpush1.msra.mxu0 0.0
    %1696 = vmatprep.subr.mxu0 0.0
    %1697 = vmatpush1.msra.mxu0 0.0
    %1698 = vmatprep.subr.mxu0 0.0
    %1699 = vmatpush1.msra.mxu0 0.0
    %1700 = vmatprep.subr.mxu0 0.0
    %1701 = vmatpush1.msra.mxu0 0.0
    %1702 = vmatprep.subr.mxu0 0.0
    %1703 = vmatpush1.msra.mxu0 0.0
    %1704 = vmatprep.subr.mxu0 0.0
    %1705 = vmatpush1.msra.mxu0 0.0
    %1706 = vmatprep.subr.mxu0 0.0
    %1707 = vmatpush1.msra.mxu0 0.0
    %1708 = vmatprep.subr.mxu0 0.0
    %1709 = vmatpush1.msra.mxu0 0.0
    %1710 = vmatprep.subr.mxu0 0.0
    %1711 = vmatpush1.msra.mxu0 0.0
    %1712 = vmatprep.subr.mxu0 0.0
    %1713 = vmatpush1.msra.mxu0 0.0
    %1714 = vmatprep.mubr.f32.mxu0 0.0
    %1715 = vmatmul.mubr.f32.gmra.mrb[0].mxu0 %v1645
    %v1716 = vpop.f32.mrb[0].mxu0
    %v1717 = vadd.f32 %v1642, %v1716
    %v1718 = vpop.f32.mrb[0].mxu0
    %1719 = vmatprep.mubr.f32.mxu0 0.0
    %1720 = vmatmul.mubr.f32.gmra.mrb[0].mxu0 %v1648
    %v1721 = vpop.f32.mrb[0].mxu0
    %v1722 = vadd.f32 %v1642, %v1721
    %v1723 = vpop.f32.mrb[0].mxu0
    %1724 = vdwg.mxu0
    %v1725 = vadd.f32 %v157, %v1717
    %v1726 = vadd.f32 %v158, %v1722
    %v1727 = vld [vmem:[%s8] sm:$0x1]
    %v1728 = vld [vmem:[%s9] sm:$0x1]
    %v1729 = vsel %vm115, %v1725, 0.0
    %1730 = vadd.xlane.f32.xlu0 %v1729
    %v1731 = vpop.xlane.xlu0 %1730
    %v1732 = vsel %vm115, %v1726, 0.0
    %1733 = vadd.xlane.f32.xlu0 %v1732
    %v1734 = vpop.xlane.xlu0 %1733
    %v1735 = vmul.f32 %v1731, %v122
    %v1736 = vmul.f32 %v1734, %v122
    %v1737 = vsub.f32 %v1725, %v1735
    %v1738 = vsub.f32 %v1726, %v1736
    %v1739 = vmul.f32 %v1737, %v1737
    %v1740 = vmul.f32 %v1738, %v1738
    %v1741 = vsel %vm115, %v1739, 0.0
    %1742 = vadd.xlane.f32.xlu0 %v1741
    %v1743 = vpop.xlane.xlu0 %1742
    %v1744 = vsel %vm115, %v1740, 0.0
    %1745 = vadd.xlane.f32.xlu0 %v1744
    %v1746 = vpop.xlane.xlu0 %1745
    %v1747 = vmul.f32 %v1743, %v122
    %v1748 = vmul.f32 %v1746, %v122
    %v1749 = vadd.f32 %v1747, 1e-12
    %v1750 = vadd.f32 %v1748, 1e-12
    %v1751 = vrsqrt.pop %v1749
    %v1752 = vrsqrt.pop %v1750
    %v1753 = vmul.f32 %v1737, %v1751
    %v1754 = vmul.f32 %v1738, %v1752
    %v1756 = vlaneseq
    %v1757 = vshrl.u32 %v1756, 7
    %v1758 = vsub.s32 0, %v1757
    %v1759 = vrot.slane %v1727, %v1758
    %v1761 = vmul.f32 %v1753, %v1759
    %v1762 = vmul.f32 %v1754, %v1759
    %v1764 = vlaneseq
    %v1765 = vshrl.u32 %v1764, 7
    %v1766 = vsub.s32 0, %v1765
    %v1767 = vrot.slane %v1728, %v1766
    %v1769 = vadd.f32 %v1761, %v1767
    %v1770 = vadd.f32 %v1762, %v1767
    %v1771 = vld [vmem:[%s10] sm:$0xff]
    %v1772 = vld [vmem:[%s10 + $0x8] sm:$0xff]
    %v1773 = vld [vmem:[%s10 + $0x10] sm:$0xff]
    %v1774 = vld [vmem:[%s10 + $0x18] sm:$0xff]
    %v1775 = vld [vmem:[%s11] sm:$0x1]
    %v1777 = vlaneseq
    %v1778 = vshrl.u32 %v1777, 7
    %v1779 = vsub.s32 0, %v1778
    %v1780 = vrot.slane %v1775, %v1779
    %v1783 = vsel %vm115, %v1769, 0
    %v1786 = vsel %vm115, %v1770, 0
    %1788 = vmatprep.subr.mxu0 0.0
    %1789 = vmatpush1.msra.mxu0 %v1771
    %1790 = vmatprep.subr.mxu0 0.0
    %1791 = vmatpush1.msra.mxu0 %v1772
    %1792 = vmatprep.subr.mxu0 0.0
    %1793 = vmatpush1.msra.mxu0 %v1773
    %1794 = vmatprep.subr.mxu0 0.0
    %1795 = vmatpush1.msra.mxu0 %v1774
    %1796 = vmatprep.subr.mxu0 0.0
    %1797 = vmatpush1.msra.mxu0 0.0
    %1798 = vmatprep.subr.mxu0 0.0
    %1799 = vmatpush1.msra.mxu0 0.0
    %1800 = vmatprep.subr.mxu0 0.0
    %1801 = vmatpush1.msra.mxu0 0.0
    %1802 = vmatprep.subr.mxu0 0.0
    %1803 = vmatpush1.msra.mxu0 0.0
    %1804 = vmatprep.subr.mxu0 0.0
    %1805 = vmatpush1.msra.mxu0 0.0
    %1806 = vmatprep.subr.mxu0 0.0
    %1807 = vmatpush1.msra.mxu0 0.0
    %1808 = vmatprep.subr.mxu0 0.0
    %1809 = vmatpush1.msra.mxu0 0.0
    %1810 = vmatprep.subr.mxu0 0.0
    %1811 = vmatpush1.msra.mxu0 0.0
    %1812 = vmatprep.subr.mxu0 0.0
    %1813 = vmatpush1.msra.mxu0 0.0
    %1814 = vmatprep.subr.mxu0 0.0
    %1815 = vmatpush1.msra.mxu0 0.0
    %1816 = vmatprep.subr.mxu0 0.0
    %1817 = vmatpush1.msra.mxu0 0.0
    %1818 = vmatprep.subr.mxu0 0.0
    %1819 = vmatpush1.msra.mxu0 0.0
    %1820 = vmatprep.subr.mxu0 0.0
    %1821 = vmatpush1.msra.mxu0 0.0
    %1822 = vmatprep.subr.mxu0 0.0
    %1823 = vmatpush1.msra.mxu0 0.0
    %1824 = vmatprep.subr.mxu0 0.0
    %1825 = vmatpush1.msra.mxu0 0.0
    %1826 = vmatprep.subr.mxu0 0.0
    %1827 = vmatpush1.msra.mxu0 0.0
    %1828 = vmatprep.subr.mxu0 0.0
    %1829 = vmatpush1.msra.mxu0 0.0
    %1830 = vmatprep.subr.mxu0 0.0
    %1831 = vmatpush1.msra.mxu0 0.0
    %1832 = vmatprep.subr.mxu0 0.0
    %1833 = vmatpush1.msra.mxu0 0.0
    %1834 = vmatprep.subr.mxu0 0.0
    %1835 = vmatpush1.msra.mxu0 0.0
    %1836 = vmatprep.subr.mxu0 0.0
    %1837 = vmatpush1.msra.mxu0 0.0
    %1838 = vmatprep.subr.mxu0 0.0
    %1839 = vmatpush1.msra.mxu0 0.0
    %1840 = vmatprep.subr.mxu0 0.0
    %1841 = vmatpush1.msra.mxu0 0.0
    %1842 = vmatprep.subr.mxu0 0.0
    %1843 = vmatpush1.msra.mxu0 0.0
    %1844 = vmatprep.subr.mxu0 0.0
    %1845 = vmatpush1.msra.mxu0 0.0
    %1846 = vmatprep.subr.mxu0 0.0
    %1847 = vmatpush1.msra.mxu0 0.0
    %1848 = vmatprep.subr.mxu0 0.0
    %1849 = vmatpush1.msra.mxu0 0.0
    %1850 = vmatprep.subr.mxu0 0.0
    %1851 = vmatpush1.msra.mxu0 0.0
    %1852 = vmatprep.mubr.f32.mxu0 0.0
    %1853 = vmatmul.mubr.f32.gmra.mrb[0].mxu0 %v1783
    %v1854 = vpop.f32.mrb[0].mxu0
    %v1855 = vadd.f32 %v1780, %v1854
    %v1856 = vpop.f32.mrb[0].mxu0
    %1857 = vmatprep.mubr.f32.mxu0 0.0
    %1858 = vmatmul.mubr.f32.gmra.mrb[0].mxu0 %v1786
    %v1859 = vpop.f32.mrb[0].mxu0
    %v1860 = vadd.f32 %v1780, %v1859
    %v1861 = vpop.f32.mrb[0].mxu0
    %1862 = vdwg.mxu0
    %v1863 = vmul.f32 %v1855, %v1855
    %v1864 = vmul.f32 %v1860, %v1860
    %v1865 = vmul.f32 %v1855, %v1863
    %v1866 = vmul.f32 %v1860, %v1864
    %v1867 = vmul.f32 %v1865, 0.044715
    %v1868 = vmul.f32 %v1866, 0.044715
    %v1869 = vadd.f32 %v1855, %v1867
    %v1870 = vadd.f32 %v1860, %v1868
    %v1871 = vmul.f32 %v1869, 0.7978846
    %v1872 = vmul.f32 %v1870, 0.7978846
    %v1873 = vtanh.pop %v1871
    %v1874 = vtanh.pop %v1872
    %v1875 = vadd.f32 %v1873, 1.0
    %v1876 = vadd.f32 %v1874, 1.0
    %v1877 = vmul.f32 %v1875, 0.5
    %v1878 = vmul.f32 %v1876, 0.5
    %v1879 = vmul.f32 %v1855, %v1877
    %v1880 = vmul.f32 %v1860, %v1878
    %v1881 = vld [vmem:[%s12] sm:$0xff]
    %v1882 = vld [vmem:[%s12 + $0x8] sm:$0xff]
    %v1883 = vld [vmem:[%s12 + $0x10] sm:$0xff]
    %v1884 = vld [vmem:[%s12 + $0x18] sm:$0xff]
    %v1885 = vld [vmem:[%s12 + $0x20] sm:$0xff]
    %v1886 = vld [vmem:[%s12 + $0x28] sm:$0xff]
    %v1887 = vld [vmem:[%s12 + $0x30] sm:$0xff]
    %v1888 = vld [vmem:[%s12 + $0x38] sm:$0xff]
    %v1889 = vld [vmem:[%s13] sm:$0x1]
    %v1891 = vlaneseq
    %v1892 = vshrl.u32 %v1891, 7
    %v1893 = vsub.s32 0, %v1892
    %v1894 = vrot.slane %v1889, %v1893
    %vm1896 = vcmask 523264
    %v1898 = vsel %vm1896, %v1879, 0
    %v1901 = vsel %vm1896, %v1880, 0
    %1903 = vmatprep.subr.mxu0 0.0
    %1904 = vmatpush1.msra.mxu0 %v1881
    %1905 = vmatprep.subr.mxu0 0.0
    %1906 = vmatpush1.msra.mxu0 %v1882
    %1907 = vmatprep.subr.mxu0 0.0
    %1908 = vmatpush1.msra.mxu0 %v1883
    %1909 = vmatprep.subr.mxu0 0.0
    %1910 = vmatpush1.msra.mxu0 %v1884
    %1911 = vmatprep.subr.mxu0 0.0
    %1912 = vmatpush1.msra.mxu0 %v1885
    %1913 = vmatprep.subr.mxu0 0.0
    %1914 = vmatpush1.msra.mxu0 %v1886
    %1915 = vmatprep.subr.mxu0 0.0
    %1916 = vmatpush1.msra.mxu0 %v1887
    %1917 = vmatprep.subr.mxu0 0.0
    %1918 = vmatpush1.msra.mxu0 %v1888
    %1919 = vmatprep.subr.mxu0 0.0
    %1920 = vmatpush1.msra.mxu0 0.0
    %1921 = vmatprep.subr.mxu0 0.0
    %1922 = vmatpush1.msra.mxu0 0.0
    %1923 = vmatprep.subr.mxu0 0.0
    %1924 = vmatpush1.msra.mxu0 0.0
    %1925 = vmatprep.subr.mxu0 0.0
    %1926 = vmatpush1.msra.mxu0 0.0
    %1927 = vmatprep.subr.mxu0 0.0
    %1928 = vmatpush1.msra.mxu0 0.0
    %1929 = vmatprep.subr.mxu0 0.0
    %1930 = vmatpush1.msra.mxu0 0.0
    %1931 = vmatprep.subr.mxu0 0.0
    %1932 = vmatpush1.msra.mxu0 0.0
    %1933 = vmatprep.subr.mxu0 0.0
    %1934 = vmatpush1.msra.mxu0 0.0
    %1935 = vmatprep.subr.mxu0 0.0
    %1936 = vmatpush1.msra.mxu0 0.0
    %1937 = vmatprep.subr.mxu0 0.0
    %1938 = vmatpush1.msra.mxu0 0.0
    %1939 = vmatprep.subr.mxu0 0.0
    %1940 = vmatpush1.msra.mxu0 0.0
    %1941 = vmatprep.subr.mxu0 0.0
    %1942 = vmatpush1.msra.mxu0 0.0
    %1943 = vmatprep.subr.mxu0 0.0
    %1944 = vmatpush1.msra.mxu0 0.0
    %1945 = vmatprep.subr.mxu0 0.0
    %1946 = vmatpush1.msra.mxu0 0.0
    %1947 = vmatprep.subr.mxu0 0.0
    %1948 = vmatpush1.msra.mxu0 0.0
    %1949 = vmatprep.subr.mxu0 0.0
    %1950 = vmatpush1.msra.mxu0 0.0
    %1951 = vmatprep.subr.mxu0 0.0
    %1952 = vmatpush1.msra.mxu0 0.0
    %1953 = vmatprep.subr.mxu0 0.0
    %1954 = vmatpush1.msra.mxu0 0.0
    %1955 = vmatprep.subr.mxu0 0.0
    %1956 = vmatpush1.msra.mxu0 0.0
    %1957 = vmatprep.subr.mxu0 0.0
    %1958 = vmatpush1.msra.mxu0 0.0
    %1959 = vmatprep.subr.mxu0 0.0
    %1960 = vmatpush1.msra.mxu0 0.0
    %1961 = vmatprep.subr.mxu0 0.0
    %1962 = vmatpush1.msra.mxu0 0.0
    %1963 = vmatprep.subr.mxu0 0.0
    %1964 = vmatpush1.msra.mxu0 0.0
    %1965 = vmatprep.subr.mxu0 0.0
    %1966 = vmatpush1.msra.mxu0 0.0
    %1967 = vmatprep.mubr.f32.mxu0 0.0
    %1968 = vmatmul.mubr.f32.gmra.mrb[0].mxu0 %v1898
    %v1969 = vpop.f32.mrb[0].mxu0
    %v1970 = vadd.f32 %v1894, %v1969
    %v1971 = vpop.f32.mrb[0].mxu0
    %1972 = vmatprep.mubr.f32.mxu0 0.0
    %1973 = vmatmul.mubr.f32.gmra.mrb[0].mxu0 %v1901
    %v1974 = vpop.f32.mrb[0].mxu0
    %v1975 = vadd.f32 %v1894, %v1974
    %v1976 = vpop.f32.mrb[0].mxu0
    %1977 = vdwg.mxu0
    %v1978 = vadd.f32 %v1769, %v1970
    %v1979 = vadd.f32 %v1770, %v1975
    %v1980 = vld [vmem:[%s14] sm:$0x1]
    %v1981 = vld [vmem:[%s15] sm:$0x1]
    %v1982 = vsel %vm115, %v1978, 0.0
    %1983 = vadd.xlane.f32.xlu0 %v1982
    %v1984 = vpop.xlane.xlu0 %1983
    %v1985 = vsel %vm115, %v1979, 0.0
    %1986 = vadd.xlane.f32.xlu0 %v1985
    %v1987 = vpop.xlane.xlu0 %1986
    %v1988 = vmul.f32 %v1984, %v122
    %v1989 = vmul.f32 %v1987, %v122
    %v1990 = vsub.f32 %v1978, %v1988
    %v1991 = vsub.f32 %v1979, %v1989
    %v1992 = vmul.f32 %v1990, %v1990
    %v1993 = vmul.f32 %v1991, %v1991
    %v1994 = vsel %vm115, %v1992, 0.0
    %1995 = vadd.xlane.f32.xlu0 %v1994
    %v1996 = vpop.xlane.xlu0 %1995
    %v1997 = vsel %vm115, %v1993, 0.0
    %1998 = vadd.xlane.f32.xlu0 %v1997
    %v1999 = vpop.xlane.xlu0 %1998
    %v2000 = vmul.f32 %v1996, %v122
    %v2001 = vmul.f32 %v1999, %v122
    %v2002 = vadd.f32 %v2000, 1e-12
    %v2003 = vadd.f32 %v2001, 1e-12
    %v2004 = vrsqrt.pop %v2002
    %v2005 = vrsqrt.pop %v2003
    %v2006 = vmul.f32 %v1990, %v2004
    %v2007 = vmul.f32 %v1991, %v2005
    %v2009 = vlaneseq
    %v2010 = vshrl.u32 %v2009, 7
    %v2011 = vsub.s32 0, %v2010
    %v2012 = vrot.slane %v1980, %v2011
    %v2014 = vmul.f32 %v2006, %v2012
    %v2015 = vmul.f32 %v2007, %v2012
    %v2017 = vlaneseq
    %v2018 = vshrl.u32 %v2017, 7
    %v2019 = vsub.s32 0, %v2018
    %v2020 = vrot.slane %v1981, %v2019
    %v2022 = vadd.f32 %v2014, %v2020
    %v2023 = vadd.f32 %v2015, %v2020
    %s2024 = scalar_lea.vmem %s4, 32
    %v2025 = vld [vmem:[%s2024] sm:$0xff]
    %v2026 = vld [vmem:[%s2024 + $0x8] sm:$0xff]
    %v2027 = vld [vmem:[%s2024 + $0x10] sm:$0xff]
    %v2028 = vld [vmem:[%s2024 + $0x18] sm:$0xff]
    %s2029 = scalar_lea.vmem %s5, 1
    %v2030 = vld [vmem:[%s2029] sm:$0x1]
    %v2032 = vlaneseq
    %v2033 = vshrl.u32 %v2032, 7
    %v2034 = vsub.s32 0, %v2033
    %v2035 = vrot.slane %v2030, %v2034
    %v2038 = vsel %vm115, %v2022, 0
    %v2041 = vsel %vm115, %v2023, 0
    %2043 = vmatprep.subr.mxu0 0.0
    %2044 = vmatpush1.msra.mxu0 %v2025
    %2045 = vmatprep.subr.mxu0 0.0
    %2046 = vmatpush1.msra.mxu0 %v2026
    %2047 = vmatprep.subr.mxu0 0.0
    %2048 = vmatpush1.msra.mxu0 %v2027
    %2049 = vmatprep.subr.mxu0 0.0
    %2050 = vmatpush1.msra.mxu0 %v2028
    %2051 = vmatprep.subr.mxu0 0.0
    %2052 = vmatpush1.msra.mxu0 0.0
    %2053 = vmatprep.subr.mxu0 0.0
    %2054 = vmatpush1.msra.mxu0 0.0
    %2055 = vmatprep.subr.mxu0 0.0
    %2056 = vmatpush1.msra.mxu0 0.0
    %2057 = vmatprep.subr.mxu0 0.0
    %2058 = vmatpush1.msra.mxu0 0.0
    %2059 = vmatprep.subr.mxu0 0.0
    %2060 = vmatpush1.msra.mxu0 0.0
    %2061 = vmatprep.subr.mxu0 0.0
    %2062 = vmatpush1.msra.mxu0 0.0
    %2063 = vmatprep.subr.mxu0 0.0
    %2064 = vmatpush1.msra.mxu0 0.0
    %2065 = vmatprep.subr.mxu0 0.0
    %2066 = vmatpush1.msra.mxu0 0.0
    %2067 = vmatprep.subr.mxu0 0.0
    %2068 = vmatpush1.msra.mxu0 0.0
    %2069 = vmatprep.subr.mxu0 0.0
    %2070 = vmatpush1.msra.mxu0 0.0
    %2071 = vmatprep.subr.mxu0 0.0
    %2072 = vmatpush1.msra.mxu0 0.0
    %2073 = vmatprep.subr.mxu0 0.0
    %2074 = vmatpush1.msra.mxu0 0.0
    %2075 = vmatprep.subr.mxu0 0.0
    %2076 = vmatpush1.msra.mxu0 0.0
    %2077 = vmatprep.subr.mxu0 0.0
    %2078 = vmatpush1.msra.mxu0 0.0
    %2079 = vmatprep.subr.mxu0 0.0
    %2080 = vmatpush1.msra.mxu0 0.0
    %2081 = vmatprep.subr.mxu0 0.0
    %2082 = vmatpush1.msra.mxu0 0.0
    %2083 = vmatprep.subr.mxu0 0.0
    %2084 = vmatpush1.msra.mxu0 0.0
    %2085 = vmatprep.subr.mxu0 0.0
    %2086 = vmatpush1.msra.mxu0 0.0
    %2087 = vmatprep.subr.mxu0 0.0
    %2088 = vmatpush1.msra.mxu0 0.0
    %2089 = vmatprep.subr.mxu0 0.0
    %2090 = vmatpush1.msra.mxu0 0.0
    %2091 = vmatprep.subr.mxu0 0.0
    %2092 = vmatpush1.msra.mxu0 0.0
    %2093 = vmatprep.subr.mxu0 0.0
    %2094 = vmatpush1.msra.mxu0 0.0
    %2095 = vmatprep.subr.mxu0 0.0
    %2096 = vmatpush1.msra.mxu0 0.0
    %2097 = vmatprep.subr.mxu0 0.0
    %2098 = vmatpush1.msra.mxu0 0.0
    %2099 = vmatprep.subr.mxu0 0.0
    %2100 = vmatpush1.msra.mxu0 0.0
    %2101 = vmatprep.subr.mxu0 0.0
    %2102 = vmatpush1.msra.mxu0 0.0
    %2103 = vmatprep.subr.mxu0 0.0
    %2104 = vmatpush1.msra.mxu0 0.0
    %2105 = vmatprep.subr.mxu0 0.0
    %2106 = vmatpush1.msra.mxu0 0.0
    %2107 = vmatprep.mubr.f32.mxu0 0.0
    %2108 = vmatmul.mubr.f32.gmra.mrb[0].mxu0 %v2038
    %v2109 = vpop.f32.mrb[0].mxu0
    %v2110 = vadd.f32 %v2035, %v2109
    %v2111 = vpop.f32.mrb[0].mxu0
    %2112 = vmatprep.mubr.f32.mxu0 0.0
    %2113 = vmatmul.mubr.f32.gmra.mrb[0].mxu0 %v2041
    %v2114 = vpop.f32.mrb[0].mxu0
    %v2115 = vadd.f32 %v2035, %v2114
    %v2116 = vpop.f32.mrb[0].mxu0
    %2117 = vdwg.mxu0
    %2119 = vrot.lane.b32.xlu0 %v2110, 96
    %v2120 = vpop.permute.xlu0 %2119
    %v2121 = vsel %vm255, %v2110, 0
    %v2123 = vsel %vm255, %v2120, 0
    %2125 = vmatprep.subr.mxu0 0.0
    %2126 = vmatpush1.xpose.msra.mxu0 %v2123
    %2127 = vmatprep.subr.mxu0 0.0
    %2128 = vmatpush1.xpose.msra.mxu0 0.0
    %2129 = vmatprep.subr.mxu0 0.0
    %2130 = vmatpush1.xpose.msra.mxu0 0.0
    %2131 = vmatprep.subr.mxu0 0.0
    %2132 = vmatpush1.xpose.msra.mxu0 0.0
    %2133 = vmatprep.subr.mxu0 0.0
    %2134 = vmatpush1.xpose.msra.mxu0 0.0
    %2135 = vmatprep.subr.mxu0 0.0
    %2136 = vmatpush1.xpose.msra.mxu0 0.0
    %2137 = vmatprep.subr.mxu0 0.0
    %2138 = vmatpush1.xpose.msra.mxu0 0.0
    %2139 = vmatprep.subr.mxu0 0.0
    %2140 = vmatpush1.xpose.msra.mxu0 0.0
    %2141 = vmatprep.subr.mxu0 0.0
    %2142 = vmatpush1.xpose.msra.mxu0 0.0
    %2143 = vmatprep.subr.mxu0 0.0
    %2144 = vmatpush1.xpose.msra.mxu0 0.0
    %2145 = vmatprep.subr.mxu0 0.0
    %2146 = vmatpush1.xpose.msra.mxu0 0.0
    %2147 = vmatprep.subr.mxu0 0.0
    %2148 = vmatpush1.xpose.msra.mxu0 0.0
    %2149 = vmatprep.subr.mxu0 0.0
    %2150 = vmatpush1.xpose.msra.mxu0 0.0
    %2151 = vmatprep.subr.mxu0 0.0
    %2152 = vmatpush1.xpose.msra.mxu0 0.0
    %2153 = vmatprep.subr.mxu0 0.0
    %2154 = vmatpush1.xpose.msra.mxu0 0.0
    %2155 = vmatprep.subr.mxu0 0.0
    %2156 = vmatpush1.xpose.msra.mxu0 0.0
    %2157 = vmatprep.subr.mxu0 0.0
    %2158 = vmatpush1.xpose.msra.mxu0 0.0
    %2159 = vmatprep.subr.mxu0 0.0
    %2160 = vmatpush1.xpose.msra.mxu0 0.0
    %2161 = vmatprep.subr.mxu0 0.0
    %2162 = vmatpush1.xpose.msra.mxu0 0.0
    %2163 = vmatprep.subr.mxu0 0.0
    %2164 = vmatpush1.xpose.msra.mxu0 0.0
    %2165 = vmatprep.subr.mxu0 0.0
    %2166 = vmatpush1.xpose.msra.mxu0 0.0
    %2167 = vmatprep.subr.mxu0 0.0
    %2168 = vmatpush1.xpose.msra.mxu0 0.0
    %2169 = vmatprep.subr.mxu0 0.0
    %2170 = vmatpush1.xpose.msra.mxu0 0.0
    %2171 = vmatprep.subr.mxu0 0.0
    %2172 = vmatpush1.xpose.msra.mxu0 0.0
    %2173 = vmatprep.subr.mxu0 0.0
    %2174 = vmatpush1.xpose.msra.mxu0 0.0
    %2175 = vmatprep.subr.mxu0 0.0
    %2176 = vmatpush1.xpose.msra.mxu0 0.0
    %2177 = vmatprep.subr.mxu0 0.0
    %2178 = vmatpush1.xpose.msra.mxu0 0.0
    %2179 = vmatprep.subr.mxu0 0.0
    %2180 = vmatpush1.xpose.msra.mxu0 0.0
    %2181 = vmatprep.subr.mxu0 0.0
    %2182 = vmatpush1.xpose.msra.mxu0 0.0
    %2183 = vmatprep.subr.mxu0 0.0
    %2184 = vmatpush1.xpose.msra.mxu0 0.0
    %2185 = vmatprep.subr.mxu0 0.0
    %2186 = vmatpush1.xpose.msra.mxu0 0.0
    %2187 = vmatprep.subr.mxu0 0.0
    %2188 = vmatpush1.xpose.msra.mxu0 0.0
    %2189 = vmatprep.mubr.f32.mxu0 0.0
    %2190 = vmatmul.mubr.f32.gmra.mrb[0].mxu0 %v2121
    %v2191 = vpop.f32.mrb[0].mxu0
    %v2192 = vadd.f32 0.0, %v2191
    %v2193 = vpop.f32.mrb[0].mxu0
    %2194 = vdwg.mxu0
    %v2195 = vmul.f32 %v2192, 0.35355338
    %v2196 = vadd.f32 %v2195, %v335
    %v2197 = vsel %vm255, %v2196, -inf
    %2198 = vmax.xlane.f32.xlu0 %v2197
    %v2199 = vpop.xlane.xlu0 %2198
    %v2200 = vsub.f32 %v2196, %v2199
    %v2201 = vmul.f32 %v2200, 1.442695
    %v2202 = vpow.pop %v2201
    %v2203 = vsel %vm255, %v2202, 0.0
    %2204 = vadd.xlane.f32.xlu0 %v2203
    %v2205 = vpop.xlane.xlu0 %2204
    %v2206 = vrcp.pop %v2205
    %v2207 = vmul.f32 %v2202, %v2206
    %2208 = vrot.lane.b32.xlu0 %v2110, 64
    %v2209 = vpop.permute.xlu0 %2208
    %v2212 = vsel %vm255, %v2207, 0
    %2214 = vmatprep.subr.mxu0 0.0
    %2215 = vmatpush1.msra.mxu0 %v2209
    %2216 = vmatprep.subr.mxu0 0.0
    %2217 = vmatpush1.msra.mxu0 0.0
    %2218 = vmatprep.subr.mxu0 0.0
    %2219 = vmatpush1.msra.mxu0 0.0
    %2220 = vmatprep.subr.mxu0 0.0
    %2221 = vmatpush1.msra.mxu0 0.0
    %2222 = vmatprep.subr.mxu0 0.0
    %2223 = vmatpush1.msra.mxu0 0.0
    %2224 = vmatprep.subr.mxu0 0.0
    %2225 = vmatpush1.msra.mxu0 0.0
    %2226 = vmatprep.subr.mxu0 0.0
    %2227 = vmatpush1.msra.mxu0 0.0
    %2228 = vmatprep.subr.mxu0 0.0
    %2229 = vmatpush1.msra.mxu0 0.0
    %2230 = vmatprep.subr.mxu0 0.0
    %2231 = vmatpush1.msra.mxu0 0.0
    %2232 = vmatprep.subr.mxu0 0.0
    %2233 = vmatpush1.msra.mxu0 0.0
    %2234 = vmatprep.subr.mxu0 0.0
    %2235 = vmatpush1.msra.mxu0 0.0
    %2236 = vmatprep.subr.mxu0 0.0
    %2237 = vmatpush1.msra.mxu0 0.0
    %2238 = vmatprep.subr.mxu0 0.0
    %2239 = vmatpush1.msra.mxu0 0.0
    %2240 = vmatprep.subr.mxu0 0.0
    %2241 = vmatpush1.msra.mxu0 0.0
    %2242 = vmatprep.subr.mxu0 0.0
    %2243 = vmatpush1.msra.mxu0 0.0
    %2244 = vmatprep.subr.mxu0 0.0
    %2245 = vmatpush1.msra.mxu0 0.0
    %2246 = vmatprep.subr.mxu0 0.0
    %2247 = vmatpush1.msra.mxu0 0.0
    %2248 = vmatprep.subr.mxu0 0.0
    %2249 = vmatpush1.msra.mxu0 0.0
    %2250 = vmatprep.subr.mxu0 0.0
    %2251 = vmatpush1.msra.mxu0 0.0
    %2252 = vmatprep.subr.mxu0 0.0
    %2253 = vmatpush1.msra.mxu0 0.0
    %2254 = vmatprep.subr.mxu0 0.0
    %2255 = vmatpush1.msra.mxu0 0.0
    %2256 = vmatprep.subr.mxu0 0.0
    %2257 = vmatpush1.msra.mxu0 0.0
    %2258 = vmatprep.subr.mxu0 0.0
    %2259 = vmatpush1.msra.mxu0 0.0
    %2260 = vmatprep.subr.mxu0 0.0
    %2261 = vmatpush1.msra.mxu0 0.0
    %2262 = vmatprep.subr.mxu0 0.0
    %2263 = vmatpush1.msra.mxu0 0.0
    %2264 = vmatprep.subr.mxu0 0.0
    %2265 = vmatpush1.msra.mxu0 0.0
    %2266 = vmatprep.subr.mxu0 0.0
    %2267 = vmatpush1.msra.mxu0 0.0
    %2268 = vmatprep.subr.mxu0 0.0
    %2269 = vmatpush1.msra.mxu0 0.0
    %2270 = vmatprep.subr.mxu0 0.0
    %2271 = vmatpush1.msra.mxu0 0.0
    %2272 = vmatprep.subr.mxu0 0.0
    %2273 = vmatpush1.msra.mxu0 0.0
    %2274 = vmatprep.subr.mxu0 0.0
    %2275 = vmatpush1.msra.mxu0 0.0
    %2276 = vmatprep.subr.mxu0 0.0
    %2277 = vmatpush1.msra.mxu0 0.0
    %2278 = vmatprep.mubr.f32.mxu0 0.0
    %2279 = vmatmul.mubr.f32.gmra.mrb[0].mxu0 %v2212
    %v2280 = vpop.f32.mrb[0].mxu0
    %v2281 = vadd.f32 0.0, %v2280
    %v2282 = vpop.f32.mrb[0].mxu0
    %2283 = vdwg.mxu0
    %2284 = vrot.lane.b32.xlu0 %v2110, 120
    %v2285 = vpop.permute.xlu0 %2284
    %2286 = vrot.lane.b32.xlu0 %v2110, 88
    %v2287 = vpop.permute.xlu0 %2286
    %v2288 = vsel %vm255, %v2285, 0
    %v2290 = vsel %vm255, %v2287, 0
    %2292 = vmatprep.subr.mxu0 0.0
    %2293 = vmatpush1.xpose.msra.mxu0 %v2290
    %2294 = vmatprep.subr.mxu0 0.0
    %2295 = vmatpush1.xpose.msra.mxu0 0.0
    %2296 = vmatprep.subr.mxu0 0.0
    %2297 = vmatpush1.xpose.msra.mxu0 0.0
    %2298 = vmatprep.subr.mxu0 0.0
    %2299 = vmatpush1.xpose.msra.mxu0 0.0
    %2300 = vmatprep.subr.mxu0 0.0
    %2301 = vmatpush1.xpose.msra.mxu0 0.0
    %2302 = vmatprep.subr.mxu0 0.0
    %2303 = vmatpush1.xpose.msra.mxu0 0.0
    %2304 = vmatprep.subr.mxu0 0.0
    %2305 = vmatpush1.xpose.msra.mxu0 0.0
    %2306 = vmatprep.subr.mxu0 0.0
    %2307 = vmatpush1.xpose.msra.mxu0 0.0
    %2308 = vmatprep.subr.mxu0 0.0
    %2309 = vmatpush1.xpose.msra.mxu0 0.0
    %2310 = vmatprep.subr.mxu0 0.0
    %2311 = vmatpush1.xpose.msra.mxu0 0.0
    %2312 = vmatprep.subr.mxu0 0.0
    %2313 = vmatpush1.xpose.msra.mxu0 0.0
    %2314 = vmatprep.subr.mxu0 0.0
    %2315 = vmatpush1.xpose.msra.mxu0 0.0
    %2316 = vmatprep.subr.mxu0 0.0
    %2317 = vmatpush1.xpose.msra.mxu0 0.0
    %2318 = vmatprep.subr.mxu0 0.0
    %2319 = vmatpush1.xpose.msra.mxu0 0.0
    %2320 = vmatprep.subr.mxu0 0.0
    %2321 = vmatpush1.xpose.msra.mxu0 0.0
    %2322 = vmatprep.subr.mxu0 0.0
    %2323 = vmatpush1.xpose.msra.mxu0 0.0
    %2324 = vmatprep.subr.mxu0 0.0
    %2325 = vmatpush1.xpose.msra.mxu0 0.0
    %2326 = vmatprep.subr.mxu0 0.0
    %2327 = vmatpush1.xpose.msra.mxu0 0.0
    %2328 = vmatprep.subr.mxu0 0.0
    %2329 = vmatpush1.xpose.msra.mxu0 0.0
    %2330 = vmatprep.subr.mxu0 0.0
    %2331 = vmatpush1.xpose.msra.mxu0 0.0
    %2332 = vmatprep.subr.mxu0 0.0
    %2333 = vmatpush1.xpose.msra.mxu0 0.0
    %2334 = vmatprep.subr.mxu0 0.0
    %2335 = vmatpush1.xpose.msra.mxu0 0.0
    %2336 = vmatprep.subr.mxu0 0.0
    %2337 = vmatpush1.xpose.msra.mxu0 0.0
    %2338 = vmatprep.subr.mxu0 0.0
    %2339 = vmatpush1.xpose.msra.mxu0 0.0
    %2340 = vmatprep.subr.mxu0 0.0
    %2341 = vmatpush1.xpose.msra.mxu0 0.0
    %2342 = vmatprep.subr.mxu0 0.0
    %2343 = vmatpush1.xpose.msra.mxu0 0.0
    %2344 = vmatprep.subr.mxu0 0.0
    %2345 = vmatpush1.xpose.msra.mxu0 0.0
    %2346 = vmatprep.subr.mxu0 0.0
    %2347 = vmatpush1.xpose.msra.mxu0 0.0
    %2348 = vmatprep.subr.mxu0 0.0
    %2349 = vmatpush1.xpose.msra.mxu0 0.0
    %2350 = vmatprep.subr.mxu0 0.0
    %2351 = vmatpush1.xpose.msra.mxu0 0.0
    %2352 = vmatprep.subr.mxu0 0.0
    %2353 = vmatpush1.xpose.msra.mxu0 0.0
    %2354 = vmatprep.subr.mxu0 0.0
    %2355 = vmatpush1.xpose.msra.mxu0 0.0
    %2356 = vmatprep.mubr.f32.mxu0 0.0
    %2357 = vmatmul.mubr.f32.gmra.mrb[0].mxu0 %v2288
    %v2358 = vpop.f32.mrb[0].mxu0
    %v2359 = vadd.f32 0.0, %v2358
    %v2360 = vpop.f32.mrb[0].mxu0
    %2361 = vdwg.mxu0
    %v2362 = vmul.f32 %v2359, 0.35355338
    %v2363 = vadd.f32 %v2362, %v335
    %v2364 = vsel %vm255, %v2363, -inf
    %2365 = vmax.xlane.f32.xlu0 %v2364
    %v2366 = vpop.xlane.xlu0 %2365
    %v2367 = vsub.f32 %v2363, %v2366
    %v2368 = vmul.f32 %v2367, 1.442695
    %v2369 = vpow.pop %v2368
    %v2370 = vsel %vm255, %v2369, 0.0
    %2371 = vadd.xlane.f32.xlu0 %v2370
    %v2372 = vpop.xlane.xlu0 %2371
    %v2373 = vrcp.pop %v2372
    %v2374 = vmul.f32 %v2369, %v2373
    %2375 = vrot.lane.b32.xlu0 %v2110, 56
    %v2376 = vpop.permute.xlu0 %2375
    %v2379 = vsel %vm255, %v2374, 0
    %2381 = vmatprep.subr.mxu0 0.0
    %2382 = vmatpush1.msra.mxu0 %v2376
    %2383 = vmatprep.subr.mxu0 0.0
    %2384 = vmatpush1.msra.mxu0 0.0
    %2385 = vmatprep.subr.mxu0 0.0
    %2386 = vmatpush1.msra.mxu0 0.0
    %2387 = vmatprep.subr.mxu0 0.0
    %2388 = vmatpush1.msra.mxu0 0.0
    %2389 = vmatprep.subr.mxu0 0.0
    %2390 = vmatpush1.msra.mxu0 0.0
    %2391 = vmatprep.subr.mxu0 0.0
    %2392 = vmatpush1.msra.mxu0 0.0
    %2393 = vmatprep.subr.mxu0 0.0
    %2394 = vmatpush1.msra.mxu0 0.0
    %2395 = vmatprep.subr.mxu0 0.0
    %2396 = vmatpush1.msra.mxu0 0.0
    %2397 = vmatprep.subr.mxu0 0.0
    %2398 = vmatpush1.msra.mxu0 0.0
    %2399 = vmatprep.subr.mxu0 0.0
    %2400 = vmatpush1.msra.mxu0 0.0
    %2401 = vmatprep.subr.mxu0 0.0
    %2402 = vmatpush1.msra.mxu0 0.0
    %2403 = vmatprep.subr.mxu0 0.0
    %2404 = vmatpush1.msra.mxu0 0.0
    %2405 = vmatprep.subr.mxu0 0.0
    %2406 = vmatpush1.msra.mxu0 0.0
    %2407 = vmatprep.subr.mxu0 0.0
    %2408 = vmatpush1.msra.mxu0 0.0
    %2409 = vmatprep.subr.mxu0 0.0
    %2410 = vmatpush1.msra.mxu0 0.0
    %2411 = vmatprep.subr.mxu0 0.0
    %2412 = vmatpush1.msra.mxu0 0.0
    %2413 = vmatprep.subr.mxu0 0.0
    %2414 = vmatpush1.msra.mxu0 0.0
    %2415 = vmatprep.subr.mxu0 0.0
    %2416 = vmatpush1.msra.mxu0 0.0
    %2417 = vmatprep.subr.mxu0 0.0
    %2418 = vmatpush1.msra.mxu0 0.0
    %2419 = vmatprep.subr.mxu0 0.0
    %2420 = vmatpush1.msra.mxu0 0.0
    %2421 = vmatprep.subr.mxu0 0.0
    %2422 = vmatpush1.msra.mxu0 0.0
    %2423 = vmatprep.subr.mxu0 0.0
    %2424 = vmatpush1.msra.mxu0 0.0
    %2425 = vmatprep.subr.mxu0 0.0
    %2426 = vmatpush1.msra.mxu0 0.0
    %2427 = vmatprep.subr.mxu0 0.0
    %2428 = vmatpush1.msra.mxu0 0.0
    %2429 = vmatprep.subr.mxu0 0.0
    %2430 = vmatpush1.msra.mxu0 0.0
    %2431 = vmatprep.subr.mxu0 0.0
    %2432 = vmatpush1.msra.mxu0 0.0
    %2433 = vmatprep.subr.mxu0 0.0
    %2434 = vmatpush1.msra.mxu0 0.0
    %2435 = vmatprep.subr.mxu0 0.0
    %2436 = vmatpush1.msra.mxu0 0.0
    %2437 = vmatprep.subr.mxu0 0.0
    %2438 = vmatpush1.msra.mxu0 0.0
    %2439 = vmatprep.subr.mxu0 0.0
    %2440 = vmatpush1.msra.mxu0 0.0
    %2441 = vmatprep.subr.mxu0 0.0
    %2442 = vmatpush1.msra.mxu0 0.0
    %2443 = vmatprep.subr.mxu0 0.0
    %2444 = vmatpush1.msra.mxu0 0.0
    %2445 = vmatprep.mubr.f32.mxu0 0.0
    %2446 = vmatmul.mubr.f32.gmra.mrb[0].mxu0 %v2379
    %v2447 = vpop.f32.mrb[0].mxu0
    %v2448 = vadd.f32 0.0, %v2447
    %v2449 = vpop.f32.mrb[0].mxu0
    %2450 = vdwg.mxu0
    %2451 = vrot.lane.b32.xlu0 %v2110, 112
    %v2452 = vpop.permute.xlu0 %2451
    %2453 = vrot.lane.b32.xlu0 %v2110, 80
    %v2454 = vpop.permute.xlu0 %2453
    %v2455 = vsel %vm255, %v2452, 0
    %v2457 = vsel %vm255, %v2454, 0
    %2459 = vmatprep.subr.mxu0 0.0
    %2460 = vmatpush1.xpose.msra.mxu0 %v2457
    %2461 = vmatprep.subr.mxu0 0.0
    %2462 = vmatpush1.xpose.msra.mxu0 0.0
    %2463 = vmatprep.subr.mxu0 0.0
    %2464 = vmatpush1.xpose.msra.mxu0 0.0
    %2465 = vmatprep.subr.mxu0 0.0
    %2466 = vmatpush1.xpose.msra.mxu0 0.0
    %2467 = vmatprep.subr.mxu0 0.0
    %2468 = vmatpush1.xpose.msra.mxu0 0.0
    %2469 = vmatprep.subr.mxu0 0.0
    %2470 = vmatpush1.xpose.msra.mxu0 0.0
    %2471 = vmatprep.subr.mxu0 0.0
    %2472 = vmatpush1.xpose.msra.mxu0 0.0
    %2473 = vmatprep.subr.mxu0 0.0
    %2474 = vmatpush1.xpose.msra.mxu0 0.0
    %2475 = vmatprep.subr.mxu0 0.0
    %2476 = vmatpush1.xpose.msra.mxu0 0.0
    %2477 = vmatprep.subr.mxu0 0.0
    %2478 = vmatpush1.xpose.msra.mxu0 0.0
    %2479 = vmatprep.subr.mxu0 0.0
    %2480 = vmatpush1.xpose.msra.mxu0 0.0
    %2481 = vmatprep.subr.mxu0 0.0
    %2482 = vmatpush1.xpose.msra.mxu0 0.0
    %2483 = vmatprep.subr.mxu0 0.0
    %2484 = vmatpush1.xpose.msra.mxu0 0.0
    %2485 = vmatprep.subr.mxu0 0.0
    %2486 = vmatpush1.xpose.msra.mxu0 0.0
    %2487 = vmatprep.subr.mxu0 0.0
    %2488 = vmatpush1.xpose.msra.mxu0 0.0
    %2489 = vmatprep.subr.mxu0 0.0
    %2490 = vmatpush1.xpose.msra.mxu0 0.0
    %2491 = vmatprep.subr.mxu0 0.0
    %2492 = vmatpush1.xpose.msra.mxu0 0.0
    %2493 = vmatprep.subr.mxu0 0.0
    %2494 = vmatpush1.xpose.msra.mxu0 0.0
    %2495 = vmatprep.subr.mxu0 0.0
    %2496 = vmatpush1.xpose.msra.mxu0 0.0
    %2497 = vmatprep.subr.mxu0 0.0
    %2498 = vmatpush1.xpose.msra.mxu0 0.0
    %2499 = vmatprep.subr.mxu0 0.0
    %2500 = vmatpush1.xpose.msra.mxu0 0.0
    %2501 = vmatprep.subr.mxu0 0.0
    %2502 = vmatpush1.xpose.msra.mxu0 0.0
    %2503 = vmatprep.subr.mxu0 0.0
    %2504 = vmatpush1.xpose.msra.mxu0 0.0
    %2505 = vmatprep.subr.mxu0 0.0
    %2506 = vmatpush1.xpose.msra.mxu0 0.0
    %2507 = vmatprep.subr.mxu0 0.0
    %2508 = vmatpush1.xpose.msra.mxu0 0.0
    %2509 = vmatprep.subr.mxu0 0.0
    %2510 = vmatpush1.xpose.msra.mxu0 0.0
    %2511 = vmatprep.subr.mxu0 0.0
    %2512 = vmatpush1.xpose.msra.mxu0 0.0
    %2513 = vmatprep.subr.mxu0 0.0
    %2514 = vmatpush1.xpose.msra.mxu0 0.0
    %2515 = vmatprep.subr.mxu0 0.0
    %2516 = vmatpush1.xpose.msra.mxu0 0.0
    %2517 = vmatprep.subr.mxu0 0.0
    %2518 = vmatpush1.xpose.msra.mxu0 0.0
    %2519 = vmatprep.subr.mxu0 0.0
    %2520 = vmatpush1.xpose.msra.mxu0 0.0
    %2521 = vmatprep.subr.mxu0 0.0
    %2522 = vmatpush1.xpose.msra.mxu0 0.0
    %2523 = vmatprep.mubr.f32.mxu0 0.0
    %2524 = vmatmul.mubr.f32.gmra.mrb[0].mxu0 %v2455
    %v2525 = vpop.f32.mrb[0].mxu0
    %v2526 = vadd.f32 0.0, %v2525
    %v2527 = vpop.f32.mrb[0].mxu0
    %2528 = vdwg.mxu0
    %v2529 = vmul.f32 %v2526, 0.35355338
    %v2530 = vadd.f32 %v2529, %v335
    %v2531 = vsel %vm255, %v2530, -inf
    %2532 = vmax.xlane.f32.xlu0 %v2531
    %v2533 = vpop.xlane.xlu0 %2532
    %v2534 = vsub.f32 %v2530, %v2533
    %v2535 = vmul.f32 %v2534, 1.442695
    %v2536 = vpow.pop %v2535
    %v2537 = vsel %vm255, %v2536, 0.0
    %2538 = vadd.xlane.f32.xlu0 %v2537
    %v2539 = vpop.xlane.xlu0 %2538
    %v2540 = vrcp.pop %v2539
    %v2541 = vmul.f32 %v2536, %v2540
    %2542 = vrot.lane.b32.xlu0 %v2110, 48
    %v2543 = vpop.permute.xlu0 %2542
    %v2546 = vsel %vm255, %v2541, 0
    %2548 = vmatprep.subr.mxu0 0.0
    %2549 = vmatpush1.msra.mxu0 %v2543
    %2550 = vmatprep.subr.mxu0 0.0
    %2551 = vmatpush1.msra.mxu0 0.0
    %2552 = vmatprep.subr.mxu0 0.0
    %2553 = vmatpush1.msra.mxu0 0.0
    %2554 = vmatprep.subr.mxu0 0.0
    %2555 = vmatpush1.msra.mxu0 0.0
    %2556 = vmatprep.subr.mxu0 0.0
    %2557 = vmatpush1.msra.mxu0 0.0
    %2558 = vmatprep.subr.mxu0 0.0
    %2559 = vmatpush1.msra.mxu0 0.0
    %2560 = vmatprep.subr.mxu0 0.0
    %2561 = vmatpush1.msra.mxu0 0.0
    %2562 = vmatprep.subr.mxu0 0.0
    %2563 = vmatpush1.msra.mxu0 0.0
    %2564 = vmatprep.subr.mxu0 0.0
    %2565 = vmatpush1.msra.mxu0 0.0
    %2566 = vmatprep.subr.mxu0 0.0
    %2567 = vmatpush1.msra.mxu0 0.0
    %2568 = vmatprep.subr.mxu0 0.0
    %2569 = vmatpush1.msra.mxu0 0.0
    %2570 = vmatprep.subr.mxu0 0.0
    %2571 = vmatpush1.msra.mxu0 0.0
    %2572 = vmatprep.subr.mxu0 0.0
    %2573 = vmatpush1.msra.mxu0 0.0
    %2574 = vmatprep.subr.mxu0 0.0
    %2575 = vmatpush1.msra.mxu0 0.0
    %2576 = vmatprep.subr.mxu0 0.0
    %2577 = vmatpush1.msra.mxu0 0.0
    %2578 = vmatprep.subr.mxu0 0.0
    %2579 = vmatpush1.msra.mxu0 0.0
    %2580 = vmatprep.subr.mxu0 0.0
    %2581 = vmatpush1.msra.mxu0 0.0
    %2582 = vmatprep.subr.mxu0 0.0
    %2583 = vmatpush1.msra.mxu0 0.0
    %2584 = vmatprep.subr.mxu0 0.0
    %2585 = vmatpush1.msra.mxu0 0.0
    %2586 = vmatprep.subr.mxu0 0.0
    %2587 = vmatpush1.msra.mxu0 0.0
    %2588 = vmatprep.subr.mxu0 0.0
    %2589 = vmatpush1.msra.mxu0 0.0
    %2590 = vmatprep.subr.mxu0 0.0
    %2591 = vmatpush1.msra.mxu0 0.0
    %2592 = vmatprep.subr.mxu0 0.0
    %2593 = vmatpush1.msra.mxu0 0.0
    %2594 = vmatprep.subr.mxu0 0.0
    %2595 = vmatpush1.msra.mxu0 0.0
    %2596 = vmatprep.subr.mxu0 0.0
    %2597 = vmatpush1.msra.mxu0 0.0
    %2598 = vmatprep.subr.mxu0 0.0
    %2599 = vmatpush1.msra.mxu0 0.0
    %2600 = vmatprep.subr.mxu0 0.0
    %2601 = vmatpush1.msra.mxu0 0.0
    %2602 = vmatprep.subr.mxu0 0.0
    %2603 = vmatpush1.msra.mxu0 0.0
    %2604 = vmatprep.subr.mxu0 0.0
    %2605 = vmatpush1.msra.mxu0 0.0
    %2606 = vmatprep.subr.mxu0 0.0
    %2607 = vmatpush1.msra.mxu0 0.0
    %2608 = vmatprep.subr.mxu0 0.0
    %2609 = vmatpush1.msra.mxu0 0.0
    %2610 = vmatprep.subr.mxu0 0.0
    %2611 = vmatpush1.msra.mxu0 0.0
    %2612 = vmatprep.mubr.f32.mxu0 0.0
    %2613 = vmatmul.mubr.f32.gmra.mrb[0].mxu0 %v2546
    %v2614 = vpop.f32.mrb[0].mxu0
    %v2615 = vadd.f32 0.0, %v2614
    %v2616 = vpop.f32.mrb[0].mxu0
    %2617 = vdwg.mxu0
    %2618 = vrot.lane.b32.xlu0 %v2110, 104
    %v2619 = vpop.permute.xlu0 %2618
    %2620 = vrot.lane.b32.xlu0 %v2110, 72
    %v2621 = vpop.permute.xlu0 %2620
    %v2622 = vsel %vm255, %v2619, 0
    %v2624 = vsel %vm255, %v2621, 0
    %2626 = vmatprep.subr.mxu0 0.0
    %2627 = vmatpush1.xpose.msra.mxu0 %v2624
    %2628 = vmatprep.subr.mxu0 0.0
    %2629 = vmatpush1.xpose.msra.mxu0 0.0
    %2630 = vmatprep.subr.mxu0 0.0
    %2631 = vmatpush1.xpose.msra.mxu0 0.0
    %2632 = vmatprep.subr.mxu0 0.0
    %2633 = vmatpush1.xpose.msra.mxu0 0.0
    %2634 = vmatprep.subr.mxu0 0.0
    %2635 = vmatpush1.xpose.msra.mxu0 0.0
    %2636 = vmatprep.subr.mxu0 0.0
    %2637 = vmatpush1.xpose.msra.mxu0 0.0
    %2638 = vmatprep.subr.mxu0 0.0
    %2639 = vmatpush1.xpose.msra.mxu0 0.0
    %2640 = vmatprep.subr.mxu0 0.0
    %2641 = vmatpush1.xpose.msra.mxu0 0.0
    %2642 = vmatprep.subr.mxu0 0.0
    %2643 = vmatpush1.xpose.msra.mxu0 0.0
    %2644 = vmatprep.subr.mxu0 0.0
    %2645 = vmatpush1.xpose.msra.mxu0 0.0
    %2646 = vmatprep.subr.mxu0 0.0
    %2647 = vmatpush1.xpose.msra.mxu0 0.0
    %2648 = vmatprep.subr.mxu0 0.0
    %2649 = vmatpush1.xpose.msra.mxu0 0.0
    %2650 = vmatprep.subr.mxu0 0.0
    %2651 = vmatpush1.xpose.msra.mxu0 0.0
    %2652 = vmatprep.subr.mxu0 0.0
    %2653 = vmatpush1.xpose.msra.mxu0 0.0
    %2654 = vmatprep.subr.mxu0 0.0
    %2655 = vmatpush1.xpose.msra.mxu0 0.0
    %2656 = vmatprep.subr.mxu0 0.0
    %2657 = vmatpush1.xpose.msra.mxu0 0.0
    %2658 = vmatprep.subr.mxu0 0.0
    %2659 = vmatpush1.xpose.msra.mxu0 0.0
    %2660 = vmatprep.subr.mxu0 0.0
    %2661 = vmatpush1.xpose.msra.mxu0 0.0
    %2662 = vmatprep.subr.mxu0 0.0
    %2663 = vmatpush1.xpose.msra.mxu0 0.0
    %2664 = vmatprep.subr.mxu0 0.0
    %2665 = vmatpush1.xpose.msra.mxu0 0.0
    %2666 = vmatprep.subr.mxu0 0.0
    %2667 = vmatpush1.xpose.msra.mxu0 0.0
    %2668 = vmatprep.subr.mxu0 0.0
    %2669 = vmatpush1.xpose.msra.mxu0 0.0
    %2670 = vmatprep.subr.mxu0 0.0
    %2671 = vmatpush1.xpose.msra.mxu0 0.0
    %2672 = vmatprep.subr.mxu0 0.0
    %2673 = vmatpush1.xpose.msra.mxu0 0.0
    %2674 = vmatprep.subr.mxu0 0.0
    %2675 = vmatpush1.xpose.msra.mxu0 0.0
    %2676 = vmatprep.subr.mxu0 0.0
    %2677 = vmatpush1.xpose.msra.mxu0 0.0
    %2678 = vmatprep.subr.mxu0 0.0
    %2679 = vmatpush1.xpose.msra.mxu0 0.0
    %2680 = vmatprep.subr.mxu0 0.0
    %2681 = vmatpush1.xpose.msra.mxu0 0.0
    %2682 = vmatprep.subr.mxu0 0.0
    %2683 = vmatpush1.xpose.msra.mxu0 0.0
    %2684 = vmatprep.subr.mxu0 0.0
    %2685 = vmatpush1.xpose.msra.mxu0 0.0
    %2686 = vmatprep.subr.mxu0 0.0
    %2687 = vmatpush1.xpose.msra.mxu0 0.0
    %2688 = vmatprep.subr.mxu0 0.0
    %2689 = vmatpush1.xpose.msra.mxu0 0.0
    %2690 = vmatprep.mubr.f32.mxu0 0.0
    %2691 = vmatmul.mubr.f32.gmra.mrb[0].mxu0 %v2622
    %v2692 = vpop.f32.mrb[0].mxu0
    %v2693 = vadd.f32 0.0, %v2692
    %v2694 = vpop.f32.mrb[0].mxu0
    %2695 = vdwg.mxu0
    %v2696 = vmul.f32 %v2693, 0.35355338
    %v2697 = vadd.f32 %v2696, %v335
    %v2698 = vsel %vm255, %v2697, -inf
    %2699 = vmax.xlane.f32.xlu0 %v2698
    %v2700 = vpop.xlane.xlu0 %2699
    %v2701 = vsub.f32 %v2697, %v2700
    %v2702 = vmul.f32 %v2701, 1.442695
    %v2703 = vpow.pop %v2702
    %v2704 = vsel %vm255, %v2703, 0.0
    %2705 = vadd.xlane.f32.xlu0 %v2704
    %v2706 = vpop.xlane.xlu0 %2705
    %v2707 = vrcp.pop %v2706
    %v2708 = vmul.f32 %v2703, %v2707
    %2709 = vrot.lane.b32.xlu0 %v2110, 40
    %v2710 = vpop.permute.xlu0 %2709
    %v2713 = vsel %vm255, %v2708, 0
    %2715 = vmatprep.subr.mxu0 0.0
    %2716 = vmatpush1.msra.mxu0 %v2710
    %2717 = vmatprep.subr.mxu0 0.0
    %2718 = vmatpush1.msra.mxu0 0.0
    %2719 = vmatprep.subr.mxu0 0.0
    %2720 = vmatpush1.msra.mxu0 0.0
    %2721 = vmatprep.subr.mxu0 0.0
    %2722 = vmatpush1.msra.mxu0 0.0
    %2723 = vmatprep.subr.mxu0 0.0
    %2724 = vmatpush1.msra.mxu0 0.0
    %2725 = vmatprep.subr.mxu0 0.0
    %2726 = vmatpush1.msra.mxu0 0.0
    %2727 = vmatprep.subr.mxu0 0.0
    %2728 = vmatpush1.msra.mxu0 0.0
    %2729 = vmatprep.subr.mxu0 0.0
    %2730 = vmatpush1.msra.mxu0 0.0
    %2731 = vmatprep.subr.mxu0 0.0
    %2732 = vmatpush1.msra.mxu0 0.0
    %2733 = vmatprep.subr.mxu0 0.0
    %2734 = vmatpush1.msra.mxu0 0.0
    %2735 = vmatprep.subr.mxu0 0.0
    %2736 = vmatpush1.msra.mxu0 0.0
    %2737 = vmatprep.subr.mxu0 0.0
    %2738 = vmatpush1.msra.mxu0 0.0
    %2739 = vmatprep.subr.mxu0 0.0
    %2740 = vmatpush1.msra.mxu0 0.0
    %2741 = vmatprep.subr.mxu0 0.0
    %2742 = vmatpush1.msra.mxu0 0.0
    %2743 = vmatprep.subr.mxu0 0.0
    %2744 = vmatpush1.msra.mxu0 0.0
    %2745 = vmatprep.subr.mxu0 0.0
    %2746 = vmatpush1.msra.mxu0 0.0
    %2747 = vmatprep.subr.mxu0 0.0
    %2748 = vmatpush1.msra.mxu0 0.0
    %2749 = vmatprep.subr.mxu0 0.0
    %2750 = vmatpush1.msra.mxu0 0.0
    %2751 = vmatprep.subr.mxu0 0.0
    %2752 = vmatpush1.msra.mxu0 0.0
    %2753 = vmatprep.subr.mxu0 0.0
    %2754 = vmatpush1.msra.mxu0 0.0
    %2755 = vmatprep.subr.mxu0 0.0
    %2756 = vmatpush1.msra.mxu0 0.0
    %2757 = vmatprep.subr.mxu0 0.0
    %2758 = vmatpush1.msra.mxu0 0.0
    %2759 = vmatprep.subr.mxu0 0.0
    %2760 = vmatpush1.msra.mxu0 0.0
    %2761 = vmatprep.subr.mxu0 0.0
    %2762 = vmatpush1.msra.mxu0 0.0
    %2763 = vmatprep.subr.mxu0 0.0
    %2764 = vmatpush1.msra.mxu0 0.0
    %2765 = vmatprep.subr.mxu0 0.0
    %2766 = vmatpush1.msra.mxu0 0.0
    %2767 = vmatprep.subr.mxu0 0.0
    %2768 = vmatpush1.msra.mxu0 0.0
    %2769 = vmatprep.subr.mxu0 0.0
    %2770 = vmatpush1.msra.mxu0 0.0
    %2771 = vmatprep.subr.mxu0 0.0
    %2772 = vmatpush1.msra.mxu0 0.0
    %2773 = vmatprep.subr.mxu0 0.0
    %2774 = vmatpush1.msra.mxu0 0.0
    %2775 = vmatprep.subr.mxu0 0.0
    %2776 = vmatpush1.msra.mxu0 0.0
    %2777 = vmatprep.subr.mxu0 0.0
    %2778 = vmatpush1.msra.mxu0 0.0
    %2779 = vmatprep.mubr.f32.mxu0 0.0
    %2780 = vmatmul.mubr.f32.gmra.mrb[0].mxu0 %v2713
    %v2781 = vpop.f32.mrb[0].mxu0
    %v2782 = vadd.f32 0.0, %v2781
    %v2783 = vpop.f32.mrb[0].mxu0
    %2784 = vdwg.mxu0
    %2786 = vrot.lane.b32.xlu0 %v2448, 8
    %v2787 = vpop.permute.xlu0 %2786
    %2790 = vrot.lane.b32.xlu0 %v2615, 16
    %v2791 = vpop.permute.xlu0 %2790
    %2794 = vrot.lane.b32.xlu0 %v2782, 24
    %v2795 = vpop.permute.xlu0 %2794
    %v2797 = vsel %vm255, %v2281, %v2787
    %v2798 = vsel %vm939, %v2797, %v2791
    %v2799 = vsel %vm941, %v2798, %v2795
    %2801 = vrot.lane.b32.xlu0 %v2115, 96
    %v2802 = vpop.permute.xlu0 %2801
    %v2803 = vsel %vm255, %v2115, 0
    %v2805 = vsel %vm255, %v2802, 0
    %2807 = vmatprep.subr.mxu0 0.0
    %2808 = vmatpush1.xpose.msra.mxu0 %v2805
    %2809 = vmatprep.subr.mxu0 0.0
    %2810 = vmatpush1.xpose.msra.mxu0 0.0
    %2811 = vmatprep.subr.mxu0 0.0
    %2812 = vmatpush1.xpose.msra.mxu0 0.0
    %2813 = vmatprep.subr.mxu0 0.0
    %2814 = vmatpush1.xpose.msra.mxu0 0.0
    %2815 = vmatprep.subr.mxu0 0.0
    %2816 = vmatpush1.xpose.msra.mxu0 0.0
    %2817 = vmatprep.subr.mxu0 0.0
    %2818 = vmatpush1.xpose.msra.mxu0 0.0
    %2819 = vmatprep.subr.mxu0 0.0
    %2820 = vmatpush1.xpose.msra.mxu0 0.0
    %2821 = vmatprep.subr.mxu0 0.0
    %2822 = vmatpush1.xpose.msra.mxu0 0.0
    %2823 = vmatprep.subr.mxu0 0.0
    %2824 = vmatpush1.xpose.msra.mxu0 0.0
    %2825 = vmatprep.subr.mxu0 0.0
    %2826 = vmatpush1.xpose.msra.mxu0 0.0
    %2827 = vmatprep.subr.mxu0 0.0
    %2828 = vmatpush1.xpose.msra.mxu0 0.0
    %2829 = vmatprep.subr.mxu0 0.0
    %2830 = vmatpush1.xpose.msra.mxu0 0.0
    %2831 = vmatprep.subr.mxu0 0.0
    %2832 = vmatpush1.xpose.msra.mxu0 0.0
    %2833 = vmatprep.subr.mxu0 0.0
    %2834 = vmatpush1.xpose.msra.mxu0 0.0
    %2835 = vmatprep.subr.mxu0 0.0
    %2836 = vmatpush1.xpose.msra.mxu0 0.0
    %2837 = vmatprep.subr.mxu0 0.0
    %2838 = vmatpush1.xpose.msra.mxu0 0.0
    %2839 = vmatprep.subr.mxu0 0.0
    %2840 = vmatpush1.xpose.msra.mxu0 0.0
    %2841 = vmatprep.subr.mxu0 0.0
    %2842 = vmatpush1.xpose.msra.mxu0 0.0
    %2843 = vmatprep.subr.mxu0 0.0
    %2844 = vmatpush1.xpose.msra.mxu0 0.0
    %2845 = vmatprep.subr.mxu0 0.0
    %2846 = vmatpush1.xpose.msra.mxu0 0.0
    %2847 = vmatprep.subr.mxu0 0.0
    %2848 = vmatpush1.xpose.msra.mxu0 0.0
    %2849 = vmatprep.subr.mxu0 0.0
    %2850 = vmatpush1.xpose.msra.mxu0 0.0
    %2851 = vmatprep.subr.mxu0 0.0
    %2852 = vmatpush1.xpose.msra.mxu0 0.0
    %2853 = vmatprep.subr.mxu0 0.0
    %2854 = vmatpush1.xpose.msra.mxu0 0.0
    %2855 = vmatprep.subr.mxu0 0.0
    %2856 = vmatpush1.xpose.msra.mxu0 0.0
    %2857 = vmatprep.subr.mxu0 0.0
    %2858 = vmatpush1.xpose.msra.mxu0 0.0
    %2859 = vmatprep.subr.mxu0 0.0
    %2860 = vmatpush1.xpose.msra.mxu0 0.0
    %2861 = vmatprep.subr.mxu0 0.0
    %2862 = vmatpush1.xpose.msra.mxu0 0.0
    %2863 = vmatprep.subr.mxu0 0.0
    %2864 = vmatpush1.xpose.msra.mxu0 0.0
    %2865 = vmatprep.subr.mxu0 0.0
    %2866 = vmatpush1.xpose.msra.mxu0 0.0
    %2867 = vmatprep.subr.mxu0 0.0
    %2868 = vmatpush1.xpose.msra.mxu0 0.0
    %2869 = vmatprep.subr.mxu0 0.0
    %2870 = vmatpush1.xpose.msra.mxu0 0.0
    %2871 = vmatprep.mubr.f32.mxu0 0.0
    %2872 = vmatmul.mubr.f32.gmra.mrb[0].mxu0 %v2803
    %v2873 = vpop.f32.mrb[0].mxu0
    %v2874 = vadd.f32 0.0, %v2873
    %v2875 = vpop.f32.mrb[0].mxu0
    %2876 = vdwg.mxu0
    %v2877 = vmul.f32 %v2874, 0.35355338
    %v2878 = vadd.f32 %v2877, %v1027
    %v2879 = vsel %vm255, %v2878, -inf
    %2880 = vmax.xlane.f32.xlu0 %v2879
    %v2881 = vpop.xlane.xlu0 %2880
    %v2882 = vsub.f32 %v2878, %v2881
    %v2883 = vmul.f32 %v2882, 1.442695
    %v2884 = vpow.pop %v2883
    %v2885 = vsel %vm255, %v2884, 0.0
    %2886 = vadd.xlane.f32.xlu0 %v2885
    %v2887 = vpop.xlane.xlu0 %2886
    %v2888 = vrcp.pop %v2887
    %v2889 = vmul.f32 %v2884, %v2888
    %2890 = vrot.lane.b32.xlu0 %v2115, 64
    %v2891 = vpop.permute.xlu0 %2890
    %v2894 = vsel %vm255, %v2889, 0
    %2896 = vmatprep.subr.mxu0 0.0
    %2897 = vmatpush1.msra.mxu0 %v2891
    %2898 = vmatprep.subr.mxu0 0.0
    %2899 = vmatpush1.msra.mxu0 0.0
    %2900 = vmatprep.subr.mxu0 0.0
    %2901 = vmatpush1.msra.mxu0 0.0
    %2902 = vmatprep.subr.mxu0 0.0
    %2903 = vmatpush1.msra.mxu0 0.0
    %2904 = vmatprep.subr.mxu0 0.0
    %2905 = vmatpush1.msra.mxu0 0.0
    %2906 = vmatprep.subr.mxu0 0.0
    %2907 = vmatpush1.msra.mxu0 0.0
    %2908 = vmatprep.subr.mxu0 0.0
    %2909 = vmatpush1.msra.mxu0 0.0
    %2910 = vmatprep.subr.mxu0 0.0
    %2911 = vmatpush1.msra.mxu0 0.0
    %2912 = vmatprep.subr.mxu0 0.0
    %2913 = vmatpush1.msra.mxu0 0.0
    %2914 = vmatprep.subr.mxu0 0.0
    %2915 = vmatpush1.msra.mxu0 0.0
    %2916 = vmatprep.subr.mxu0 0.0
    %2917 = vmatpush1.msra.mxu0 0.0
    %2918 = vmatprep.subr.mxu0 0.0
    %2919 = vmatpush1.msra.mxu0 0.0
    %2920 = vmatprep.subr.mxu0 0.0
    %2921 = vmatpush1.msra.mxu0 0.0
    %2922 = vmatprep.subr.mxu0 0.0
    %2923 = vmatpush1.msra.mxu0 0.0
    %2924 = vmatprep.subr.mxu0 0.0
    %2925 = vmatpush1.msra.mxu0 0.0
    %2926 = vmatprep.subr.mxu0 0.0
    %2927 = vmatpush1.msra.mxu0 0.0
    %2928 = vmatprep.subr.mxu0 0.0
    %2929 = vmatpush1.msra.mxu0 0.0
    %2930 = vmatprep.subr.mxu0 0.0
    %2931 = vmatpush1.msra.mxu0 0.0
    %2932 = vmatprep.subr.mxu0 0.0
    %2933 = vmatpush1.msra.mxu0 0.0
    %2934 = vmatprep.subr.mxu0 0.0
    %2935 = vmatpush1.msra.mxu0 0.0
    %2936 = vmatprep.subr.mxu0 0.0
    %2937 = vmatpush1.msra.mxu0 0.0
    %2938 = vmatprep.subr.mxu0 0.0
    %2939 = vmatpush1.msra.mxu0 0.0
    %2940 = vmatprep.subr.mxu0 0.0
    %2941 = vmatpush1.msra.mxu0 0.0
    %2942 = vmatprep.subr.mxu0 0.0
    %2943 = vmatpush1.msra.mxu0 0.0
    %2944 = vmatprep.subr.mxu0 0.0
    %2945 = vmatpush1.msra.mxu0 0.0
    %2946 = vmatprep.subr.mxu0 0.0
    %2947 = vmatpush1.msra.mxu0 0.0
    %2948 = vmatprep.subr.mxu0 0.0
    %2949 = vmatpush1.msra.mxu0 0.0
    %2950 = vmatprep.subr.mxu0 0.0
    %2951 = vmatpush1.msra.mxu0 0.0
    %2952 = vmatprep.subr.mxu0 0.0
    %2953 = vmatpush1.msra.mxu0 0.0
    %2954 = vmatprep.subr.mxu0 0.0
    %2955 = vmatpush1.msra.mxu0 0.0
    %2956 = vmatprep.subr.mxu0 0.0
    %2957 = vmatpush1.msra.mxu0 0.0
    %2958 = vmatprep.subr.mxu0 0.0
    %2959 = vmatpush1.msra.mxu0 0.0
    %2960 = vmatprep.mubr.f32.mxu0 0.0
    %2961 = vmatmul.mubr.f32.gmra.mrb[0].mxu0 %v2894
    %v2962 = vpop.f32.mrb[0].mxu0
    %v2963 = vadd.f32 0.0, %v2962
    %v2964 = vpop.f32.mrb[0].mxu0
    %2965 = vdwg.mxu0
    %2966 = vrot.lane.b32.xlu0 %v2115, 120
    %v2967 = vpop.permute.xlu0 %2966
    %2968 = vrot.lane.b32.xlu0 %v2115, 88
    %v2969 = vpop.permute.xlu0 %2968
    %v2970 = vsel %vm255, %v2967, 0
    %v2972 = vsel %vm255, %v2969, 0
    %2974 = vmatprep.subr.mxu0 0.0
    %2975 = vmatpush1.xpose.msra.mxu0 %v2972
    %2976 = vmatprep.subr.mxu0 0.0
    %2977 = vmatpush1.xpose.msra.mxu0 0.0
    %2978 = vmatprep.subr.mxu0 0.0
    %2979 = vmatpush1.xpose.msra.mxu0 0.0
    %2980 = vmatprep.subr.mxu0 0.0
    %2981 = vmatpush1.xpose.msra.mxu0 0.0
    %2982 = vmatprep.subr.mxu0 0.0
    %2983 = vmatpush1.xpose.msra.mxu0 0.0
    %2984 = vmatprep.subr.mxu0 0.0
    %2985 = vmatpush1.xpose.msra.mxu0 0.0
    %2986 = vmatprep.subr.mxu0 0.0
    %2987 = vmatpush1.xpose.msra.mxu0 0.0
    %2988 = vmatprep.subr.mxu0 0.0
    %2989 = vmatpush1.xpose.msra.mxu0 0.0
    %2990 = vmatprep.subr.mxu0 0.0
    %2991 = vmatpush1.xpose.msra.mxu0 0.0
    %2992 = vmatprep.subr.mxu0 0.0
    %2993 = vmatpush1.xpose.msra.mxu0 0.0
    %2994 = vmatprep.subr.mxu0 0.0
    %2995 = vmatpush1.xpose.msra.mxu0 0.0
    %2996 = vmatprep.subr.mxu0 0.0
    %2997 = vmatpush1.xpose.msra.mxu0 0.0
    %2998 = vmatprep.subr.mxu0 0.0
    %2999 = vmatpush1.xpose.msra.mxu0 0.0
    %3000 = vmatprep.subr.mxu0 0.0
    %3001 = vmatpush1.xpose.msra.mxu0 0.0
    %3002 = vmatprep.subr.mxu0 0.0
    %3003 = vmatpush1.xpose.msra.mxu0 0.0
    %3004 = vmatprep.subr.mxu0 0.0
    %3005 = vmatpush1.xpose.msra.mxu0 0.0
    %3006 = vmatprep.subr.mxu0 0.0
    %3007 = vmatpush1.xpose.msra.mxu0 0.0
    %3008 = vmatprep.subr.mxu0 0.0
    %3009 = vmatpush1.xpose.msra.mxu0 0.0
    %3010 = vmatprep.subr.mxu0 0.0
    %3011 = vmatpush1.xpose.msra.mxu0 0.0
    %3012 = vmatprep.subr.mxu0 0.0
    %3013 = vmatpush1.xpose.msra.mxu0 0.0
    %3014 = vmatprep.subr.mxu0 0.0
    %3015 = vmatpush1.xpose.msra.mxu0 0.0
    %3016 = vmatprep.subr.mxu0 0.0
    %3017 = vmatpush1.xpose.msra.mxu0 0.0
    %3018 = vmatprep.subr.mxu0 0.0
    %3019 = vmatpush1.xpose.msra.mxu0 0.0
    %3020 = vmatprep.subr.mxu0 0.0
    %3021 = vmatpush1.xpose.msra.mxu0 0.0
    %3022 = vmatprep.subr.mxu0 0.0
    %3023 = vmatpush1.xpose.msra.mxu0 0.0
    %3024 = vmatprep.subr.mxu0 0.0
    %3025 = vmatpush1.xpose.msra.mxu0 0.0
    %3026 = vmatprep.subr.mxu0 0.0
    %3027 = vmatpush1.xpose.msra.mxu0 0.0
    %3028 = vmatprep.subr.mxu0 0.0
    %3029 = vmatpush1.xpose.msra.mxu0 0.0
    %3030 = vmatprep.subr.mxu0 0.0
    %3031 = vmatpush1.xpose.msra.mxu0 0.0
    %3032 = vmatprep.subr.mxu0 0.0
    %3033 = vmatpush1.xpose.msra.mxu0 0.0
    %3034 = vmatprep.subr.mxu0 0.0
    %3035 = vmatpush1.xpose.msra.mxu0 0.0
    %3036 = vmatprep.subr.mxu0 0.0
    %3037 = vmatpush1.xpose.msra.mxu0 0.0
    %3038 = vmatprep.mubr.f32.mxu0 0.0
    %3039 = vmatmul.mubr.f32.gmra.mrb[0].mxu0 %v2970
    %v3040 = vpop.f32.mrb[0].mxu0
    %v3041 = vadd.f32 0.0, %v3040
    %v3042 = vpop.f32.mrb[0].mxu0
    %3043 = vdwg.mxu0
    %v3044 = vmul.f32 %v3041, 0.35355338
    %v3045 = vadd.f32 %v3044, %v1027
    %v3046 = vsel %vm255, %v3045, -inf
    %3047 = vmax.xlane.f32.xlu0 %v3046
    %v3048 = vpop.xlane.xlu0 %3047
    %v3049 = vsub.f32 %v3045, %v3048
    %v3050 = vmul.f32 %v3049, 1.442695
    %v3051 = vpow.pop %v3050
    %v3052 = vsel %vm255, %v3051, 0.0
    %3053 = vadd.xlane.f32.xlu0 %v3052
    %v3054 = vpop.xlane.xlu0 %3053
    %v3055 = vrcp.pop %v3054
    %v3056 = vmul.f32 %v3051, %v3055
    %3057 = vrot.lane.b32.xlu0 %v2115, 56
    %v3058 = vpop.permute.xlu0 %3057
    %v3061 = vsel %vm255, %v3056, 0
    %3063 = vmatprep.subr.mxu0 0.0
    %3064 = vmatpush1.msra.mxu0 %v3058
    %3065 = vmatprep.subr.mxu0 0.0
    %3066 = vmatpush1.msra.mxu0 0.0
    %3067 = vmatprep.subr.mxu0 0.0
    %3068 = vmatpush1.msra.mxu0 0.0
    %3069 = vmatprep.subr.mxu0 0.0
    %3070 = vmatpush1.msra.mxu0 0.0
    %3071 = vmatprep.subr.mxu0 0.0
    %3072 = vmatpush1.msra.mxu0 0.0
    %3073 = vmatprep.subr.mxu0 0.0
    %3074 = vmatpush1.msra.mxu0 0.0
    %3075 = vmatprep.subr.mxu0 0.0
    %3076 = vmatpush1.msra.mxu0 0.0
    %3077 = vmatprep.subr.mxu0 0.0
    %3078 = vmatpush1.msra.mxu0 0.0
    %3079 = vmatprep.subr.mxu0 0.0
    %3080 = vmatpush1.msra.mxu0 0.0
    %3081 = vmatprep.subr.mxu0 0.0
    %3082 = vmatpush1.msra.mxu0 0.0
    %3083 = vmatprep.subr.mxu0 0.0
    %3084 = vmatpush1.msra.mxu0 0.0
    %3085 = vmatprep.subr.mxu0 0.0
    %3086 = vmatpush1.msra.mxu0 0.0
    %3087 = vmatprep.subr.mxu0 0.0
    %3088 = vmatpush1.msra.mxu0 0.0
    %3089 = vmatprep.subr.mxu0 0.0
    %3090 = vmatpush1.msra.mxu0 0.0
    %3091 = vmatprep.subr.mxu0 0.0
    %3092 = vmatpush1.msra.mxu0 0.0
    %3093 = vmatprep.subr.mxu0 0.0
    %3094 = vmatpush1.msra.mxu0 0.0
    %3095 = vmatprep.subr.mxu0 0.0
    %3096 = vmatpush1.msra.mxu0 0.0
    %3097 = vmatprep.subr.mxu0 0.0
    %3098 = vmatpush1.msra.mxu0 0.0
    %3099 = vmatprep.subr.mxu0 0.0
    %3100 = vmatpush1.msra.mxu0 0.0
    %3101 = vmatprep.subr.mxu0 0.0
    %3102 = vmatpush1.msra.mxu0 0.0
    %3103 = vmatprep.subr.mxu0 0.0
    %3104 = vmatpush1.msra.mxu0 0.0
    %3105 = vmatprep.subr.mxu0 0.0
    %3106 = vmatpush1.msra.mxu0 0.0
    %3107 = vmatprep.subr.mxu0 0.0
    %3108 = vmatpush1.msra.mxu0 0.0
    %3109 = vmatprep.subr.mxu0 0.0
    %3110 = vmatpush1.msra.mxu0 0.0
    %3111 = vmatprep.subr.mxu0 0.0
    %3112 = vmatpush1.msra.mxu0 0.0
    %3113 = vmatprep.subr.mxu0 0.0
    %3114 = vmatpush1.msra.mxu0 0.0
    %3115 = vmatprep.subr.mxu0 0.0
    %3116 = vmatpush1.msra.mxu0 0.0
    %3117 = vmatprep.subr.mxu0 0.0
    %3118 = vmatpush1.msra.mxu0 0.0
    %3119 = vmatprep.subr.mxu0 0.0
    %3120 = vmatpush1.msra.mxu0 0.0
    %3121 = vmatprep.subr.mxu0 0.0
    %3122 = vmatpush1.msra.mxu0 0.0
    %3123 = vmatprep.subr.mxu0 0.0
    %3124 = vmatpush1.msra.mxu0 0.0
    %3125 = vmatprep.subr.mxu0 0.0
    %3126 = vmatpush1.msra.mxu0 0.0
    %3127 = vmatprep.mubr.f32.mxu0 0.0
    %3128 = vmatmul.mubr.f32.gmra.mrb[0].mxu0 %v3061
    %v3129 = vpop.f32.mrb[0].mxu0
    %v3130 = vadd.f32 0.0, %v3129
    %v3131 = vpop.f32.mrb[0].mxu0
    %3132 = vdwg.mxu0
    %3133 = vrot.lane.b32.xlu0 %v2115, 112
    %v3134 = vpop.permute.xlu0 %3133
    %3135 = vrot.lane.b32.xlu0 %v2115, 80
    %v3136 = vpop.permute.xlu0 %3135
    %v3137 = vsel %vm255, %v3134, 0
    %v3139 = vsel %vm255, %v3136, 0
    %3141 = vmatprep.subr.mxu0 0.0
    %3142 = vmatpush1.xpose.msra.mxu0 %v3139
    %3143 = vmatprep.subr.mxu0 0.0
    %3144 = vmatpush1.xpose.msra.mxu0 0.0
    %3145 = vmatprep.subr.mxu0 0.0
    %3146 = vmatpush1.xpose.msra.mxu0 0.0
    %3147 = vmatprep.subr.mxu0 0.0
    %3148 = vmatpush1.xpose.msra.mxu0 0.0
    %3149 = vmatprep.subr.mxu0 0.0
    %3150 = vmatpush1.xpose.msra.mxu0 0.0
    %3151 = vmatprep.subr.mxu0 0.0
    %3152 = vmatpush1.xpose.msra.mxu0 0.0
    %3153 = vmatprep.subr.mxu0 0.0
    %3154 = vmatpush1.xpose.msra.mxu0 0.0
    %3155 = vmatprep.subr.mxu0 0.0
    %3156 = vmatpush1.xpose.msra.mxu0 0.0
    %3157 = vmatprep.subr.mxu0 0.0
    %3158 = vmatpush1.xpose.msra.mxu0 0.0
    %3159 = vmatprep.subr.mxu0 0.0
    %3160 = vmatpush1.xpose.msra.mxu0 0.0
    %3161 = vmatprep.subr.mxu0 0.0
    %3162 = vmatpush1.xpose.msra.mxu0 0.0
    %3163 = vmatprep.subr.mxu0 0.0
    %3164 = vmatpush1.xpose.msra.mxu0 0.0
    %3165 = vmatprep.subr.mxu0 0.0
    %3166 = vmatpush1.xpose.msra.mxu0 0.0
    %3167 = vmatprep.subr.mxu0 0.0
    %3168 = vmatpush1.xpose.msra.mxu0 0.0
    %3169 = vmatprep.subr.mxu0 0.0
    %3170 = vmatpush1.xpose.msra.mxu0 0.0
    %3171 = vmatprep.subr.mxu0 0.0
    %3172 = vmatpush1.xpose.msra.mxu0 0.0
    %3173 = vmatprep.subr.mxu0 0.0
    %3174 = vmatpush1.xpose.msra.mxu0 0.0
    %3175 = vmatprep.subr.mxu0 0.0
    %3176 = vmatpush1.xpose.msra.mxu0 0.0
    %3177 = vmatprep.subr.mxu0 0.0
    %3178 = vmatpush1.xpose.msra.mxu0 0.0
    %3179 = vmatprep.subr.mxu0 0.0
    %3180 = vmatpush1.xpose.msra.mxu0 0.0
    %3181 = vmatprep.subr.mxu0 0.0
    %3182 = vmatpush1.xpose.msra.mxu0 0.0
    %3183 = vmatprep.subr.mxu0 0.0
    %3184 = vmatpush1.xpose.msra.mxu0 0.0
    %3185 = vmatprep.subr.mxu0 0.0
    %3186 = vmatpush1.xpose.msra.mxu0 0.0
    %3187 = vmatprep.subr.mxu0 0.0
    %3188 = vmatpush1.xpose.msra.mxu0 0.0
    %3189 = vmatprep.subr.mxu0 0.0
    %3190 = vmatpush1.xpose.msra.mxu0 0.0
    %3191 = vmatprep.subr.mxu0 0.0
    %3192 = vmatpush1.xpose.msra.mxu0 0.0
    %3193 = vmatprep.subr.mxu0 0.0
    %3194 = vmatpush1.xpose.msra.mxu0 0.0
    %3195 = vmatprep.subr.mxu0 0.0
    %3196 = vmatpush1.xpose.msra.mxu0 0.0
    %3197 = vmatprep.subr.mxu0 0.0
    %3198 = vmatpush1.xpose.msra.mxu0 0.0
    %3199 = vmatprep.subr.mxu0 0.0
    %3200 = vmatpush1.xpose.msra.mxu0 0.0
    %3201 = vmatprep.subr.mxu0 0.0
    %3202 = vmatpush1.xpose.msra.mxu0 0.0
    %3203 = vmatprep.subr.mxu0 0.0
    %3204 = vmatpush1.xpose.msra.mxu0 0.0
    %3205 = vmatprep.mubr.f32.mxu0 0.0
    %3206 = vmatmul.mubr.f32.gmra.mrb[0].mxu0 %v3137
    %v3207 = vpop.f32.mrb[0].mxu0
    %v3208 = vadd.f32 0.0, %v3207
    %v3209 = vpop.f32.mrb[0].mxu0
    %3210 = vdwg.mxu0
    %v3211 = vmul.f32 %v3208, 0.35355338
    %v3212 = vadd.f32 %v3211, %v1027
    %v3213 = vsel %vm255, %v3212, -inf
    %3214 = vmax.xlane.f32.xlu0 %v3213
    %v3215 = vpop.xlane.xlu0 %3214
    %v3216 = vsub.f32 %v3212, %v3215
    %v3217 = vmul.f32 %v3216, 1.442695
    %v3218 = vpow.pop %v3217
    %v3219 = vsel %vm255, %v3218, 0.0
    %3220 = vadd.xlane.f32.xlu0 %v3219
    %v3221 = vpop.xlane.xlu0 %3220
    %v3222 = vrcp.pop %v3221
    %v3223 = vmul.f32 %v3218, %v3222
    %3224 = vrot.lane.b32.xlu0 %v2115, 48
    %v3225 = vpop.permute.xlu0 %3224
    %v3228 = vsel %vm255, %v3223, 0
    %3230 = vmatprep.subr.mxu0 0.0
    %3231 = vmatpush1.msra.mxu0 %v3225
    %3232 = vmatprep.subr.mxu0 0.0
    %3233 = vmatpush1.msra.mxu0 0.0
    %3234 = vmatprep.subr.mxu0 0.0
    %3235 = vmatpush1.msra.mxu0 0.0
    %3236 = vmatprep.subr.mxu0 0.0
    %3237 = vmatpush1.msra.mxu0 0.0
    %3238 = vmatprep.subr.mxu0 0.0
    %3239 = vmatpush1.msra.mxu0 0.0
    %3240 = vmatprep.subr.mxu0 0.0
    %3241 = vmatpush1.msra.mxu0 0.0
    %3242 = vmatprep.subr.mxu0 0.0
    %3243 = vmatpush1.msra.mxu0 0.0
    %3244 = vmatprep.subr.mxu0 0.0
    %3245 = vmatpush1.msra.mxu0 0.0
    %3246 = vmatprep.subr.mxu0 0.0
    %3247 = vmatpush1.msra.mxu0 0.0
    %3248 = vmatprep.subr.mxu0 0.0
    %3249 = vmatpush1.msra.mxu0 0.0
    %3250 = vmatprep.subr.mxu0 0.0
    %3251 = vmatpush1.msra.mxu0 0.0
    %3252 = vmatprep.subr.mxu0 0.0
    %3253 = vmatpush1.msra.mxu0 0.0
    %3254 = vmatprep.subr.mxu0 0.0
    %3255 = vmatpush1.msra.mxu0 0.0
    %3256 = vmatprep.subr.mxu0 0.0
    %3257 = vmatpush1.msra.mxu0 0.0
    %3258 = vmatprep.subr.mxu0 0.0
    %3259 = vmatpush1.msra.mxu0 0.0
    %3260 = vmatprep.subr.mxu0 0.0
    %3261 = vmatpush1.msra.mxu0 0.0
    %3262 = vmatprep.subr.mxu0 0.0
    %3263 = vmatpush1.msra.mxu0 0.0
    %3264 = vmatprep.subr.mxu0 0.0
    %3265 = vmatpush1.msra.mxu0 0.0
    %3266 = vmatprep.subr.mxu0 0.0
    %3267 = vmatpush1.msra.mxu0 0.0
    %3268 = vmatprep.subr.mxu0 0.0
    %3269 = vmatpush1.msra.mxu0 0.0
    %3270 = vmatprep.subr.mxu0 0.0
    %3271 = vmatpush1.msra.mxu0 0.0
    %3272 = vmatprep.subr.mxu0 0.0
    %3273 = vmatpush1.msra.mxu0 0.0
    %3274 = vmatprep.subr.mxu0 0.0
    %3275 = vmatpush1.msra.mxu0 0.0
    %3276 = vmatprep.subr.mxu0 0.0
    %3277 = vmatpush1.msra.mxu0 0.0
    %3278 = vmatprep.subr.mxu0 0.0
    %3279 = vmatpush1.msra.mxu0 0.0
    %3280 = vmatprep.subr.mxu0 0.0
    %3281 = vmatpush1.msra.mxu0 0.0
    %3282 = vmatprep.subr.mxu0 0.0
    %3283 = vmatpush1.msra.mxu0 0.0
    %3284 = vmatprep.subr.mxu0 0.0
    %3285 = vmatpush1.msra.mxu0 0.0
    %3286 = vmatprep.subr.mxu0 0.0
    %3287 = vmatpush1.msra.mxu0 0.0
    %3288 = vmatprep.subr.mxu0 0.0
    %3289 = vmatpush1.msra.mxu0 0.0
    %3290 = vmatprep.subr.mxu0 0.0
    %3291 = vmatpush1.msra.mxu0 0.0
    %3292 = vmatprep.subr.mxu0 0.0
    %3293 = vmatpush1.msra.mxu0 0.0
    %3294 = vmatprep.mubr.f32.mxu0 0.0
    %3295 = vmatmul.mubr.f32.gmra.mrb[0].mxu0 %v3228
    %v3296 = vpop.f32.mrb[0].mxu0
    %v3297 = vadd.f32 0.0, %v3296
    %v3298 = vpop.f32.mrb[0].mxu0
    %3299 = vdwg.mxu0
    %3300 = vrot.lane.b32.xlu0 %v2115, 104
    %v3301 = vpop.permute.xlu0 %3300
    %3302 = vrot.lane.b32.xlu0 %v2115, 72
    %v3303 = vpop.permute.xlu0 %3302
    %v3304 = vsel %vm255, %v3301, 0
    %v3306 = vsel %vm255, %v3303, 0
    %3308 = vmatprep.subr.mxu0 0.0
    %3309 = vmatpush1.xpose.msra.mxu0 %v3306
    %3310 = vmatprep.subr.mxu0 0.0
    %3311 = vmatpush1.xpose.msra.mxu0 0.0
    %3312 = vmatprep.subr.mxu0 0.0
    %3313 = vmatpush1.xpose.msra.mxu0 0.0
    %3314 = vmatprep.subr.mxu0 0.0
    %3315 = vmatpush1.xpose.msra.mxu0 0.0
    %3316 = vmatprep.subr.mxu0 0.0
    %3317 = vmatpush1.xpose.msra.mxu0 0.0
    %3318 = vmatprep.subr.mxu0 0.0
    %3319 = vmatpush1.xpose.msra.mxu0 0.0
    %3320 = vmatprep.subr.mxu0 0.0
    %3321 = vmatpush1.xpose.msra.mxu0 0.0
    %3322 = vmatprep.subr.mxu0 0.0
    %3323 = vmatpush1.xpose.msra.mxu0 0.0
    %3324 = vmatprep.subr.mxu0 0.0
    %3325 = vmatpush1.xpose.msra.mxu0 0.0
    %3326 = vmatprep.subr.mxu0 0.0
    %3327 = vmatpush1.xpose.msra.mxu0 0.0
    %3328 = vmatprep.subr.mxu0 0.0
    %3329 = vmatpush1.xpose.msra.mxu0 0.0
    %3330 = vmatprep.subr.mxu0 0.0
    %3331 = vmatpush1.xpose.msra.mxu0 0.0
    %3332 = vmatprep.subr.mxu0 0.0
    %3333 = vmatpush1.xpose.msra.mxu0 0.0
    %3334 = vmatprep.subr.mxu0 0.0
    %3335 = vmatpush1.xpose.msra.mxu0 0.0
    %3336 = vmatprep.subr.mxu0 0.0
    %3337 = vmatpush1.xpose.msra.mxu0 0.0
    %3338 = vmatprep.subr.mxu0 0.0
    %3339 = vmatpush1.xpose.msra.mxu0 0.0
    %3340 = vmatprep.subr.mxu0 0.0
    %3341 = vmatpush1.xpose.msra.mxu0 0.0
    %3342 = vmatprep.subr.mxu0 0.0
    %3343 = vmatpush1.xpose.msra.mxu0 0.0
    %3344 = vmatprep.subr.mxu0 0.0
    %3345 = vmatpush1.xpose.msra.mxu0 0.0
    %3346 = vmatprep.subr.mxu0 0.0
    %3347 = vmatpush1.xpose.msra.mxu0 0.0
    %3348 = vmatprep.subr.mxu0 0.0
    %3349 = vmatpush1.xpose.msra.mxu0 0.0
    %3350 = vmatprep.subr.mxu0 0.0
    %3351 = vmatpush1.xpose.msra.mxu0 0.0
    %3352 = vmatprep.subr.mxu0 0.0
    %3353 = vmatpush1.xpose.msra.mxu0 0.0
    %3354 = vmatprep.subr.mxu0 0.0
    %3355 = vmatpush1.xpose.msra.mxu0 0.0
    %3356 = vmatprep.subr.mxu0 0.0
    %3357 = vmatpush1.xpose.msra.mxu0 0.0
    %3358 = vmatprep.subr.mxu0 0.0
    %3359 = vmatpush1.xpose.msra.mxu0 0.0
    %3360 = vmatprep.subr.mxu0 0.0
    %3361 = vmatpush1.xpose.msra.mxu0 0.0
    %3362 = vmatprep.subr.mxu0 0.0
    %3363 = vmatpush1.xpose.msra.mxu0 0.0
    %3364 = vmatprep.subr.mxu0 0.0
    %3365 = vmatpush1.xpose.msra.mxu0 0.0
    %3366 = vmatprep.subr.mxu0 0.0
    %3367 = vmatpush1.xpose.msra.mxu0 0.0
    %3368 = vmatprep.subr.mxu0 0.0
    %3369 = vmatpush1.xpose.msra.mxu0 0.0
    %3370 = vmatprep.subr.mxu0 0.0
    %3371 = vmatpush1.xpose.msra.mxu0 0.0
    %3372 = vmatprep.mubr.f32.mxu0 0.0
    %3373 = vmatmul.mubr.f32.gmra.mrb[0].mxu0 %v3304
    %v3374 = vpop.f32.mrb[0].mxu0
    %v3375 = vadd.f32 0.0, %v3374
    %v3376 = vpop.f32.mrb[0].mxu0
    %3377 = vdwg.mxu0
    %v3378 = vmul.f32 %v3375, 0.35355338
    %v3379 = vadd.f32 %v3378, %v1027
    %v3380 = vsel %vm255, %v3379, -inf
    %3381 = vmax.xlane.f32.xlu0 %v3380
    %v3382 = vpop.xlane.xlu0 %3381
    %v3383 = vsub.f32 %v3379, %v3382
    %v3384 = vmul.f32 %v3383, 1.442695
    %v3385 = vpow.pop %v3384
    %v3386 = vsel %vm255, %v3385, 0.0
    %3387 = vadd.xlane.f32.xlu0 %v3386
    %v3388 = vpop.xlane.xlu0 %3387
    %v3389 = vrcp.pop %v3388
    %v3390 = vmul.f32 %v3385, %v3389
    %3391 = vrot.lane.b32.xlu0 %v2115, 40
    %v3392 = vpop.permute.xlu0 %3391
    %v3395 = vsel %vm255, %v3390, 0
    %3397 = vmatprep.subr.mxu0 0.0
    %3398 = vmatpush1.msra.mxu0 %v3392
    %3399 = vmatprep.subr.mxu0 0.0
    %3400 = vmatpush1.msra.mxu0 0.0
    %3401 = vmatprep.subr.mxu0 0.0
    %3402 = vmatpush1.msra.mxu0 0.0
    %3403 = vmatprep.subr.mxu0 0.0
    %3404 = vmatpush1.msra.mxu0 0.0
    %3405 = vmatprep.subr.mxu0 0.0
    %3406 = vmatpush1.msra.mxu0 0.0
    %3407 = vmatprep.subr.mxu0 0.0
    %3408 = vmatpush1.msra.mxu0 0.0
    %3409 = vmatprep.subr.mxu0 0.0
    %3410 = vmatpush1.msra.mxu0 0.0
    %3411 = vmatprep.subr.mxu0 0.0
    %3412 = vmatpush1.msra.mxu0 0.0
    %3413 = vmatprep.subr.mxu0 0.0
    %3414 = vmatpush1.msra.mxu0 0.0
    %3415 = vmatprep.subr.mxu0 0.0
    %3416 = vmatpush1.msra.mxu0 0.0
    %3417 = vmatprep.subr.mxu0 0.0
    %3418 = vmatpush1.msra.mxu0 0.0
    %3419 = vmatprep.subr.mxu0 0.0
    %3420 = vmatpush1.msra.mxu0 0.0
    %3421 = vmatprep.subr.mxu0 0.0
    %3422 = vmatpush1.msra.mxu0 0.0
    %3423 = vmatprep.subr.mxu0 0.0
    %3424 = vmatpush1.msra.mxu0 0.0
    %3425 = vmatprep.subr.mxu0 0.0
    %3426 = vmatpush1.msra.mxu0 0.0
    %3427 = vmatprep.subr.mxu0 0.0
    %3428 = vmatpush1.msra.mxu0 0.0
    %3429 = vmatprep.subr.mxu0 0.0
    %3430 = vmatpush1.msra.mxu0 0.0
    %3431 = vmatprep.subr.mxu0 0.0
    %3432 = vmatpush1.msra.mxu0 0.0
    %3433 = vmatprep.subr.mxu0 0.0
    %3434 = vmatpush1.msra.mxu0 0.0
    %3435 = vmatprep.subr.mxu0 0.0
    %3436 = vmatpush1.msra.mxu0 0.0
    %3437 = vmatprep.subr.mxu0 0.0
    %3438 = vmatpush1.msra.mxu0 0.0
    %3439 = vmatprep.subr.mxu0 0.0
    %3440 = vmatpush1.msra.mxu0 0.0
    %3441 = vmatprep.subr.mxu0 0.0
    %3442 = vmatpush1.msra.mxu0 0.0
    %3443 = vmatprep.subr.mxu0 0.0
    %3444 = vmatpush1.msra.mxu0 0.0
    %3445 = vmatprep.subr.mxu0 0.0
    %3446 = vmatpush1.msra.mxu0 0.0
    %3447 = vmatprep.subr.mxu0 0.0
    %3448 = vmatpush1.msra.mxu0 0.0
    %3449 = vmatprep.subr.mxu0 0.0
    %3450 = vmatpush1.msra.mxu0 0.0
    %3451 = vmatprep.subr.mxu0 0.0
    %3452 = vmatpush1.msra.mxu0 0.0
    %3453 = vmatprep.subr.mxu0 0.0
    %3454 = vmatpush1.msra.mxu0 0.0
    %3455 = vmatprep.subr.mxu0 0.0
    %3456 = vmatpush1.msra.mxu0 0.0
    %3457 = vmatprep.subr.mxu0 0.0
    %3458 = vmatpush1.msra.mxu0 0.0
    %3459 = vmatprep.subr.mxu0 0.0
    %3460 = vmatpush1.msra.mxu0 0.0
    %3461 = vmatprep.mubr.f32.mxu0 0.0
    %3462 = vmatmul.mubr.f32.gmra.mrb[0].mxu0 %v3395
    %v3463 = vpop.f32.mrb[0].mxu0
    %v3464 = vadd.f32 0.0, %v3463
    %v3465 = vpop.f32.mrb[0].mxu0
    %3466 = vdwg.mxu0
    %3468 = vrot.lane.b32.xlu0 %v3130, 8
    %v3469 = vpop.permute.xlu0 %3468
    %3472 = vrot.lane.b32.xlu0 %v3297, 16
    %v3473 = vpop.permute.xlu0 %3472
    %3476 = vrot.lane.b32.xlu0 %v3464, 24
    %v3477 = vpop.permute.xlu0 %3476
    %v3479 = vsel %vm255, %v2963, %v3469
    %v3480 = vsel %vm939, %v3479, %v3473
    %v3481 = vsel %vm941, %v3480, %v3477
    %s3482 = scalar_lea.vmem %s6, 32
    %v3483 = vld [vmem:[%s3482] sm:$0xff]
    %v3484 = vld [vmem:[%s3482 + $0x8] sm:$0xff]
    %v3485 = vld [vmem:[%s3482 + $0x10] sm:$0xff]
    %v3486 = vld [vmem:[%s3482 + $0x18] sm:$0xff]
    %s3487 = scalar_lea.vmem %s7, 1
    %v3488 = vld [vmem:[%s3487] sm:$0x1]
    %v3490 = vlaneseq
    %v3491 = vshrl.u32 %v3490, 7
    %v3492 = vsub.s32 0, %v3491
    %v3493 = vrot.slane %v3488, %v3492
    %v3496 = vsel %vm115, %v2799, 0
    %v3499 = vsel %vm115, %v3481, 0
    %3501 = vmatprep.subr.mxu0 0.0
    %3502 = vmatpush1.msra.mxu0 %v3483
    %3503 = vmatprep.subr.mxu0 0.0
    %3504 = vmatpush1.msra.mxu0 %v3484
    %3505 = vmatprep.subr.mxu0 0.0
    %3506 = vmatpush1.msra.mxu0 %v3485
    %3507 = vmatprep.subr.mxu0 0.0
    %3508 = vmatpush1.msra.mxu0 %v3486
    %3509 = vmatprep.subr.mxu0 0.0
    %3510 = vmatpush1.msra.mxu0 0.0
    %3511 = vmatprep.subr.mxu0 0.0
    %3512 = vmatpush1.msra.mxu0 0.0
    %3513 = vmatprep.subr.mxu0 0.0
    %3514 = vmatpush1.msra.mxu0 0.0
    %3515 = vmatprep.subr.mxu0 0.0
    %3516 = vmatpush1.msra.mxu0 0.0
    %3517 = vmatprep.subr.mxu0 0.0
    %3518 = vmatpush1.msra.mxu0 0.0
    %3519 = vmatprep.subr.mxu0 0.0
    %3520 = vmatpush1.msra.mxu0 0.0
    %3521 = vmatprep.subr.mxu0 0.0
    %3522 = vmatpush1.msra.mxu0 0.0
    %3523 = vmatprep.subr.mxu0 0.0
    %3524 = vmatpush1.msra.mxu0 0.0
    %3525 = vmatprep.subr.mxu0 0.0
    %3526 = vmatpush1.msra.mxu0 0.0
    %3527 = vmatprep.subr.mxu0 0.0
    %3528 = vmatpush1.msra.mxu0 0.0
    %3529 = vmatprep.subr.mxu0 0.0
    %3530 = vmatpush1.msra.mxu0 0.0
    %3531 = vmatprep.subr.mxu0 0.0
    %3532 = vmatpush1.msra.mxu0 0.0
    %3533 = vmatprep.subr.mxu0 0.0
    %3534 = vmatpush1.msra.mxu0 0.0
    %3535 = vmatprep.subr.mxu0 0.0
    %3536 = vmatpush1.msra.mxu0 0.0
    %3537 = vmatprep.subr.mxu0 0.0
    %3538 = vmatpush1.msra.mxu0 0.0
    %3539 = vmatprep.subr.mxu0 0.0
    %3540 = vmatpush1.msra.mxu0 0.0
    %3541 = vmatprep.subr.mxu0 0.0
    %3542 = vmatpush1.msra.mxu0 0.0
    %3543 = vmatprep.subr.mxu0 0.0
    %3544 = vmatpush1.msra.mxu0 0.0
    %3545 = vmatprep.subr.mxu0 0.0
    %3546 = vmatpush1.msra.mxu0 0.0
    %3547 = vmatprep.subr.mxu0 0.0
    %3548 = vmatpush1.msra.mxu0 0.0
    %3549 = vmatprep.subr.mxu0 0.0
    %3550 = vmatpush1.msra.mxu0 0.0
    %3551 = vmatprep.subr.mxu0 0.0
    %3552 = vmatpush1.msra.mxu0 0.0
    %3553 = vmatprep.subr.mxu0 0.0
    %3554 = vmatpush1.msra.mxu0 0.0
    %3555 = vmatprep.subr.mxu0 0.0
    %3556 = vmatpush1.msra.mxu0 0.0
    %3557 = vmatprep.subr.mxu0 0.0
    %3558 = vmatpush1.msra.mxu0 0.0
    %3559 = vmatprep.subr.mxu0 0.0
    %3560 = vmatpush1.msra.mxu0 0.0
    %3561 = vmatprep.subr.mxu0 0.0
    %3562 = vmatpush1.msra.mxu0 0.0
    %3563 = vmatprep.subr.mxu0 0.0
    %3564 = vmatpush1.msra.mxu0 0.0
    %3565 = vmatprep.mubr.f32.mxu0 0.0
    %3566 = vmatmul.mubr.f32.gmra.mrb[0].mxu0 %v3496
    %v3567 = vpop.f32.mrb[0].mxu0
    %v3568 = vadd.f32 %v3493, %v3567
    %v3569 = vpop.f32.mrb[0].mxu0
    %3570 = vmatprep.mubr.f32.mxu0 0.0
    %3571 = vmatmul.mubr.f32.gmra.mrb[0].mxu0 %v3499
    %v3572 = vpop.f32.mrb[0].mxu0
    %v3573 = vadd.f32 %v3493, %v3572
    %v3574 = vpop.f32.mrb[0].mxu0
    %3575 = vdwg.mxu0
    %v3576 = vadd.f32 %v2022, %v3568
    %v3577 = vadd.f32 %v2023, %v3573
    %s3578 = scalar_lea.vmem %s8, 1
    %v3579 = vld [vmem:[%s3578] sm:$0x1]
    %s3580 = scalar_lea.vmem %s9, 1
    %v3581 = vld [vmem:[%s3580] sm:$0x1]
    %v3582 = vsel %vm115, %v3576, 0.0
    %3583 = vadd.xlane.f32.xlu0 %v3582
    %v3584 = vpop.xlane.xlu0 %3583
    %v3585 = vsel %vm115, %v3577, 0.0
    %3586 = vadd.xlane.f32.xlu0 %v3585
    %v3587 = vpop.xlane.xlu0 %3586
    %v3588 = vmul.f32 %v3584, %v122
    %v3589 = vmul.f32 %v3587, %v122
    %v3590 = vsub.f32 %v3576, %v3588
    %v3591 = vsub.f32 %v3577, %v3589
    %v3592 = vmul.f32 %v3590, %v3590
    %v3593 = vmul.f32 %v3591, %v3591
    %v3594 = vsel %vm115, %v3592, 0.0
    %3595 = vadd.xlane.f32.xlu0 %v3594
    %v3596 = vpop.xlane.xlu0 %3595
    %v3597 = vsel %vm115, %v3593, 0.0
    %3598 = vadd.xlane.f32.xlu0 %v3597
    %v3599 = vpop.xlane.xlu0 %3598
    %v3600 = vmul.f32 %v3596, %v122
    %v3601 = vmul.f32 %v3599, %v122
    %v3602 = vadd.f32 %v3600, 1e-12
    %v3603 = vadd.f32 %v3601, 1e-12
    %v3604 = vrsqrt.pop %v3602
    %v3605 = vrsqrt.pop %v3603
    %v3606 = vmul.f32 %v3590, %v3604
    %v3607 = vmul.f32 %v3591, %v3605
    %v3609 = vlaneseq
    %v3610 = vshrl.u32 %v3609, 7
    %v3611 = vsub.s32 0, %v3610
    %v3612 = vrot.slane %v3579, %v3611
    %v3614 = vmul.f32 %v3606, %v3612
    %v3615 = vmul.f32 %v3607, %v3612
    %v3617 = vlaneseq
    %v3618 = vshrl.u32 %v3617, 7
    %v3619 = vsub.s32 0, %v3618
    %v3620 = vrot.slane %v3581, %v3619
    %v3622 = vadd.f32 %v3614, %v3620
    %v3623 = vadd.f32 %v3615, %v3620
    %s3624 = scalar_lea.vmem %s10, 32
    %v3625 = vld [vmem:[%s3624] sm:$0xff]
    %v3626 = vld [vmem:[%s3624 + $0x8] sm:$0xff]
    %v3627 = vld [vmem:[%s3624 + $0x10] sm:$0xff]
    %v3628 = vld [vmem:[%s3624 + $0x18] sm:$0xff]
    %s3629 = scalar_lea.vmem %s11, 1
    %v3630 = vld [vmem:[%s3629] sm:$0x1]
    %v3632 = vlaneseq
    %v3633 = vshrl.u32 %v3632, 7
    %v3634 = vsub.s32 0, %v3633
    %v3635 = vrot.slane %v3630, %v3634
    %v3638 = vsel %vm115, %v3622, 0
    %v3641 = vsel %vm115, %v3623, 0
    %3643 = vmatprep.subr.mxu0 0.0
    %3644 = vmatpush1.msra.mxu0 %v3625
    %3645 = vmatprep.subr.mxu0 0.0
    %3646 = vmatpush1.msra.mxu0 %v3626
    %3647 = vmatprep.subr.mxu0 0.0
    %3648 = vmatpush1.msra.mxu0 %v3627
    %3649 = vmatprep.subr.mxu0 0.0
    %3650 = vmatpush1.msra.mxu0 %v3628
    %3651 = vmatprep.subr.mxu0 0.0
    %3652 = vmatpush1.msra.mxu0 0.0
    %3653 = vmatprep.subr.mxu0 0.0
    %3654 = vmatpush1.msra.mxu0 0.0
    %3655 = vmatprep.subr.mxu0 0.0
    %3656 = vmatpush1.msra.mxu0 0.0
    %3657 = vmatprep.subr.mxu0 0.0
    %3658 = vmatpush1.msra.mxu0 0.0
    %3659 = vmatprep.subr.mxu0 0.0
    %3660 = vmatpush1.msra.mxu0 0.0
    %3661 = vmatprep.subr.mxu0 0.0
    %3662 = vmatpush1.msra.mxu0 0.0
    %3663 = vmatprep.subr.mxu0 0.0
    %3664 = vmatpush1.msra.mxu0 0.0
    %3665 = vmatprep.subr.mxu0 0.0
    %3666 = vmatpush1.msra.mxu0 0.0
    %3667 = vmatprep.subr.mxu0 0.0
    %3668 = vmatpush1.msra.mxu0 0.0
    %3669 = vmatprep.subr.mxu0 0.0
    %3670 = vmatpush1.msra.mxu0 0.0
    %3671 = vmatprep.subr.mxu0 0.0
    %3672 = vmatpush1.msra.mxu0 0.0
    %3673 = vmatprep.subr.mxu0 0.0
    %3674 = vmatpush1.msra.mxu0 0.0
    %3675 = vmatprep.subr.mxu0 0.0
    %3676 = vmatpush1.msra.mxu0 0.0
    %3677 = vmatprep.subr.mxu0 0.0
    %3678 = vmatpush1.msra.mxu0 0.0
    %3679 = vmatprep.subr.mxu0 0.0
    %3680 = vmatpush1.msra.mxu0 0.0
    %3681 = vmatprep.subr.mxu0 0.0
    %3682 = vmatpush1.msra.mxu0 0.0
    %3683 = vmatprep.subr.mxu0 0.0
    %3684 = vmatpush1.msra.mxu0 0.0
    %3685 = vmatprep.subr.mxu0 0.0
    %3686 = vmatpush1.msra.mxu0 0.0
    %3687 = vmatprep.subr.mxu0 0.0
    %3688 = vmatpush1.msra.mxu0 0.0
    %3689 = vmatprep.subr.mxu0 0.0
    %3690 = vmatpush1.msra.mxu0 0.0
    %3691 = vmatprep.subr.mxu0 0.0
    %3692 = vmatpush1.msra.mxu0 0.0
    %3693 = vmatprep.subr.mxu0 0.0
    %3694 = vmatpush1.msra.mxu0 0.0
    %3695 = vmatprep.subr.mxu0 0.0
    %3696 = vmatpush1.msra.mxu0 0.0
    %3697 = vmatprep.subr.mxu0 0.0
    %3698 = vmatpush1.msra.mxu0 0.0
    %3699 = vmatprep.subr.mxu0 0.0
    %3700 = vmatpush1.msra.mxu0 0.0
    %3701 = vmatprep.subr.mxu0 0.0
    %3702 = vmatpush1.msra.mxu0 0.0
    %3703 = vmatprep.subr.mxu0 0.0
    %3704 = vmatpush1.msra.mxu0 0.0
    %3705 = vmatprep.subr.mxu0 0.0
    %3706 = vmatpush1.msra.mxu0 0.0
    %3707 = vmatprep.mubr.f32.mxu0 0.0
    %3708 = vmatmul.mubr.f32.gmra.mrb[0].mxu0 %v3638
    %v3709 = vpop.f32.mrb[0].mxu0
    %v3710 = vadd.f32 %v3635, %v3709
    %v3711 = vpop.f32.mrb[0].mxu0
    %3712 = vmatprep.mubr.f32.mxu0 0.0
    %3713 = vmatmul.mubr.f32.gmra.mrb[0].mxu0 %v3641
    %v3714 = vpop.f32.mrb[0].mxu0
    %v3715 = vadd.f32 %v3635, %v3714
    %v3716 = vpop.f32.mrb[0].mxu0
    %3717 = vdwg.mxu0
    %v3718 = vmul.f32 %v3710, %v3710
    %v3719 = vmul.f32 %v3715, %v3715
    %v3720 = vmul.f32 %v3710, %v3718
    %v3721 = vmul.f32 %v3715, %v3719
    %v3722 = vmul.f32 %v3720, 0.044715
    %v3723 = vmul.f32 %v3721, 0.044715
    %v3724 = vadd.f32 %v3710, %v3722
    %v3725 = vadd.f32 %v3715, %v3723
    %v3726 = vmul.f32 %v3724, 0.7978846
    %v3727 = vmul.f32 %v3725, 0.7978846
    %v3728 = vtanh.pop %v3726
    %v3729 = vtanh.pop %v3727
    %v3730 = vadd.f32 %v3728, 1.0
    %v3731 = vadd.f32 %v3729, 1.0
    %v3732 = vmul.f32 %v3730, 0.5
    %v3733 = vmul.f32 %v3731, 0.5
    %v3734 = vmul.f32 %v3710, %v3732
    %v3735 = vmul.f32 %v3715, %v3733
    %s3736 = scalar_lea.vmem %s12, 64
    %v3737 = vld [vmem:[%s3736] sm:$0xff]
    %v3738 = vld [vmem:[%s3736 + $0x8] sm:$0xff]
    %v3739 = vld [vmem:[%s3736 + $0x10] sm:$0xff]
    %v3740 = vld [vmem:[%s3736 + $0x18] sm:$0xff]
    %v3741 = vld [vmem:[%s3736 + $0x20] sm:$0xff]
    %v3742 = vld [vmem:[%s3736 + $0x28] sm:$0xff]
    %v3743 = vld [vmem:[%s3736 + $0x30] sm:$0xff]
    %v3744 = vld [vmem:[%s3736 + $0x38] sm:$0xff]
    %s3745 = scalar_lea.vmem %s13, 1
    %v3746 = vld [vmem:[%s3745] sm:$0x1]
    %v3748 = vlaneseq
    %v3749 = vshrl.u32 %v3748, 7
    %v3750 = vsub.s32 0, %v3749
    %v3751 = vrot.slane %v3746, %v3750
    %v3754 = vsel %vm1896, %v3734, 0
    %v3757 = vsel %vm1896, %v3735, 0
    %3759 = vmatprep.subr.mxu0 0.0
    %3760 = vmatpush1.msra.mxu0 %v3737
    %3761 = vmatprep.subr.mxu0 0.0
    %3762 = vmatpush1.msra.mxu0 %v3738
    %3763 = vmatprep.subr.mxu0 0.0
    %3764 = vmatpush1.msra.mxu0 %v3739
    %3765 = vmatprep.subr.mxu0 0.0
    %3766 = vmatpush1.msra.mxu0 %v3740
    %3767 = vmatprep.subr.mxu0 0.0
    %3768 = vmatpush1.msra.mxu0 %v3741
    %3769 = vmatprep.subr.mxu0 0.0
    %3770 = vmatpush1.msra.mxu0 %v3742
    %3771 = vmatprep.subr.mxu0 0.0
    %3772 = vmatpush1.msra.mxu0 %v3743
    %3773 = vmatprep.subr.mxu0 0.0
    %3774 = vmatpush1.msra.mxu0 %v3744
    %3775 = vmatprep.subr.mxu0 0.0
    %3776 = vmatpush1.msra.mxu0 0.0
    %3777 = vmatprep.subr.mxu0 0.0
    %3778 = vmatpush1.msra.mxu0 0.0
    %3779 = vmatprep.subr.mxu0 0.0
    %3780 = vmatpush1.msra.mxu0 0.0
    %3781 = vmatprep.subr.mxu0 0.0
    %3782 = vmatpush1.msra.mxu0 0.0
    %3783 = vmatprep.subr.mxu0 0.0
    %3784 = vmatpush1.msra.mxu0 0.0
    %3785 = vmatprep.subr.mxu0 0.0
    %3786 = vmatpush1.msra.mxu0 0.0
    %3787 = vmatprep.subr.mxu0 0.0
    %3788 = vmatpush1.msra.mxu0 0.0
    %3789 = vmatprep.subr.mxu0 0.0
    %3790 = vmatpush1.msra.mxu0 0.0
    %3791 = vmatprep.subr.mxu0 0.0
    %3792 = vmatpush1.msra.mxu0 0.0
    %3793 = vmatprep.subr.mxu0 0.0
    %3794 = vmatpush1.msra.mxu0 0.0
    %3795 = vmatprep.subr.mxu0 0.0
    %3796 = vmatpush1.msra.mxu0 0.0
    %3797 = vmatprep.subr.mxu0 0.0
    %3798 = vmatpush1.msra.mxu0 0.0
    %3799 = vmatprep.subr.mxu0 0.0
    %3800 = vmatpush1.msra.mxu0 0.0
    %3801 = vmatprep.subr.mxu0 0.0
    %3802 = vmatpush1.msra.mxu0 0.0
    %3803 = vmatprep.subr.mxu0 0.0
    %3804 = vmatpush1.msra.mxu0 0.0
    %3805 = vmatprep.subr.mxu0 0.0
    %3806 = vmatpush1.msra.mxu0 0.0
    %3807 = vmatprep.subr.mxu0 0.0
    %3808 = vmatpush1.msra.mxu0 0.0
    %3809 = vmatprep.subr.mxu0 0.0
    %3810 = vmatpush1.msra.mxu0 0.0
    %3811 = vmatprep.subr.mxu0 0.0
    %3812 = vmatpush1.msra.mxu0 0.0
    %3813 = vmatprep.subr.mxu0 0.0
    %3814 = vmatpush1.msra.mxu0 0.0
    %3815 = vmatprep.subr.mxu0 0.0
    %3816 = vmatpush1.msra.mxu0 0.0
    %3817 = vmatprep.subr.mxu0 0.0
    %3818 = vmatpush1.msra.mxu0 0.0
    %3819 = vmatprep.subr.mxu0 0.0
    %3820 = vmatpush1.msra.mxu0 0.0
    %3821 = vmatprep.subr.mxu0 0.0
    %3822 = vmatpush1.msra.mxu0 0.0
    %3823 = vmatprep.mubr.f32.mxu0 0.0
    %3824 = vmatmul.mubr.f32.gmra.mrb[0].mxu0 %v3754
    %v3825 = vpop.f32.mrb[0].mxu0
    %v3826 = vadd.f32 %v3751, %v3825
    %v3827 = vpop.f32.mrb[0].mxu0
    %3828 = vmatprep.mubr.f32.mxu0 0.0
    %3829 = vmatmul.mubr.f32.gmra.mrb[0].mxu0 %v3757
    %v3830 = vpop.f32.mrb[0].mxu0
    %v3831 = vadd.f32 %v3751, %v3830
    %v3832 = vpop.f32.mrb[0].mxu0
    %3833 = vdwg.mxu0
    %v3834 = vadd.f32 %v3622, %v3826
    %v3835 = vadd.f32 %v3623, %v3831
    %s3836 = scalar_lea.vmem %s14, 1
    %v3837 = vld [vmem:[%s3836] sm:$0x1]
    %s3838 = scalar_lea.vmem %s15, 1
    %v3839 = vld [vmem:[%s3838] sm:$0x1]
    %v3840 = vsel %vm115, %v3834, 0.0
    %3841 = vadd.xlane.f32.xlu0 %v3840
    %v3842 = vpop.xlane.xlu0 %3841
    %v3843 = vsel %vm115, %v3835, 0.0
    %3844 = vadd.xlane.f32.xlu0 %v3843
    %v3845 = vpop.xlane.xlu0 %3844
    %v3846 = vmul.f32 %v3842, %v122
    %v3847 = vmul.f32 %v3845, %v122
    %v3848 = vsub.f32 %v3834, %v3846
    %v3849 = vsub.f32 %v3835, %v3847
    %v3850 = vmul.f32 %v3848, %v3848
    %v3851 = vmul.f32 %v3849, %v3849
    %v3852 = vsel %vm115, %v3850, 0.0
    %3853 = vadd.xlane.f32.xlu0 %v3852
    %v3854 = vpop.xlane.xlu0 %3853
    %v3855 = vsel %vm115, %v3851, 0.0
    %3856 = vadd.xlane.f32.xlu0 %v3855
    %v3857 = vpop.xlane.xlu0 %3856
    %v3858 = vmul.f32 %v3854, %v122
    %v3859 = vmul.f32 %v3857, %v122
    %v3860 = vadd.f32 %v3858, 1e-12
    %v3861 = vadd.f32 %v3859, 1e-12
    %v3862 = vrsqrt.pop %v3860
    %v3863 = vrsqrt.pop %v3861
    %v3864 = vmul.f32 %v3848, %v3862
    %v3865 = vmul.f32 %v3849, %v3863
    %v3867 = vlaneseq
    %v3868 = vshrl.u32 %v3867, 7
    %v3869 = vsub.s32 0, %v3868
    %v3870 = vrot.slane %v3837, %v3869
    %v3872 = vmul.f32 %v3864, %v3870
    %v3873 = vmul.f32 %v3865, %v3870
    %v3875 = vlaneseq
    %v3876 = vshrl.u32 %v3875, 7
    %v3877 = vsub.s32 0, %v3876
    %v3878 = vrot.slane %v3839, %v3877
    %v3880 = vadd.f32 %v3872, %v3878
    %v3881 = vadd.f32 %v3873, %v3878
    %v3882 = vld [vmem:[%s16] sm:$0xff]
    %v3883 = vld [vmem:[%s16 + $0x8] sm:$0xff]
    %v3884 = vld [vmem:[%s16 + $0x10] sm:$0xff]
    %v3885 = vld [vmem:[%s16 + $0x18] sm:$0xff]
    %v3886 = vld [vmem:[%s17] sm:$0x1]
    %v3888 = vlaneseq
    %v3889 = vshrl.u32 %v3888, 7
    %v3890 = vsub.s32 0, %v3889
    %v3891 = vrot.slane %v3886, %v3890
    %v3894 = vsel %vm115, %v3880, 0
    %v3897 = vsel %vm115, %v3881, 0
    %3899 = vmatprep.subr.mxu0 0.0
    %3900 = vmatpush1.msra.mxu0 %v3882
    %3901 = vmatprep.subr.mxu0 0.0
    %3902 = vmatpush1.msra.mxu0 %v3883
    %3903 = vmatprep.subr.mxu0 0.0
    %3904 = vmatpush1.msra.mxu0 %v3884
    %3905 = vmatprep.subr.mxu0 0.0
    %3906 = vmatpush1.msra.mxu0 %v3885
    %3907 = vmatprep.subr.mxu0 0.0
    %3908 = vmatpush1.msra.mxu0 0.0
    %3909 = vmatprep.subr.mxu0 0.0
    %3910 = vmatpush1.msra.mxu0 0.0
    %3911 = vmatprep.subr.mxu0 0.0
    %3912 = vmatpush1.msra.mxu0 0.0
    %3913 = vmatprep.subr.mxu0 0.0
    %3914 = vmatpush1.msra.mxu0 0.0
    %3915 = vmatprep.subr.mxu0 0.0
    %3916 = vmatpush1.msra.mxu0 0.0
    %3917 = vmatprep.subr.mxu0 0.0
    %3918 = vmatpush1.msra.mxu0 0.0
    %3919 = vmatprep.subr.mxu0 0.0
    %3920 = vmatpush1.msra.mxu0 0.0
    %3921 = vmatprep.subr.mxu0 0.0
    %3922 = vmatpush1.msra.mxu0 0.0
    %3923 = vmatprep.subr.mxu0 0.0
    %3924 = vmatpush1.msra.mxu0 0.0
    %3925 = vmatprep.subr.mxu0 0.0
    %3926 = vmatpush1.msra.mxu0 0.0
    %3927 = vmatprep.subr.mxu0 0.0
    %3928 = vmatpush1.msra.mxu0 0.0
    %3929 = vmatprep.subr.mxu0 0.0
    %3930 = vmatpush1.msra.mxu0 0.0
    %3931 = vmatprep.subr.mxu0 0.0
    %3932 = vmatpush1.msra.mxu0 0.0
    %3933 = vmatprep.subr.mxu0 0.0
    %3934 = vmatpush1.msra.mxu0 0.0
    %3935 = vmatprep.subr.mxu0 0.0
    %3936 = vmatpush1.msra.mxu0 0.0
    %3937 = vmatprep.subr.mxu0 0.0
    %3938 = vmatpush1.msra.mxu0 0.0
    %3939 = vmatprep.subr.mxu0 0.0
    %3940 = vmatpush1.msra.mxu0 0.0
    %3941 = vmatprep.subr.mxu0 0.0
    %3942 = vmatpush1.msra.mxu0 0.0
    %3943 = vmatprep.subr.mxu0 0.0
    %3944 = vmatpush1.msra.mxu0 0.0
    %3945 = vmatprep.subr.mxu0 0.0
    %3946 = vmatpush1.msra.mxu0 0.0
    %3947 = vmatprep.subr.mxu0 0.0
    %3948 = vmatpush1.msra.mxu0 0.0
    %3949 = vmatprep.subr.mxu0 0.0
    %3950 = vmatpush1.msra.mxu0 0.0
    %3951 = vmatprep.subr.mxu0 0.0
    %3952 = vmatpush1.msra.mxu0 0.0
    %3953 = vmatprep.subr.mxu0 0.0
    %3954 = vmatpush1.msra.mxu0 0.0
    %3955 = vmatprep.subr.mxu0 0.0
    %3956 = vmatpush1.msra.mxu0 0.0
    %3957 = vmatprep.subr.mxu0 0.0
    %3958 = vmatpush1.msra.mxu0 0.0
    %3959 = vmatprep.subr.mxu0 0.0
    %3960 = vmatpush1.msra.mxu0 0.0
    %3961 = vmatprep.subr.mxu0 0.0
    %3962 = vmatpush1.msra.mxu0 0.0
    %3963 = vmatprep.mubr.f32.mxu0 0.0
    %3964 = vmatmul.mubr.f32.gmra.mrb[0].mxu0 %v3894
    %v3965 = vpop.f32.mrb[0].mxu0
    %v3966 = vadd.f32 %v3891, %v3965
    %v3967 = vpop.f32.mrb[0].mxu0
    %3968 = vmatprep.mubr.f32.mxu0 0.0
    %3969 = vmatmul.mubr.f32.gmra.mrb[0].mxu0 %v3897
    %v3970 = vpop.f32.mrb[0].mxu0
    %v3971 = vadd.f32 %v3891, %v3970
    %v3972 = vpop.f32.mrb[0].mxu0
    %3973 = vdwg.mxu0
    %v3974 = vld [vmem:[%s18] sm:$0x1f]
    %v3975 = vlaneseq
    %v3976 = vand.u32 %v3975, 127
    %v3977 = vlaneseq
    %v3978 = vshrl.u32 %v3977, 7
    %s3979 = sld [smem:[#allocation7]]
    %v3980 = vld [vmem:[%s19] sm:$0xff]
    %3981 = vset.pattern.permute.xlu0 0
    %3982 = vperm.xlu0 %3981, %v3980
    %v3983 = vpop.permute.xlu0 %3982
    %vm3984 = vcmp.eq.s32.totalorder %v3983, %v3976
    %vm3985 = vcmp.ge.s32.totalorder %v3978, 1
    %v3986 = vstv %s3979
    %vm3987 = vcmp.le.s32.totalorder %v3978, %v3986
    %vm3988 = vmand %vm3985, %vm3987
    %vm3989 = vmand %vm3984, %vm3988
    %v3990 = vsel %vm3989, %v3966, 0.0
    %vm3991 = vcmask 39936
    %v3992 = vsel %vm3991, %v3990, 0.0
    %3993 = vadd.xlane.f32.xlu0 %v3992
    %v3994 = vpop.xlane.xlu0 %3993
    %v3995 = vrot.slane %v3994, 4
    %v3996 = vadd.f32 %v3994, %v3995
    %v3997 = vrot.slane %v3996, 2
    %v3998 = vadd.f32 %v3996, %v3997
    %v3999 = vrot.slane %v3998, 1
    %v4000 = vadd.f32 %v3998, %v3999
    %s4001 = vtos %v4000
    %s4002 = sld [smem:[#allocation5 + $0x1]]
    %s4003 = sadd.s32 %s4002, 15
    %s4004 = sld [smem:[#allocation2 + %s4003]]
    %s4005 = sadd.f32 %s4001, %s4004
    %s4006 = sld [smem:[#allocation5 + $0x2]]
    %s4007 = smul.u32 %s4002, 5
    %s4008 = sadd.s32 %s4007, %s4006
    %s4009 = sld [smem:[#allocation2 + %s4008]]
    %p4010 = scmp.ge.s32.totalorder %s3979, 2
    %s4011 = scalar_select %p4010, %s4009, 0.0
    %s4012 = sadd.f32 %s4005, %s4011
    %s4013 = scalar_select %p4010, %s4006, %s4002
    %s4014 = sld [smem:[#allocation5 + $0x3]]
    %s4015 = smul.u32 %s4013, 5
    %s4016 = sadd.s32 %s4015, %s4014
    %s4017 = sld [smem:[#allocation2 + %s4016]]
    %p4018 = scmp.ge.s32.totalorder %s3979, 3
    %s4019 = scalar_select %p4018, %s4017, 0.0
    %s4020 = sadd.f32 %s4012, %s4019
    %s4021 = scalar_select %p4018, %s4014, %s4013
    %s4022 = sld [smem:[#allocation5 + $0x4]]
    %s4023 = smul.u32 %s4021, 5
    %s4024 = sadd.s32 %s4023, %s4022
    %s4025 = sld [smem:[#allocation2 + %s4024]]
    %p4026 = scmp.ge.s32.totalorder %s3979, 4
    %s4027 = scalar_select %p4026, %s4025, 0.0
    %s4028 = sadd.f32 %s4020, %s4027
    %s4029 = scalar_select %p4026, %s4022, %s4021
    %s4030 = sld [smem:[#allocation5 + $0x5]]
    %s4031 = smul.u32 %s4029, 5
    %s4032 = sadd.s32 %s4031, %s4030
    %s4033 = sld [smem:[#allocation2 + %s4032]]
    %p4034 = scmp.ge.s32.totalorder %s3979, 5
    %s4035 = scalar_select %p4034, %s4033, 0.0
    %s4036 = sadd.f32 %s4028, %s4035
    %s4037 = scalar_select %p4034, %s4030, %s4029
    %s4038 = sld [smem:[#allocation5 + $0x6]]
    %s4039 = smul.u32 %s4037, 5
    %s4040 = sadd.s32 %s4039, %s4038
    %s4041 = sld [smem:[#allocation2 + %s4040]]
    %p4042 = scmp.ge.s32.totalorder %s3979, 6
    %s4043 = scalar_select %p4042, %s4041, 0.0
    %s4044 = sadd.f32 %s4036, %s4043
    %s4045 = scalar_select %p4042, %s4038, %s4037
    %s4046 = sld [smem:[#allocation5 + $0x7]]
    %s4047 = smul.u32 %s4045, 5
    %s4048 = sadd.s32 %s4047, %s4046
    %s4049 = sld [smem:[#allocation2 + %s4048]]
    %p4050 = scmp.ge.s32.totalorder %s3979, 7
    %s4051 = scalar_select %p4050, %s4049, 0.0
    %s4052 = sadd.f32 %s4044, %s4051
    %s4053 = scalar_select %p4050, %s4046, %s4045
    %s4054 = smul.u32 %s4053, 5
    %s4055 = sadd.s32 %s4054, 4
    %s4056 = sld [smem:[#allocation2 + %s4055]]
    %s4057 = sadd.f32 %s4052, %s4056
    %v4059 = vrot.slane %v3974, 2
    %v4061 = vadd.f32 %v3966, %v4059
    %v4063 = vrot.slane %v4061, 1
    %4065 = vxpose.xlu0.b32.start [1/16] %v4063, 128
    %4066 = vxpose.xlu0.b32.cont [2/16] 0.0, 128
    %4067 = vxpose.xlu0.b32.cont [3/16] 0.0, 128
    %4068 = vxpose.xlu0.b32.cont [4/16] 0.0, 128
    %4069 = vxpose.xlu0.b32.cont [5/16] 0.0, 128
    %4070 = vxpose.xlu0.b32.cont [6/16] 0.0, 128
    %4071 = vxpose.xlu0.b32.cont [7/16] 0.0, 128
    %4072 = vxpose.xlu0.b32.cont [8/16] 0.0, 128
    %4073 = vxpose.xlu0.b32.cont [9/16] 0.0, 128
    %4074 = vxpose.xlu0.b32.cont [10/16] 0.0, 128
    %4075 = vxpose.xlu0.b32.cont [11/16] 0.0, 128
    %4076 = vxpose.xlu0.b32.cont [12/16] 0.0, 128
    %4077 = vxpose.xlu0.b32.cont [13/16] 0.0, 128
    %4078 = vxpose.xlu0.b32.cont [14/16] 0.0, 128
    %4079 = vxpose.xlu0.b32.cont [15/16] 0.0, 128
    %4080 = vxpose.xlu0.b32.end [16/16] 0.0, 128
    %v4081 = vpop.trf.xlu0
    %v4082 = vpop.trf.xlu0
    %v4083 = vpop.trf.xlu0
    %v4084 = vpop.trf.xlu0
    %v4085 = vpop.trf.xlu0
    %v4086 = vpop.trf.xlu0
    %v4087 = vpop.trf.xlu0
    %v4088 = vpop.trf.xlu0
    %v4089 = vpop.trf.xlu0
    %v4090 = vpop.trf.xlu0
    %v4091 = vpop.trf.xlu0
    %v4092 = vpop.trf.xlu0
    %v4093 = vpop.trf.xlu0
    %v4094 = vpop.trf.xlu0
    %v4095 = vpop.trf.xlu0
    %v4096 = vpop.trf.xlu0
    %4098 = vset.pattern.permute.xlu0 0
    %4099 = vperm.xlu0 %4098, %v4081
    %v4100 = vpop.permute.xlu0 %4099
    %v4102 = vlaneseq
    %v4103 = vshrl.u32 %v4102, 7
    %v4104 = vsub.s32 2, %v4103
    %v4105 = vrot.slane %v3966, %v4104
    %v4106 = vadd.f32 %v4100, %v4105
    %v4107 = vadd.f32 %v4106, %v3974
    %vm4108 = vcmask 36864
    %v4109 = vsel %vm4108, %v4107, -inf
    %v4110 = vrot.slane %v4109, 4
    %v4111 = vmax.f32 %v4109, %v4110
    %v4112 = vrot.slane %v4111, 2
    %v4113 = vmax.f32 %v4111, %v4112
    %v4114 = vrot.slane %v4113, 1
    %v4115 = vmax.f32 %v4113, %v4114
    %v4116 = vsub.f32 %v4107, %v4115
    %v4117 = vmul.f32 %v4116, 1.442695
    %v4118 = vpow.pop %v4117
    %v4119 = vsel %vm4108, %v4118, 0.0
    %v4120 = vrot.slane %v4119, 4
    %v4121 = vadd.f32 %v4119, %v4120
    %v4122 = vrot.slane %v4121, 2
    %v4123 = vadd.f32 %v4121, %v4122
    %v4124 = vrot.slane %v4123, 1
    %v4125 = vadd.f32 %v4123, %v4124
    %v4126 = vlog2.pop %v4125
    %v4127 = vmul.f32 %v4126, 0.6931472
    %v4128 = vadd.f32 %v4115, %v4127
    %s4129 = scalar_select %p4010, 1, 0
    %v4130 = vstv %s4129
    %vm4131 = vcmp.eq.s32.totalorder %v4130, 1
    %v4132 = vsel %vm4131, %v4128, %v4061
    %v4134 = vrot.slane %v4132, 1
    %4136 = vxpose.xlu0.b32.start [1/16] %v4134, 128
    %4137 = vxpose.xlu0.b32.cont [2/16] 0.0, 128
    %4138 = vxpose.xlu0.b32.cont [3/16] 0.0, 128
    %4139 = vxpose.xlu0.b32.cont [4/16] 0.0, 128
    %4140 = vxpose.xlu0.b32.cont [5/16] 0.0, 128
    %4141 = vxpose.xlu0.b32.cont [6/16] 0.0, 128
    %4142 = vxpose.xlu0.b32.cont [7/16] 0.0, 128
    %4143 = vxpose.xlu0.b32.cont [8/16] 0.0, 128
    %4144 = vxpose.xlu0.b32.cont [9/16] 0.0, 128
    %4145 = vxpose.xlu0.b32.cont [10/16] 0.0, 128
    %4146 = vxpose.xlu0.b32.cont [11/16] 0.0, 128
    %4147 = vxpose.xlu0.b32.cont [12/16] 0.0, 128
    %4148 = vxpose.xlu0.b32.cont [13/16] 0.0, 128
    %4149 = vxpose.xlu0.b32.cont [14/16] 0.0, 128
    %4150 = vxpose.xlu0.b32.cont [15/16] 0.0, 128
    %4151 = vxpose.xlu0.b32.end [16/16] 0.0, 128
    %v4152 = vpop.trf.xlu0
    %v4153 = vpop.trf.xlu0
    %v4154 = vpop.trf.xlu0
    %v4155 = vpop.trf.xlu0
    %v4156 = vpop.trf.xlu0
    %v4157 = vpop.trf.xlu0
    %v4158 = vpop.trf.xlu0
    %v4159 = vpop.trf.xlu0
    %v4160 = vpop.trf.xlu0
    %v4161 = vpop.trf.xlu0
    %v4162 = vpop.trf.xlu0
    %v4163 = vpop.trf.xlu0
    %v4164 = vpop.trf.xlu0
    %v4165 = vpop.trf.xlu0
    %v4166 = vpop.trf.xlu0
    %v4167 = vpop.trf.xlu0
    %4169 = vset.pattern.permute.xlu0 0
    %4170 = vperm.xlu0 %4169, %v4152
    %v4171 = vpop.permute.xlu0 %4170
    %v4173 = vlaneseq
    %v4174 = vshrl.u32 %v4173, 7
    %v4175 = vsub.s32 3, %v4174
    %v4176 = vrot.slane %v3966, %v4175
    %v4177 = vadd.f32 %v4171, %v4176
    %v4178 = vadd.f32 %v4177, %v3974
    %v4179 = vsel %vm4108, %v4178, -inf
    %v4180 = vrot.slane %v4179, 4
    %v4181 = vmax.f32 %v4179, %v4180
    %v4182 = vrot.slane %v4181, 2
    %v4183 = vmax.f32 %v4181, %v4182
    %v4184 = vrot.slane %v4183, 1
    %v4185 = vmax.f32 %v4183, %v4184
    %v4186 = vsub.f32 %v4178, %v4185
    %v4187 = vmul.f32 %v4186, 1.442695
    %v4188 = vpow.pop %v4187
    %v4189 = vsel %vm4108, %v4188, 0.0
    %v4190 = vrot.slane %v4189, 4
    %v4191 = vadd.f32 %v4189, %v4190
    %v4192 = vrot.slane %v4191, 2
    %v4193 = vadd.f32 %v4191, %v4192
    %v4194 = vrot.slane %v4193, 1
    %v4195 = vadd.f32 %v4193, %v4194
    %v4196 = vlog2.pop %v4195
    %v4197 = vmul.f32 %v4196, 0.6931472
    %v4198 = vadd.f32 %v4185, %v4197
    %s4199 = scalar_select %p4018, 1, 0
    %v4200 = vstv %s4199
    %vm4201 = vcmp.eq.s32.totalorder %v4200, 1
    %v4202 = vsel %vm4201, %v4198, %v4132
    %v4204 = vrot.slane %v4202, 1
    %4206 = vxpose.xlu0.b32.start [1/16] %v4204, 128
    %4207 = vxpose.xlu0.b32.cont [2/16] 0.0, 128
    %4208 = vxpose.xlu0.b32.cont [3/16] 0.0, 128
    %4209 = vxpose.xlu0.b32.cont [4/16] 0.0, 128
    %4210 = vxpose.xlu0.b32.cont [5/16] 0.0, 128
    %4211 = vxpose.xlu0.b32.cont [6/16] 0.0, 128
    %4212 = vxpose.xlu0.b32.cont [7/16] 0.0, 128
    %4213 = vxpose.xlu0.b32.cont [8/16] 0.0, 128
    %4214 = vxpose.xlu0.b32.cont [9/16] 0.0, 128
    %4215 = vxpose.xlu0.b32.cont [10/16] 0.0, 128
    %4216 = vxpose.xlu0.b32.cont [11/16] 0.0, 128
    %4217 = vxpose.xlu0.b32.cont [12/16] 0.0, 128
    %4218 = vxpose.xlu0.b32.cont [13/16] 0.0, 128
    %4219 = vxpose.xlu0.b32.cont [14/16] 0.0, 128
    %4220 = vxpose.xlu0.b32.cont [15/16] 0.0, 128
    %4221 = vxpose.xlu0.b32.end [16/16] 0.0, 128
    %v4222 = vpop.trf.xlu0
    %v4223 = vpop.trf.xlu0
    %v4224 = vpop.trf.xlu0
    %v4225 = vpop.trf.xlu0
    %v4226 = vpop.trf.xlu0
    %v4227 = vpop.trf.xlu0
    %v4228 = vpop.trf.xlu0
    %v4229 = vpop.trf.xlu0
    %v4230 = vpop.trf.xlu0
    %v4231 = vpop.trf.xlu0
    %v4232 = vpop.trf.xlu0
    %v4233 = vpop.trf.xlu0
    %v4234 = vpop.trf.xlu0
    %v4235 = vpop.trf.xlu0
    %v4236 = vpop.trf.xlu0
    %v4237 = vpop.trf.xlu0
    %4239 = vset.pattern.permute.xlu0 0
    %4240 = vperm.xlu0 %4239, %v4222
    %v4241 = vpop.permute.xlu0 %4240
    %v4243 = vlaneseq
    %v4244 = vshrl.u32 %v4243, 7
    %v4245 = vsub.s32 4, %v4244
    %v4246 = vrot.slane %v3966, %v4245
    %v4247 = vadd.f32 %v4241, %v4246
    %v4248 = vadd.f32 %v4247, %v3974
    %v4249 = vsel %vm4108, %v4248, -inf
    %v4250 = vrot.slane %v4249, 4
    %v4251 = vmax.f32 %v4249, %v4250
    %v4252 = vrot.slane %v4251, 2
    %v4253 = vmax.f32 %v4251, %v4252
    %v4254 = vrot.slane %v4253, 1
    %v4255 = vmax.f32 %v4253, %v4254
    %v4256 = vsub.f32 %v4248, %v4255
    %v4257 = vmul.f32 %v4256, 1.442695
    %v4258 = vpow.pop %v4257
    %v4259 = vsel %vm4108, %v4258, 0.0
    %v4260 = vrot.slane %v4259, 4
    %v4261 = vadd.f32 %v4259, %v4260
    %v4262 = vrot.slane %v4261, 2
    %v4263 = vadd.f32 %v4261, %v4262
    %v4264 = vrot.slane %v4263, 1
    %v4265 = vadd.f32 %v4263, %v4264
    %v4266 = vlog2.pop %v4265
    %v4267 = vmul.f32 %v4266, 0.6931472
    %v4268 = vadd.f32 %v4255, %v4267
    %s4269 = scalar_select %p4026, 1, 0
    %v4270 = vstv %s4269
    %vm4271 = vcmp.eq.s32.totalorder %v4270, 1
    %v4272 = vsel %vm4271, %v4268, %v4202
    %v4274 = vrot.slane %v4272, 1
    %4276 = vxpose.xlu0.b32.start [1/16] %v4274, 128
    %4277 = vxpose.xlu0.b32.cont [2/16] 0.0, 128
    %4278 = vxpose.xlu0.b32.cont [3/16] 0.0, 128
    %4279 = vxpose.xlu0.b32.cont [4/16] 0.0, 128
    %4280 = vxpose.xlu0.b32.cont [5/16] 0.0, 128
    %4281 = vxpose.xlu0.b32.cont [6/16] 0.0, 128
    %4282 = vxpose.xlu0.b32.cont [7/16] 0.0, 128
    %4283 = vxpose.xlu0.b32.cont [8/16] 0.0, 128
    %4284 = vxpose.xlu0.b32.cont [9/16] 0.0, 128
    %4285 = vxpose.xlu0.b32.cont [10/16] 0.0, 128
    %4286 = vxpose.xlu0.b32.cont [11/16] 0.0, 128
    %4287 = vxpose.xlu0.b32.cont [12/16] 0.0, 128
    %4288 = vxpose.xlu0.b32.cont [13/16] 0.0, 128
    %4289 = vxpose.xlu0.b32.cont [14/16] 0.0, 128
    %4290 = vxpose.xlu0.b32.cont [15/16] 0.0, 128
    %4291 = vxpose.xlu0.b32.end [16/16] 0.0, 128
    %v4292 = vpop.trf.xlu0
    %v4293 = vpop.trf.xlu0
    %v4294 = vpop.trf.xlu0
    %v4295 = vpop.trf.xlu0
    %v4296 = vpop.trf.xlu0
    %v4297 = vpop.trf.xlu0
    %v4298 = vpop.trf.xlu0
    %v4299 = vpop.trf.xlu0
    %v4300 = vpop.trf.xlu0
    %v4301 = vpop.trf.xlu0
    %v4302 = vpop.trf.xlu0
    %v4303 = vpop.trf.xlu0
    %v4304 = vpop.trf.xlu0
    %v4305 = vpop.trf.xlu0
    %v4306 = vpop.trf.xlu0
    %v4307 = vpop.trf.xlu0
    %4309 = vset.pattern.permute.xlu0 0
    %4310 = vperm.xlu0 %4309, %v4292
    %v4311 = vpop.permute.xlu0 %4310
    %v4313 = vlaneseq
    %v4314 = vshrl.u32 %v4313, 7
    %v4315 = vsub.s32 5, %v4314
    %v4316 = vrot.slane %v3966, %v4315
    %v4317 = vadd.f32 %v4311, %v4316
    %v4318 = vadd.f32 %v4317, %v3974
    %v4319 = vsel %vm4108, %v4318, -inf
    %v4320 = vrot.slane %v4319, 4
    %v4321 = vmax.f32 %v4319, %v4320
    %v4322 = vrot.slane %v4321, 2
    %v4323 = vmax.f32 %v4321, %v4322
    %v4324 = vrot.slane %v4323, 1
    %v4325 = vmax.f32 %v4323, %v4324
    %v4326 = vsub.f32 %v4318, %v4325
    %v4327 = vmul.f32 %v4326, 1.442695
    %v4328 = vpow.pop %v4327
    %v4329 = vsel %vm4108, %v4328, 0.0
    %v4330 = vrot.slane %v4329, 4
    %v4331 = vadd.f32 %v4329, %v4330
    %v4332 = vrot.slane %v4331, 2
    %v4333 = vadd.f32 %v4331, %v4332
    %v4334 = vrot.slane %v4333, 1
    %v4335 = vadd.f32 %v4333, %v4334
    %v4336 = vlog2.pop %v4335
    %v4337 = vmul.f32 %v4336, 0.6931472
    %v4338 = vadd.f32 %v4325, %v4337
    %s4339 = scalar_select %p4034, 1, 0
    %v4340 = vstv %s4339
    %vm4341 = vcmp.eq.s32.totalorder %v4340, 1
    %v4342 = vsel %vm4341, %v4338, %v4272
    %v4344 = vrot.slane %v4342, 1
    %4346 = vxpose.xlu0.b32.start [1/16] %v4344, 128
    %4347 = vxpose.xlu0.b32.cont [2/16] 0.0, 128
    %4348 = vxpose.xlu0.b32.cont [3/16] 0.0, 128
    %4349 = vxpose.xlu0.b32.cont [4/16] 0.0, 128
    %4350 = vxpose.xlu0.b32.cont [5/16] 0.0, 128
    %4351 = vxpose.xlu0.b32.cont [6/16] 0.0, 128
    %4352 = vxpose.xlu0.b32.cont [7/16] 0.0, 128
    %4353 = vxpose.xlu0.b32.cont [8/16] 0.0, 128
    %4354 = vxpose.xlu0.b32.cont [9/16] 0.0, 128
    %4355 = vxpose.xlu0.b32.cont [10/16] 0.0, 128
    %4356 = vxpose.xlu0.b32.cont [11/16] 0.0, 128
    %4357 = vxpose.xlu0.b32.cont [12/16] 0.0, 128
    %4358 = vxpose.xlu0.b32.cont [13/16] 0.0, 128
    %4359 = vxpose.xlu0.b32.cont [14/16] 0.0, 128
    %4360 = vxpose.xlu0.b32.cont [15/16] 0.0, 128
    %4361 = vxpose.xlu0.b32.end [16/16] 0.0, 128
    %v4362 = vpop.trf.xlu0
    %v4363 = vpop.trf.xlu0
    %v4364 = vpop.trf.xlu0
    %v4365 = vpop.trf.xlu0
    %v4366 = vpop.trf.xlu0
    %v4367 = vpop.trf.xlu0
    %v4368 = vpop.trf.xlu0
    %v4369 = vpop.trf.xlu0
    %v4370 = vpop.trf.xlu0
    %v4371 = vpop.trf.xlu0
    %v4372 = vpop.trf.xlu0
    %v4373 = vpop.trf.xlu0
    %v4374 = vpop.trf.xlu0
    %v4375 = vpop.trf.xlu0
    %v4376 = vpop.trf.xlu0
    %v4377 = vpop.trf.xlu0
    %4379 = vset.pattern.permute.xlu0 0
    %4380 = vperm.xlu0 %4379, %v4362
    %v4381 = vpop.permute.xlu0 %4380
    %v4383 = vlaneseq
    %v4384 = vshrl.u32 %v4383, 7
    %v4385 = vsub.s32 6, %v4384
    %v4386 = vrot.slane %v3966, %v4385
    %v4387 = vadd.f32 %v4381, %v4386
    %v4388 = vadd.f32 %v4387, %v3974
    %v4389 = vsel %vm4108, %v4388, -inf
    %v4390 = vrot.slane %v4389, 4
    %v4391 = vmax.f32 %v4389, %v4390
    %v4392 = vrot.slane %v4391, 2
    %v4393 = vmax.f32 %v4391, %v4392
    %v4394 = vrot.slane %v4393, 1
    %v4395 = vmax.f32 %v4393, %v4394
    %v4396 = vsub.f32 %v4388, %v4395
    %v4397 = vmul.f32 %v4396, 1.442695
    %v4398 = vpow.pop %v4397
    %v4399 = vsel %vm4108, %v4398, 0.0
    %v4400 = vrot.slane %v4399, 4
    %v4401 = vadd.f32 %v4399, %v4400
    %v4402 = vrot.slane %v4401, 2
    %v4403 = vadd.f32 %v4401, %v4402
    %v4404 = vrot.slane %v4403, 1
    %v4405 = vadd.f32 %v4403, %v4404
    %v4406 = vlog2.pop %v4405
    %v4407 = vmul.f32 %v4406, 0.6931472
    %v4408 = vadd.f32 %v4395, %v4407
    %s4409 = scalar_select %p4042, 1, 0
    %v4410 = vstv %s4409
    %vm4411 = vcmp.eq.s32.totalorder %v4410, 1
    %v4412 = vsel %vm4411, %v4408, %v4342
    %v4414 = vrot.slane %v4412, 1
    %4416 = vxpose.xlu0.b32.start [1/16] %v4414, 128
    %4417 = vxpose.xlu0.b32.cont [2/16] 0.0, 128
    %4418 = vxpose.xlu0.b32.cont [3/16] 0.0, 128
    %4419 = vxpose.xlu0.b32.cont [4/16] 0.0, 128
    %4420 = vxpose.xlu0.b32.cont [5/16] 0.0, 128
    %4421 = vxpose.xlu0.b32.cont [6/16] 0.0, 128
    %4422 = vxpose.xlu0.b32.cont [7/16] 0.0, 128
    %4423 = vxpose.xlu0.b32.cont [8/16] 0.0, 128
    %4424 = vxpose.xlu0.b32.cont [9/16] 0.0, 128
    %4425 = vxpose.xlu0.b32.cont [10/16] 0.0, 128
    %4426 = vxpose.xlu0.b32.cont [11/16] 0.0, 128
    %4427 = vxpose.xlu0.b32.cont [12/16] 0.0, 128
    %4428 = vxpose.xlu0.b32.cont [13/16] 0.0, 128
    %4429 = vxpose.xlu0.b32.cont [14/16] 0.0, 128
    %4430 = vxpose.xlu0.b32.cont [15/16] 0.0, 128
    %4431 = vxpose.xlu0.b32.end [16/16] 0.0, 128
    %v4432 = vpop.trf.xlu0
    %v4433 = vpop.trf.xlu0
    %v4434 = vpop.trf.xlu0
    %v4435 = vpop.trf.xlu0
    %v4436 = vpop.trf.xlu0
    %v4437 = vpop.trf.xlu0
    %v4438 = vpop.trf.xlu0
    %v4439 = vpop.trf.xlu0
    %v4440 = vpop.trf.xlu0
    %v4441 = vpop.trf.xlu0
    %v4442 = vpop.trf.xlu0
    %v4443 = vpop.trf.xlu0
    %v4444 = vpop.trf.xlu0
    %v4445 = vpop.trf.xlu0
    %v4446 = vpop.trf.xlu0
    %v4447 = vpop.trf.xlu0
    %4449 = vset.pattern.permute.xlu0 0
    %4450 = vperm.xlu0 %4449, %v4432
    %v4451 = vpop.permute.xlu0 %4450
    %v4453 = vlaneseq
    %v4454 = vshrl.u32 %v4453, 7
    %v4455 = vsub.s32 7, %v4454
    %v4456 = vrot.slane %v3966, %v4455
    %v4457 = vadd.f32 %v4451, %v4456
    %v4458 = vadd.f32 %v4457, %v3974
    %v4459 = vsel %vm4108, %v4458, -inf
    %v4460 = vrot.slane %v4459, 4
    %v4461 = vmax.f32 %v4459, %v4460
    %v4462 = vrot.slane %v4461, 2
    %v4463 = vmax.f32 %v4461, %v4462
    %v4464 = vrot.slane %v4463, 1
    %v4465 = vmax.f32 %v4463, %v4464
    %v4466 = vsub.f32 %v4458, %v4465
    %v4467 = vmul.f32 %v4466, 1.442695
    %v4468 = vpow.pop %v4467
    %v4469 = vsel %vm4108, %v4468, 0.0
    %v4470 = vrot.slane %v4469, 4
    %v4471 = vadd.f32 %v4469, %v4470
    %v4472 = vrot.slane %v4471, 2
    %v4473 = vadd.f32 %v4471, %v4472
    %v4474 = vrot.slane %v4473, 1
    %v4475 = vadd.f32 %v4473, %v4474
    %v4476 = vlog2.pop %v4475
    %v4477 = vmul.f32 %v4476, 0.6931472
    %v4478 = vadd.f32 %v4465, %v4477
    %s4479 = scalar_select %p4050, 1, 0
    %v4480 = vstv %s4479
    %vm4481 = vcmp.eq.s32.totalorder %v4480, 1
    %v4482 = vsel %vm4481, %v4478, %v4412
    %vm4483 = vcmask 33793
    %v4484 = vsel %vm4483, %v4482, -inf
    %4485 = vmax.xlane.f32.xlu0 %v4484
    %v4486 = vpop.xlane.xlu0 %4485
    %v4487 = vrot.slane %v4486, 4
    %v4488 = vmax.f32 %v4486, %v4487
    %v4489 = vrot.slane %v4488, 2
    %v4490 = vmax.f32 %v4488, %v4489
    %v4491 = vrot.slane %v4490, 1
    %v4492 = vmax.f32 %v4490, %v4491
    %s4493 = vtos %v4492
    %v4494 = vstv %s4493
    %v4495 = vsub.f32 %v4482, %v4494
    %v4496 = vmul.f32 %v4495, 1.442695
    %v4497 = vpow.pop %v4496
    %v4499 = vrot.slane %v4497, 1
    %vm4501 = vcmask 32768
    %v4502 = vsel %vm4501, %v4499, 0.0
    %4503 = vadd.xlane.f32.xlu0 %v4502
    %v4504 = vpop.xlane.xlu0 %4503
    %v4505 = vrot.slane %v4504, 4
    %v4506 = vadd.f32 %v4504, %v4505
    %v4507 = vrot.slane %v4506, 2
    %v4508 = vadd.f32 %v4506, %v4507
    %v4509 = vrot.slane %v4508, 1
    %v4510 = vadd.f32 %v4508, %v4509
    %s4511 = vtos %v4510
    %v4512 = vstv %s4511
    %v4513 = vlog2.pop %v4512
    %v4514 = vmul.f32 %v4513, 0.6931472
    %s4515 = vtos %v4514
    %s4516 = sadd.f32 %s4493, %s4515
    %s4517 = ssub.f32 %s4516, %s4057
    %s4518 = sadd.f32 %s4517, 0.0
    %s4519 = sld [smem:[#allocation7 + $0x1]]
    %4520 = vset.pattern.permute.xlu0 1
    %4521 = vperm.xlu0 %4520, %v3980
    %v4522 = vpop.permute.xlu0 %4521
    %vm4523 = vcmp.eq.s32.totalorder %v4522, %v3976
    %v4524 = vstv %s4519
    %vm4525 = vcmp.le.s32.totalorder %v3978, %v4524
    %vm4526 = vmand %vm3985, %vm4525
    %vm4527 = vmand %vm4523, %vm4526
    %v4528 = vsel %vm4527, %v3971, 0.0
    %v4529 = vsel %vm3991, %v4528, 0.0
    %4530 = vadd.xlane.f32.xlu0 %v4529
    %v4531 = vpop.xlane.xlu0 %4530
    %v4532 = vrot.slane %v4531, 4
    %v4533 = vadd.f32 %v4531, %v4532
    %v4534 = vrot.slane %v4533, 2
    %v4535 = vadd.f32 %v4533, %v4534
    %v4536 = vrot.slane %v4535, 1
    %v4537 = vadd.f32 %v4535, %v4536
    %s4538 = vtos %v4537
    %s4539 = sld [smem:[#allocation5 + $0x81]]
    %s4540 = sadd.s32 %s4539, 15
    %s4541 = sld [smem:[#allocation2 + %s4540]]
    %s4542 = sadd.f32 %s4538, %s4541
    %s4543 = sld [smem:[#allocation5 + $0x82]]
    %s4544 = smul.u32 %s4539, 5
    %s4545 = sadd.s32 %s4544, %s4543
    %s4546 = sld [smem:[#allocation2 + %s4545]]
    %p4547 = scmp.ge.s32.totalorder %s4519, 2
    %s4548 = scalar_select %p4547, %s4546, 0.0
    %s4549 = sadd.f32 %s4542, %s4548
    %s4550 = scalar_select %p4547, %s4543, %s4539
    %s4551 = sld [smem:[#allocation5 + $0x83]]
    %s4552 = smul.u32 %s4550, 5
    %s4553 = sadd.s32 %s4552, %s4551
    %s4554 = sld [smem:[#allocation2 + %s4553]]
    %p4555 = scmp.ge.s32.totalorder %s4519, 3
    %s4556 = scalar_select %p4555, %s4554, 0.0
    %s4557 = sadd.f32 %s4549, %s4556
    %s4558 = scalar_select %p4555, %s4551, %s4550
    %s4559 = sld [smem:[#allocation5 + $0x84]]
    %s4560 = smul.u32 %s4558, 5
    %s4561 = sadd.s32 %s4560, %s4559
    %s4562 = sld [smem:[#allocation2 + %s4561]]
    %p4563 = scmp.ge.s32.totalorder %s4519, 4
    %s4564 = scalar_select %p4563, %s4562, 0.0
    %s4565 = sadd.f32 %s4557, %s4564
    %s4566 = scalar_select %p4563, %s4559, %s4558
    %s4567 = sld [smem:[#allocation5 + $0x85]]
    %s4568 = smul.u32 %s4566, 5
    %s4569 = sadd.s32 %s4568, %s4567
    %s4570 = sld [smem:[#allocation2 + %s4569]]
    %p4571 = scmp.ge.s32.totalorder %s4519, 5
    %s4572 = scalar_select %p4571, %s4570, 0.0
    %s4573 = sadd.f32 %s4565, %s4572
    %s4574 = scalar_select %p4571, %s4567, %s4566
    %s4575 = sld [smem:[#allocation5 + $0x86]]
    %s4576 = smul.u32 %s4574, 5
    %s4577 = sadd.s32 %s4576, %s4575
    %s4578 = sld [smem:[#allocation2 + %s4577]]
    %p4579 = scmp.ge.s32.totalorder %s4519, 6
    %s4580 = scalar_select %p4579, %s4578, 0.0
    %s4581 = sadd.f32 %s4573, %s4580
    %s4582 = scalar_select %p4579, %s4575, %s4574
    %s4583 = sld [smem:[#allocation5 + $0x87]]
    %s4584 = smul.u32 %s4582, 5
    %s4585 = sadd.s32 %s4584, %s4583
    %s4586 = sld [smem:[#allocation2 + %s4585]]
    %p4587 = scmp.ge.s32.totalorder %s4519, 7
    %s4588 = scalar_select %p4587, %s4586, 0.0
    %s4589 = sadd.f32 %s4581, %s4588
    %s4590 = scalar_select %p4587, %s4583, %s4582
    %s4591 = smul.u32 %s4590, 5
    %s4592 = sadd.s32 %s4591, 4
    %s4593 = sld [smem:[#allocation2 + %s4592]]
    %s4594 = sadd.f32 %s4589, %s4593
    %v4595 = vadd.f32 %v3971, %v4059
    %v4597 = vrot.slane %v4595, 1
    %4599 = vxpose.xlu0.b32.start [1/16] %v4597, 128
    %4600 = vxpose.xlu0.b32.cont [2/16] 0.0, 128
    %4601 = vxpose.xlu0.b32.cont [3/16] 0.0, 128
    %4602 = vxpose.xlu0.b32.cont [4/16] 0.0, 128
    %4603 = vxpose.xlu0.b32.cont [5/16] 0.0, 128
    %4604 = vxpose.xlu0.b32.cont [6/16] 0.0, 128
    %4605 = vxpose.xlu0.b32.cont [7/16] 0.0, 128
    %4606 = vxpose.xlu0.b32.cont [8/16] 0.0, 128
    %4607 = vxpose.xlu0.b32.cont [9/16] 0.0, 128
    %4608 = vxpose.xlu0.b32.cont [10/16] 0.0, 128
    %4609 = vxpose.xlu0.b32.cont [11/16] 0.0, 128
    %4610 = vxpose.xlu0.b32.cont [12/16] 0.0, 128
    %4611 = vxpose.xlu0.b32.cont [13/16] 0.0, 128
    %4612 = vxpose.xlu0.b32.cont [14/16] 0.0, 128
    %4613 = vxpose.xlu0.b32.cont [15/16] 0.0, 128
    %4614 = vxpose.xlu0.b32.end [16/16] 0.0, 128
    %v4615 = vpop.trf.xlu0
    %v4616 = vpop.trf.xlu0
    %v4617 = vpop.trf.xlu0
    %v4618 = vpop.trf.xlu0
    %v4619 = vpop.trf.xlu0
    %v4620 = vpop.trf.xlu0
    %v4621 = vpop.trf.xlu0
    %v4622 = vpop.trf.xlu0
    %v4623 = vpop.trf.xlu0
    %v4624 = vpop.trf.xlu0
    %v4625 = vpop.trf.xlu0
    %v4626 = vpop.trf.xlu0
    %v4627 = vpop.trf.xlu0
    %v4628 = vpop.trf.xlu0
    %v4629 = vpop.trf.xlu0
    %v4630 = vpop.trf.xlu0
    %4632 = vset.pattern.permute.xlu0 0
    %4633 = vperm.xlu0 %4632, %v4615
    %v4634 = vpop.permute.xlu0 %4633
    %v4636 = vlaneseq
    %v4637 = vshrl.u32 %v4636, 7
    %v4638 = vsub.s32 2, %v4637
    %v4639 = vrot.slane %v3971, %v4638
    %v4640 = vadd.f32 %v4634, %v4639
    %v4641 = vadd.f32 %v4640, %v3974
    %v4642 = vsel %vm4108, %v4641, -inf
    %v4643 = vrot.slane %v4642, 4
    %v4644 = vmax.f32 %v4642, %v4643
    %v4645 = vrot.slane %v4644, 2
    %v4646 = vmax.f32 %v4644, %v4645
    %v4647 = vrot.slane %v4646, 1
    %v4648 = vmax.f32 %v4646, %v4647
    %v4649 = vsub.f32 %v4641, %v4648
    %v4650 = vmul.f32 %v4649, 1.442695
    %v4651 = vpow.pop %v4650
    %v4652 = vsel %vm4108, %v4651, 0.0
    %v4653 = vrot.slane %v4652, 4
    %v4654 = vadd.f32 %v4652, %v4653
    %v4655 = vrot.slane %v4654, 2
    %v4656 = vadd.f32 %v4654, %v4655
    %v4657 = vrot.slane %v4656, 1
    %v4658 = vadd.f32 %v4656, %v4657
    %v4659 = vlog2.pop %v4658
    %v4660 = vmul.f32 %v4659, 0.6931472
    %v4661 = vadd.f32 %v4648, %v4660
    %s4662 = scalar_select %p4547, 1, 0
    %v4663 = vstv %s4662
    %vm4664 = vcmp.eq.s32.totalorder %v4663, 1
    %v4665 = vsel %vm4664, %v4661, %v4595
    %v4667 = vrot.slane %v4665, 1
    %4669 = vxpose.xlu0.b32.start [1/16] %v4667, 128
    %4670 = vxpose.xlu0.b32.cont [2/16] 0.0, 128
    %4671 = vxpose.xlu0.b32.cont [3/16] 0.0, 128
    %4672 = vxpose.xlu0.b32.cont [4/16] 0.0, 128
    %4673 = vxpose.xlu0.b32.cont [5/16] 0.0, 128
    %4674 = vxpose.xlu0.b32.cont [6/16] 0.0, 128
    %4675 = vxpose.xlu0.b32.cont [7/16] 0.0, 128
    %4676 = vxpose.xlu0.b32.cont [8/16] 0.0, 128
    %4677 = vxpose.xlu0.b32.cont [9/16] 0.0, 128
    %4678 = vxpose.xlu0.b32.cont [10/16] 0.0, 128
    %4679 = vxpose.xlu0.b32.cont [11/16] 0.0, 128
    %4680 = vxpose.xlu0.b32.cont [12/16] 0.0, 128
    %4681 = vxpose.xlu0.b32.cont [13/16] 0.0, 128
    %4682 = vxpose.xlu0.b32.cont [14/16] 0.0, 128
    %4683 = vxpose.xlu0.b32.cont [15/16] 0.0, 128
    %4684 = vxpose.xlu0.b32.end [16/16] 0.0, 128
    %v4685 = vpop.trf.xlu0
    %v4686 = vpop.trf.xlu0
    %v4687 = vpop.trf.xlu0
    %v4688 = vpop.trf.xlu0
    %v4689 = vpop.trf.xlu0
    %v4690 = vpop.trf.xlu0
    %v4691 = vpop.trf.xlu0
    %v4692 = vpop.trf.xlu0
    %v4693 = vpop.trf.xlu0
    %v4694 = vpop.trf.xlu0
    %v4695 = vpop.trf.xlu0
    %v4696 = vpop.trf.xlu0
    %v4697 = vpop.trf.xlu0
    %v4698 = vpop.trf.xlu0
    %v4699 = vpop.trf.xlu0
    %v4700 = vpop.trf.xlu0
    %4702 = vset.pattern.permute.xlu0 0
    %4703 = vperm.xlu0 %4702, %v4685
    %v4704 = vpop.permute.xlu0 %4703
    %v4706 = vlaneseq
    %v4707 = vshrl.u32 %v4706, 7
    %v4708 = vsub.s32 3, %v4707
    %v4709 = vrot.slane %v3971, %v4708
    %v4710 = vadd.f32 %v4704, %v4709
    %v4711 = vadd.f32 %v4710, %v3974
    %v4712 = vsel %vm4108, %v4711, -inf
    %v4713 = vrot.slane %v4712, 4
    %v4714 = vmax.f32 %v4712, %v4713
    %v4715 = vrot.slane %v4714, 2
    %v4716 = vmax.f32 %v4714, %v4715
    %v4717 = vrot.slane %v4716, 1
    %v4718 = vmax.f32 %v4716, %v4717
    %v4719 = vsub.f32 %v4711, %v4718
    %v4720 = vmul.f32 %v4719, 1.442695
    %v4721 = vpow.pop %v4720
    %v4722 = vsel %vm4108, %v4721, 0.0
    %v4723 = vrot.slane %v4722, 4
    %v4724 = vadd.f32 %v4722, %v4723
    %v4725 = vrot.slane %v4724, 2
    %v4726 = vadd.f32 %v4724, %v4725
    %v4727 = vrot.slane %v4726, 1
    %v4728 = vadd.f32 %v4726, %v4727
    %v4729 = vlog2.pop %v4728
    %v4730 = vmul.f32 %v4729, 0.6931472
    %v4731 = vadd.f32 %v4718, %v4730
    %s4732 = scalar_select %p4555, 1, 0
    %v4733 = vstv %s4732
    %vm4734 = vcmp.eq.s32.totalorder %v4733, 1
    %v4735 = vsel %vm4734, %v4731, %v4665
    %v4737 = vrot.slane %v4735, 1
    %4739 = vxpose.xlu0.b32.start [1/16] %v4737, 128
    %4740 = vxpose.xlu0.b32.cont [2/16] 0.0, 128
    %4741 = vxpose.xlu0.b32.cont [3/16] 0.0, 128
    %4742 = vxpose.xlu0.b32.cont [4/16] 0.0, 128
    %4743 = vxpose.xlu0.b32.cont [5/16] 0.0, 128
    %4744 = vxpose.xlu0.b32.cont [6/16] 0.0, 128
    %4745 = vxpose.xlu0.b32.cont [7/16] 0.0, 128
    %4746 = vxpose.xlu0.b32.cont [8/16] 0.0, 128
    %4747 = vxpose.xlu0.b32.cont [9/16] 0.0, 128
    %4748 = vxpose.xlu0.b32.cont [10/16] 0.0, 128
    %4749 = vxpose.xlu0.b32.cont [11/16] 0.0, 128
    %4750 = vxpose.xlu0.b32.cont [12/16] 0.0, 128
    %4751 = vxpose.xlu0.b32.cont [13/16] 0.0, 128
    %4752 = vxpose.xlu0.b32.cont [14/16] 0.0, 128
    %4753 = vxpose.xlu0.b32.cont [15/16] 0.0, 128
    %4754 = vxpose.xlu0.b32.end [16/16] 0.0, 128
    %v4755 = vpop.trf.xlu0
    %v4756 = vpop.trf.xlu0
    %v4757 = vpop.trf.xlu0
    %v4758 = vpop.trf.xlu0
    %v4759 = vpop.trf.xlu0
    %v4760 = vpop.trf.xlu0
    %v4761 = vpop.trf.xlu0
    %v4762 = vpop.trf.xlu0
    %v4763 = vpop.trf.xlu0
    %v4764 = vpop.trf.xlu0
    %v4765 = vpop.trf.xlu0
    %v4766 = vpop.trf.xlu0
    %v4767 = vpop.trf.xlu0
    %v4768 = vpop.trf.xlu0
    %v4769 = vpop.trf.xlu0
    %v4770 = vpop.trf.xlu0
    %4772 = vset.pattern.permute.xlu0 0
    %4773 = vperm.xlu0 %4772, %v4755
    %v4774 = vpop.permute.xlu0 %4773
    %v4776 = vlaneseq
    %v4777 = vshrl.u32 %v4776, 7
    %v4778 = vsub.s32 4, %v4777
    %v4779 = vrot.slane %v3971, %v4778
    %v4780 = vadd.f32 %v4774, %v4779
    %v4781 = vadd.f32 %v4780, %v3974
    %v4782 = vsel %vm4108, %v4781, -inf
    %v4783 = vrot.slane %v4782, 4
    %v4784 = vmax.f32 %v4782, %v4783
    %v4785 = vrot.slane %v4784, 2
    %v4786 = vmax.f32 %v4784, %v4785
    %v4787 = vrot.slane %v4786, 1
    %v4788 = vmax.f32 %v4786, %v4787
    %v4789 = vsub.f32 %v4781, %v4788
    %v4790 = vmul.f32 %v4789, 1.442695
    %v4791 = vpow.pop %v4790
    %v4792 = vsel %vm4108, %v4791, 0.0
    %v4793 = vrot.slane %v4792, 4
    %v4794 = vadd.f32 %v4792, %v4793
    %v4795 = vrot.slane %v4794, 2
    %v4796 = vadd.f32 %v4794, %v4795
    %v4797 = vrot.slane %v4796, 1
    %v4798 = vadd.f32 %v4796, %v4797
    %v4799 = vlog2.pop %v4798
    %v4800 = vmul.f32 %v4799, 0.6931472
    %v4801 = vadd.f32 %v4788, %v4800
    %s4802 = scalar_select %p4563, 1, 0
    %v4803 = vstv %s4802
    %vm4804 = vcmp.eq.s32.totalorder %v4803, 1
    %v4805 = vsel %vm4804, %v4801, %v4735
    %v4807 = vrot.slane %v4805, 1
    %4809 = vxpose.xlu0.b32.start [1/16] %v4807, 128
    %4810 = vxpose.xlu0.b32.cont [2/16] 0.0, 128
    %4811 = vxpose.xlu0.b32.cont [3/16] 0.0, 128
    %4812 = vxpose.xlu0.b32.cont [4/16] 0.0, 128
    %4813 = vxpose.xlu0.b32.cont [5/16] 0.0, 128
    %4814 = vxpose.xlu0.b32.cont [6/16] 0.0, 128
    %4815 = vxpose.xlu0.b32.cont [7/16] 0.0, 128
    %4816 = vxpose.xlu0.b32.cont [8/16] 0.0, 128
    %4817 = vxpose.xlu0.b32.cont [9/16] 0.0, 128
    %4818 = vxpose.xlu0.b32.cont [10/16] 0.0, 128
    %4819 = vxpose.xlu0.b32.cont [11/16] 0.0, 128
    %4820 = vxpose.xlu0.b32.cont [12/16] 0.0, 128
    %4821 = vxpose.xlu0.b32.cont [13/16] 0.0, 128
    %4822 = vxpose.xlu0.b32.cont [14/16] 0.0, 128
    %4823 = vxpose.xlu0.b32.cont [15/16] 0.0, 128
    %4824 = vxpose.xlu0.b32.end [16/16] 0.0, 128
    %v4825 = vpop.trf.xlu0
    %v4826 = vpop.trf.xlu0
    %v4827 = vpop.trf.xlu0
    %v4828 = vpop.trf.xlu0
    %v4829 = vpop.trf.xlu0
    %v4830 = vpop.trf.xlu0
    %v4831 = vpop.trf.xlu0
    %v4832 = vpop.trf.xlu0
    %v4833 = vpop.trf.xlu0
    %v4834 = vpop.trf.xlu0
    %v4835 = vpop.trf.xlu0
    %v4836 = vpop.trf.xlu0
    %v4837 = vpop.trf.xlu0
    %v4838 = vpop.trf.xlu0
    %v4839 = vpop.trf.xlu0
    %v4840 = vpop.trf.xlu0
    %4842 = vset.pattern.permute.xlu0 0
    %4843 = vperm.xlu0 %4842, %v4825
    %v4844 = vpop.permute.xlu0 %4843
    %v4846 = vlaneseq
    %v4847 = vshrl.u32 %v4846, 7
    %v4848 = vsub.s32 5, %v4847
    %v4849 = vrot.slane %v3971, %v4848
    %v4850 = vadd.f32 %v4844, %v4849
    %v4851 = vadd.f32 %v4850, %v3974
    %v4852 = vsel %vm4108, %v4851, -inf
    %v4853 = vrot.slane %v4852, 4
    %v4854 = vmax.f32 %v4852, %v4853
    %v4855 = vrot.slane %v4854, 2
    %v4856 = vmax.f32 %v4854, %v4855
    %v4857 = vrot.slane %v4856, 1
    %v4858 = vmax.f32 %v4856, %v4857
    %v4859 = vsub.f32 %v4851, %v4858
    %v4860 = vmul.f32 %v4859, 1.442695
    %v4861 = vpow.pop %v4860
    %v4862 = vsel %vm4108, %v4861, 0.0
    %v4863 = vrot.slane %v4862, 4
    %v4864 = vadd.f32 %v4862, %v4863
    %v4865 = vrot.slane %v4864, 2
    %v4866 = vadd.f32 %v4864, %v4865
    %v4867 = vrot.slane %v4866, 1
    %v4868 = vadd.f32 %v4866, %v4867
    %v4869 = vlog2.pop %v4868
    %v4870 = vmul.f32 %v4869, 0.6931472
    %v4871 = vadd.f32 %v4858, %v4870
    %s4872 = scalar_select %p4571, 1, 0
    %v4873 = vstv %s4872
    %vm4874 = vcmp.eq.s32.totalorder %v4873, 1
    %v4875 = vsel %vm4874, %v4871, %v4805
    %v4877 = vrot.slane %v4875, 1
    %4879 = vxpose.xlu0.b32.start [1/16] %v4877, 128
    %4880 = vxpose.xlu0.b32.cont [2/16] 0.0, 128
    %4881 = vxpose.xlu0.b32.cont [3/16] 0.0, 128
    %4882 = vxpose.xlu0.b32.cont [4/16] 0.0, 128
    %4883 = vxpose.xlu0.b32.cont [5/16] 0.0, 128
    %4884 = vxpose.xlu0.b32.cont [6/16] 0.0, 128
    %4885 = vxpose.xlu0.b32.cont [7/16] 0.0, 128
    %4886 = vxpose.xlu0.b32.cont [8/16] 0.0, 128
    %4887 = vxpose.xlu0.b32.cont [9/16] 0.0, 128
    %4888 = vxpose.xlu0.b32.cont [10/16] 0.0, 128
    %4889 = vxpose.xlu0.b32.cont [11/16] 0.0, 128
    %4890 = vxpose.xlu0.b32.cont [12/16] 0.0, 128
    %4891 = vxpose.xlu0.b32.cont [13/16] 0.0, 128
    %4892 = vxpose.xlu0.b32.cont [14/16] 0.0, 128
    %4893 = vxpose.xlu0.b32.cont [15/16] 0.0, 128
    %4894 = vxpose.xlu0.b32.end [16/16] 0.0, 128
    %v4895 = vpop.trf.xlu0
    %v4896 = vpop.trf.xlu0
    %v4897 = vpop.trf.xlu0
    %v4898 = vpop.trf.xlu0
    %v4899 = vpop.trf.xlu0
    %v4900 = vpop.trf.xlu0
    %v4901 = vpop.trf.xlu0
    %v4902 = vpop.trf.xlu0
    %v4903 = vpop.trf.xlu0
    %v4904 = vpop.trf.xlu0
    %v4905 = vpop.trf.xlu0
    %v4906 = vpop.trf.xlu0
    %v4907 = vpop.trf.xlu0
    %v4908 = vpop.trf.xlu0
    %v4909 = vpop.trf.xlu0
    %v4910 = vpop.trf.xlu0
    %4912 = vset.pattern.permute.xlu0 0
    %4913 = vperm.xlu0 %4912, %v4895
    %v4914 = vpop.permute.xlu0 %4913
    %v4916 = vlaneseq
    %v4917 = vshrl.u32 %v4916, 7
    %v4918 = vsub.s32 6, %v4917
    %v4919 = vrot.slane %v3971, %v4918
    %v4920 = vadd.f32 %v4914, %v4919
    %v4921 = vadd.f32 %v4920, %v3974
    %v4922 = vsel %vm4108, %v4921, -inf
    %v4923 = vrot.slane %v4922, 4
    %v4924 = vmax.f32 %v4922, %v4923
    %v4925 = vrot.slane %v4924, 2
    %v4926 = vmax.f32 %v4924, %v4925
    %v4927 = vrot.slane %v4926, 1
    %v4928 = vmax.f32 %v4926, %v4927
    %v4929 = vsub.f32 %v4921, %v4928
    %v4930 = vmul.f32 %v4929, 1.442695
    %v4931 = vpow.pop %v4930
    %v4932 = vsel %vm4108, %v4931, 0.0
    %v4933 = vrot.slane %v4932, 4
    %v4934 = vadd.f32 %v4932, %v4933
    %v4935 = vrot.slane %v4934, 2
    %v4936 = vadd.f32 %v4934, %v4935
    %v4937 = vrot.slane %v4936, 1
    %v4938 = vadd.f32 %v4936, %v4937
    %v4939 = vlog2.pop %v4938
    %v4940 = vmul.f32 %v4939, 0.6931472
    %v4941 = vadd.f32 %v4928, %v4940
    %s4942 = scalar_select %p4579, 1, 0
    %v4943 = vstv %s4942
    %vm4944 = vcmp.eq.s32.totalorder %v4943, 1
    %v4945 = vsel %vm4944, %v4941, %v4875
    %v4947 = vrot.slane %v4945, 1
    %4949 = vxpose.xlu0.b32.start [1/16] %v4947, 128
    %4950 = vxpose.xlu0.b32.cont [2/16] 0.0, 128
    %4951 = vxpose.xlu0.b32.cont [3/16] 0.0, 128
    %4952 = vxpose.xlu0.b32.cont [4/16] 0.0, 128
    %4953 = vxpose.xlu0.b32.cont [5/16] 0.0, 128
    %4954 = vxpose.xlu0.b32.cont [6/16] 0.0, 128
    %4955 = vxpose.xlu0.b32.cont [7/16] 0.0, 128
    %4956 = vxpose.xlu0.b32.cont [8/16] 0.0, 128
    %4957 = vxpose.xlu0.b32.cont [9/16] 0.0, 128
    %4958 = vxpose.xlu0.b32.cont [10/16] 0.0, 128
    %4959 = vxpose.xlu0.b32.cont [11/16] 0.0, 128
    %4960 = vxpose.xlu0.b32.cont [12/16] 0.0, 128
    %4961 = vxpose.xlu0.b32.cont [13/16] 0.0, 128
    %4962 = vxpose.xlu0.b32.cont [14/16] 0.0, 128
    %4963 = vxpose.xlu0.b32.cont [15/16] 0.0, 128
    %4964 = vxpose.xlu0.b32.end [16/16] 0.0, 128
    %v4965 = vpop.trf.xlu0
    %v4966 = vpop.trf.xlu0
    %v4967 = vpop.trf.xlu0
    %v4968 = vpop.trf.xlu0
    %v4969 = vpop.trf.xlu0
    %v4970 = vpop.trf.xlu0
    %v4971 = vpop.trf.xlu0
    %v4972 = vpop.trf.xlu0
    %v4973 = vpop.trf.xlu0
    %v4974 = vpop.trf.xlu0
    %v4975 = vpop.trf.xlu0
    %v4976 = vpop.trf.xlu0
    %v4977 = vpop.trf.xlu0
    %v4978 = vpop.trf.xlu0
    %v4979 = vpop.trf.xlu0
    %v4980 = vpop.trf.xlu0
    %4982 = vset.pattern.permute.xlu0 0
    %4983 = vperm.xlu0 %4982, %v4965
    %v4984 = vpop.permute.xlu0 %4983
    %v4986 = vlaneseq
    %v4987 = vshrl.u32 %v4986, 7
    %v4988 = vsub.s32 7, %v4987
    %v4989 = vrot.slane %v3971, %v4988
    %v4990 = vadd.f32 %v4984, %v4989
    %v4991 = vadd.f32 %v4990, %v3974
    %v4992 = vsel %vm4108, %v4991, -inf
    %v4993 = vrot.slane %v4992, 4
    %v4994 = vmax.f32 %v4992, %v4993
    %v4995 = vrot.slane %v4994, 2
    %v4996 = vmax.f32 %v4994, %v4995
    %v4997 = vrot.slane %v4996, 1
    %v4998 = vmax.f32 %v4996, %v4997
    %v4999 = vsub.f32 %v4991, %v4998
    %v5000 = vmul.f32 %v4999, 1.442695
    %v5001 = vpow.pop %v5000
    %v5002 = vsel %vm4108, %v5001, 0.0
    %v5003 = vrot.slane %v5002, 4
    %v5004 = vadd.f32 %v5002, %v5003
    %v5005 = vrot.slane %v5004, 2
    %v5006 = vadd.f32 %v5004, %v5005
    %v5007 = vrot.slane %v5006, 1
    %v5008 = vadd.f32 %v5006, %v5007
    %v5009 = vlog2.pop %v5008
    %v5010 = vmul.f32 %v5009, 0.6931472
    %v5011 = vadd.f32 %v4998, %v5010
    %s5012 = scalar_select %p4587, 1, 0
    %v5013 = vstv %s5012
    %vm5014 = vcmp.eq.s32.totalorder %v5013, 1
    %v5015 = vsel %vm5014, %v5011, %v4945
    %v5016 = vsel %vm4483, %v5015, -inf
    %5017 = vmax.xlane.f32.xlu0 %v5016
    %v5018 = vpop.xlane.xlu0 %5017
    %v5019 = vrot.slane %v5018, 4
    %v5020 = vmax.f32 %v5018, %v5019
    %v5021 = vrot.slane %v5020, 2
    %v5022 = vmax.f32 %v5020, %v5021
    %v5023 = vrot.slane %v5022, 1
    %v5024 = vmax.f32 %v5022, %v5023
    %s5025 = vtos %v5024
    %v5026 = vstv %s5025
    %v5027 = vsub.f32 %v5015, %v5026
    %v5028 = vmul.f32 %v5027, 1.442695
    %v5029 = vpow.pop %v5028
    %v5031 = vrot.slane %v5029, 1
    %v5033 = vsel %vm4501, %v5031, 0.0
    %5034 = vadd.xlane.f32.xlu0 %v5033
    %v5035 = vpop.xlane.xlu0 %5034
    %v5036 = vrot.slane %v5035, 4
    %v5037 = vadd.f32 %v5035, %v5036
    %v5038 = vrot.slane %v5037, 2
    %v5039 = vadd.f32 %v5037, %v5038
    %v5040 = vrot.slane %v5039, 1
    %v5041 = vadd.f32 %v5039, %v5040
    %s5042 = vtos %v5041
    %v5043 = vstv %s5042
    %v5044 = vlog2.pop %v5043
    %v5045 = vmul.f32 %v5044, 0.6931472
    %s5046 = vtos %v5045
    %s5047 = sadd.f32 %s5025, %s5046
    %s5048 = ssub.f32 %s5047, %s4594
    %s5049 = sadd.f32 %s4518, %s5048
    %s5050 = smul.f32 %s5049, 0.5
    %v5051 = vstv %s5050
    %v5052 = vadd.f32 %v5051, 0.0
    %5053 = vst [vmem:[#allocation8] sm:$0x1] %v5052
    // Predicated region
    $region106: #{bert_crf_forward.1} parent=1 // pred_check
      _
    $region107: #{bert_crf_forward.1} parent=1 // pred_check_branch
      %5055 = sbr.rel (0) target = $region109
    $region108: #{bert_crf_forward.1} parent=1 // pred_region
      %s5057 = ssub.s32 16, 16
      %5058 = vsyncadd [#allocation3], %s5057
      %s5060 = sshll.u32 [#allocation8], 4
      %s5061 = int_to_ptr.vmem [resolvable:$true] %s5060
      %5063 = dma.vmem_to_hbm [thread:$0]  %s5061, 16, %s23, [#allocation3]
    $region109: #{bert_crf_forward.1} parent=1 // pred_fallthru
      _
    // Predicated region
    $region110: #{bert_crf_forward.1} parent=1 // pred_check
      _
    $region111: #{bert_crf_forward.1} parent=1 // pred_check_branch
      %5065 = sbr.rel (0) target = $region113
    $region112: #{bert_crf_forward.1} parent=1 // pred_region
      %5066 = dma.done [#allocation3], 16
    $region113: #{bert_crf_forward.1} parent=1 // pred_fallthru
      _
    %5067 = vsyncpa [#allocation3], 1
    %5068 = vsyncpa [#allocation4], 1
    %5069 = vsyncpa [#allocation6], 1

</llo_original>
